<compile_context>
chip_gen: v7x
topology: tpu7x:2x2x1
jax: 0.10.0
libtpu: 0.0.40
codegen_flags: <defaults>
</compile_context>

<pallas_src>
import functools

import jax
import jax.numpy as jnp
from jax import lax
from jax.experimental import pallas as pl
from jax.experimental.pallas import tpu as pltpu

_MM_DTYPE = jnp.bfloat16            # MXU operand dtype; accumulation stays f32
_VMEM_LIMIT = 64 * 1024 * 1024      # explicit scoped-VMEM limit (<= physical on
                                    # v5e/v6e/v7x); retune per generation/tile.


# -----------------------------------------------------------------------------
# In-kernel helpers
# -----------------------------------------------------------------------------
def _dot_f32(a, b):
    return jnp.dot(a, b, preferred_element_type=jnp.float32)


def _softmax_exact(a):
    m = jnp.max(a, axis=-1, keepdims=True)
    e = jnp.exp(a - m)
    return e / jnp.sum(e, axis=-1, keepdims=True)


def _softmax_approx(a):
    # reciprocal rides the EUP slot instead of a VALU divide
    m = jnp.max(a, axis=-1, keepdims=True)
    e = jnp.exp(a - m)
    return e * pl.reciprocal(jnp.sum(e, axis=-1, keepdims=True), approx=True)


def _wcontract(s3_k, w3_k):
    """Per-Chebyshev-order weight contraction; rank-1 inputs use the VPU."""
    if w3_k.shape[0] == 1:      # fin == 1 (e.g. input_dim / output_dim == 1)
        return s3_k.astype(jnp.float32) * w3_k.astype(jnp.float32)
    return _dot_f32(s3_k, w3_k)


def _gconv(x_nm, w3, sall_b, *, n_nodes, bt, k_sup):
    """Graph convolution + weight contraction.

    x_nm : (N, Bt*Fin) node-major activations (b-major columns).
    w3   : (K, Fin, Out) bf16 weights, one slice per stacked Chebyshev support.
    sall_b : (K*N, N) bf16 stacked supports.
    Returns (N*Bt, Out) float32 with rows ordered (node, batch-in-tile).
    """
    fin = w3.shape[1]
    # ONE wide support matmul: contraction over nodes, Bt*Fin output lanes.
    s = _dot_f32(sall_b, x_nm.astype(_MM_DTYPE))                # (K*N, Bt*Fin)
    # bf16 once (review: hold gconv intermediates in bf16); fold k into the
    # weight contraction instead of per-k feature concatenation.  With bt == 1
    # this reshape is a pure leading-dim split (free).
    s3 = s.astype(_MM_DTYPE).reshape(k_sup, n_nodes * bt, fin)
    out = _wcontract(s3[0], w3[0])
    for k in range(1, k_sup):
        out = out + _wcontract(s3[k], w3[k])
    return out                                                   # (N*Bt, Out) f32


def _agcrn_cell(x_pairs, h_rows, sall_b, whg3, whc3, bg, bc, *,
                n_nodes, bt, k_sup, hidden):
    """One graph-conv GRU cell step.

    x_pairs : list of (x_nm (N, Bt*Fin), w3 (K, Fin, 3H)) input groups —
              split-weight equivalent of concatenating the cell inputs.
    h_rows  : (N*Bt, H) f32 recurrent state, rows ordered (node, batch).
    """
    # x-side: fused [z | r | candidate] heads, support matmul shared between
    # the gate and candidate passes (one MXU group instead of two).
    gx = None
    for x_nm, w3 in x_pairs:
        g = _gconv(x_nm, w3, sall_b, n_nodes=n_nodes, bt=bt, k_sup=k_sup)
        gx = g if gx is None else gx + g                         # (N*Bt, 3H)

    h_nm = h_rows.reshape(n_nodes, bt * hidden)                  # node-major view
    ghg = _gconv(h_nm, whg3, sall_b, n_nodes=n_nodes, bt=bt, k_sup=k_sup)
    zr = jax.nn.sigmoid(gx[:, :2 * hidden] + ghg + bg)           # (N*Bt, 2H)
    z = zr[:, :hidden]
    r = zr[:, hidden:]

    zh_nm = (z * h_rows).reshape(n_nodes, bt * hidden)
    ghc = _gconv(zh_nm, whc3, sall_b, n_nodes=n_nodes, bt=bt, k_sup=k_sup)
    hc = jnp.tanh(gx[:, 2 * hidden:] + ghc + bc)                 # (N*Bt, H)
    return r * h_rows + (1.0 - r) * hc


# -----------------------------------------------------------------------------
# Kernels
# -----------------------------------------------------------------------------
def _graph_supports_kernel(we1_ref, we2_ref, mem_ref, sup_ref, *, cheb_k):
    """Fused meta-graph + Chebyshev supports (exact softmax: feeds recurrence)."""
    mem = mem_ref[...]
    e1 = _dot_f32(we1_ref[...], mem)
    e2 = _dot_f32(we2_ref[...], mem)
    dims = (((1,), (1,)), ((), ()))
    g1 = _softmax_exact(jnp.maximum(
        lax.dot_general(e1, e2, dims, preferred_element_type=jnp.float32), 0.0))
    g2 = _softmax_exact(jnp.maximum(
        lax.dot_general(e2, e1, dims, preferred_element_type=jnp.float32), 0.0))

    n = g1.shape[0]
    rows = lax.broadcasted_iota(jnp.int32, (n, n), 0)
    cols = lax.broadcasted_iota(jnp.int32, (n, n), 1)
    eye = jnp.where(rows == cols, 1.0, 0.0).astype(jnp.float32)

    for gi, g in enumerate((g1, g2)):
        base = gi * cheb_k
        sup_ref[base] = eye
        if cheb_k > 1:
            sup_ref[base + 1] = g
        prev2, prev1 = eye, g
        for k in range(2, cheb_k):
            nxt = 2.0 * _dot_f32(g, prev1) - prev2
            sup_ref[base + k] = nxt
            prev2, prev1 = prev1, nxt


def _make_encoder_kernel(num_layers, n_nodes, bt, k_sup, hidden):
    n_w = 5 * num_layers

    def kernel(x_ref, sall_ref, wq_ref, mem_ref, *rest):
        w_refs = rest[:n_w]
        h0_ref = rest[n_w]
        state_ref = rest[n_w + 1]          # VMEM scratch (layers, N*Bt, H) f32

        t = pl.program_id(1)

        @pl.when(t == 0)
        def _init():
            state_ref[...] = jnp.zeros(state_ref.shape, state_ref.dtype)

        sall_b = sall_ref[...]             # bf16, VMEM-resident, single-buffered
        cur_nm = x_ref[0, 0]               # (N, Bt*Cin) node-major input block
        cur_rows = None
        for l in range(num_layers):
            wx3, whg3, whc3, bg, bc = [w_refs[5 * l + i][...] for i in range(5)]
            if l > 0:
                cur_nm = cur_rows.reshape(n_nodes, bt * hidden)
            new = _agcrn_cell([(cur_nm, wx3)], state_ref[l], sall_b,
                              whg3, whc3, bg, bc,
                              n_nodes=n_nodes, bt=bt, k_sup=k_sup, hidden=hidden)
            state_ref[l] = new
            cur_rows = new

        # h0 = [h_T | memory-attention value] written ONLY on the final step
        # (skips L-1 redundant VMEM stores; eval mode drops the training-only
        # raw query / top-k pos-neg lookups).
        @pl.when(t == pl.num_programs(1) - 1)
        def _final():
            mem = mem_ref[...]
            q = _dot_f32(cur_rows, wq_ref[...])                  # (N*Bt, mem_dim)
            att = _softmax_approx(
                lax.dot_general(q, mem, (((1,), (1,)), ((), ())),
                                preferred_element_type=jnp.float32))
            h_att = _dot_f32(att, mem)                           # (N*Bt, mem_dim)
            h0_ref[0, :, :hidden] = cur_rows
            h0_ref[0, :, hidden:] = h_att

    return kernel


def _make_decoder_kernel(num_layers, n_nodes, bt, k_sup, hidden, out_dim):
    n_w = 5 * num_layers

    def kernel(ycov_ref, h0_ref, sall_ref, *rest):
        w_refs = rest[:n_w]
        pw_ref = rest[n_w]
        pb_ref = rest[n_w + 1]
        out_ref = rest[n_w + 2]
        state_ref = rest[n_w + 3]          # VMEM scratch (layers, N*Bt, Hdec) f32
        go_ref = rest[n_w + 4]             # VMEM scratch (N, Bt*out_dim) f32

        t = pl.program_id(1)

        @pl.when(t == 0)
        def _init():
            for l in range(num_layers):
                state_ref[l] = h0_ref[0]
            go_ref[...] = jnp.zeros(go_ref.shape, go_ref.dtype)

        sall_b = sall_ref[...]
        ycov_nm = ycov_ref[0, 0]                                 # (N, Bt*ycov)

        cur_rows = None
        for l in range(num_layers):
            wx3, whg3, whc3, bg, bc = [w_refs[5 * l + i][...] for i in range(5)]
            if l == 0:
                # x = [go | ycov]: split-weight form, no per-step concatenation
                x_pairs = [(go_ref[...], wx3[:, :out_dim, :]),
                           (ycov_nm, wx3[:, out_dim:, :])]
            else:
                x_pairs = [(cur_rows.reshape(n_nodes, bt * hidden), wx3)]
            new = _agcrn_cell(x_pairs, state_ref[l], sall_b, whg3, whc3, bg, bc,
                              n_nodes=n_nodes, bt=bt, k_sup=k_sup, hidden=hidden)
            state_ref[l] = new
            cur_rows = new

        # fused output projection; go kept in node-major layout so it is both
        # the next-step gconv operand and the per-step output block.
        go_rows = _dot_f32(cur_rows, pw_ref[...]) + pb_ref[...]  # (N*Bt, out)
        go_nm = go_rows.reshape(n_nodes, bt * out_dim)
        go_ref[...] = go_nm
        out_ref[0, 0] = go_nm

    return kernel


# -----------------------------------------------------------------------------
# Pallas wrappers
# -----------------------------------------------------------------------------
def _const_spec(arr):
    """VMEM-resident, single-buffered block for grid-invariant operands."""
    zeros = (0,) * arr.ndim
    return pl.BlockSpec(arr.shape, lambda *_: zeros,
                        pipeline_mode=pl.Buffered(1))


def graph_supports(we1, we2, memory, cheb_k):
    n = we1.shape[0]
    return pl.pallas_call(
        functools.partial(_graph_supports_kernel, cheb_k=cheb_k),
        out_shape=jax.ShapeDtypeStruct((2 * cheb_k, n, n), jnp.float32),
        grid=(1,),
        in_specs=[pl.BlockSpec(we1.shape, lambda i: (0, 0)),
                  pl.BlockSpec(we2.shape, lambda i: (0, 0)),
                  pl.BlockSpec(memory.shape, lambda i: (0, 0))],
        out_specs=pl.BlockSpec((2 * cheb_k, n, n), lambda i: (0, 0, 0)),
        compiler_params=pltpu.CompilerParams(
            dimension_semantics=("arbitrary",),
            vmem_limit_bytes=_VMEM_LIMIT),
    )(we1, we2, memory)


def run_encoder(x_seq, sall, wq, memory, enc_params, *, n_tiles, bt, n_nodes,
                hidden, k_sup, num_layers, mem_dim):
    seq_len = x_seq.shape[0]
    cin_cols = x_seq.shape[-1]
    flat_w = [w for layer in enc_params for w in layer]
    kernel = _make_encoder_kernel(num_layers, n_nodes, bt, k_sup, hidden)
    in_specs = ([pl.BlockSpec((1, 1, n_nodes, cin_cols), lambda b, t: (t, b, 0, 0)),
                 _const_spec(sall), _const_spec(wq), _const_spec(memory)]
                + [_const_spec(w) for w in flat_w])
    return pl.pallas_call(
        kernel,
        out_shape=jax.ShapeDtypeStruct(
            (n_tiles, n_nodes * bt, hidden + mem_dim), jnp.float32),
        grid=(n_tiles, seq_len),
        in_specs=in_specs,
        out_specs=pl.BlockSpec((1, n_nodes * bt, hidden + mem_dim),
                               lambda b, t: (b, 0, 0)),
        scratch_shapes=[pltpu.VMEM((num_layers, n_nodes * bt, hidden),
                                   jnp.float32)],
        compiler_params=pltpu.CompilerParams(
            dimension_semantics=("parallel", "arbitrary"),
            vmem_limit_bytes=_VMEM_LIMIT),
    )(x_seq, sall, wq, memory, *flat_w)


def run_decoder(y_seq, h0, sall, dec_params, proj_w, proj_b, *, n_tiles, bt,
                n_nodes, hidden, k_sup, num_layers, out_dim):
    horizon = y_seq.shape[0]
    ycov_cols = y_seq.shape[-1]
    flat_w = [w for layer in dec_params for w in layer]
    kernel = _make_decoder_kernel(num_layers, n_nodes, bt, k_sup, hidden, out_dim)
    in_specs = ([pl.BlockSpec((1, 1, n_nodes, ycov_cols), lambda b, t: (t, b, 0, 0)),
                 pl.BlockSpec((1, n_nodes * bt, hidden), lambda b, t: (b, 0, 0)),
                 _const_spec(sall)]
                + [_const_spec(w) for w in flat_w]
                + [_const_spec(proj_w), _const_spec(proj_b)])
    return pl.pallas_call(
        kernel,
        out_shape=jax.ShapeDtypeStruct(
            (horizon, n_tiles, n_nodes, bt * out_dim), jnp.float32),
        grid=(n_tiles, horizon),
        in_specs=in_specs,
        out_specs=pl.BlockSpec((1, 1, n_nodes, bt * out_dim),
                               lambda b, t: (t, b, 0, 0)),
        scratch_shapes=[pltpu.VMEM((num_layers, n_nodes * bt, hidden), jnp.float32),
                        pltpu.VMEM((n_nodes, bt * out_dim), jnp.float32)],
        compiler_params=pltpu.CompilerParams(
            dimension_semantics=("parallel", "arbitrary"),
            vmem_limit_bytes=_VMEM_LIMIT),
    )(y_seq, h0, sall, *flat_w, proj_w, proj_b)


# -----------------------------------------------------------------------------
# MegaCRN forward (eval mode)
# -----------------------------------------------------------------------------
@functools.partial(jax.jit, static_argnames=("cfg", "batch_tile"))
def megacrn_forward(x, targets_time, params, cfg, batch_tile=1):
    (num_nodes, input_dim, output_dim, horizon, rnn_units,
     num_layers, cheb_k, ycov_dim, mem_num, mem_dim) = cfg
    del mem_num

    B = x.shape[0]
    N = num_nodes
    assert B % batch_tile == 0
    bt = batch_tile
    nt = B // bt
    K = 2 * cheb_k
    dec_dim = rnn_units + mem_dim

    # x: (B, C, N, L) -> (B, L, N, C)  [torch x.transpose(1, -1)]
    x_blnc = jnp.swapaxes(x, 1, -1)
    L = x_blnc.shape[1]
    # -> (L, n_tiles, N, bt*C): node-major per batch tile, b-major columns
    x_seq = (x_blnc.transpose(1, 0, 2, 3)
             .reshape(L, nt, bt, N, input_dim)
             .transpose(0, 1, 3, 2, 4)
             .reshape(L, nt, N, bt * input_dim))

    # targets_time: (B, ycov, 1, horizon) -> (B, horizon, N, ycov)
    y_cov = jnp.swapaxes(jnp.tile(targets_time, (1, 1, N, 1)), 1, -1)
    y_seq = (y_cov.transpose(1, 0, 2, 3)
             .reshape(horizon, nt, bt, N, ycov_dim)
             .transpose(0, 1, 3, 2, 4)
             .reshape(horizon, nt, N, bt * ycov_dim))

    # meta-graph + Chebyshev supports, stacked as (K*N, N) for one-matmul gconv
    sup = graph_supports(params["We1"], params["We2"], params["Memory"], cheb_k)
    sall = sup.reshape(K * N, N).astype(_MM_DTYPE)

    # fused encoder over the whole sequence (+ memory-attention query);
    # emits h0 = [h_T | h_att] directly in the decoder's state layout.
    h0 = run_encoder(x_seq, sall, params["Wq"], params["Memory"], params["enc"],
                     n_tiles=nt, bt=bt, n_nodes=N, hidden=rnn_units,
                     k_sup=K, num_layers=num_layers, mem_dim=mem_dim)

    # fused decoder over the whole horizon (+ output projection)
    out = run_decoder(y_seq, h0, sall, params["dec"], params["proj_w"],
                      params["proj_b"], n_tiles=nt, bt=bt, n_nodes=N,
                      hidden=dec_dim, k_sup=K, num_layers=num_layers,
                      out_dim=output_dim)

    # (horizon, nt, N, bt*out) -> (B, out, N, horizon)
    out = (out.reshape(horizon, nt, N, bt, output_dim)
           .transpose(1, 3, 4, 2, 0)
           .reshape(B, output_dim, N, horizon))
    return out


# -----------------------------------------------------------------------------
# Parameter construction (deterministic, synthetic)
# -----------------------------------------------------------------------------
def make_params(key, num_nodes, input_dim, output_dim, rnn_units, num_layers,
                cheb_k, ycov_dim, mem_num, mem_dim):
    K = 2 * cheb_k
    dec_dim = rnn_units + mem_dim
    ks = iter(jax.random.split(key, 128))

    def rnd(shape, scale=0.1):
        return scale * jax.random.normal(next(ks), shape, dtype=jnp.float32)

    def cell_params(dim_in, dim_out):
        # Split-weight / split-input re-parameterisation of the reference
        # (K*(dim_in+dim_out), n_out) AGCN weights:
        #   Wx3  : x-side, fused [z | r | candidate] heads   (K, dim_in, 3H)
        #   Whg3 : h-side gate [z | r]                       (K, dim_out, 2H)
        #   Whc3 : h-side candidate                          (K, dim_out, H)
        # MXU weights pre-cast to bf16; biases stay f32.
        return (rnd((K, dim_in, 3 * dim_out)).astype(_MM_DTYPE),
                rnd((K, dim_out, 2 * dim_out)).astype(_MM_DTYPE),
                rnd((K, dim_out, dim_out)).astype(_MM_DTYPE),
                jnp.zeros((1, 2 * dim_out), jnp.float32),
                jnp.zeros((1, dim_out), jnp.float32))

    enc = [cell_params(input_dim if i == 0 else rnn_units, rnn_units)
           for i in range(num_layers)]
    dec = [cell_params(output_dim + ycov_dim if i == 0 else dec_dim, dec_dim)
           for i in range(num_layers)]

    return {
        "Memory": rnd((mem_num, mem_dim)),
        "Wq": rnd((rnn_units, mem_dim)),
        "We1": rnd((num_nodes, mem_num)),
        "We2": rnd((num_nodes, mem_num)),
        "enc": enc,
        "dec": dec,
        "proj_w": rnd((dec_dim, output_dim)),
        "proj_b": jnp.zeros((1, output_dim), jnp.float32),
    }


# -----------------------------------------------------------------------------
if __name__ == "__main__":
    # small config
    num_nodes, input_dim, output_dim = 16, 1, 1
    horizon, rnn_units, num_layers = 4, 32, 1
    cheb_k, ycov_dim, mem_num, mem_dim = 3, 5, 8, 16
    B, L = 2, 8

    key = jax.random.PRNGKey(0)
    k_x, k_tt, k_p = jax.random.split(key, 3)

    x = jax.random.normal(k_x, (B, input_dim, num_nodes, L), dtype=jnp.float32)
    targets_time = jax.random.normal(k_tt, (B, ycov_dim, 1, horizon),
                                     dtype=jnp.float32)
    params = make_params(k_p, num_nodes, input_dim, output_dim, rnn_units,
                         num_layers, cheb_k, ycov_dim, mem_num, mem_dim)

    cfg = (num_nodes, input_dim, output_dim, horizon, rnn_units,
           num_layers, cheb_k, ycov_dim, mem_num, mem_dim)

    # batch_tile=1 exercises the parallel batch-tile grid axis (2 tiles);
    # raise it on real workloads to widen the gconv matmul lanes (Bt*F).
    out = megacrn_forward(x, targets_time, params, cfg, batch_tile=1)
    out = jax.block_until_ready(out)
    assert out.shape == (B, output_dim, num_nodes, horizon), out.shape
    assert bool(jnp.all(jnp.isfinite(out)))
    print("KERNEL_OK")
</pallas_src>

<mosaic_0001>
module attributes {stable_mosaic.version = 11 : i64} {
  func.func @_graph_supports_kernel(%arg0: i32, %arg1: memref<16x8xf32, #tpu.memory_space<vmem>>, %arg2: memref<16x8xf32, #tpu.memory_space<vmem>>, %arg3: memref<8x16xf32, #tpu.memory_space<vmem>>, %arg4: memref<6x16x16xf32, #tpu.memory_space<vmem>>) attributes {dimension_semantics = [#tpu.dimension_semantics<arbitrary>], iteration_bounds = array<i64: 1>, scalar_prefetch = 0 : i64, scratch_operands = 0 : i64, tpu.core_type = #tpu.core_type<tc>, window_params = [{pipeline_mode = #tpu.pipeline_mode<synchronous>, transform_indices = @transform_0, window_bounds = array<i64: 16, 8>}, {pipeline_mode = #tpu.pipeline_mode<synchronous>, transform_indices = @transform_1, window_bounds = array<i64: 16, 8>}, {pipeline_mode = #tpu.pipeline_mode<synchronous>, transform_indices = @transform_2, window_bounds = array<i64: 8, 16>}, {pipeline_mode = #tpu.pipeline_mode<synchronous>, transform_indices = @transform_3, window_bounds = array<i64: 6, 16, 16>}]} {
    %c0 = arith.constant 0 : index
    %c0_0 = arith.constant 0 : index
    %0 = vector.load %arg3[%c0, %c0_0] : memref<8x16xf32, #tpu.memory_space<vmem>>, vector<8x16xf32>
    %c0_1 = arith.constant 0 : index
    %c0_2 = arith.constant 0 : index
    %1 = vector.load %arg1[%c0_1, %c0_2] : memref<16x8xf32, #tpu.memory_space<vmem>>, vector<16x8xf32>
    %cst = arith.constant dense<0.000000e+00> : vector<16x16xf32>
    %2 = tpu.matmul %1, %0, %cst {dimension_numbers = #tpu.dot_dimension_numbers<[1], [0], [0], [1], [0, 0, 1, 1], [], []>} : vector<16x8xf32>, vector<8x16xf32>, vector<16x16xf32> -> vector<16x16xf32>
    %c0_3 = arith.constant 0 : index
    %c0_4 = arith.constant 0 : index
    %3 = vector.load %arg2[%c0_3, %c0_4] : memref<16x8xf32, #tpu.memory_space<vmem>>, vector<16x8xf32>
    %cst_5 = arith.constant dense<0.000000e+00> : vector<16x16xf32>
    %4 = tpu.matmul %3, %0, %cst_5 {dimension_numbers = #tpu.dot_dimension_numbers<[1], [0], [0], [1], [0, 0, 1, 1], [], []>} : vector<16x8xf32>, vector<8x16xf32>, vector<16x16xf32> -> vector<16x16xf32>
    %cst_6 = arith.constant dense<0.000000e+00> : vector<16x16xf32>
    %5 = tpu.matmul %2, %4, %cst_6 {dimension_numbers = #tpu.dot_dimension_numbers<[1], [1], [0], [0], [0, 0, 1, 0], [], []>} : vector<16x16xf32>, vector<16x16xf32>, vector<16x16xf32> -> vector<16x16xf32>
    %cst_7 = arith.constant 0.000000e+00 : f32
    %6 = vector.broadcast %cst_7 : f32 to vector<16x16xf32>
    %7 = arith.maximumf %5, %6 : vector<16x16xf32>
    %cst_8 = arith.constant dense<0xFF800000> : vector<16xf32>
    %8 = vector.multi_reduction <maximumf>, %7, %cst_8 [1] : vector<16x16xf32> to vector<16xf32>
    %9 = vector.shape_cast %8 : vector<16xf32> to vector<16x1xf32>
    %10 = vector.broadcast %9 : vector<16x1xf32> to vector<16x16xf32>
    %11 = arith.subf %7, %10 : vector<16x16xf32>
    %12 = math.exp %11 : vector<16x16xf32>
    %cst_9 = arith.constant dense<0.000000e+00> : vector<16xf32>
    %13 = vector.multi_reduction <add>, %12, %cst_9 [1] : vector<16x16xf32> to vector<16xf32>
    %14 = vector.shape_cast %13 : vector<16xf32> to vector<16x1xf32>
    %15 = vector.broadcast %14 : vector<16x1xf32> to vector<16x16xf32>
    %16 = arith.divf %12, %15 : vector<16x16xf32>
    %cst_10 = arith.constant dense<0.000000e+00> : vector<16x16xf32>
    %17 = tpu.matmul %4, %2, %cst_10 {dimension_numbers = #tpu.dot_dimension_numbers<[1], [1], [0], [0], [0, 0, 1, 0], [], []>} : vector<16x16xf32>, vector<16x16xf32>, vector<16x16xf32> -> vector<16x16xf32>
    %cst_11 = arith.constant 0.000000e+00 : f32
    %18 = vector.broadcast %cst_11 : f32 to vector<16x16xf32>
    %19 = arith.maximumf %17, %18 : vector<16x16xf32>
    %cst_12 = arith.constant dense<0xFF800000> : vector<16xf32>
    %20 = vector.multi_reduction <maximumf>, %19, %cst_12 [1] : vector<16x16xf32> to vector<16xf32>
    %21 = vector.shape_cast %20 : vector<16xf32> to vector<16x1xf32>
    %22 = vector.broadcast %21 : vector<16x1xf32> to vector<16x16xf32>
    %23 = arith.subf %19, %22 : vector<16x16xf32>
    %24 = math.exp %23 : vector<16x16xf32>
    %cst_13 = arith.constant dense<0.000000e+00> : vector<16xf32>
    %25 = vector.multi_reduction <add>, %24, %cst_13 [1] : vector<16x16xf32> to vector<16xf32>
    %26 = vector.shape_cast %25 : vector<16xf32> to vector<16x1xf32>
    %27 = vector.broadcast %26 : vector<16x1xf32> to vector<16x16xf32>
    %28 = arith.divf %24, %27 : vector<16x16xf32>
    %29 = tpu.iota {dimensions = array<i32: 0>} : vector<16x16xi32>
    %30 = tpu.iota {dimensions = array<i32: 1>} : vector<16x16xi32>
    %31 = arith.cmpi eq, %29, %30 : vector<16x16xi32>
    %cst_14 = arith.constant 1.000000e+00 : f32
    %cst_15 = arith.constant 0.000000e+00 : f32
    %32 = vector.broadcast %cst_14 : f32 to vector<16x16xf32>
    %33 = vector.broadcast %cst_15 : f32 to vector<16x16xf32>
    %34 = arith.select %31, %32, %33 : vector<16x16xi1>, vector<16x16xf32>
    %c0_16 = arith.constant 0 : index
    %c0_17 = arith.constant 0 : index
    %c0_18 = arith.constant 0 : index
    %35 = vector.load %arg4[%c0_16, %c0_17, %c0_18] : memref<6x16x16xf32, #tpu.memory_space<vmem>>, vector<1x16x16xf32>
    %36 = vector.shape_cast %35 : vector<1x16x16xf32> to vector<16x16xf32>
    %37 = vector.shape_cast %34 : vector<16x16xf32> to vector<1x16x16xf32>
    tpu.vector_store %arg4[%c0_16, %c0_17, %c0_18], %37 {strides = array<i32>} : memref<6x16x16xf32, #tpu.memory_space<vmem>>, vector<1x16x16xf32>,
    %c1 = arith.constant 1 : index
    %c0_19 = arith.constant 0 : index
    %c0_20 = arith.constant 0 : index
    %38 = vector.load %arg4[%c1, %c0_19, %c0_20] : memref<6x16x16xf32, #tpu.memory_space<vmem>>, vector<1x16x16xf32>
    %39 = vector.shape_cast %38 : vector<1x16x16xf32> to vector<16x16xf32>
    %40 = vector.shape_cast %16 : vector<16x16xf32> to vector<1x16x16xf32>
    tpu.vector_store %arg4[%c1, %c0_19, %c0_20], %40 {strides = array<i32>} : memref<6x16x16xf32, #tpu.memory_space<vmem>>, vector<1x16x16xf32>,
    %cst_21 = arith.constant dense<0.000000e+00> : vector<16x16xf32>
    %41 = tpu.matmul %16, %16, %cst_21 {dimension_numbers = #tpu.dot_dimension_numbers<[1], [0], [0], [1], [0, 0, 1, 1], [], []>} : vector<16x16xf32>, vector<16x16xf32>, vector<16x16xf32> -> vector<16x16xf32>
    %cst_22 = arith.constant 2.000000e+00 : f32
    %42 = vector.broadcast %cst_22 : f32 to vector<16x16xf32>
    %43 = arith.mulf %42, %41 : vector<16x16xf32>
    %44 = arith.subf %43, %34 : vector<16x16xf32>
    %c2 = arith.constant 2 : index
    %c0_23 = arith.constant 0 : index
    %c0_24 = arith.constant 0 : index
    %45 = vector.load %arg4[%c2, %c0_23, %c0_24] : memref<6x16x16xf32, #tpu.memory_space<vmem>>, vector<1x16x16xf32>
    %46 = vector.shape_cast %45 : vector<1x16x16xf32> to vector<16x16xf32>
    %47 = vector.shape_cast %44 : vector<16x16xf32> to vector<1x16x16xf32>
    tpu.vector_store %arg4[%c2, %c0_23, %c0_24], %47 {strides = array<i32>} : memref<6x16x16xf32, #tpu.memory_space<vmem>>, vector<1x16x16xf32>,
    %c3 = arith.constant 3 : index
    %c0_25 = arith.constant 0 : index
    %c0_26 = arith.constant 0 : index
    %48 = vector.load %arg4[%c3, %c0_25, %c0_26] : memref<6x16x16xf32, #tpu.memory_space<vmem>>, vector<1x16x16xf32>
    %49 = vector.shape_cast %48 : vector<1x16x16xf32> to vector<16x16xf32>
    %50 = vector.shape_cast %34 : vector<16x16xf32> to vector<1x16x16xf32>
    tpu.vector_store %arg4[%c3, %c0_25, %c0_26], %50 {strides = array<i32>} : memref<6x16x16xf32, #tpu.memory_space<vmem>>, vector<1x16x16xf32>,
    %c4 = arith.constant 4 : index
    %c0_27 = arith.constant 0 : index
    %c0_28 = arith.constant 0 : index
    %51 = vector.load %arg4[%c4, %c0_27, %c0_28] : memref<6x16x16xf32, #tpu.memory_space<vmem>>, vector<1x16x16xf32>
    %52 = vector.shape_cast %51 : vector<1x16x16xf32> to vector<16x16xf32>
    %53 = vector.shape_cast %28 : vector<16x16xf32> to vector<1x16x16xf32>
    tpu.vector_store %arg4[%c4, %c0_27, %c0_28], %53 {strides = array<i32>} : memref<6x16x16xf32, #tpu.memory_space<vmem>>, vector<1x16x16xf32>,
    %cst_29 = arith.constant dense<0.000000e+00> : vector<16x16xf32>
    %54 = tpu.matmul %28, %28, %cst_29 {dimension_numbers = #tpu.dot_dimension_numbers<[1], [0], [0], [1], [0, 0, 1, 1], [], []>} : vector<16x16xf32>, vector<16x16xf32>, vector<16x16xf32> -> vector<16x16xf32>
    %cst_30 = arith.constant 2.000000e+00 : f32
    %55 = vector.broadcast %cst_30 : f32 to vector<16x16xf32>
    %56 = arith.mulf %55, %54 : vector<16x16xf32>
    %57 = arith.subf %56, %34 : vector<16x16xf32>
    %c5 = arith.constant 5 : index
    %c0_31 = arith.constant 0 : index
    %c0_32 = arith.constant 0 : index
    %58 = vector.load %arg4[%c5, %c0_31, %c0_32] : memref<6x16x16xf32, #tpu.memory_space<vmem>>, vector<1x16x16xf32>
    %59 = vector.shape_cast %58 : vector<1x16x16xf32> to vector<16x16xf32>
    %60 = vector.shape_cast %57 : vector<16x16xf32> to vector<1x16x16xf32>
    tpu.vector_store %arg4[%c5, %c0_31, %c0_32], %60 {strides = array<i32>} : memref<6x16x16xf32, #tpu.memory_space<vmem>>, vector<1x16x16xf32>,
    return
  }
  func.func @transform_0(%arg0: i32) -> (i32, i32) {
    %c0_i32 = arith.constant 0 : i32
    %c0_i32_0 = arith.constant 0 : i32
    %c0_i32_1 = arith.constant 0 : i32
    return %c0_i32, %c0_i32_0 : i32, i32
  }
  func.func @transform_1(%arg0: i32) -> (i32, i32) {
    %c0_i32 = arith.constant 0 : i32
    %c0_i32_0 = arith.constant 0 : i32
    %c0_i32_1 = arith.constant 0 : i32
    return %c0_i32, %c0_i32_0 : i32, i32
  }
  func.func @transform_2(%arg0: i32) -> (i32, i32) {
    %c0_i32 = arith.constant 0 : i32
    %c0_i32_0 = arith.constant 0 : i32
    %c0_i32_1 = arith.constant 0 : i32
    return %c0_i32, %c0_i32_0 : i32, i32
  }
  func.func @transform_3(%arg0: i32) -> (i32, i32, i32) {
    %c0_i32 = arith.constant 0 : i32
    %c0_i32_0 = arith.constant 0 : i32
    %c0_i32_1 = arith.constant 0 : i32
    %c0_i32_2 = arith.constant 0 : i32
    return %c0_i32, %c0_i32_0, %c0_i32_1 : i32, i32, i32
  }
}

module attributes {stable_mosaic.version = 11 : i64} {
  func.func @kernel(%arg0: i32, %arg1: i32, %arg2: memref<1x1x16x1xf32, #tpu.memory_space<vmem>>, %arg3: memref<96x16xbf16, #tpu.memory_space<vmem>>, %arg4: memref<32x16xf32, #tpu.memory_space<vmem>>, %arg5: memref<8x16xf32, #tpu.memory_space<vmem>>, %arg6: memref<6x1x96xbf16, #tpu.memory_space<vmem>>, %arg7: memref<6x32x64xbf16, #tpu.memory_space<vmem>>, %arg8: memref<6x32x32xbf16, #tpu.memory_space<vmem>>, %arg9: memref<1x64xf32, #tpu.memory_space<vmem>>, %arg10: memref<1x32xf32, #tpu.memory_space<vmem>>, %arg11: memref<1x16x48xf32, #tpu.memory_space<vmem>>, %arg12: memref<1x16x32xf32, #tpu.memory_space<vmem>>) attributes {dimension_semantics = [#tpu.dimension_semantics<parallel>, #tpu.dimension_semantics<arbitrary>], iteration_bounds = array<i64: 2, 8>, scalar_prefetch = 0 : i64, scratch_operands = 1 : i64, tpu.core_type = #tpu.core_type<tc>, window_params = [{transform_indices = @transform_0, window_bounds = array<i64: 1, 1, 16, 1>}, {pipeline_mode = #tpu.pipeline_mode<synchronous>, transform_indices = @transform_1, window_bounds = array<i64: 96, 16>}, {pipeline_mode = #tpu.pipeline_mode<synchronous>, transform_indices = @transform_2, window_bounds = array<i64: 32, 16>}, {pipeline_mode = #tpu.pipeline_mode<synchronous>, transform_indices = @transform_3, window_bounds = array<i64: 8, 16>}, {pipeline_mode = #tpu.pipeline_mode<synchronous>, transform_indices = @transform_4, window_bounds = array<i64: 6, 1, 96>}, {pipeline_mode = #tpu.pipeline_mode<synchronous>, transform_indices = @transform_5, window_bounds = array<i64: 6, 32, 64>}, {pipeline_mode = #tpu.pipeline_mode<synchronous>, transform_indices = @transform_6, window_bounds = array<i64: 6, 32, 32>}, {pipeline_mode = #tpu.pipeline_mode<synchronous>, transform_indices = @transform_7, window_bounds = array<i64: 1, 64>}, {pipeline_mode = #tpu.pipeline_mode<synchronous>, transform_indices = @transform_8, window_bounds = array<i64: 1, 32>}, {transform_indices = @transform_9, window_bounds = array<i64: 1, 16, 48>}]} {
    %c0_i32 = arith.constant 0 : i32
    %0 = arith.cmpi eq, %arg1, %c0_i32 : i32
    %1 = arith.extui %0 : i1 to i32
    %c0_i32_0 = arith.constant 0 : i32
    %2 = arith.cmpi ne, %1, %c0_i32_0 : i32
    scf.if %2 {
      %cst_42 = arith.constant 0.000000e+00 : f32
      %182 = vector.broadcast %cst_42 : f32 to vector<1x16x32xf32>
      %c0_43 = arith.constant 0 : index
      %c0_44 = arith.constant 0 : index
      %c0_45 = arith.constant 0 : index
      %183 = vector.load %arg12[%c0_43, %c0_44, %c0_45] : memref<1x16x32xf32, #tpu.memory_space<vmem>>, vector<1x16x32xf32>
      tpu.vector_store %arg12[%c0_43, %c0_44, %c0_45], %182 {strides = array<i32>} : memref<1x16x32xf32, #tpu.memory_space<vmem>>, vector<1x16x32xf32>,
    } else {
    }
    %c0 = arith.constant 0 : index
    %c0_1 = arith.constant 0 : index
    %3 = vector.load %arg3[%c0, %c0_1] : memref<96x16xbf16, #tpu.memory_space<vmem>>, vector<96x16xbf16>
    %c0_2 = arith.constant 0 : index
    %c0_3 = arith.constant 0 : index
    %c0_4 = arith.constant 0 : index
    %c0_5 = arith.constant 0 : index
    %4 = vector.load %arg2[%c0_2, %c0_3, %c0_4, %c0_5] : memref<1x1x16x1xf32, #tpu.memory_space<vmem>>, vector<1x1x16x1xf32>
    %5 = vector.shape_cast %4 : vector<1x1x16x1xf32> to vector<16x1xf32>
    %c0_6 = arith.constant 0 : index
    %c0_7 = arith.constant 0 : index
    %c0_8 = arith.constant 0 : index
    %6 = vector.load %arg6[%c0_6, %c0_7, %c0_8] : memref<6x1x96xbf16, #tpu.memory_space<vmem>>, vector<6x1x96xbf16>
    %c0_9 = arith.constant 0 : index
    %c0_10 = arith.constant 0 : index
    %c0_11 = arith.constant 0 : index
    %7 = vector.load %arg7[%c0_9, %c0_10, %c0_11] : memref<6x32x64xbf16, #tpu.memory_space<vmem>>, vector<6x32x64xbf16>
    %c0_12 = arith.constant 0 : index
    %c0_13 = arith.constant 0 : index
    %c0_14 = arith.constant 0 : index
    %8 = vector.load %arg8[%c0_12, %c0_13, %c0_14] : memref<6x32x32xbf16, #tpu.memory_space<vmem>>, vector<6x32x32xbf16>
    %c0_15 = arith.constant 0 : index
    %c0_16 = arith.constant 0 : index
    %9 = vector.load %arg9[%c0_15, %c0_16] : memref<1x64xf32, #tpu.memory_space<vmem>>, vector<1x64xf32>
    %c0_17 = arith.constant 0 : index
    %c0_18 = arith.constant 0 : index
    %10 = vector.load %arg10[%c0_17, %c0_18] : memref<1x32xf32, #tpu.memory_space<vmem>>, vector<1x32xf32>
    %c0_19 = arith.constant 0 : index
    %c0_20 = arith.constant 0 : index
    %c0_21 = arith.constant 0 : index
    %11 = vector.load %arg12[%c0_19, %c0_20, %c0_21] : memref<1x16x32xf32, #tpu.memory_space<vmem>>, vector<1x16x32xf32>
    %12 = vector.shape_cast %11 : vector<1x16x32xf32> to vector<16x32xf32>
    %13 = arith.truncf %5 : vector<16x1xf32> to vector<16x1xbf16>
    %cst = arith.constant dense<0.000000e+00> : vector<96x1xf32>
    %14 = tpu.matmul %3, %13, %cst {dimension_numbers = #tpu.dot_dimension_numbers<[1], [0], [0], [1], [0, 0, 1, 1], [], []>} : vector<96x16xbf16>, vector<16x1xbf16>, vector<96x1xf32> -> vector<96x1xf32>
    %15 = arith.truncf %14 : vector<96x1xf32> to vector<96x1xbf16>
    %16 = vector.shape_cast %15 : vector<96x1xbf16> to vector<6x16x1xbf16>
    %17 = vector.extract_strided_slice %16 {offsets = [0, 0, 0], sizes = [1, 16, 1], strides = [1, 1, 1]} : vector<6x16x1xbf16> to vector<1x16x1xbf16>
    %18 = vector.shape_cast %17 : vector<1x16x1xbf16> to vector<16x1xbf16>
    %19 = vector.extract_strided_slice %6 {offsets = [0, 0, 0], sizes = [1, 1, 96], strides = [1, 1, 1]} : vector<6x1x96xbf16> to vector<1x1x96xbf16>
    %20 = vector.shape_cast %19 : vector<1x1x96xbf16> to vector<1x96xbf16>
    %21 = arith.extf %18 : vector<16x1xbf16> to vector<16x1xf32>
    %22 = arith.extf %20 : vector<1x96xbf16> to vector<1x96xf32>
    %23 = vector.broadcast %21 : vector<16x1xf32> to vector<16x96xf32>
    %24 = vector.broadcast %22 : vector<1x96xf32> to vector<16x96xf32>
    %25 = arith.mulf %23, %24 : vector<16x96xf32>
    %26 = vector.extract_strided_slice %16 {offsets = [1, 0, 0], sizes = [1, 16, 1], strides = [1, 1, 1]} : vector<6x16x1xbf16> to vector<1x16x1xbf16>
    %27 = vector.shape_cast %26 : vector<1x16x1xbf16> to vector<16x1xbf16>
    %28 = vector.extract_strided_slice %6 {offsets = [1, 0, 0], sizes = [1, 1, 96], strides = [1, 1, 1]} : vector<6x1x96xbf16> to vector<1x1x96xbf16>
    %29 = vector.shape_cast %28 : vector<1x1x96xbf16> to vector<1x96xbf16>
    %30 = arith.extf %27 : vector<16x1xbf16> to vector<16x1xf32>
    %31 = arith.extf %29 : vector<1x96xbf16> to vector<1x96xf32>
    %32 = vector.broadcast %30 : vector<16x1xf32> to vector<16x96xf32>
    %33 = vector.broadcast %31 : vector<1x96xf32> to vector<16x96xf32>
    %34 = arith.mulf %32, %33 : vector<16x96xf32>
    %35 = arith.addf %25, %34 : vector<16x96xf32>
    %36 = vector.extract_strided_slice %16 {offsets = [2, 0, 0], sizes = [1, 16, 1], strides = [1, 1, 1]} : vector<6x16x1xbf16> to vector<1x16x1xbf16>
    %37 = vector.shape_cast %36 : vector<1x16x1xbf16> to vector<16x1xbf16>
    %38 = vector.extract_strided_slice %6 {offsets = [2, 0, 0], sizes = [1, 1, 96], strides = [1, 1, 1]} : vector<6x1x96xbf16> to vector<1x1x96xbf16>
    %39 = vector.shape_cast %38 : vector<1x1x96xbf16> to vector<1x96xbf16>
    %40 = arith.extf %37 : vector<16x1xbf16> to vector<16x1xf32>
    %41 = arith.extf %39 : vector<1x96xbf16> to vector<1x96xf32>
    %42 = vector.broadcast %40 : vector<16x1xf32> to vector<16x96xf32>
    %43 = vector.broadcast %41 : vector<1x96xf32> to vector<16x96xf32>
    %44 = arith.mulf %42, %43 : vector<16x96xf32>
    %45 = arith.addf %35, %44 : vector<16x96xf32>
    %46 = vector.extract_strided_slice %16 {offsets = [3, 0, 0], sizes = [1, 16, 1], strides = [1, 1, 1]} : vector<6x16x1xbf16> to vector<1x16x1xbf16>
    %47 = vector.shape_cast %46 : vector<1x16x1xbf16> to vector<16x1xbf16>
    %48 = vector.extract_strided_slice %6 {offsets = [3, 0, 0], sizes = [1, 1, 96], strides = [1, 1, 1]} : vector<6x1x96xbf16> to vector<1x1x96xbf16>
    %49 = vector.shape_cast %48 : vector<1x1x96xbf16> to vector<1x96xbf16>
    %50 = arith.extf %47 : vector<16x1xbf16> to vector<16x1xf32>
    %51 = arith.extf %49 : vector<1x96xbf16> to vector<1x96xf32>
    %52 = vector.broadcast %50 : vector<16x1xf32> to vector<16x96xf32>
    %53 = vector.broadcast %51 : vector<1x96xf32> to vector<16x96xf32>
    %54 = arith.mulf %52, %53 : vector<16x96xf32>
    %55 = arith.addf %45, %54 : vector<16x96xf32>
    %56 = vector.extract_strided_slice %16 {offsets = [4, 0, 0], sizes = [1, 16, 1], strides = [1, 1, 1]} : vector<6x16x1xbf16> to vector<1x16x1xbf16>
    %57 = vector.shape_cast %56 : vector<1x16x1xbf16> to vector<16x1xbf16>
    %58 = vector.extract_strided_slice %6 {offsets = [4, 0, 0], sizes = [1, 1, 96], strides = [1, 1, 1]} : vector<6x1x96xbf16> to vector<1x1x96xbf16>
    %59 = vector.shape_cast %58 : vector<1x1x96xbf16> to vector<1x96xbf16>
    %60 = arith.extf %57 : vector<16x1xbf16> to vector<16x1xf32>
    %61 = arith.extf %59 : vector<1x96xbf16> to vector<1x96xf32>
    %62 = vector.broadcast %60 : vector<16x1xf32> to vector<16x96xf32>
    %63 = vector.broadcast %61 : vector<1x96xf32> to vector<16x96xf32>
    %64 = arith.mulf %62, %63 : vector<16x96xf32>
    %65 = arith.addf %55, %64 : vector<16x96xf32>
    %66 = vector.extract_strided_slice %16 {offsets = [5, 0, 0], sizes = [1, 16, 1], strides = [1, 1, 1]} : vector<6x16x1xbf16> to vector<1x16x1xbf16>
    %67 = vector.shape_cast %66 : vector<1x16x1xbf16> to vector<16x1xbf16>
    %68 = vector.extract_strided_slice %6 {offsets = [5, 0, 0], sizes = [1, 1, 96], strides = [1, 1, 1]} : vector<6x1x96xbf16> to vector<1x1x96xbf16>
    %69 = vector.shape_cast %68 : vector<1x1x96xbf16> to vector<1x96xbf16>
    %70 = arith.extf %67 : vector<16x1xbf16> to vector<16x1xf32>
    %71 = arith.extf %69 : vector<1x96xbf16> to vector<1x96xf32>
    %72 = vector.broadcast %70 : vector<16x1xf32> to vector<16x96xf32>
    %73 = vector.broadcast %71 : vector<1x96xf32> to vector<16x96xf32>
    %74 = arith.mulf %72, %73 : vector<16x96xf32>
    %75 = arith.addf %65, %74 : vector<16x96xf32>
    %76 = arith.truncf %12 : vector<16x32xf32> to vector<16x32xbf16>
    %cst_22 = arith.constant dense<0.000000e+00> : vector<96x32xf32>
    %77 = tpu.matmul %3, %76, %cst_22 {dimension_numbers = #tpu.dot_dimension_numbers<[1], [0], [0], [1], [0, 0, 1, 1], [], []>} : vector<96x16xbf16>, vector<16x32xbf16>, vector<96x32xf32> -> vector<96x32xf32>
    %78 = arith.truncf %77 : vector<96x32xf32> to vector<96x32xbf16>
    %79 = vector.shape_cast %78 : vector<96x32xbf16> to vector<6x16x32xbf16>
    %80 = vector.extract_strided_slice %79 {offsets = [0, 0, 0], sizes = [1, 16, 32], strides = [1, 1, 1]} : vector<6x16x32xbf16> to vector<1x16x32xbf16>
    %81 = vector.shape_cast %80 : vector<1x16x32xbf16> to vector<16x32xbf16>
    %82 = vector.extract_strided_slice %7 {offsets = [0, 0, 0], sizes = [1, 32, 64], strides = [1, 1, 1]} : vector<6x32x64xbf16> to vector<1x32x64xbf16>
    %83 = vector.shape_cast %82 : vector<1x32x64xbf16> to vector<32x64xbf16>
    %cst_23 = arith.constant dense<0.000000e+00> : vector<16x64xf32>
    %84 = tpu.matmul %81, %83, %cst_23 {dimension_numbers = #tpu.dot_dimension_numbers<[1], [0], [0], [1], [0, 0, 1, 1], [], []>} : vector<16x32xbf16>, vector<32x64xbf16>, vector<16x64xf32> -> vector<16x64xf32>
    %85 = vector.extract_strided_slice %79 {offsets = [1, 0, 0], sizes = [1, 16, 32], strides = [1, 1, 1]} : vector<6x16x32xbf16> to vector<1x16x32xbf16>
    %86 = vector.shape_cast %85 : vector<1x16x32xbf16> to vector<16x32xbf16>
    %87 = vector.extract_strided_slice %7 {offsets = [1, 0, 0], sizes = [1, 32, 64], strides = [1, 1, 1]} : vector<6x32x64xbf16> to vector<1x32x64xbf16>
    %88 = vector.shape_cast %87 : vector<1x32x64xbf16> to vector<32x64xbf16>
    %cst_24 = arith.constant dense<0.000000e+00> : vector<16x64xf32>
    %89 = tpu.matmul %86, %88, %cst_24 {dimension_numbers = #tpu.dot_dimension_numbers<[1], [0], [0], [1], [0, 0, 1, 1], [], []>} : vector<16x32xbf16>, vector<32x64xbf16>, vector<16x64xf32> -> vector<16x64xf32>
    %90 = arith.addf %84, %89 : vector<16x64xf32>
    %91 = vector.extract_strided_slice %79 {offsets = [2, 0, 0], sizes = [1, 16, 32], strides = [1, 1, 1]} : vector<6x16x32xbf16> to vector<1x16x32xbf16>
    %92 = vector.shape_cast %91 : vector<1x16x32xbf16> to vector<16x32xbf16>
    %93 = vector.extract_strided_slice %7 {offsets = [2, 0, 0], sizes = [1, 32, 64], strides = [1, 1, 1]} : vector<6x32x64xbf16> to vector<1x32x64xbf16>
    %94 = vector.shape_cast %93 : vector<1x32x64xbf16> to vector<32x64xbf16>
    %cst_25 = arith.constant dense<0.000000e+00> : vector<16x64xf32>
    %95 = tpu.matmul %92, %94, %cst_25 {dimension_numbers = #tpu.dot_dimension_numbers<[1], [0], [0], [1], [0, 0, 1, 1], [], []>} : vector<16x32xbf16>, vector<32x64xbf16>, vector<16x64xf32> -> vector<16x64xf32>
    %96 = arith.addf %90, %95 : vector<16x64xf32>
    %97 = vector.extract_strided_slice %79 {offsets = [3, 0, 0], sizes = [1, 16, 32], strides = [1, 1, 1]} : vector<6x16x32xbf16> to vector<1x16x32xbf16>
    %98 = vector.shape_cast %97 : vector<1x16x32xbf16> to vector<16x32xbf16>
    %99 = vector.extract_strided_slice %7 {offsets = [3, 0, 0], sizes = [1, 32, 64], strides = [1, 1, 1]} : vector<6x32x64xbf16> to vector<1x32x64xbf16>
    %100 = vector.shape_cast %99 : vector<1x32x64xbf16> to vector<32x64xbf16>
    %cst_26 = arith.constant dense<0.000000e+00> : vector<16x64xf32>
    %101 = tpu.matmul %98, %100, %cst_26 {dimension_numbers = #tpu.dot_dimension_numbers<[1], [0], [0], [1], [0, 0, 1, 1], [], []>} : vector<16x32xbf16>, vector<32x64xbf16>, vector<16x64xf32> -> vector<16x64xf32>
    %102 = arith.addf %96, %101 : vector<16x64xf32>
    %103 = vector.extract_strided_slice %79 {offsets = [4, 0, 0], sizes = [1, 16, 32], strides = [1, 1, 1]} : vector<6x16x32xbf16> to vector<1x16x32xbf16>
    %104 = vector.shape_cast %103 : vector<1x16x32xbf16> to vector<16x32xbf16>
    %105 = vector.extract_strided_slice %7 {offsets = [4, 0, 0], sizes = [1, 32, 64], strides = [1, 1, 1]} : vector<6x32x64xbf16> to vector<1x32x64xbf16>
    %106 = vector.shape_cast %105 : vector<1x32x64xbf16> to vector<32x64xbf16>
    %cst_27 = arith.constant dense<0.000000e+00> : vector<16x64xf32>
    %107 = tpu.matmul %104, %106, %cst_27 {dimension_numbers = #tpu.dot_dimension_numbers<[1], [0], [0], [1], [0, 0, 1, 1], [], []>} : vector<16x32xbf16>, vector<32x64xbf16>, vector<16x64xf32> -> vector<16x64xf32>
    %108 = arith.addf %102, %107 : vector<16x64xf32>
    %109 = vector.extract_strided_slice %79 {offsets = [5, 0, 0], sizes = [1, 16, 32], strides = [1, 1, 1]} : vector<6x16x32xbf16> to vector<1x16x32xbf16>
    %110 = vector.shape_cast %109 : vector<1x16x32xbf16> to vector<16x32xbf16>
    %111 = vector.extract_strided_slice %7 {offsets = [5, 0, 0], sizes = [1, 32, 64], strides = [1, 1, 1]} : vector<6x32x64xbf16> to vector<1x32x64xbf16>
    %112 = vector.shape_cast %111 : vector<1x32x64xbf16> to vector<32x64xbf16>
    %cst_28 = arith.constant dense<0.000000e+00> : vector<16x64xf32>
    %113 = tpu.matmul %110, %112, %cst_28 {dimension_numbers = #tpu.dot_dimension_numbers<[1], [0], [0], [1], [0, 0, 1, 1], [], []>} : vector<16x32xbf16>, vector<32x64xbf16>, vector<16x64xf32> -> vector<16x64xf32>
    %114 = arith.addf %108, %113 : vector<16x64xf32>
    %115 = vector.extract_strided_slice %75 {offsets = [0, 0], sizes = [16, 64], strides = [1, 1]} : vector<16x96xf32> to vector<16x64xf32>
    %116 = arith.addf %115, %114 : vector<16x64xf32>
    %117 = vector.broadcast %9 : vector<1x64xf32> to vector<16x64xf32>
    %118 = arith.addf %116, %117 : vector<16x64xf32>
    %119 = arith.negf %118 : vector<16x64xf32>
    %120 = math.exp %119 : vector<16x64xf32>
    %cst_29 = arith.constant 1.000000e+00 : f32
    %121 = vector.broadcast %cst_29 : f32 to vector<16x64xf32>
    %122 = arith.addf %121, %120 : vector<16x64xf32>
    %123 = arith.divf %121, %122 : vector<16x64xf32>
    %124 = vector.extract_strided_slice %123 {offsets = [0, 0], sizes = [16, 32], strides = [1, 1]} : vector<16x64xf32> to vector<16x32xf32>
    %125 = vector.extract_strided_slice %123 {offsets = [0, 32], sizes = [16, 32], strides = [1, 1]} : vector<16x64xf32> to vector<16x32xf32>
    %126 = arith.mulf %124, %12 : vector<16x32xf32>
    %127 = arith.truncf %126 : vector<16x32xf32> to vector<16x32xbf16>
    %cst_30 = arith.constant dense<0.000000e+00> : vector<96x32xf32>
    %128 = tpu.matmul %3, %127, %cst_30 {dimension_numbers = #tpu.dot_dimension_numbers<[1], [0], [0], [1], [0, 0, 1, 1], [], []>} : vector<96x16xbf16>, vector<16x32xbf16>, vector<96x32xf32> -> vector<96x32xf32>
    %129 = arith.truncf %128 : vector<96x32xf32> to vector<96x32xbf16>
    %130 = vector.shape_cast %129 : vector<96x32xbf16> to vector<6x16x32xbf16>
    %131 = vector.extract_strided_slice %130 {offsets = [0, 0, 0], sizes = [1, 16, 32], strides = [1, 1, 1]} : vector<6x16x32xbf16> to vector<1x16x32xbf16>
    %132 = vector.shape_cast %131 : vector<1x16x32xbf16> to vector<16x32xbf16>
    %133 = vector.extract_strided_slice %8 {offsets = [0, 0, 0], sizes = [1, 32, 32], strides = [1, 1, 1]} : vector<6x32x32xbf16> to vector<1x32x32xbf16>
    %134 = vector.shape_cast %133 : vector<1x32x32xbf16> to vector<32x32xbf16>
    %cst_31 = arith.constant dense<0.000000e+00> : vector<16x32xf32>
    %135 = tpu.matmul %132, %134, %cst_31 {dimension_numbers = #tpu.dot_dimension_numbers<[1], [0], [0], [1], [0, 0, 1, 1], [], []>} : vector<16x32xbf16>, vector<32x32xbf16>, vector<16x32xf32> -> vector<16x32xf32>
    %136 = vector.extract_strided_slice %130 {offsets = [1, 0, 0], sizes = [1, 16, 32], strides = [1, 1, 1]} : vector<6x16x32xbf16> to vector<1x16x32xbf16>
    %137 = vector.shape_cast %136 : vector<1x16x32xbf16> to vector<16x32xbf16>
    %138 = vector.extract_strided_slice %8 {offsets = [1, 0, 0], sizes = [1, 32, 32], strides = [1, 1, 1]} : vector<6x32x32xbf16> to vector<1x32x32xbf16>
    %139 = vector.shape_cast %138 : vector<1x32x32xbf16> to vector<32x32xbf16>
    %cst_32 = arith.constant dense<0.000000e+00> : vector<16x32xf32>
    %140 = tpu.matmul %137, %139, %cst_32 {dimension_numbers = #tpu.dot_dimension_numbers<[1], [0], [0], [1], [0, 0, 1, 1], [], []>} : vector<16x32xbf16>, vector<32x32xbf16>, vector<16x32xf32> -> vector<16x32xf32>
    %141 = arith.addf %135, %140 : vector<16x32xf32>
    %142 = vector.extract_strided_slice %130 {offsets = [2, 0, 0], sizes = [1, 16, 32], strides = [1, 1, 1]} : vector<6x16x32xbf16> to vector<1x16x32xbf16>
    %143 = vector.shape_cast %142 : vector<1x16x32xbf16> to vector<16x32xbf16>
    %144 = vector.extract_strided_slice %8 {offsets = [2, 0, 0], sizes = [1, 32, 32], strides = [1, 1, 1]} : vector<6x32x32xbf16> to vector<1x32x32xbf16>
    %145 = vector.shape_cast %144 : vector<1x32x32xbf16> to vector<32x32xbf16>
    %cst_33 = arith.constant dense<0.000000e+00> : vector<16x32xf32>
    %146 = tpu.matmul %143, %145, %cst_33 {dimension_numbers = #tpu.dot_dimension_numbers<[1], [0], [0], [1], [0, 0, 1, 1], [], []>} : vector<16x32xbf16>, vector<32x32xbf16>, vector<16x32xf32> -> vector<16x32xf32>
    %147 = arith.addf %141, %146 : vector<16x32xf32>
    %148 = vector.extract_strided_slice %130 {offsets = [3, 0, 0], sizes = [1, 16, 32], strides = [1, 1, 1]} : vector<6x16x32xbf16> to vector<1x16x32xbf16>
    %149 = vector.shape_cast %148 : vector<1x16x32xbf16> to vector<16x32xbf16>
    %150 = vector.extract_strided_slice %8 {offsets = [3, 0, 0], sizes = [1, 32, 32], strides = [1, 1, 1]} : vector<6x32x32xbf16> to vector<1x32x32xbf16>
    %151 = vector.shape_cast %150 : vector<1x32x32xbf16> to vector<32x32xbf16>
    %cst_34 = arith.constant dense<0.000000e+00> : vector<16x32xf32>
    %152 = tpu.matmul %149, %151, %cst_34 {dimension_numbers = #tpu.dot_dimension_numbers<[1], [0], [0], [1], [0, 0, 1, 1], [], []>} : vector<16x32xbf16>, vector<32x32xbf16>, vector<16x32xf32> -> vector<16x32xf32>
    %153 = arith.addf %147, %152 : vector<16x32xf32>
    %154 = vector.extract_strided_slice %130 {offsets = [4, 0, 0], sizes = [1, 16, 32], strides = [1, 1, 1]} : vector<6x16x32xbf16> to vector<1x16x32xbf16>
    %155 = vector.shape_cast %154 : vector<1x16x32xbf16> to vector<16x32xbf16>
    %156 = vector.extract_strided_slice %8 {offsets = [4, 0, 0], sizes = [1, 32, 32], strides = [1, 1, 1]} : vector<6x32x32xbf16> to vector<1x32x32xbf16>
    %157 = vector.shape_cast %156 : vector<1x32x32xbf16> to vector<32x32xbf16>
    %cst_35 = arith.constant dense<0.000000e+00> : vector<16x32xf32>
    %158 = tpu.matmul %155, %157, %cst_35 {dimension_numbers = #tpu.dot_dimension_numbers<[1], [0], [0], [1], [0, 0, 1, 1], [], []>} : vector<16x32xbf16>, vector<32x32xbf16>, vector<16x32xf32> -> vector<16x32xf32>
    %159 = arith.addf %153, %158 : vector<16x32xf32>
    %160 = vector.extract_strided_slice %130 {offsets = [5, 0, 0], sizes = [1, 16, 32], strides = [1, 1, 1]} : vector<6x16x32xbf16> to vector<1x16x32xbf16>
    %161 = vector.shape_cast %160 : vector<1x16x32xbf16> to vector<16x32xbf16>
    %162 = vector.extract_strided_slice %8 {offsets = [5, 0, 0], sizes = [1, 32, 32], strides = [1, 1, 1]} : vector<6x32x32xbf16> to vector<1x32x32xbf16>
    %163 = vector.shape_cast %162 : vector<1x32x32xbf16> to vector<32x32xbf16>
    %cst_36 = arith.constant dense<0.000000e+00> : vector<16x32xf32>
    %164 = tpu.matmul %161, %163, %cst_36 {dimension_numbers = #tpu.dot_dimension_numbers<[1], [0], [0], [1], [0, 0, 1, 1], [], []>} : vector<16x32xbf16>, vector<32x32xbf16>, vector<16x32xf32> -> vector<16x32xf32>
    %165 = arith.addf %159, %164 : vector<16x32xf32>
    %166 = vector.extract_strided_slice %75 {offsets = [0, 64], sizes = [16, 32], strides = [1, 1]} : vector<16x96xf32> to vector<16x32xf32>
    %167 = arith.addf %166, %165 : vector<16x32xf32>
    %168 = vector.broadcast %10 : vector<1x32xf32> to vector<16x32xf32>
    %169 = arith.addf %167, %168 : vector<16x32xf32>
    %170 = math.tanh %169 : vector<16x32xf32>
    %171 = arith.mulf %125, %12 : vector<16x32xf32>
    %cst_37 = arith.constant 1.000000e+00 : f32
    %172 = vector.broadcast %cst_37 : f32 to vector<16x32xf32>
    %173 = arith.subf %172, %125 : vector<16x32xf32>
    %174 = arith.mulf %173, %170 : vector<16x32xf32>
    %175 = arith.addf %171, %174 : vector<16x32xf32>
    %c0_38 = arith.constant 0 : index
    %c0_39 = arith.constant 0 : index
    %c0_40 = arith.constant 0 : index
    %176 = vector.load %arg12[%c0_38, %c0_39, %c0_40] : memref<1x16x32xf32, #tpu.memory_space<vmem>>, vector<1x16x32xf32>
    %177 = vector.shape_cast %176 : vector<1x16x32xf32> to vector<16x32xf32>
    %178 = vector.shape_cast %175 : vector<16x32xf32> to vector<1x16x32xf32>
    tpu.vector_store %arg12[%c0_38, %c0_39, %c0_40], %178 {strides = array<i32>} : memref<1x16x32xf32, #tpu.memory_space<vmem>>, vector<1x16x32xf32>,
    %c7_i32 = arith.constant 7 : i32
    %179 = arith.cmpi eq, %arg1, %c7_i32 : i32
    %180 = arith.extui %179 : i1 to i32
    %c0_i32_41 = arith.constant 0 : i32
    %181 = arith.cmpi ne, %180, %c0_i32_41 : i32
    scf.if %181 {
      %c0_42 = arith.constant 0 : index
      %c0_43 = arith.constant 0 : index
      %182 = vector.load %arg5[%c0_42, %c0_43] : memref<8x16xf32, #tpu.memory_space<vmem>>, vector<8x16xf32>
      %c0_44 = arith.constant 0 : index
      %c0_45 = arith.constant 0 : index
      %183 = vector.load %arg4[%c0_44, %c0_45] : memref<32x16xf32, #tpu.memory_space<vmem>>, vector<32x16xf32>
      %cst_46 = arith.constant dense<0.000000e+00> : vector<16x16xf32>
      %184 = tpu.matmul %175, %183, %cst_46 {dimension_numbers = #tpu.dot_dimension_numbers<[1], [0], [0], [1], [0, 0, 1, 1], [], []>} : vector<16x32xf32>, vector<32x16xf32>, vector<16x16xf32> -> vector<16x16xf32>
      %cst_47 = arith.constant dense<0.000000e+00> : vector<16x8xf32>
      %185 = tpu.matmul %184, %182, %cst_47 {dimension_numbers = #tpu.dot_dimension_numbers<[1], [1], [0], [0], [0, 0, 1, 0], [], []>} : vector<16x16xf32>, vector<8x16xf32>, vector<16x8xf32> -> vector<16x8xf32>
      %cst_48 = arith.constant dense<0xFF800000> : vector<16xf32>
      %186 = vector.multi_reduction <maximumf>, %185, %cst_48 [1] : vector<16x8xf32> to vector<16xf32>
      %187 = vector.shape_cast %186 : vector<16xf32> to vector<16x1xf32>
      %188 = vector.broadcast %187 : vector<16x1xf32> to vector<16x8xf32>
      %189 = arith.subf %185, %188 : vector<16x8xf32>
      %190 = math.exp %189 : vector<16x8xf32>
      %cst_49 = arith.constant dense<0.000000e+00> : vector<16xf32>
      %191 = vector.multi_reduction <add>, %190, %cst_49 [1] : vector<16x8xf32> to vector<16xf32>
      %192 = vector.shape_cast %191 : vector<16xf32> to vector<16x1xf32>
      %193 = tpu.reciprocal %192 {approx = true} : vector<16x1xf32> -> vector<16x1xf32>
      %194 = vector.broadcast %193 : vector<16x1xf32> to vector<16x8xf32>
      %195 = arith.mulf %190, %194 : vector<16x8xf32>
      %cst_50 = arith.constant dense<0.000000e+00> : vector<16x16xf32>
      %196 = tpu.matmul %195, %182, %cst_50 {dimension_numbers = #tpu.dot_dimension_numbers<[1], [0], [0], [1], [0, 0, 1, 1], [], []>} : vector<16x8xf32>, vector<8x16xf32>, vector<16x16xf32> -> vector<16x16xf32>
      %c0_51 = arith.constant 0 : index
      %c0_52 = arith.constant 0 : index
      %c0_53 = arith.constant 0 : index
      %197 = vector.load %arg11[%c0_51, %c0_52, %c0_53] : memref<1x16x48xf32, #tpu.memory_space<vmem>>, vector<1x16x32xf32>
      %198 = vector.shape_cast %197 : vector<1x16x32xf32> to vector<16x32xf32>
      %199 = vector.shape_cast %175 : vector<16x32xf32> to vector<1x16x32xf32>
      tpu.vector_store %arg11[%c0_51, %c0_52, %c0_53], %199 {strides = array<i32>} : memref<1x16x48xf32, #tpu.memory_space<vmem>>, vector<1x16x32xf32>,
      %c0_54 = arith.constant 0 : index
      %c0_55 = arith.constant 0 : index
      %c32 = arith.constant 32 : index
      %200 = vector.load %arg11[%c0_54, %c0_55, %c32] : memref<1x16x48xf32, #tpu.memory_space<vmem>>, vector<1x16x16xf32>
      %201 = vector.shape_cast %200 : vector<1x16x16xf32> to vector<16x16xf32>
      %202 = vector.shape_cast %196 : vector<16x16xf32> to vector<1x16x16xf32>
      tpu.vector_store %arg11[%c0_54, %c0_55, %c32], %202 {strides = array<i32>} : memref<1x16x48xf32, #tpu.memory_space<vmem>>, vector<1x16x16xf32>,
    } else {
    }
    return
  }
  func.func @transform_0(%arg0: i32, %arg1: i32) -> (i32, i32, i32, i32) {
    %c0_i32 = arith.constant 0 : i32
    %c0_i32_0 = arith.constant 0 : i32
    %c0_i32_1 = arith.constant 0 : i32
    return %arg1, %arg0, %c0_i32, %c0_i32_0 : i32, i32, i32, i32
  }
  func.func @transform_1(%arg0: i32, %arg1: i32) -> (i32, i32) {
    %c0_i32 = arith.constant 0 : i32
    %c0_i32_0 = arith.constant 0 : i32
    %c0_i32_1 = arith.constant 0 : i32
    return %c0_i32, %c0_i32_0 : i32, i32
  }
  func.func @transform_2(%arg0: i32, %arg1: i32) -> (i32, i32) {
    %c0_i32 = arith.constant 0 : i32
    %c0_i32_0 = arith.constant 0 : i32
    %c0_i32_1 = arith.constant 0 : i32
    return %c0_i32, %c0_i32_0 : i32, i32
  }
  func.func @transform_3(%arg0: i32, %arg1: i32) -> (i32, i32) {
    %c0_i32 = arith.constant 0 : i32
    %c0_i32_0 = arith.constant 0 : i32
    %c0_i32_1 = arith.constant 0 : i32
    return %c0_i32, %c0_i32_0 : i32, i32
  }
  func.func @transform_4(%arg0: i32, %arg1: i32) -> (i32, i32, i32) {
    %c0_i32 = arith.constant 0 : i32
    %c0_i32_0 = arith.constant 0 : i32
    %c0_i32_1 = arith.constant 0 : i32
    %c0_i32_2 = arith.constant 0 : i32
    return %c0_i32, %c0_i32_0, %c0_i32_1 : i32, i32, i32
  }
  func.func @transform_5(%arg0: i32, %arg1: i32) -> (i32, i32, i32) {
    %c0_i32 = arith.constant 0 : i32
    %c0_i32_0 = arith.constant 0 : i32
    %c0_i32_1 = arith.constant 0 : i32
    %c0_i32_2 = arith.constant 0 : i32
    return %c0_i32, %c0_i32_0, %c0_i32_1 : i32, i32, i32
  }
  func.func @transform_6(%arg0: i32, %arg1: i32) -> (i32, i32, i32) {
    %c0_i32 = arith.constant 0 : i32
    %c0_i32_0 = arith.constant 0 : i32
    %c0_i32_1 = arith.constant 0 : i32
    %c0_i32_2 = arith.constant 0 : i32
    return %c0_i32, %c0_i32_0, %c0_i32_1 : i32, i32, i32
  }
  func.func @transform_7(%arg0: i32, %arg1: i32) -> (i32, i32) {
    %c0_i32 = arith.constant 0 : i32
    %c0_i32_0 = arith.constant 0 : i32
    %c0_i32_1 = arith.constant 0 : i32
    return %c0_i32, %c0_i32_0 : i32, i32
  }
  func.func @transform_8(%arg0: i32, %arg1: i32) -> (i32, i32) {
    %c0_i32 = arith.constant 0 : i32
    %c0_i32_0 = arith.constant 0 : i32
    %c0_i32_1 = arith.constant 0 : i32
    return %c0_i32, %c0_i32_0 : i32, i32
  }
  func.func @transform_9(%arg0: i32, %arg1: i32) -> (i32, i32, i32) {
    %c0_i32 = arith.constant 0 : i32
    %c0_i32_0 = arith.constant 0 : i32
    %c0_i32_1 = arith.constant 0 : i32
    return %arg0, %c0_i32, %c0_i32_0 : i32, i32, i32
  }
}

module attributes {stable_mosaic.version = 11 : i64} {
  func.func @kernel(%arg0: i32, %arg1: i32, %arg2: memref<1x1x16x5xf32, #tpu.memory_space<vmem>>, %arg3: memref<1x16x48xf32, #tpu.memory_space<vmem>>, %arg4: memref<96x16xbf16, #tpu.memory_space<vmem>>, %arg5: memref<6x6x144xbf16, #tpu.memory_space<vmem>>, %arg6: memref<6x48x96xbf16, #tpu.memory_space<vmem>>, %arg7: memref<6x48x48xbf16, #tpu.memory_space<vmem>>, %arg8: memref<1x96xf32, #tpu.memory_space<vmem>>, %arg9: memref<1x48xf32, #tpu.memory_space<vmem>>, %arg10: memref<48x1xf32, #tpu.memory_space<vmem>>, %arg11: memref<1x1xf32, #tpu.memory_space<vmem>>, %arg12: memref<1x1x16x1xf32, #tpu.memory_space<vmem>>, %arg13: memref<1x16x48xf32, #tpu.memory_space<vmem>>, %arg14: memref<16x1xf32, #tpu.memory_space<vmem>>) attributes {dimension_semantics = [#tpu.dimension_semantics<parallel>, #tpu.dimension_semantics<arbitrary>], iteration_bounds = array<i64: 2, 4>, scalar_prefetch = 0 : i64, scratch_operands = 2 : i64, tpu.core_type = #tpu.core_type<tc>, window_params = [{transform_indices = @transform_0, window_bounds = array<i64: 1, 1, 16, 5>}, {transform_indices = @transform_1, window_bounds = array<i64: 1, 16, 48>}, {pipeline_mode = #tpu.pipeline_mode<synchronous>, transform_indices = @transform_2, window_bounds = array<i64: 96, 16>}, {pipeline_mode = #tpu.pipeline_mode<synchronous>, transform_indices = @transform_3, window_bounds = array<i64: 6, 6, 144>}, {pipeline_mode = #tpu.pipeline_mode<synchronous>, transform_indices = @transform_4, window_bounds = array<i64: 6, 48, 96>}, {pipeline_mode = #tpu.pipeline_mode<synchronous>, transform_indices = @transform_5, window_bounds = array<i64: 6, 48, 48>}, {pipeline_mode = #tpu.pipeline_mode<synchronous>, transform_indices = @transform_6, window_bounds = array<i64: 1, 96>}, {pipeline_mode = #tpu.pipeline_mode<synchronous>, transform_indices = @transform_7, window_bounds = array<i64: 1, 48>}, {pipeline_mode = #tpu.pipeline_mode<synchronous>, transform_indices = @transform_8, window_bounds = array<i64: 48, 1>}, {pipeline_mode = #tpu.pipeline_mode<synchronous>, transform_indices = @transform_9, window_bounds = array<i64: 1, 1>}, {transform_indices = @transform_10, window_bounds = array<i64: 1, 1, 16, 1>}]} {
    %c0_i32 = arith.constant 0 : i32
    %0 = arith.cmpi eq, %arg1, %c0_i32 : i32
    %1 = arith.extui %0 : i1 to i32
    %c0_i32_0 = arith.constant 0 : i32
    %2 = arith.cmpi ne, %1, %c0_i32_0 : i32
    scf.if %2 {
      %c0_61 = arith.constant 0 : index
      %c0_62 = arith.constant 0 : index
      %c0_63 = arith.constant 0 : index
      %231 = vector.load %arg3[%c0_61, %c0_62, %c0_63] : memref<1x16x48xf32, #tpu.memory_space<vmem>>, vector<1x16x48xf32>
      %232 = vector.shape_cast %231 : vector<1x16x48xf32> to vector<16x48xf32>
      %c0_64 = arith.constant 0 : index
      %c0_65 = arith.constant 0 : index
      %c0_66 = arith.constant 0 : index
      %233 = vector.load %arg13[%c0_64, %c0_65, %c0_66] : memref<1x16x48xf32, #tpu.memory_space<vmem>>, vector<1x16x48xf32>
      %234 = vector.shape_cast %233 : vector<1x16x48xf32> to vector<16x48xf32>
      %235 = vector.shape_cast %232 : vector<16x48xf32> to vector<1x16x48xf32>
      tpu.vector_store %arg13[%c0_64, %c0_65, %c0_66], %235 {strides = array<i32>} : memref<1x16x48xf32, #tpu.memory_space<vmem>>, vector<1x16x48xf32>,
      %cst_67 = arith.constant 0.000000e+00 : f32
      %236 = vector.broadcast %cst_67 : f32 to vector<16x1xf32>
      %c0_68 = arith.constant 0 : index
      %c0_69 = arith.constant 0 : index
      %237 = vector.load %arg14[%c0_68, %c0_69] : memref<16x1xf32, #tpu.memory_space<vmem>>, vector<16x1xf32>
      tpu.vector_store %arg14[%c0_68, %c0_69], %236 {strides = array<i32>} : memref<16x1xf32, #tpu.memory_space<vmem>>, vector<16x1xf32>,
    } else {
    }
    %c0 = arith.constant 0 : index
    %c0_1 = arith.constant 0 : index
    %3 = vector.load %arg4[%c0, %c0_1] : memref<96x16xbf16, #tpu.memory_space<vmem>>, vector<96x16xbf16>
    %c0_2 = arith.constant 0 : index
    %c0_3 = arith.constant 0 : index
    %c0_4 = arith.constant 0 : index
    %c0_5 = arith.constant 0 : index
    %4 = vector.load %arg2[%c0_2, %c0_3, %c0_4, %c0_5] : memref<1x1x16x5xf32, #tpu.memory_space<vmem>>, vector<1x1x16x5xf32>
    %5 = vector.shape_cast %4 : vector<1x1x16x5xf32> to vector<16x5xf32>
    %c0_6 = arith.constant 0 : index
    %c0_7 = arith.constant 0 : index
    %c0_8 = arith.constant 0 : index
    %6 = vector.load %arg5[%c0_6, %c0_7, %c0_8] : memref<6x6x144xbf16, #tpu.memory_space<vmem>>, vector<6x6x144xbf16>
    %c0_9 = arith.constant 0 : index
    %c0_10 = arith.constant 0 : index
    %c0_11 = arith.constant 0 : index
    %7 = vector.load %arg6[%c0_9, %c0_10, %c0_11] : memref<6x48x96xbf16, #tpu.memory_space<vmem>>, vector<6x48x96xbf16>
    %c0_12 = arith.constant 0 : index
    %c0_13 = arith.constant 0 : index
    %c0_14 = arith.constant 0 : index
    %8 = vector.load %arg7[%c0_12, %c0_13, %c0_14] : memref<6x48x48xbf16, #tpu.memory_space<vmem>>, vector<6x48x48xbf16>
    %c0_15 = arith.constant 0 : index
    %c0_16 = arith.constant 0 : index
    %9 = vector.load %arg8[%c0_15, %c0_16] : memref<1x96xf32, #tpu.memory_space<vmem>>, vector<1x96xf32>
    %c0_17 = arith.constant 0 : index
    %c0_18 = arith.constant 0 : index
    %10 = vector.load %arg9[%c0_17, %c0_18] : memref<1x48xf32, #tpu.memory_space<vmem>>, vector<1x48xf32>
    %c0_19 = arith.constant 0 : index
    %c0_20 = arith.constant 0 : index
    %11 = vector.load %arg14[%c0_19, %c0_20] : memref<16x1xf32, #tpu.memory_space<vmem>>, vector<16x1xf32>
    %12 = vector.extract_strided_slice %6 {offsets = [0, 0, 0], sizes = [6, 1, 144], strides = [1, 1, 1]} : vector<6x6x144xbf16> to vector<6x1x144xbf16>
    %13 = vector.extract_strided_slice %6 {offsets = [0, 1, 0], sizes = [6, 5, 144], strides = [1, 1, 1]} : vector<6x6x144xbf16> to vector<6x5x144xbf16>
    %c0_21 = arith.constant 0 : index
    %c0_22 = arith.constant 0 : index
    %c0_23 = arith.constant 0 : index
    %14 = vector.load %arg13[%c0_21, %c0_22, %c0_23] : memref<1x16x48xf32, #tpu.memory_space<vmem>>, vector<1x16x48xf32>
    %15 = vector.shape_cast %14 : vector<1x16x48xf32> to vector<16x48xf32>
    %16 = arith.truncf %11 : vector<16x1xf32> to vector<16x1xbf16>
    %cst = arith.constant dense<0.000000e+00> : vector<96x1xf32>
    %17 = tpu.matmul %3, %16, %cst {dimension_numbers = #tpu.dot_dimension_numbers<[1], [0], [0], [1], [0, 0, 1, 1], [], []>} : vector<96x16xbf16>, vector<16x1xbf16>, vector<96x1xf32> -> vector<96x1xf32>
    %18 = arith.truncf %17 : vector<96x1xf32> to vector<96x1xbf16>
    %19 = vector.shape_cast %18 : vector<96x1xbf16> to vector<6x16x1xbf16>
    %20 = vector.extract_strided_slice %19 {offsets = [0, 0, 0], sizes = [1, 16, 1], strides = [1, 1, 1]} : vector<6x16x1xbf16> to vector<1x16x1xbf16>
    %21 = vector.shape_cast %20 : vector<1x16x1xbf16> to vector<16x1xbf16>
    %22 = vector.extract_strided_slice %12 {offsets = [0, 0, 0], sizes = [1, 1, 144], strides = [1, 1, 1]} : vector<6x1x144xbf16> to vector<1x1x144xbf16>
    %23 = vector.shape_cast %22 : vector<1x1x144xbf16> to vector<1x144xbf16>
    %24 = arith.extf %21 : vector<16x1xbf16> to vector<16x1xf32>
    %25 = arith.extf %23 : vector<1x144xbf16> to vector<1x144xf32>
    %26 = vector.broadcast %24 : vector<16x1xf32> to vector<16x144xf32>
    %27 = vector.broadcast %25 : vector<1x144xf32> to vector<16x144xf32>
    %28 = arith.mulf %26, %27 : vector<16x144xf32>
    %29 = vector.extract_strided_slice %19 {offsets = [1, 0, 0], sizes = [1, 16, 1], strides = [1, 1, 1]} : vector<6x16x1xbf16> to vector<1x16x1xbf16>
    %30 = vector.shape_cast %29 : vector<1x16x1xbf16> to vector<16x1xbf16>
    %31 = vector.extract_strided_slice %12 {offsets = [1, 0, 0], sizes = [1, 1, 144], strides = [1, 1, 1]} : vector<6x1x144xbf16> to vector<1x1x144xbf16>
    %32 = vector.shape_cast %31 : vector<1x1x144xbf16> to vector<1x144xbf16>
    %33 = arith.extf %30 : vector<16x1xbf16> to vector<16x1xf32>
    %34 = arith.extf %32 : vector<1x144xbf16> to vector<1x144xf32>
    %35 = vector.broadcast %33 : vector<16x1xf32> to vector<16x144xf32>
    %36 = vector.broadcast %34 : vector<1x144xf32> to vector<16x144xf32>
    %37 = arith.mulf %35, %36 : vector<16x144xf32>
    %38 = arith.addf %28, %37 : vector<16x144xf32>
    %39 = vector.extract_strided_slice %19 {offsets = [2, 0, 0], sizes = [1, 16, 1], strides = [1, 1, 1]} : vector<6x16x1xbf16> to vector<1x16x1xbf16>
    %40 = vector.shape_cast %39 : vector<1x16x1xbf16> to vector<16x1xbf16>
    %41 = vector.extract_strided_slice %12 {offsets = [2, 0, 0], sizes = [1, 1, 144], strides = [1, 1, 1]} : vector<6x1x144xbf16> to vector<1x1x144xbf16>
    %42 = vector.shape_cast %41 : vector<1x1x144xbf16> to vector<1x144xbf16>
    %43 = arith.extf %40 : vector<16x1xbf16> to vector<16x1xf32>
    %44 = arith.extf %42 : vector<1x144xbf16> to vector<1x144xf32>
    %45 = vector.broadcast %43 : vector<16x1xf32> to vector<16x144xf32>
    %46 = vector.broadcast %44 : vector<1x144xf32> to vector<16x144xf32>
    %47 = arith.mulf %45, %46 : vector<16x144xf32>
    %48 = arith.addf %38, %47 : vector<16x144xf32>
    %49 = vector.extract_strided_slice %19 {offsets = [3, 0, 0], sizes = [1, 16, 1], strides = [1, 1, 1]} : vector<6x16x1xbf16> to vector<1x16x1xbf16>
    %50 = vector.shape_cast %49 : vector<1x16x1xbf16> to vector<16x1xbf16>
    %51 = vector.extract_strided_slice %12 {offsets = [3, 0, 0], sizes = [1, 1, 144], strides = [1, 1, 1]} : vector<6x1x144xbf16> to vector<1x1x144xbf16>
    %52 = vector.shape_cast %51 : vector<1x1x144xbf16> to vector<1x144xbf16>
    %53 = arith.extf %50 : vector<16x1xbf16> to vector<16x1xf32>
    %54 = arith.extf %52 : vector<1x144xbf16> to vector<1x144xf32>
    %55 = vector.broadcast %53 : vector<16x1xf32> to vector<16x144xf32>
    %56 = vector.broadcast %54 : vector<1x144xf32> to vector<16x144xf32>
    %57 = arith.mulf %55, %56 : vector<16x144xf32>
    %58 = arith.addf %48, %57 : vector<16x144xf32>
    %59 = vector.extract_strided_slice %19 {offsets = [4, 0, 0], sizes = [1, 16, 1], strides = [1, 1, 1]} : vector<6x16x1xbf16> to vector<1x16x1xbf16>
    %60 = vector.shape_cast %59 : vector<1x16x1xbf16> to vector<16x1xbf16>
    %61 = vector.extract_strided_slice %12 {offsets = [4, 0, 0], sizes = [1, 1, 144], strides = [1, 1, 1]} : vector<6x1x144xbf16> to vector<1x1x144xbf16>
    %62 = vector.shape_cast %61 : vector<1x1x144xbf16> to vector<1x144xbf16>
    %63 = arith.extf %60 : vector<16x1xbf16> to vector<16x1xf32>
    %64 = arith.extf %62 : vector<1x144xbf16> to vector<1x144xf32>
    %65 = vector.broadcast %63 : vector<16x1xf32> to vector<16x144xf32>
    %66 = vector.broadcast %64 : vector<1x144xf32> to vector<16x144xf32>
    %67 = arith.mulf %65, %66 : vector<16x144xf32>
    %68 = arith.addf %58, %67 : vector<16x144xf32>
    %69 = vector.extract_strided_slice %19 {offsets = [5, 0, 0], sizes = [1, 16, 1], strides = [1, 1, 1]} : vector<6x16x1xbf16> to vector<1x16x1xbf16>
    %70 = vector.shape_cast %69 : vector<1x16x1xbf16> to vector<16x1xbf16>
    %71 = vector.extract_strided_slice %12 {offsets = [5, 0, 0], sizes = [1, 1, 144], strides = [1, 1, 1]} : vector<6x1x144xbf16> to vector<1x1x144xbf16>
    %72 = vector.shape_cast %71 : vector<1x1x144xbf16> to vector<1x144xbf16>
    %73 = arith.extf %70 : vector<16x1xbf16> to vector<16x1xf32>
    %74 = arith.extf %72 : vector<1x144xbf16> to vector<1x144xf32>
    %75 = vector.broadcast %73 : vector<16x1xf32> to vector<16x144xf32>
    %76 = vector.broadcast %74 : vector<1x144xf32> to vector<16x144xf32>
    %77 = arith.mulf %75, %76 : vector<16x144xf32>
    %78 = arith.addf %68, %77 : vector<16x144xf32>
    %79 = arith.truncf %5 : vector<16x5xf32> to vector<16x5xbf16>
    %cst_24 = arith.constant dense<0.000000e+00> : vector<96x5xf32>
    %80 = tpu.matmul %3, %79, %cst_24 {dimension_numbers = #tpu.dot_dimension_numbers<[1], [0], [0], [1], [0, 0, 1, 1], [], []>} : vector<96x16xbf16>, vector<16x5xbf16>, vector<96x5xf32> -> vector<96x5xf32>
    %81 = arith.truncf %80 : vector<96x5xf32> to vector<96x5xbf16>
    %82 = vector.shape_cast %81 : vector<96x5xbf16> to vector<6x16x5xbf16>
    %83 = vector.extract_strided_slice %82 {offsets = [0, 0, 0], sizes = [1, 16, 5], strides = [1, 1, 1]} : vector<6x16x5xbf16> to vector<1x16x5xbf16>
    %84 = vector.shape_cast %83 : vector<1x16x5xbf16> to vector<16x5xbf16>
    %85 = vector.extract_strided_slice %13 {offsets = [0, 0, 0], sizes = [1, 5, 144], strides = [1, 1, 1]} : vector<6x5x144xbf16> to vector<1x5x144xbf16>
    %86 = vector.shape_cast %85 : vector<1x5x144xbf16> to vector<5x144xbf16>
    %cst_25 = arith.constant dense<0.000000e+00> : vector<16x144xf32>
    %87 = tpu.matmul %84, %86, %cst_25 {dimension_numbers = #tpu.dot_dimension_numbers<[1], [0], [0], [1], [0, 0, 1, 1], [], []>} : vector<16x5xbf16>, vector<5x144xbf16>, vector<16x144xf32> -> vector<16x144xf32>
    %88 = vector.extract_strided_slice %82 {offsets = [1, 0, 0], sizes = [1, 16, 5], strides = [1, 1, 1]} : vector<6x16x5xbf16> to vector<1x16x5xbf16>
    %89 = vector.shape_cast %88 : vector<1x16x5xbf16> to vector<16x5xbf16>
    %90 = vector.extract_strided_slice %13 {offsets = [1, 0, 0], sizes = [1, 5, 144], strides = [1, 1, 1]} : vector<6x5x144xbf16> to vector<1x5x144xbf16>
    %91 = vector.shape_cast %90 : vector<1x5x144xbf16> to vector<5x144xbf16>
    %cst_26 = arith.constant dense<0.000000e+00> : vector<16x144xf32>
    %92 = tpu.matmul %89, %91, %cst_26 {dimension_numbers = #tpu.dot_dimension_numbers<[1], [0], [0], [1], [0, 0, 1, 1], [], []>} : vector<16x5xbf16>, vector<5x144xbf16>, vector<16x144xf32> -> vector<16x144xf32>
    %93 = arith.addf %87, %92 : vector<16x144xf32>
    %94 = vector.extract_strided_slice %82 {offsets = [2, 0, 0], sizes = [1, 16, 5], strides = [1, 1, 1]} : vector<6x16x5xbf16> to vector<1x16x5xbf16>
    %95 = vector.shape_cast %94 : vector<1x16x5xbf16> to vector<16x5xbf16>
    %96 = vector.extract_strided_slice %13 {offsets = [2, 0, 0], sizes = [1, 5, 144], strides = [1, 1, 1]} : vector<6x5x144xbf16> to vector<1x5x144xbf16>
    %97 = vector.shape_cast %96 : vector<1x5x144xbf16> to vector<5x144xbf16>
    %cst_27 = arith.constant dense<0.000000e+00> : vector<16x144xf32>
    %98 = tpu.matmul %95, %97, %cst_27 {dimension_numbers = #tpu.dot_dimension_numbers<[1], [0], [0], [1], [0, 0, 1, 1], [], []>} : vector<16x5xbf16>, vector<5x144xbf16>, vector<16x144xf32> -> vector<16x144xf32>
    %99 = arith.addf %93, %98 : vector<16x144xf32>
    %100 = vector.extract_strided_slice %82 {offsets = [3, 0, 0], sizes = [1, 16, 5], strides = [1, 1, 1]} : vector<6x16x5xbf16> to vector<1x16x5xbf16>
    %101 = vector.shape_cast %100 : vector<1x16x5xbf16> to vector<16x5xbf16>
    %102 = vector.extract_strided_slice %13 {offsets = [3, 0, 0], sizes = [1, 5, 144], strides = [1, 1, 1]} : vector<6x5x144xbf16> to vector<1x5x144xbf16>
    %103 = vector.shape_cast %102 : vector<1x5x144xbf16> to vector<5x144xbf16>
    %cst_28 = arith.constant dense<0.000000e+00> : vector<16x144xf32>
    %104 = tpu.matmul %101, %103, %cst_28 {dimension_numbers = #tpu.dot_dimension_numbers<[1], [0], [0], [1], [0, 0, 1, 1], [], []>} : vector<16x5xbf16>, vector<5x144xbf16>, vector<16x144xf32> -> vector<16x144xf32>
    %105 = arith.addf %99, %104 : vector<16x144xf32>
    %106 = vector.extract_strided_slice %82 {offsets = [4, 0, 0], sizes = [1, 16, 5], strides = [1, 1, 1]} : vector<6x16x5xbf16> to vector<1x16x5xbf16>
    %107 = vector.shape_cast %106 : vector<1x16x5xbf16> to vector<16x5xbf16>
    %108 = vector.extract_strided_slice %13 {offsets = [4, 0, 0], sizes = [1, 5, 144], strides = [1, 1, 1]} : vector<6x5x144xbf16> to vector<1x5x144xbf16>
    %109 = vector.shape_cast %108 : vector<1x5x144xbf16> to vector<5x144xbf16>
    %cst_29 = arith.constant dense<0.000000e+00> : vector<16x144xf32>
    %110 = tpu.matmul %107, %109, %cst_29 {dimension_numbers = #tpu.dot_dimension_numbers<[1], [0], [0], [1], [0, 0, 1, 1], [], []>} : vector<16x5xbf16>, vector<5x144xbf16>, vector<16x144xf32> -> vector<16x144xf32>
    %111 = arith.addf %105, %110 : vector<16x144xf32>
    %112 = vector.extract_strided_slice %82 {offsets = [5, 0, 0], sizes = [1, 16, 5], strides = [1, 1, 1]} : vector<6x16x5xbf16> to vector<1x16x5xbf16>
    %113 = vector.shape_cast %112 : vector<1x16x5xbf16> to vector<16x5xbf16>
    %114 = vector.extract_strided_slice %13 {offsets = [5, 0, 0], sizes = [1, 5, 144], strides = [1, 1, 1]} : vector<6x5x144xbf16> to vector<1x5x144xbf16>
    %115 = vector.shape_cast %114 : vector<1x5x144xbf16> to vector<5x144xbf16>
    %cst_30 = arith.constant dense<0.000000e+00> : vector<16x144xf32>
    %116 = tpu.matmul %113, %115, %cst_30 {dimension_numbers = #tpu.dot_dimension_numbers<[1], [0], [0], [1], [0, 0, 1, 1], [], []>} : vector<16x5xbf16>, vector<5x144xbf16>, vector<16x144xf32> -> vector<16x144xf32>
    %117 = arith.addf %111, %116 : vector<16x144xf32>
    %118 = arith.addf %78, %117 : vector<16x144xf32>
    %119 = arith.truncf %15 : vector<16x48xf32> to vector<16x48xbf16>
    %cst_31 = arith.constant dense<0.000000e+00> : vector<96x48xf32>
    %120 = tpu.matmul %3, %119, %cst_31 {dimension_numbers = #tpu.dot_dimension_numbers<[1], [0], [0], [1], [0, 0, 1, 1], [], []>} : vector<96x16xbf16>, vector<16x48xbf16>, vector<96x48xf32> -> vector<96x48xf32>
    %121 = arith.truncf %120 : vector<96x48xf32> to vector<96x48xbf16>
    %122 = vector.shape_cast %121 : vector<96x48xbf16> to vector<6x16x48xbf16>
    %123 = vector.extract_strided_slice %122 {offsets = [0, 0, 0], sizes = [1, 16, 48], strides = [1, 1, 1]} : vector<6x16x48xbf16> to vector<1x16x48xbf16>
    %124 = vector.shape_cast %123 : vector<1x16x48xbf16> to vector<16x48xbf16>
    %125 = vector.extract_strided_slice %7 {offsets = [0, 0, 0], sizes = [1, 48, 96], strides = [1, 1, 1]} : vector<6x48x96xbf16> to vector<1x48x96xbf16>
    %126 = vector.shape_cast %125 : vector<1x48x96xbf16> to vector<48x96xbf16>
    %cst_32 = arith.constant dense<0.000000e+00> : vector<16x96xf32>
    %127 = tpu.matmul %124, %126, %cst_32 {dimension_numbers = #tpu.dot_dimension_numbers<[1], [0], [0], [1], [0, 0, 1, 1], [], []>} : vector<16x48xbf16>, vector<48x96xbf16>, vector<16x96xf32> -> vector<16x96xf32>
    %128 = vector.extract_strided_slice %122 {offsets = [1, 0, 0], sizes = [1, 16, 48], strides = [1, 1, 1]} : vector<6x16x48xbf16> to vector<1x16x48xbf16>
    %129 = vector.shape_cast %128 : vector<1x16x48xbf16> to vector<16x48xbf16>
    %130 = vector.extract_strided_slice %7 {offsets = [1, 0, 0], sizes = [1, 48, 96], strides = [1, 1, 1]} : vector<6x48x96xbf16> to vector<1x48x96xbf16>
    %131 = vector.shape_cast %130 : vector<1x48x96xbf16> to vector<48x96xbf16>
    %cst_33 = arith.constant dense<0.000000e+00> : vector<16x96xf32>
    %132 = tpu.matmul %129, %131, %cst_33 {dimension_numbers = #tpu.dot_dimension_numbers<[1], [0], [0], [1], [0, 0, 1, 1], [], []>} : vector<16x48xbf16>, vector<48x96xbf16>, vector<16x96xf32> -> vector<16x96xf32>
    %133 = arith.addf %127, %132 : vector<16x96xf32>
    %134 = vector.extract_strided_slice %122 {offsets = [2, 0, 0], sizes = [1, 16, 48], strides = [1, 1, 1]} : vector<6x16x48xbf16> to vector<1x16x48xbf16>
    %135 = vector.shape_cast %134 : vector<1x16x48xbf16> to vector<16x48xbf16>
    %136 = vector.extract_strided_slice %7 {offsets = [2, 0, 0], sizes = [1, 48, 96], strides = [1, 1, 1]} : vector<6x48x96xbf16> to vector<1x48x96xbf16>
    %137 = vector.shape_cast %136 : vector<1x48x96xbf16> to vector<48x96xbf16>
    %cst_34 = arith.constant dense<0.000000e+00> : vector<16x96xf32>
    %138 = tpu.matmul %135, %137, %cst_34 {dimension_numbers = #tpu.dot_dimension_numbers<[1], [0], [0], [1], [0, 0, 1, 1], [], []>} : vector<16x48xbf16>, vector<48x96xbf16>, vector<16x96xf32> -> vector<16x96xf32>
    %139 = arith.addf %133, %138 : vector<16x96xf32>
    %140 = vector.extract_strided_slice %122 {offsets = [3, 0, 0], sizes = [1, 16, 48], strides = [1, 1, 1]} : vector<6x16x48xbf16> to vector<1x16x48xbf16>
    %141 = vector.shape_cast %140 : vector<1x16x48xbf16> to vector<16x48xbf16>
    %142 = vector.extract_strided_slice %7 {offsets = [3, 0, 0], sizes = [1, 48, 96], strides = [1, 1, 1]} : vector<6x48x96xbf16> to vector<1x48x96xbf16>
    %143 = vector.shape_cast %142 : vector<1x48x96xbf16> to vector<48x96xbf16>
    %cst_35 = arith.constant dense<0.000000e+00> : vector<16x96xf32>
    %144 = tpu.matmul %141, %143, %cst_35 {dimension_numbers = #tpu.dot_dimension_numbers<[1], [0], [0], [1], [0, 0, 1, 1], [], []>} : vector<16x48xbf16>, vector<48x96xbf16>, vector<16x96xf32> -> vector<16x96xf32>
    %145 = arith.addf %139, %144 : vector<16x96xf32>
    %146 = vector.extract_strided_slice %122 {offsets = [4, 0, 0], sizes = [1, 16, 48], strides = [1, 1, 1]} : vector<6x16x48xbf16> to vector<1x16x48xbf16>
    %147 = vector.shape_cast %146 : vector<1x16x48xbf16> to vector<16x48xbf16>
    %148 = vector.extract_strided_slice %7 {offsets = [4, 0, 0], sizes = [1, 48, 96], strides = [1, 1, 1]} : vector<6x48x96xbf16> to vector<1x48x96xbf16>
    %149 = vector.shape_cast %148 : vector<1x48x96xbf16> to vector<48x96xbf16>
    %cst_36 = arith.constant dense<0.000000e+00> : vector<16x96xf32>
    %150 = tpu.matmul %147, %149, %cst_36 {dimension_numbers = #tpu.dot_dimension_numbers<[1], [0], [0], [1], [0, 0, 1, 1], [], []>} : vector<16x48xbf16>, vector<48x96xbf16>, vector<16x96xf32> -> vector<16x96xf32>
    %151 = arith.addf %145, %150 : vector<16x96xf32>
    %152 = vector.extract_strided_slice %122 {offsets = [5, 0, 0], sizes = [1, 16, 48], strides = [1, 1, 1]} : vector<6x16x48xbf16> to vector<1x16x48xbf16>
    %153 = vector.shape_cast %152 : vector<1x16x48xbf16> to vector<16x48xbf16>
    %154 = vector.extract_strided_slice %7 {offsets = [5, 0, 0], sizes = [1, 48, 96], strides = [1, 1, 1]} : vector<6x48x96xbf16> to vector<1x48x96xbf16>
    %155 = vector.shape_cast %154 : vector<1x48x96xbf16> to vector<48x96xbf16>
    %cst_37 = arith.constant dense<0.000000e+00> : vector<16x96xf32>
    %156 = tpu.matmul %153, %155, %cst_37 {dimension_numbers = #tpu.dot_dimension_numbers<[1], [0], [0], [1], [0, 0, 1, 1], [], []>} : vector<16x48xbf16>, vector<48x96xbf16>, vector<16x96xf32> -> vector<16x96xf32>
    %157 = arith.addf %151, %156 : vector<16x96xf32>
    %158 = vector.extract_strided_slice %118 {offsets = [0, 0], sizes = [16, 96], strides = [1, 1]} : vector<16x144xf32> to vector<16x96xf32>
    %159 = arith.addf %158, %157 : vector<16x96xf32>
    %160 = vector.broadcast %9 : vector<1x96xf32> to vector<16x96xf32>
    %161 = arith.addf %159, %160 : vector<16x96xf32>
    %162 = arith.negf %161 : vector<16x96xf32>
    %163 = math.exp %162 : vector<16x96xf32>
    %cst_38 = arith.constant 1.000000e+00 : f32
    %164 = vector.broadcast %cst_38 : f32 to vector<16x96xf32>
    %165 = arith.addf %164, %163 : vector<16x96xf32>
    %166 = arith.divf %164, %165 : vector<16x96xf32>
    %167 = vector.extract_strided_slice %166 {offsets = [0, 0], sizes = [16, 48], strides = [1, 1]} : vector<16x96xf32> to vector<16x48xf32>
    %168 = vector.extract_strided_slice %166 {offsets = [0, 48], sizes = [16, 48], strides = [1, 1]} : vector<16x96xf32> to vector<16x48xf32>
    %169 = arith.mulf %167, %15 : vector<16x48xf32>
    %170 = arith.truncf %169 : vector<16x48xf32> to vector<16x48xbf16>
    %cst_39 = arith.constant dense<0.000000e+00> : vector<96x48xf32>
    %171 = tpu.matmul %3, %170, %cst_39 {dimension_numbers = #tpu.dot_dimension_numbers<[1], [0], [0], [1], [0, 0, 1, 1], [], []>} : vector<96x16xbf16>, vector<16x48xbf16>, vector<96x48xf32> -> vector<96x48xf32>
    %172 = arith.truncf %171 : vector<96x48xf32> to vector<96x48xbf16>
    %173 = vector.shape_cast %172 : vector<96x48xbf16> to vector<6x16x48xbf16>
    %174 = vector.extract_strided_slice %173 {offsets = [0, 0, 0], sizes = [1, 16, 48], strides = [1, 1, 1]} : vector<6x16x48xbf16> to vector<1x16x48xbf16>
    %175 = vector.shape_cast %174 : vector<1x16x48xbf16> to vector<16x48xbf16>
    %176 = vector.extract_strided_slice %8 {offsets = [0, 0, 0], sizes = [1, 48, 48], strides = [1, 1, 1]} : vector<6x48x48xbf16> to vector<1x48x48xbf16>
    %177 = vector.shape_cast %176 : vector<1x48x48xbf16> to vector<48x48xbf16>
    %cst_40 = arith.constant dense<0.000000e+00> : vector<16x48xf32>
    %178 = tpu.matmul %175, %177, %cst_40 {dimension_numbers = #tpu.dot_dimension_numbers<[1], [0], [0], [1], [0, 0, 1, 1], [], []>} : vector<16x48xbf16>, vector<48x48xbf16>, vector<16x48xf32> -> vector<16x48xf32>
    %179 = vector.extract_strided_slice %173 {offsets = [1, 0, 0], sizes = [1, 16, 48], strides = [1, 1, 1]} : vector<6x16x48xbf16> to vector<1x16x48xbf16>
    %180 = vector.shape_cast %179 : vector<1x16x48xbf16> to vector<16x48xbf16>
    %181 = vector.extract_strided_slice %8 {offsets = [1, 0, 0], sizes = [1, 48, 48], strides = [1, 1, 1]} : vector<6x48x48xbf16> to vector<1x48x48xbf16>
    %182 = vector.shape_cast %181 : vector<1x48x48xbf16> to vector<48x48xbf16>
    %cst_41 = arith.constant dense<0.000000e+00> : vector<16x48xf32>
    %183 = tpu.matmul %180, %182, %cst_41 {dimension_numbers = #tpu.dot_dimension_numbers<[1], [0], [0], [1], [0, 0, 1, 1], [], []>} : vector<16x48xbf16>, vector<48x48xbf16>, vector<16x48xf32> -> vector<16x48xf32>
    %184 = arith.addf %178, %183 : vector<16x48xf32>
    %185 = vector.extract_strided_slice %173 {offsets = [2, 0, 0], sizes = [1, 16, 48], strides = [1, 1, 1]} : vector<6x16x48xbf16> to vector<1x16x48xbf16>
    %186 = vector.shape_cast %185 : vector<1x16x48xbf16> to vector<16x48xbf16>
    %187 = vector.extract_strided_slice %8 {offsets = [2, 0, 0], sizes = [1, 48, 48], strides = [1, 1, 1]} : vector<6x48x48xbf16> to vector<1x48x48xbf16>
    %188 = vector.shape_cast %187 : vector<1x48x48xbf16> to vector<48x48xbf16>
    %cst_42 = arith.constant dense<0.000000e+00> : vector<16x48xf32>
    %189 = tpu.matmul %186, %188, %cst_42 {dimension_numbers = #tpu.dot_dimension_numbers<[1], [0], [0], [1], [0, 0, 1, 1], [], []>} : vector<16x48xbf16>, vector<48x48xbf16>, vector<16x48xf32> -> vector<16x48xf32>
    %190 = arith.addf %184, %189 : vector<16x48xf32>
    %191 = vector.extract_strided_slice %173 {offsets = [3, 0, 0], sizes = [1, 16, 48], strides = [1, 1, 1]} : vector<6x16x48xbf16> to vector<1x16x48xbf16>
    %192 = vector.shape_cast %191 : vector<1x16x48xbf16> to vector<16x48xbf16>
    %193 = vector.extract_strided_slice %8 {offsets = [3, 0, 0], sizes = [1, 48, 48], strides = [1, 1, 1]} : vector<6x48x48xbf16> to vector<1x48x48xbf16>
    %194 = vector.shape_cast %193 : vector<1x48x48xbf16> to vector<48x48xbf16>
    %cst_43 = arith.constant dense<0.000000e+00> : vector<16x48xf32>
    %195 = tpu.matmul %192, %194, %cst_43 {dimension_numbers = #tpu.dot_dimension_numbers<[1], [0], [0], [1], [0, 0, 1, 1], [], []>} : vector<16x48xbf16>, vector<48x48xbf16>, vector<16x48xf32> -> vector<16x48xf32>
    %196 = arith.addf %190, %195 : vector<16x48xf32>
    %197 = vector.extract_strided_slice %173 {offsets = [4, 0, 0], sizes = [1, 16, 48], strides = [1, 1, 1]} : vector<6x16x48xbf16> to vector<1x16x48xbf16>
    %198 = vector.shape_cast %197 : vector<1x16x48xbf16> to vector<16x48xbf16>
    %199 = vector.extract_strided_slice %8 {offsets = [4, 0, 0], sizes = [1, 48, 48], strides = [1, 1, 1]} : vector<6x48x48xbf16> to vector<1x48x48xbf16>
    %200 = vector.shape_cast %199 : vector<1x48x48xbf16> to vector<48x48xbf16>
    %cst_44 = arith.constant dense<0.000000e+00> : vector<16x48xf32>
    %201 = tpu.matmul %198, %200, %cst_44 {dimension_numbers = #tpu.dot_dimension_numbers<[1], [0], [0], [1], [0, 0, 1, 1], [], []>} : vector<16x48xbf16>, vector<48x48xbf16>, vector<16x48xf32> -> vector<16x48xf32>
    %202 = arith.addf %196, %201 : vector<16x48xf32>
    %203 = vector.extract_strided_slice %173 {offsets = [5, 0, 0], sizes = [1, 16, 48], strides = [1, 1, 1]} : vector<6x16x48xbf16> to vector<1x16x48xbf16>
    %204 = vector.shape_cast %203 : vector<1x16x48xbf16> to vector<16x48xbf16>
    %205 = vector.extract_strided_slice %8 {offsets = [5, 0, 0], sizes = [1, 48, 48], strides = [1, 1, 1]} : vector<6x48x48xbf16> to vector<1x48x48xbf16>
    %206 = vector.shape_cast %205 : vector<1x48x48xbf16> to vector<48x48xbf16>
    %cst_45 = arith.constant dense<0.000000e+00> : vector<16x48xf32>
    %207 = tpu.matmul %204, %206, %cst_45 {dimension_numbers = #tpu.dot_dimension_numbers<[1], [0], [0], [1], [0, 0, 1, 1], [], []>} : vector<16x48xbf16>, vector<48x48xbf16>, vector<16x48xf32> -> vector<16x48xf32>
    %208 = arith.addf %202, %207 : vector<16x48xf32>
    %209 = vector.extract_strided_slice %118 {offsets = [0, 96], sizes = [16, 48], strides = [1, 1]} : vector<16x144xf32> to vector<16x48xf32>
    %210 = arith.addf %209, %208 : vector<16x48xf32>
    %211 = vector.broadcast %10 : vector<1x48xf32> to vector<16x48xf32>
    %212 = arith.addf %210, %211 : vector<16x48xf32>
    %213 = math.tanh %212 : vector<16x48xf32>
    %214 = arith.mulf %168, %15 : vector<16x48xf32>
    %cst_46 = arith.constant 1.000000e+00 : f32
    %215 = vector.broadcast %cst_46 : f32 to vector<16x48xf32>
    %216 = arith.subf %215, %168 : vector<16x48xf32>
    %217 = arith.mulf %216, %213 : vector<16x48xf32>
    %218 = arith.addf %214, %217 : vector<16x48xf32>
    %c0_47 = arith.constant 0 : index
    %c0_48 = arith.constant 0 : index
    %c0_49 = arith.constant 0 : index
    %219 = vector.load %arg13[%c0_47, %c0_48, %c0_49] : memref<1x16x48xf32, #tpu.memory_space<vmem>>, vector<1x16x48xf32>
    %220 = vector.shape_cast %219 : vector<1x16x48xf32> to vector<16x48xf32>
    %221 = vector.shape_cast %218 : vector<16x48xf32> to vector<1x16x48xf32>
    tpu.vector_store %arg13[%c0_47, %c0_48, %c0_49], %221 {strides = array<i32>} : memref<1x16x48xf32, #tpu.memory_space<vmem>>, vector<1x16x48xf32>,
    %c0_50 = arith.constant 0 : index
    %c0_51 = arith.constant 0 : index
    %222 = vector.load %arg10[%c0_50, %c0_51] : memref<48x1xf32, #tpu.memory_space<vmem>>, vector<48x1xf32>
    %cst_52 = arith.constant dense<0.000000e+00> : vector<16x1xf32>
    %223 = tpu.matmul %218, %222, %cst_52 {dimension_numbers = #tpu.dot_dimension_numbers<[1], [0], [0], [1], [0, 0, 1, 1], [], []>} : vector<16x48xf32>, vector<48x1xf32>, vector<16x1xf32> -> vector<16x1xf32>
    %c0_53 = arith.constant 0 : index
    %c0_54 = arith.constant 0 : index
    %224 = vector.load %arg11[%c0_53, %c0_54] : memref<1x1xf32, #tpu.memory_space<vmem>>, vector<1x1xf32>
    %225 = vector.broadcast %224 : vector<1x1xf32> to vector<16x1xf32>
    %226 = arith.addf %223, %225 : vector<16x1xf32>
    %c0_55 = arith.constant 0 : index
    %c0_56 = arith.constant 0 : index
    %227 = vector.load %arg14[%c0_55, %c0_56] : memref<16x1xf32, #tpu.memory_space<vmem>>, vector<16x1xf32>
    tpu.vector_store %arg14[%c0_55, %c0_56], %226 {strides = array<i32>} : memref<16x1xf32, #tpu.memory_space<vmem>>, vector<16x1xf32>,
    %c0_57 = arith.constant 0 : index
    %c0_58 = arith.constant 0 : index
    %c0_59 = arith.constant 0 : index
    %c0_60 = arith.constant 0 : index
    %228 = vector.load %arg12[%c0_57, %c0_58, %c0_59, %c0_60] : memref<1x1x16x1xf32, #tpu.memory_space<vmem>>, vector<1x1x16x1xf32>
    %229 = vector.shape_cast %228 : vector<1x1x16x1xf32> to vector<16x1xf32>
    %230 = vector.shape_cast %226 : vector<16x1xf32> to vector<1x1x16x1xf32>
    tpu.vector_store %arg12[%c0_57, %c0_58, %c0_59, %c0_60], %230 {strides = array<i32>} : memref<1x1x16x1xf32, #tpu.memory_space<vmem>>, vector<1x1x16x1xf32>,
    return
  }
  func.func @transform_0(%arg0: i32, %arg1: i32) -> (i32, i32, i32, i32) {
    %c0_i32 = arith.constant 0 : i32
    %c0_i32_0 = arith.constant 0 : i32
    %c0_i32_1 = arith.constant 0 : i32
    return %arg1, %arg0, %c0_i32, %c0_i32_0 : i32, i32, i32, i32
  }
  func.func @transform_1(%arg0: i32, %arg1: i32) -> (i32, i32, i32) {
    %c0_i32 = arith.constant 0 : i32
    %c0_i32_0 = arith.constant 0 : i32
    %c0_i32_1 = arith.constant 0 : i32
    return %arg0, %c0_i32, %c0_i32_0 : i32, i32, i32
  }
  func.func @transform_2(%arg0: i32, %arg1: i32) -> (i32, i32) {
    %c0_i32 = arith.constant 0 : i32
    %c0_i32_0 = arith.constant 0 : i32
    %c0_i32_1 = arith.constant 0 : i32
    return %c0_i32, %c0_i32_0 : i32, i32
  }
  func.func @transform_3(%arg0: i32, %arg1: i32) -> (i32, i32, i32) {
    %c0_i32 = arith.constant 0 : i32
    %c0_i32_0 = arith.constant 0 : i32
    %c0_i32_1 = arith.constant 0 : i32
    %c0_i32_2 = arith.constant 0 : i32
    return %c0_i32, %c0_i32_0, %c0_i32_1 : i32, i32, i32
  }
  func.func @transform_4(%arg0: i32, %arg1: i32) -> (i32, i32, i32) {
    %c0_i32 = arith.constant 0 : i32
    %c0_i32_0 = arith.constant 0 : i32
    %c0_i32_1 = arith.constant 0 : i32
    %c0_i32_2 = arith.constant 0 : i32
    return %c0_i32, %c0_i32_0, %c0_i32_1 : i32, i32, i32
  }
  func.func @transform_5(%arg0: i32, %arg1: i32) -> (i32, i32, i32) {
    %c0_i32 = arith.constant 0 : i32
    %c0_i32_0 = arith.constant 0 : i32
    %c0_i32_1 = arith.constant 0 : i32
    %c0_i32_2 = arith.constant 0 : i32
    return %c0_i32, %c0_i32_0, %c0_i32_1 : i32, i32, i32
  }
  func.func @transform_6(%arg0: i32, %arg1: i32) -> (i32, i32) {
    %c0_i32 = arith.constant 0 : i32
    %c0_i32_0 = arith.constant 0 : i32
    %c0_i32_1 = arith.constant 0 : i32
    return %c0_i32, %c0_i32_0 : i32, i32
  }
  func.func @transform_7(%arg0: i32, %arg1: i32) -> (i32, i32) {
    %c0_i32 = arith.constant 0 : i32
    %c0_i32_0 = arith.constant 0 : i32
    %c0_i32_1 = arith.constant 0 : i32
    return %c0_i32, %c0_i32_0 : i32, i32
  }
  func.func @transform_8(%arg0: i32, %arg1: i32) -> (i32, i32) {
    %c0_i32 = arith.constant 0 : i32
    %c0_i32_0 = arith.constant 0 : i32
    %c0_i32_1 = arith.constant 0 : i32
    return %c0_i32, %c0_i32_0 : i32, i32
  }
  func.func @transform_9(%arg0: i32, %arg1: i32) -> (i32, i32) {
    %c0_i32 = arith.constant 0 : i32
    %c0_i32_0 = arith.constant 0 : i32
    %c0_i32_1 = arith.constant 0 : i32
    return %c0_i32, %c0_i32_0 : i32, i32
  }
  func.func @transform_10(%arg0: i32, %arg1: i32) -> (i32, i32, i32, i32) {
    %c0_i32 = arith.constant 0 : i32
    %c0_i32_0 = arith.constant 0 : i32
    %c0_i32_1 = arith.constant 0 : i32
    return %arg1, %arg0, %c0_i32, %c0_i32_0 : i32, i32, i32, i32
  }
}

</mosaic_0001>

<llo_original>
// kernel: megacrn_forward.3
$region0: #{megacrn_forward.3}
  #allocation0 [shape = 'u32[]', space=smem, size = 0x4, offset = 0x4, fixed_abs, tag = 'smem constant byte address 0x4 - core index']
  #allocation1 [shape = 'u32[144,128]{1,0:T(1,128)}', space=vmem, size = 0x12000, scoped, tag = 'internal scratch']
  %s0 = inlined_call_operand.hbm [shape: f32[16,8], index: 0, kind: input, shape index: {}]
  %s1 = inlined_call_operand.hbm [shape: f32[16,8], index: 1, kind: input, shape index: {}]
  %s2 = inlined_call_operand.hbm [shape: f32[8,16], index: 2, kind: input, shape index: {}]
  %s3 = inlined_call_operand.hbm [shape: f32[6,16,16], index: 3, kind: output, shape index: {}]
  %s4 = sld [smem:[#allocation0]]
  $region34: #{megacrn_forward.3} parent=0
    _
  %s6 = ssub.s32 1, %s4
  %s7 = scalar_select 0, %s6, %s4
  $region1: #{megacrn_forward.3} parent=0
    #allocation2 [shape = 'u8[8192]{0}', space=vmem, size = 0x2000, scoped, tag = 'input window, operand 0, single buffered']
    #allocation3 [shape = 's32[1]{0}', space=sflag, size = 0x4, scoped, tag = 'scoped memory for megacrn_forward.3']
    #allocation4 [shape = 's32[1]{0}', space=sflag, size = 0x4, scoped, tag = 'scoped memory for megacrn_forward.3']
    #allocation5 [shape = 'u8[8192]{0}', space=vmem, size = 0x2000, scoped, tag = 'input window, operand 1, single buffered']
    #allocation6 [shape = 's32[1]{0}', space=sflag, size = 0x4, scoped, tag = 'scoped memory for megacrn_forward.3']
    #allocation7 [shape = 'u8[4096]{0}', space=vmem, size = 0x1000, scoped, tag = 'input window, operand 2, single buffered']
    #allocation8 [shape = 'u8[49152]{0}', space=vmem, size = 0xc000, scoped, tag = 'output window, operand 0, single buffered']
    %8 = vsyncpa [#allocation3], 0
    %9 = vsyncpa [#allocation6], 0
    %10 = vsyncpa [#allocation4], 0
    // Predicated region
    $region2: #{megacrn_forward.3} parent=1 // pred_check
      _
    $region3: #{megacrn_forward.3} parent=1 // pred_check_branch
      %12 = sbr.rel (0) target = $region5
    $region4: #{megacrn_forward.3} parent=1 // pred_region
      %s14 = ssub.s32 256, 256
      %15 = vsyncadd [#allocation3], %s14
      %s16 = sshll.u32 [#allocation2], 4
      %s17 = int_to_ptr.vmem [resolvable:$true] %s16
      %22 = dma.hbm_to_vmem [thread:$0]  %s0, 256, %s17, [#allocation3], 128, 128, 8
    $region5: #{megacrn_forward.3} parent=1 // pred_fallthru
      _
    // Predicated region
    $region6: #{megacrn_forward.3} parent=1 // pred_check
      _
    $region7: #{megacrn_forward.3} parent=1 // pred_check_branch
      %24 = sbr.rel (0) target = $region9
    $region8: #{megacrn_forward.3} parent=1 // pred_region
      %s26 = ssub.s32 256, 256
      %27 = vsyncadd [#allocation6], %s26
      %s28 = sshll.u32 [#allocation5], 4
      %s29 = int_to_ptr.vmem [resolvable:$true] %s28
      %34 = dma.hbm_to_vmem [thread:$0]  %s1, 256, %s29, [#allocation6], 128, 128, 8
    $region9: #{megacrn_forward.3} parent=1 // pred_fallthru
      _
    // Predicated region
    $region10: #{megacrn_forward.3} parent=1 // pred_check
      _
    $region11: #{megacrn_forward.3} parent=1 // pred_check_branch
      %36 = sbr.rel (0) target = $region13
    $region12: #{megacrn_forward.3} parent=1 // pred_region
      %s38 = ssub.s32 128, 128
      %39 = vsyncadd [#allocation6], %s38
      %s41 = sshll.u32 [#allocation7], 4
      %s42 = int_to_ptr.vmem [resolvable:$true] %s41
      %44 = dma.hbm_to_vmem [thread:$0]  %s2, 128, %s42, [#allocation6]
    $region13: #{megacrn_forward.3} parent=1 // pred_fallthru
      _
    // Predicated region
    $region14: #{megacrn_forward.3} parent=1 // pred_check
      _
    $region15: #{megacrn_forward.3} parent=1 // pred_check_branch
      %46 = sbr.rel (0) target = $region17
    $region16: #{megacrn_forward.3} parent=1 // pred_region
      %47 = dma.done [#allocation3], 256
    $region17: #{megacrn_forward.3} parent=1 // pred_fallthru
      _
    // Predicated region
    $region18: #{megacrn_forward.3} parent=1 // pred_check
      _
    $region19: #{megacrn_forward.3} parent=1 // pred_check_branch
      %49 = sbr.rel (0) target = $region21
    $region20: #{megacrn_forward.3} parent=1 // pred_region
      %50 = dma.done [#allocation6], 256
    $region21: #{megacrn_forward.3} parent=1 // pred_fallthru
      _
    // Predicated region
    $region22: #{megacrn_forward.3} parent=1 // pred_check
      _
    $region23: #{megacrn_forward.3} parent=1 // pred_check_branch
      %52 = sbr.rel (0) target = $region25
    $region24: #{megacrn_forward.3} parent=1 // pred_region
      %53 = dma.done [#allocation6], 128
    $region25: #{megacrn_forward.3} parent=1 // pred_fallthru
      _
    %v54 = vld [vmem:[#allocation7] sm:$0xff]
    %v55 = vld [vmem:[#allocation2] sm:$0xff]
    %v56 = vld [vmem:[#allocation2 + $0x8] sm:$0xff]
    %vm57 = vcmask 64512
    %v59 = vsel %vm57, %v55, 0
    %v62 = vsel %vm57, %v56, 0
    %64 = vmatprep.subr.mxu0 0.0
    %65 = vmatpush1.msra.mxu0 %v54
    %66 = vmatprep.subr.mxu0 0.0
    %67 = vmatpush1.msra.mxu0 0.0
    %68 = vmatprep.subr.mxu0 0.0
    %69 = vmatpush1.msra.mxu0 0.0
    %70 = vmatprep.subr.mxu0 0.0
    %71 = vmatpush1.msra.mxu0 0.0
    %72 = vmatprep.subr.mxu0 0.0
    %73 = vmatpush1.msra.mxu0 0.0
    %74 = vmatprep.subr.mxu0 0.0
    %75 = vmatpush1.msra.mxu0 0.0
    %76 = vmatprep.subr.mxu0 0.0
    %77 = vmatpush1.msra.mxu0 0.0
    %78 = vmatprep.subr.mxu0 0.0
    %79 = vmatpush1.msra.mxu0 0.0
    %80 = vmatprep.subr.mxu0 0.0
    %81 = vmatpush1.msra.mxu0 0.0
    %82 = vmatprep.subr.mxu0 0.0
    %83 = vmatpush1.msra.mxu0 0.0
    %84 = vmatprep.subr.mxu0 0.0
    %85 = vmatpush1.msra.mxu0 0.0
    %86 = vmatprep.subr.mxu0 0.0
    %87 = vmatpush1.msra.mxu0 0.0
    %88 = vmatprep.subr.mxu0 0.0
    %89 = vmatpush1.msra.mxu0 0.0
    %90 = vmatprep.subr.mxu0 0.0
    %91 = vmatpush1.msra.mxu0 0.0
    %92 = vmatprep.subr.mxu0 0.0
    %93 = vmatpush1.msra.mxu0 0.0
    %94 = vmatprep.subr.mxu0 0.0
    %95 = vmatpush1.msra.mxu0 0.0
    %96 = vmatprep.subr.mxu0 0.0
    %97 = vmatpush1.msra.mxu0 0.0
    %98 = vmatprep.subr.mxu0 0.0
    %99 = vmatpush1.msra.mxu0 0.0
    %100 = vmatprep.subr.mxu0 0.0
    %101 = vmatpush1.msra.mxu0 0.0
    %102 = vmatprep.subr.mxu0 0.0
    %103 = vmatpush1.msra.mxu0 0.0
    %104 = vmatprep.subr.mxu0 0.0
    %105 = vmatpush1.msra.mxu0 0.0
    %106 = vmatprep.subr.mxu0 0.0
    %107 = vmatpush1.msra.mxu0 0.0
    %108 = vmatprep.subr.mxu0 0.0
    %109 = vmatpush1.msra.mxu0 0.0
    %110 = vmatprep.subr.mxu0 0.0
    %111 = vmatpush1.msra.mxu0 0.0
    %112 = vmatprep.subr.mxu0 0.0
    %113 = vmatpush1.msra.mxu0 0.0
    %114 = vmatprep.subr.mxu0 0.0
    %115 = vmatpush1.msra.mxu0 0.0
    %116 = vmatprep.subr.mxu0 0.0
    %117 = vmatpush1.msra.mxu0 0.0
    %118 = vmatprep.subr.mxu0 0.0
    %119 = vmatpush1.msra.mxu0 0.0
    %120 = vmatprep.subr.mxu0 0.0
    %121 = vmatpush1.msra.mxu0 0.0
    %122 = vmatprep.subr.mxu0 0.0
    %123 = vmatpush1.msra.mxu0 0.0
    %124 = vmatprep.subr.mxu0 0.0
    %125 = vmatpush1.msra.mxu0 0.0
    %126 = vmatprep.subr.mxu0 0.0
    %127 = vmatpush1.msra.mxu0 0.0
    %128 = vmatprep.mubr.f32.mxu0 0.0
    %129 = vmatmul.mubr.f32.gmra.mrb[0].mxu0 %v59
    %v130 = vpop.f32.mrb[0].mxu0
    %v131 = vadd.f32 0.0, %v130
    %v132 = vpop.f32.mrb[0].mxu0
    %133 = vmatprep.mubr.f32.mxu0 0.0
    %134 = vmatmul.mubr.f32.gmra.mrb[0].mxu0 %v62
    %v135 = vpop.f32.mrb[0].mxu0
    %v136 = vadd.f32 0.0, %v135
    %v137 = vpop.f32.mrb[0].mxu0
    %138 = vdwg.mxu0
    %v139 = vld [vmem:[#allocation5] sm:$0xff]
    %v140 = vld [vmem:[#allocation5 + $0x8] sm:$0xff]
    %v142 = vsel %vm57, %v139, 0
    %v145 = vsel %vm57, %v140, 0
    %147 = vmatprep.subr.mxu0 0.0
    %148 = vmatpush1.msra.mxu0 %v54
    %149 = vmatprep.subr.mxu0 0.0
    %150 = vmatpush1.msra.mxu0 0.0
    %151 = vmatprep.subr.mxu0 0.0
    %152 = vmatpush1.msra.mxu0 0.0
    %153 = vmatprep.subr.mxu0 0.0
    %154 = vmatpush1.msra.mxu0 0.0
    %155 = vmatprep.subr.mxu0 0.0
    %156 = vmatpush1.msra.mxu0 0.0
    %157 = vmatprep.subr.mxu0 0.0
    %158 = vmatpush1.msra.mxu0 0.0
    %159 = vmatprep.subr.mxu0 0.0
    %160 = vmatpush1.msra.mxu0 0.0
    %161 = vmatprep.subr.mxu0 0.0
    %162 = vmatpush1.msra.mxu0 0.0
    %163 = vmatprep.subr.mxu0 0.0
    %164 = vmatpush1.msra.mxu0 0.0
    %165 = vmatprep.subr.mxu0 0.0
    %166 = vmatpush1.msra.mxu0 0.0
    %167 = vmatprep.subr.mxu0 0.0
    %168 = vmatpush1.msra.mxu0 0.0
    %169 = vmatprep.subr.mxu0 0.0
    %170 = vmatpush1.msra.mxu0 0.0
    %171 = vmatprep.subr.mxu0 0.0
    %172 = vmatpush1.msra.mxu0 0.0
    %173 = vmatprep.subr.mxu0 0.0
    %174 = vmatpush1.msra.mxu0 0.0
    %175 = vmatprep.subr.mxu0 0.0
    %176 = vmatpush1.msra.mxu0 0.0
    %177 = vmatprep.subr.mxu0 0.0
    %178 = vmatpush1.msra.mxu0 0.0
    %179 = vmatprep.subr.mxu0 0.0
    %180 = vmatpush1.msra.mxu0 0.0
    %181 = vmatprep.subr.mxu0 0.0
    %182 = vmatpush1.msra.mxu0 0.0
    %183 = vmatprep.subr.mxu0 0.0
    %184 = vmatpush1.msra.mxu0 0.0
    %185 = vmatprep.subr.mxu0 0.0
    %186 = vmatpush1.msra.mxu0 0.0
    %187 = vmatprep.subr.mxu0 0.0
    %188 = vmatpush1.msra.mxu0 0.0
    %189 = vmatprep.subr.mxu0 0.0
    %190 = vmatpush1.msra.mxu0 0.0
    %191 = vmatprep.subr.mxu0 0.0
    %192 = vmatpush1.msra.mxu0 0.0
    %193 = vmatprep.subr.mxu0 0.0
    %194 = vmatpush1.msra.mxu0 0.0
    %195 = vmatprep.subr.mxu0 0.0
    %196 = vmatpush1.msra.mxu0 0.0
    %197 = vmatprep.subr.mxu0 0.0
    %198 = vmatpush1.msra.mxu0 0.0
    %199 = vmatprep.subr.mxu0 0.0
    %200 = vmatpush1.msra.mxu0 0.0
    %201 = vmatprep.subr.mxu0 0.0
    %202 = vmatpush1.msra.mxu0 0.0
    %203 = vmatprep.subr.mxu0 0.0
    %204 = vmatpush1.msra.mxu0 0.0
    %205 = vmatprep.subr.mxu0 0.0
    %206 = vmatpush1.msra.mxu0 0.0
    %207 = vmatprep.subr.mxu0 0.0
    %208 = vmatpush1.msra.mxu0 0.0
    %209 = vmatprep.subr.mxu0 0.0
    %210 = vmatpush1.msra.mxu0 0.0
    %211 = vmatprep.mubr.f32.mxu0 0.0
    %212 = vmatmul.mubr.f32.gmra.mrb[0].mxu0 %v142
    %v213 = vpop.f32.mrb[0].mxu0
    %v214 = vadd.f32 0.0, %v213
    %v215 = vpop.f32.mrb[0].mxu0
    %216 = vmatprep.mubr.f32.mxu0 0.0
    %217 = vmatmul.mubr.f32.gmra.mrb[0].mxu0 %v145
    %v218 = vpop.f32.mrb[0].mxu0
    %v219 = vadd.f32 0.0, %v218
    %v220 = vpop.f32.mrb[0].mxu0
    %221 = vdwg.mxu0
    %vm222 = vcmask 130048
    %v224 = vsel %vm222, %v131, 0
    %v227 = vsel %vm222, %v136, 0
    %v230 = vsel %vm222, %v214, 0
    %v233 = vsel %vm222, %v219, 0
    %235 = vmatprep.subr.mxu0 0.0
    %236 = vmatpush1.xpose.msra.mxu0 %v230
    %237 = vmatprep.subr.mxu0 0.0
    %238 = vmatpush1.xpose.msra.mxu0 %v233
    %239 = vmatprep.subr.mxu0 0.0
    %240 = vmatpush1.xpose.msra.mxu0 0.0
    %241 = vmatprep.subr.mxu0 0.0
    %242 = vmatpush1.xpose.msra.mxu0 0.0
    %243 = vmatprep.subr.mxu0 0.0
    %244 = vmatpush1.xpose.msra.mxu0 0.0
    %245 = vmatprep.subr.mxu0 0.0
    %246 = vmatpush1.xpose.msra.mxu0 0.0
    %247 = vmatprep.subr.mxu0 0.0
    %248 = vmatpush1.xpose.msra.mxu0 0.0
    %249 = vmatprep.subr.mxu0 0.0
    %250 = vmatpush1.xpose.msra.mxu0 0.0
    %251 = vmatprep.subr.mxu0 0.0
    %252 = vmatpush1.xpose.msra.mxu0 0.0
    %253 = vmatprep.subr.mxu0 0.0
    %254 = vmatpush1.xpose.msra.mxu0 0.0
    %255 = vmatprep.subr.mxu0 0.0
    %256 = vmatpush1.xpose.msra.mxu0 0.0
    %257 = vmatprep.subr.mxu0 0.0
    %258 = vmatpush1.xpose.msra.mxu0 0.0
    %259 = vmatprep.subr.mxu0 0.0
    %260 = vmatpush1.xpose.msra.mxu0 0.0
    %261 = vmatprep.subr.mxu0 0.0
    %262 = vmatpush1.xpose.msra.mxu0 0.0
    %263 = vmatprep.subr.mxu0 0.0
    %264 = vmatpush1.xpose.msra.mxu0 0.0
    %265 = vmatprep.subr.mxu0 0.0
    %266 = vmatpush1.xpose.msra.mxu0 0.0
    %267 = vmatprep.subr.mxu0 0.0
    %268 = vmatpush1.xpose.msra.mxu0 0.0
    %269 = vmatprep.subr.mxu0 0.0
    %270 = vmatpush1.xpose.msra.mxu0 0.0
    %271 = vmatprep.subr.mxu0 0.0
    %272 = vmatpush1.xpose.msra.mxu0 0.0
    %273 = vmatprep.subr.mxu0 0.0
    %274 = vmatpush1.xpose.msra.mxu0 0.0
    %275 = vmatprep.subr.mxu0 0.0
    %276 = vmatpush1.xpose.msra.mxu0 0.0
    %277 = vmatprep.subr.mxu0 0.0
    %278 = vmatpush1.xpose.msra.mxu0 0.0
    %279 = vmatprep.subr.mxu0 0.0
    %280 = vmatpush1.xpose.msra.mxu0 0.0
    %281 = vmatprep.subr.mxu0 0.0
    %282 = vmatpush1.xpose.msra.mxu0 0.0
    %283 = vmatprep.subr.mxu0 0.0
    %284 = vmatpush1.xpose.msra.mxu0 0.0
    %285 = vmatprep.subr.mxu0 0.0
    %286 = vmatpush1.xpose.msra.mxu0 0.0
    %287 = vmatprep.subr.mxu0 0.0
    %288 = vmatpush1.xpose.msra.mxu0 0.0
    %289 = vmatprep.subr.mxu0 0.0
    %290 = vmatpush1.xpose.msra.mxu0 0.0
    %291 = vmatprep.subr.mxu0 0.0
    %292 = vmatpush1.xpose.msra.mxu0 0.0
    %293 = vmatprep.subr.mxu0 0.0
    %294 = vmatpush1.xpose.msra.mxu0 0.0
    %295 = vmatprep.subr.mxu0 0.0
    %296 = vmatpush1.xpose.msra.mxu0 0.0
    %297 = vmatprep.subr.mxu0 0.0
    %298 = vmatpush1.xpose.msra.mxu0 0.0
    %299 = vmatprep.mubr.f32.mxu0 0.0
    %300 = vmatmul.mubr.f32.gmra.mrb[0].mxu0 %v224
    %v301 = vpop.f32.mrb[0].mxu0
    %v302 = vadd.f32 0.0, %v301
    %v303 = vpop.f32.mrb[0].mxu0
    %304 = vmatprep.mubr.f32.mxu0 0.0
    %305 = vmatmul.mubr.f32.gmra.mrb[0].mxu0 %v227
    %v306 = vpop.f32.mrb[0].mxu0
    %v307 = vadd.f32 0.0, %v306
    %v308 = vpop.f32.mrb[0].mxu0
    %309 = vdwg.mxu0
    %v310 = vmax.f32 %v302, 0.0
    %v311 = vmax.f32 %v307, 0.0
    %v312 = vsel %vm222, %v310, -inf
    %313 = vmax.xlane.f32.xlu0 %v312
    %v314 = vpop.xlane.xlu0 %313
    %v315 = vsel %vm222, %v311, -inf
    %316 = vmax.xlane.f32.xlu0 %v315
    %v317 = vpop.xlane.xlu0 %316
    %v318 = vsub.f32 %v310, %v314
    %v319 = vsub.f32 %v311, %v317
    %v320 = vmul.f32 %v318, 1.442695
    %v321 = vpow.pop %v320
    %v322 = vmul.f32 %v319, 1.442695
    %v323 = vpow.pop %v322
    %v324 = vsel %vm222, %v321, 0.0
    %325 = vadd.xlane.f32.xlu0 %v324
    %v326 = vpop.xlane.xlu0 %325
    %v327 = vsel %vm222, %v323, 0.0
    %328 = vadd.xlane.f32.xlu0 %v327
    %v329 = vpop.xlane.xlu0 %328
    %v330 = vrcp.pop %v326
    %v331 = vmul.f32 %v321, %v330
    %v332 = vrcp.pop %v329
    %v333 = vmul.f32 %v323, %v332
    %334 = vmatprep.subr.mxu0 0.0
    %335 = vmatpush1.xpose.msra.mxu0 %v224
    %336 = vmatprep.subr.mxu0 0.0
    %337 = vmatpush1.xpose.msra.mxu0 %v227
    %338 = vmatprep.subr.mxu0 0.0
    %339 = vmatpush1.xpose.msra.mxu0 0.0
    %340 = vmatprep.subr.mxu0 0.0
    %341 = vmatpush1.xpose.msra.mxu0 0.0
    %342 = vmatprep.subr.mxu0 0.0
    %343 = vmatpush1.xpose.msra.mxu0 0.0
    %344 = vmatprep.subr.mxu0 0.0
    %345 = vmatpush1.xpose.msra.mxu0 0.0
    %346 = vmatprep.subr.mxu0 0.0
    %347 = vmatpush1.xpose.msra.mxu0 0.0
    %348 = vmatprep.subr.mxu0 0.0
    %349 = vmatpush1.xpose.msra.mxu0 0.0
    %350 = vmatprep.subr.mxu0 0.0
    %351 = vmatpush1.xpose.msra.mxu0 0.0
    %352 = vmatprep.subr.mxu0 0.0
    %353 = vmatpush1.xpose.msra.mxu0 0.0
    %354 = vmatprep.subr.mxu0 0.0
    %355 = vmatpush1.xpose.msra.mxu0 0.0
    %356 = vmatprep.subr.mxu0 0.0
    %357 = vmatpush1.xpose.msra.mxu0 0.0
    %358 = vmatprep.subr.mxu0 0.0
    %359 = vmatpush1.xpose.msra.mxu0 0.0
    %360 = vmatprep.subr.mxu0 0.0
    %361 = vmatpush1.xpose.msra.mxu0 0.0
    %362 = vmatprep.subr.mxu0 0.0
    %363 = vmatpush1.xpose.msra.mxu0 0.0
    %364 = vmatprep.subr.mxu0 0.0
    %365 = vmatpush1.xpose.msra.mxu0 0.0
    %366 = vmatprep.subr.mxu0 0.0
    %367 = vmatpush1.xpose.msra.mxu0 0.0
    %368 = vmatprep.subr.mxu0 0.0
    %369 = vmatpush1.xpose.msra.mxu0 0.0
    %370 = vmatprep.subr.mxu0 0.0
    %371 = vmatpush1.xpose.msra.mxu0 0.0
    %372 = vmatprep.subr.mxu0 0.0
    %373 = vmatpush1.xpose.msra.mxu0 0.0
    %374 = vmatprep.subr.mxu0 0.0
    %375 = vmatpush1.xpose.msra.mxu0 0.0
    %376 = vmatprep.subr.mxu0 0.0
    %377 = vmatpush1.xpose.msra.mxu0 0.0
    %378 = vmatprep.subr.mxu0 0.0
    %379 = vmatpush1.xpose.msra.mxu0 0.0
    %380 = vmatprep.subr.mxu0 0.0
    %381 = vmatpush1.xpose.msra.mxu0 0.0
    %382 = vmatprep.subr.mxu0 0.0
    %383 = vmatpush1.xpose.msra.mxu0 0.0
    %384 = vmatprep.subr.mxu0 0.0
    %385 = vmatpush1.xpose.msra.mxu0 0.0
    %386 = vmatprep.subr.mxu0 0.0
    %387 = vmatpush1.xpose.msra.mxu0 0.0
    %388 = vmatprep.subr.mxu0 0.0
    %389 = vmatpush1.xpose.msra.mxu0 0.0
    %390 = vmatprep.subr.mxu0 0.0
    %391 = vmatpush1.xpose.msra.mxu0 0.0
    %392 = vmatprep.subr.mxu0 0.0
    %393 = vmatpush1.xpose.msra.mxu0 0.0
    %394 = vmatprep.subr.mxu0 0.0
    %395 = vmatpush1.xpose.msra.mxu0 0.0
    %396 = vmatprep.subr.mxu0 0.0
    %397 = vmatpush1.xpose.msra.mxu0 0.0
    %398 = vmatprep.mubr.f32.mxu0 0.0
    %399 = vmatmul.mubr.f32.gmra.mrb[0].mxu0 %v230
    %v400 = vpop.f32.mrb[0].mxu0
    %v401 = vadd.f32 0.0, %v400
    %v402 = vpop.f32.mrb[0].mxu0
    %403 = vmatprep.mubr.f32.mxu0 0.0
    %404 = vmatmul.mubr.f32.gmra.mrb[0].mxu0 %v233
    %v405 = vpop.f32.mrb[0].mxu0
    %v406 = vadd.f32 0.0, %v405
    %v407 = vpop.f32.mrb[0].mxu0
    %408 = vdwg.mxu0
    %v409 = vmax.f32 %v401, 0.0
    %v410 = vmax.f32 %v406, 0.0
    %v411 = vsel %vm222, %v409, -inf
    %412 = vmax.xlane.f32.xlu0 %v411
    %v413 = vpop.xlane.xlu0 %412
    %v414 = vsel %vm222, %v410, -inf
    %415 = vmax.xlane.f32.xlu0 %v414
    %v416 = vpop.xlane.xlu0 %415
    %v417 = vsub.f32 %v409, %v413
    %v418 = vsub.f32 %v410, %v416
    %v419 = vmul.f32 %v417, 1.442695
    %v420 = vpow.pop %v419
    %v421 = vmul.f32 %v418, 1.442695
    %v422 = vpow.pop %v421
    %v423 = vsel %vm222, %v420, 0.0
    %424 = vadd.xlane.f32.xlu0 %v423
    %v425 = vpop.xlane.xlu0 %424
    %v426 = vsel %vm222, %v422, 0.0
    %427 = vadd.xlane.f32.xlu0 %v426
    %v428 = vpop.xlane.xlu0 %427
    %v429 = vrcp.pop %v425
    %v430 = vmul.f32 %v420, %v429
    %v431 = vrcp.pop %v428
    %v432 = vmul.f32 %v422, %v431
    %v433 = vlaneseq
    %v434 = vshrl.u32 %v433, 7
    %v435 = vadd.s32 %v434, 8
    %v436 = vlaneseq
    %v437 = vand.u32 %v436, 127
    %vm438 = vcmp.eq.s32.totalorder %v434, %v437
    %vm439 = vcmp.eq.s32.totalorder %v435, %v437
    %v440 = vsel %vm438, 1.0, 0.0
    %v441 = vsel %vm439, 1.0, 0.0
    %442 = vst.msk [vmem:[#allocation8] sm:$0xff] %vm222, %v440
    %443 = vst.msk [vmem:[#allocation8 + $0x8] sm:$0xff] %vm222, %v441
    %s444 = scalar_lea.vmem [#allocation8], 16
    %445 = vst.msk [vmem:[%s444] sm:$0xff] %vm222, %v331
    %446 = vst.msk [vmem:[%s444 + $0x8] sm:$0xff] %vm222, %v333
    %v448 = vsel %vm222, %v331, 0
    %v451 = vsel %vm222, %v333, 0
    %453 = vmatprep.subr.mxu0 0.0
    %454 = vmatpush1.msra.mxu0 %v331
    %455 = vmatprep.subr.mxu0 0.0
    %456 = vmatpush1.msra.mxu0 %v333
    %457 = vmatprep.subr.mxu0 0.0
    %458 = vmatpush1.msra.mxu0 0.0
    %459 = vmatprep.subr.mxu0 0.0
    %460 = vmatpush1.msra.mxu0 0.0
    %461 = vmatprep.subr.mxu0 0.0
    %462 = vmatpush1.msra.mxu0 0.0
    %463 = vmatprep.subr.mxu0 0.0
    %464 = vmatpush1.msra.mxu0 0.0
    %465 = vmatprep.subr.mxu0 0.0
    %466 = vmatpush1.msra.mxu0 0.0
    %467 = vmatprep.subr.mxu0 0.0
    %468 = vmatpush1.msra.mxu0 0.0
    %469 = vmatprep.subr.mxu0 0.0
    %470 = vmatpush1.msra.mxu0 0.0
    %471 = vmatprep.subr.mxu0 0.0
    %472 = vmatpush1.msra.mxu0 0.0
    %473 = vmatprep.subr.mxu0 0.0
    %474 = vmatpush1.msra.mxu0 0.0
    %475 = vmatprep.subr.mxu0 0.0
    %476 = vmatpush1.msra.mxu0 0.0
    %477 = vmatprep.subr.mxu0 0.0
    %478 = vmatpush1.msra.mxu0 0.0
    %479 = vmatprep.subr.mxu0 0.0
    %480 = vmatpush1.msra.mxu0 0.0
    %481 = vmatprep.subr.mxu0 0.0
    %482 = vmatpush1.msra.mxu0 0.0
    %483 = vmatprep.subr.mxu0 0.0
    %484 = vmatpush1.msra.mxu0 0.0
    %485 = vmatprep.subr.mxu0 0.0
    %486 = vmatpush1.msra.mxu0 0.0
    %487 = vmatprep.subr.mxu0 0.0
    %488 = vmatpush1.msra.mxu0 0.0
    %489 = vmatprep.subr.mxu0 0.0
    %490 = vmatpush1.msra.mxu0 0.0
    %491 = vmatprep.subr.mxu0 0.0
    %492 = vmatpush1.msra.mxu0 0.0
    %493 = vmatprep.subr.mxu0 0.0
    %494 = vmatpush1.msra.mxu0 0.0
    %495 = vmatprep.subr.mxu0 0.0
    %496 = vmatpush1.msra.mxu0 0.0
    %497 = vmatprep.subr.mxu0 0.0
    %498 = vmatpush1.msra.mxu0 0.0
    %499 = vmatprep.subr.mxu0 0.0
    %500 = vmatpush1.msra.mxu0 0.0
    %501 = vmatprep.subr.mxu0 0.0
    %502 = vmatpush1.msra.mxu0 0.0
    %503 = vmatprep.subr.mxu0 0.0
    %504 = vmatpush1.msra.mxu0 0.0
    %505 = vmatprep.subr.mxu0 0.0
    %506 = vmatpush1.msra.mxu0 0.0
    %507 = vmatprep.subr.mxu0 0.0
    %508 = vmatpush1.msra.mxu0 0.0
    %509 = vmatprep.subr.mxu0 0.0
    %510 = vmatpush1.msra.mxu0 0.0
    %511 = vmatprep.subr.mxu0 0.0
    %512 = vmatpush1.msra.mxu0 0.0
    %513 = vmatprep.subr.mxu0 0.0
    %514 = vmatpush1.msra.mxu0 0.0
    %515 = vmatprep.subr.mxu0 0.0
    %516 = vmatpush1.msra.mxu0 0.0
    %517 = vmatprep.mubr.f32.mxu0 0.0
    %518 = vmatmul.mubr.f32.gmra.mrb[0].mxu0 %v448
    %v519 = vpop.f32.mrb[0].mxu0
    %v520 = vadd.f32 0.0, %v519
    %v521 = vpop.f32.mrb[0].mxu0
    %522 = vmatprep.mubr.f32.mxu0 0.0
    %523 = vmatmul.mubr.f32.gmra.mrb[0].mxu0 %v451
    %v524 = vpop.f32.mrb[0].mxu0
    %v525 = vadd.f32 0.0, %v524
    %v526 = vpop.f32.mrb[0].mxu0
    %527 = vdwg.mxu0
    %v528 = vmul.f32 %v520, 2.0
    %v529 = vmul.f32 %v525, 2.0
    %v530 = vsub.f32 %v528, %v440
    %v531 = vsub.f32 %v529, %v441
    %s532 = scalar_lea.vmem [#allocation8], 32
    %533 = vst.msk [vmem:[%s532] sm:$0xff] %vm222, %v530
    %534 = vst.msk [vmem:[%s532 + $0x8] sm:$0xff] %vm222, %v531
    %s535 = scalar_lea.vmem [#allocation8], 48
    %536 = vst.msk [vmem:[%s535] sm:$0xff] %vm222, %v440
    %537 = vst.msk [vmem:[%s535 + $0x8] sm:$0xff] %vm222, %v441
    %s538 = scalar_lea.vmem [#allocation8], 64
    %539 = vst.msk [vmem:[%s538] sm:$0xff] %vm222, %v430
    %540 = vst.msk [vmem:[%s538 + $0x8] sm:$0xff] %vm222, %v432
    %v542 = vsel %vm222, %v430, 0
    %v545 = vsel %vm222, %v432, 0
    %547 = vmatprep.subr.mxu0 0.0
    %548 = vmatpush1.msra.mxu0 %v430
    %549 = vmatprep.subr.mxu0 0.0
    %550 = vmatpush1.msra.mxu0 %v432
    %551 = vmatprep.subr.mxu0 0.0
    %552 = vmatpush1.msra.mxu0 0.0
    %553 = vmatprep.subr.mxu0 0.0
    %554 = vmatpush1.msra.mxu0 0.0
    %555 = vmatprep.subr.mxu0 0.0
    %556 = vmatpush1.msra.mxu0 0.0
    %557 = vmatprep.subr.mxu0 0.0
    %558 = vmatpush1.msra.mxu0 0.0
    %559 = vmatprep.subr.mxu0 0.0
    %560 = vmatpush1.msra.mxu0 0.0
    %561 = vmatprep.subr.mxu0 0.0
    %562 = vmatpush1.msra.mxu0 0.0
    %563 = vmatprep.subr.mxu0 0.0
    %564 = vmatpush1.msra.mxu0 0.0
    %565 = vmatprep.subr.mxu0 0.0
    %566 = vmatpush1.msra.mxu0 0.0
    %567 = vmatprep.subr.mxu0 0.0
    %568 = vmatpush1.msra.mxu0 0.0
    %569 = vmatprep.subr.mxu0 0.0
    %570 = vmatpush1.msra.mxu0 0.0
    %571 = vmatprep.subr.mxu0 0.0
    %572 = vmatpush1.msra.mxu0 0.0
    %573 = vmatprep.subr.mxu0 0.0
    %574 = vmatpush1.msra.mxu0 0.0
    %575 = vmatprep.subr.mxu0 0.0
    %576 = vmatpush1.msra.mxu0 0.0
    %577 = vmatprep.subr.mxu0 0.0
    %578 = vmatpush1.msra.mxu0 0.0
    %579 = vmatprep.subr.mxu0 0.0
    %580 = vmatpush1.msra.mxu0 0.0
    %581 = vmatprep.subr.mxu0 0.0
    %582 = vmatpush1.msra.mxu0 0.0
    %583 = vmatprep.subr.mxu0 0.0
    %584 = vmatpush1.msra.mxu0 0.0
    %585 = vmatprep.subr.mxu0 0.0
    %586 = vmatpush1.msra.mxu0 0.0
    %587 = vmatprep.subr.mxu0 0.0
    %588 = vmatpush1.msra.mxu0 0.0
    %589 = vmatprep.subr.mxu0 0.0
    %590 = vmatpush1.msra.mxu0 0.0
    %591 = vmatprep.subr.mxu0 0.0
    %592 = vmatpush1.msra.mxu0 0.0
    %593 = vmatprep.subr.mxu0 0.0
    %594 = vmatpush1.msra.mxu0 0.0
    %595 = vmatprep.subr.mxu0 0.0
    %596 = vmatpush1.msra.mxu0 0.0
    %597 = vmatprep.subr.mxu0 0.0
    %598 = vmatpush1.msra.mxu0 0.0
    %599 = vmatprep.subr.mxu0 0.0
    %600 = vmatpush1.msra.mxu0 0.0
    %601 = vmatprep.subr.mxu0 0.0
    %602 = vmatpush1.msra.mxu0 0.0
    %603 = vmatprep.subr.mxu0 0.0
    %604 = vmatpush1.msra.mxu0 0.0
    %605 = vmatprep.subr.mxu0 0.0
    %606 = vmatpush1.msra.mxu0 0.0
    %607 = vmatprep.subr.mxu0 0.0
    %608 = vmatpush1.msra.mxu0 0.0
    %609 = vmatprep.subr.mxu0 0.0
    %610 = vmatpush1.msra.mxu0 0.0
    %611 = vmatprep.mubr.f32.mxu0 0.0
    %612 = vmatmul.mubr.f32.gmra.mrb[0].mxu0 %v542
    %v613 = vpop.f32.mrb[0].mxu0
    %v614 = vadd.f32 0.0, %v613
    %v615 = vpop.f32.mrb[0].mxu0
    %616 = vmatprep.mubr.f32.mxu0 0.0
    %617 = vmatmul.mubr.f32.gmra.mrb[0].mxu0 %v545
    %v618 = vpop.f32.mrb[0].mxu0
    %v619 = vadd.f32 0.0, %v618
    %v620 = vpop.f32.mrb[0].mxu0
    %621 = vdwg.mxu0
    %v622 = vmul.f32 %v614, 2.0
    %v623 = vmul.f32 %v619, 2.0
    %v624 = vsub.f32 %v622, %v440
    %v625 = vsub.f32 %v623, %v441
    %s626 = scalar_lea.vmem [#allocation8], 80
    %627 = vst.msk [vmem:[%s626] sm:$0xff] %vm222, %v624
    %628 = vst.msk [vmem:[%s626 + $0x8] sm:$0xff] %vm222, %v625
    // Predicated region
    $region26: #{megacrn_forward.3} parent=1 // pred_check
      _
    $region27: #{megacrn_forward.3} parent=1 // pred_check_branch
      %630 = sbr.rel (0) target = $region29
    $region28: #{megacrn_forward.3} parent=1 // pred_region
      %s632 = ssub.s32 1536, 1536
      %633 = vsyncadd [#allocation4], %s632
      %s634 = sshll.u32 [#allocation8], 4
      %s635 = int_to_ptr.vmem [resolvable:$true] %s634
      %640 = dma.vmem_to_hbm [thread:$0]  %s635, 1536, %s3, [#allocation4], 128, 128, 8
    $region29: #{megacrn_forward.3} parent=1 // pred_fallthru
      _
    // Predicated region
    $region30: #{megacrn_forward.3} parent=1 // pred_check
      _
    $region31: #{megacrn_forward.3} parent=1 // pred_check_branch
      %642 = sbr.rel (0) target = $region33
    $region32: #{megacrn_forward.3} parent=1 // pred_region
      %643 = dma.done [#allocation4], 1536
    $region33: #{megacrn_forward.3} parent=1 // pred_fallthru
      _
    %644 = vsyncpa [#allocation3], 1
    %645 = vsyncpa [#allocation6], 1
    %646 = vsyncpa [#allocation4], 1

// kernel: megacrn_forward.4
$region0: #{megacrn_forward.4}
  #allocation0 [shape = 'u32[]', space=smem, size = 0x4, offset = 0x4, fixed_abs, tag = 'smem constant byte address 0x4 - core index']
  #allocation1 [shape = 'u32[144,128]{1,0:T(1,128)}', space=vmem, size = 0x12000, scoped, tag = 'internal scratch']
  #allocation2 [shape = 'f32[1,16,32]{2,1,0:T(8,128)}', space=vmem, size = 0x2000, scoped, tag = 'scratch operand']
  %s0 = inlined_call_operand.hbm [shape: f32[8,2,16,1], index: 0, kind: input, shape index: {}]
  %s1 = inlined_call_operand.hbm [shape: bf16[96,16], index: 1, kind: input, shape index: {}]
  %s2 = inlined_call_operand.hbm [shape: f32[32,16], index: 2, kind: input, shape index: {}]
  %s3 = inlined_call_operand.hbm [shape: f32[8,16], index: 3, kind: input, shape index: {}]
  %s4 = inlined_call_operand.hbm [shape: bf16[6,1,96], index: 4, kind: input, shape index: {}]
  %s5 = inlined_call_operand.hbm [shape: bf16[6,32,64], index: 5, kind: input, shape index: {}]
  %s6 = inlined_call_operand.hbm [shape: bf16[6,32,32], index: 6, kind: input, shape index: {}]
  %s7 = inlined_call_operand.hbm [shape: f32[1,64], index: 7, kind: input, shape index: {}]
  %s8 = inlined_call_operand.hbm [shape: f32[1,32], index: 8, kind: input, shape index: {}]
  %s9 = inlined_call_operand.hbm [shape: f32[2,16,48], index: 9, kind: output, shape index: {}]
  %s10 = sld [smem:[#allocation0]]
  $region113: #{megacrn_forward.4} parent=0
    _
  %s12 = ssub.s32 1, %s10
  %s13 = scalar_select 0, %s12, %s10
  $region1: #{megacrn_forward.4} parent=0
    #allocation3 [shape = 'u8[16384]{0}', space=vmem, size = 0x4000, scoped, tag = 'input window, operand 0']
    #allocation4 [shape = 's32[2]{0}', space=sflag, size = 0x8, scoped, tag = 'scoped memory for megacrn_forward.4']
    #allocation5 [shape = 's32[2]{0}', space=sflag, size = 0x8, scoped, tag = 'scoped memory for megacrn_forward.4']
    #allocation6 [shape = 'u8[24576]{0}', space=vmem, size = 0x6000, scoped, tag = 'input window, operand 1, single buffered']
    #allocation7 [shape = 's32[1]{0}', space=sflag, size = 0x4, scoped, tag = 'scoped memory for megacrn_forward.4']
    #allocation8 [shape = 'u8[16384]{0}', space=vmem, size = 0x4000, scoped, tag = 'input window, operand 2, single buffered']
    #allocation9 [shape = 'u8[4096]{0}', space=vmem, size = 0x1000, scoped, tag = 'input window, operand 3, single buffered']
    #allocation10 [shape = 's32[1]{0}', space=sflag, size = 0x4, scoped, tag = 'scoped memory for megacrn_forward.4']
    #allocation11 [shape = 'u8[3072]{0}', space=vmem, size = 0xc00, scoped, tag = 'input window, operand 4, single buffered']
    #allocation12 [shape = 'u8[49152]{0}', space=vmem, size = 0xc000, scoped, tag = 'input window, operand 5, single buffered']
    #allocation13 [shape = 's32[1]{0}', space=sflag, size = 0x4, scoped, tag = 'scoped memory for megacrn_forward.4']
    #allocation14 [shape = 'u8[49152]{0}', space=vmem, size = 0xc000, scoped, tag = 'input window, operand 6, single buffered']
    #allocation15 [shape = 'u8[512]{0}', space=vmem, size = 0x400, scoped, tag = 'input window, operand 7, single buffered']
    #allocation16 [shape = 's32[1]{0}', space=sflag, size = 0x4, scoped, tag = 'scoped memory for megacrn_forward.4']
    #allocation17 [shape = 'u8[512]{0}', space=vmem, size = 0x400, scoped, tag = 'input window, operand 8, single buffered']
    #allocation18 [shape = 'u8[16384]{0}', space=vmem, size = 0x4000, scoped, tag = 'output window, operand 0']
    %14 = vsyncpa [#allocation4], 0
    %s15 = scalar_lea.sflag [#allocation4], 1
    %16 = vsyncpa %s15, 0
    %17 = vsyncpa [#allocation7], 0
    %18 = vsyncpa [#allocation10], 0
    %19 = vsyncpa [#allocation13], 0
    %20 = vsyncpa [#allocation16], 0
    %21 = vsyncpa [#allocation5], 0
    %s22 = scalar_lea.sflag [#allocation5], 1
    %23 = vsyncpa %s22, 0
    loop: start=0, step=1, limit=18
    $region2: #{megacrn_forward.4} parent=1 // loop_pre_header
      _
    $region3: #{megacrn_forward.4} parent=1 // loop_header
      %s25 = sphi 0, %s29
      %p26 = scmp.ge.s32.totalorder %s25, 18
      %s32 = sphi 0, %s44
      %s33 = sphi 0, %s40
      %s34 = sphi 0, %s32
      %s35 = sphi 0, %s33
      %s36 = sphi 0, %s34
      %s37 = sphi 0, %s35
      %s49 = sphi 0, %s51
      %s52 = sphi 0, %s49
      %s53 = sphi 0, %s52
      %s69 = sphi 0, %s53
      %s73 = sphi 0, %s73
      %s75 = sphi 0, %s73
      %s76 = sphi 0, %s75
      %s90 = sphi 0, %s76
      %s94 = sphi 0, %s94
      %s96 = sphi 0, %s94
      %s97 = sphi 0, %s96
      %s111 = sphi 0, %s97
      %s115 = sphi 0, %s115
      %s117 = sphi 0, %s115
      %s118 = sphi 0, %s117
      %s132 = sphi 0, %s118
      %s136 = sphi 0, %s136
      %s138 = sphi 0, %s136
      %s139 = sphi 0, %s138
      %s153 = sphi 0, %s139
      %s157 = sphi 0, %s157
      %s159 = sphi 0, %s157
      %s160 = sphi 0, %s159
      %s174 = sphi 0, %s160
      %s178 = sphi 0, %s178
      %s180 = sphi 0, %s178
      %s181 = sphi 0, %s180
      %s195 = sphi 0, %s181
      %s199 = sphi 0, %s199
      %s201 = sphi 0, %s199
      %s202 = sphi 0, %s201
      %s216 = sphi 0, %s202
      %s220 = sphi 0, %s220
      %s222 = sphi 0, %s220
      %s223 = sphi 0, %s222
      %s237 = sphi 0, %s223
      %s243 = sphi 0, %s245
      %s246 = sphi 0, %s243
      %s247 = sphi 0, %s246
      %s263 = sphi 0, %s247
    $region4: #{megacrn_forward.4} parent=1 // loop_header_branch
      %28 = sbr.rel (%p26) target = $region8
    $region5: #{megacrn_forward.4} parent=1 // loop_body
      %s30 = ssub.s32 %s25, 1
      %s31 = ssub.s32 %s25, 2
      %s38 = sadd.s32 1, %s33
      %p39 = scmp.ge.s32.totalorder %s38, 8
      %s40 = scalar_select %p39, 0, %s38
      %s41 = sadd.s32 1, %s32
      %s42 = scalar_select %p39, %s41, %s32
      %p43 = scmp.ge.s32.totalorder %s42, 2
      %s44 = scalar_select %p43, 0, %s42
      %s45 = ssub.s32 %s33, %s40
      %s46 = ssub.s32 %s32, %s44
      %s47 = sor.u32 %s45, %s46
      %p48 = scmp.eq.s32.totalorder %s47, 0
      %s50 = sadd.s32 %s49, 1
      %s51 = scalar_select %p48, %s49, %s50
      %p54 = pneg %p48
      %p55 = scmp.eq.s32.totalorder %s25, 15
      %p56 = por %p54, %p55
      %p57 = scmp.ne.s32.totalorder %s49, %s52
      %p58 = scmp.eq.s32.totalorder %s25, 0
      %p59 = por %p57, %p58
      %p60 = scmp.ne.s32.totalorder %s49, %s52
      %p61 = scmp.eq.s32.totalorder %s30, 15
      %p62 = por %p60, %p61
      %p63 = scmp.ne.s32.totalorder %s52, %s53
      %p64 = scmp.eq.s32.totalorder %s30, 0
      %p65 = por %p63, %p64
      %p66 = scmp.ne.s32.totalorder %s52, %s53
      %p67 = scmp.eq.s32.totalorder %s31, 15
      %p68 = por %p66, %p67
      %p70 = scmp.ne.s32.totalorder %s53, %s69
      %p71 = scmp.eq.s32.totalorder %s31, 0
      %p72 = por %p70, %p71
      %s74 = sadd.s32 %s73, 1
      %p77 = scmp.eq.s32.totalorder %s25, 15
      %p78 = scmp.ne.s32.totalorder %s73, %s75
      %p79 = scmp.eq.s32.totalorder %s25, 0
      %p80 = por %p78, %p79
      %p81 = scmp.ne.s32.totalorder %s73, %s75
      %p82 = scmp.eq.s32.totalorder %s30, 15
      %p83 = por %p81, %p82
      %p84 = scmp.ne.s32.totalorder %s75, %s76
      %p85 = scmp.eq.s32.totalorder %s30, 0
      %p86 = por %p84, %p85
      %p87 = scmp.ne.s32.totalorder %s75, %s76
      %p88 = scmp.eq.s32.totalorder %s31, 15
      %p89 = por %p87, %p88
      %p91 = scmp.ne.s32.totalorder %s76, %s90
      %p92 = scmp.eq.s32.totalorder %s31, 0
      %p93 = por %p91, %p92
      %s95 = sadd.s32 %s94, 1
      %p98 = scmp.eq.s32.totalorder %s25, 15
      %p99 = scmp.ne.s32.totalorder %s94, %s96
      %p100 = scmp.eq.s32.totalorder %s25, 0
      %p101 = por %p99, %p100
      %p102 = scmp.ne.s32.totalorder %s94, %s96
      %p103 = scmp.eq.s32.totalorder %s30, 15
      %p104 = por %p102, %p103
      %p105 = scmp.ne.s32.totalorder %s96, %s97
      %p106 = scmp.eq.s32.totalorder %s30, 0
      %p107 = por %p105, %p106
      %p108 = scmp.ne.s32.totalorder %s96, %s97
      %p109 = scmp.eq.s32.totalorder %s31, 15
      %p110 = por %p108, %p109
      %p112 = scmp.ne.s32.totalorder %s97, %s111
      %p113 = scmp.eq.s32.totalorder %s31, 0
      %p114 = por %p112, %p113
      %s116 = sadd.s32 %s115, 1
      %p119 = scmp.eq.s32.totalorder %s25, 15
      %p120 = scmp.ne.s32.totalorder %s115, %s117
      %p121 = scmp.eq.s32.totalorder %s25, 0
      %p122 = por %p120, %p121
      %p123 = scmp.ne.s32.totalorder %s115, %s117
      %p124 = scmp.eq.s32.totalorder %s30, 15
      %p125 = por %p123, %p124
      %p126 = scmp.ne.s32.totalorder %s117, %s118
      %p127 = scmp.eq.s32.totalorder %s30, 0
      %p128 = por %p126, %p127
      %p129 = scmp.ne.s32.totalorder %s117, %s118
      %p130 = scmp.eq.s32.totalorder %s31, 15
      %p131 = por %p129, %p130
      %p133 = scmp.ne.s32.totalorder %s118, %s132
      %p134 = scmp.eq.s32.totalorder %s31, 0
      %p135 = por %p133, %p134
      %s137 = sadd.s32 %s136, 1
      %p140 = scmp.eq.s32.totalorder %s25, 15
      %p141 = scmp.ne.s32.totalorder %s136, %s138
      %p142 = scmp.eq.s32.totalorder %s25, 0
      %p143 = por %p141, %p142
      %p144 = scmp.ne.s32.totalorder %s136, %s138
      %p145 = scmp.eq.s32.totalorder %s30, 15
      %p146 = por %p144, %p145
      %p147 = scmp.ne.s32.totalorder %s138, %s139
      %p148 = scmp.eq.s32.totalorder %s30, 0
      %p149 = por %p147, %p148
      %p150 = scmp.ne.s32.totalorder %s138, %s139
      %p151 = scmp.eq.s32.totalorder %s31, 15
      %p152 = por %p150, %p151
      %p154 = scmp.ne.s32.totalorder %s139, %s153
      %p155 = scmp.eq.s32.totalorder %s31, 0
      %p156 = por %p154, %p155
      %s158 = sadd.s32 %s157, 1
      %p161 = scmp.eq.s32.totalorder %s25, 15
      %p162 = scmp.ne.s32.totalorder %s157, %s159
      %p163 = scmp.eq.s32.totalorder %s25, 0
      %p164 = por %p162, %p163
      %p165 = scmp.ne.s32.totalorder %s157, %s159
      %p166 = scmp.eq.s32.totalorder %s30, 15
      %p167 = por %p165, %p166
      %p168 = scmp.ne.s32.totalorder %s159, %s160
      %p169 = scmp.eq.s32.totalorder %s30, 0
      %p170 = por %p168, %p169
      %p171 = scmp.ne.s32.totalorder %s159, %s160
      %p172 = scmp.eq.s32.totalorder %s31, 15
      %p173 = por %p171, %p172
      %p175 = scmp.ne.s32.totalorder %s160, %s174
      %p176 = scmp.eq.s32.totalorder %s31, 0
      %p177 = por %p175, %p176
      %s179 = sadd.s32 %s178, 1
      %p182 = scmp.eq.s32.totalorder %s25, 15
      %p183 = scmp.ne.s32.totalorder %s178, %s180
      %p184 = scmp.eq.s32.totalorder %s25, 0
      %p185 = por %p183, %p184
      %p186 = scmp.ne.s32.totalorder %s178, %s180
      %p187 = scmp.eq.s32.totalorder %s30, 15
      %p188 = por %p186, %p187
      %p189 = scmp.ne.s32.totalorder %s180, %s181
      %p190 = scmp.eq.s32.totalorder %s30, 0
      %p191 = por %p189, %p190
      %p192 = scmp.ne.s32.totalorder %s180, %s181
      %p193 = scmp.eq.s32.totalorder %s31, 15
      %p194 = por %p192, %p193
      %p196 = scmp.ne.s32.totalorder %s181, %s195
      %p197 = scmp.eq.s32.totalorder %s31, 0
      %p198 = por %p196, %p197
      %s200 = sadd.s32 %s199, 1
      %p203 = scmp.eq.s32.totalorder %s25, 15
      %p204 = scmp.ne.s32.totalorder %s199, %s201
      %p205 = scmp.eq.s32.totalorder %s25, 0
      %p206 = por %p204, %p205
      %p207 = scmp.ne.s32.totalorder %s199, %s201
      %p208 = scmp.eq.s32.totalorder %s30, 15
      %p209 = por %p207, %p208
      %p210 = scmp.ne.s32.totalorder %s201, %s202
      %p211 = scmp.eq.s32.totalorder %s30, 0
      %p212 = por %p210, %p211
      %p213 = scmp.ne.s32.totalorder %s201, %s202
      %p214 = scmp.eq.s32.totalorder %s31, 15
      %p215 = por %p213, %p214
      %p217 = scmp.ne.s32.totalorder %s202, %s216
      %p218 = scmp.eq.s32.totalorder %s31, 0
      %p219 = por %p217, %p218
      %s221 = sadd.s32 %s220, 1
      %p224 = scmp.eq.s32.totalorder %s25, 15
      %p225 = scmp.ne.s32.totalorder %s220, %s222
      %p226 = scmp.eq.s32.totalorder %s25, 0
      %p227 = por %p225, %p226
      %p228 = scmp.ne.s32.totalorder %s220, %s222
      %p229 = scmp.eq.s32.totalorder %s30, 15
      %p230 = por %p228, %p229
      %p231 = scmp.ne.s32.totalorder %s222, %s223
      %p232 = scmp.eq.s32.totalorder %s30, 0
      %p233 = por %p231, %p232
      %p234 = scmp.ne.s32.totalorder %s222, %s223
      %p235 = scmp.eq.s32.totalorder %s31, 15
      %p236 = por %p234, %p235
      %p238 = scmp.ne.s32.totalorder %s223, %s237
      %p239 = scmp.eq.s32.totalorder %s31, 0
      %p240 = por %p238, %p239
      %s241 = ssub.s32 %s32, %s44
      %p242 = scmp.eq.s32.totalorder %s241, 0
      %s244 = sadd.s32 %s243, 1
      %s245 = scalar_select %p242, %s243, %s244
      %p248 = pneg %p242
      %p249 = scmp.eq.s32.totalorder %s25, 15
      %p250 = por %p248, %p249
      %p251 = scmp.ne.s32.totalorder %s243, %s246
      %p252 = scmp.eq.s32.totalorder %s25, 0
      %p253 = por %p251, %p252
      %p254 = scmp.ne.s32.totalorder %s243, %s246
      %p255 = scmp.eq.s32.totalorder %s30, 15
      %p256 = por %p254, %p255
      %p257 = scmp.ne.s32.totalorder %s246, %s247
      %p258 = scmp.eq.s32.totalorder %s30, 0
      %p259 = por %p257, %p258
      %p260 = scmp.ne.s32.totalorder %s246, %s247
      %p261 = scmp.eq.s32.totalorder %s31, 15
      %p262 = por %p260, %p261
      %p264 = scmp.ne.s32.totalorder %s247, %s263
      %p265 = scmp.eq.s32.totalorder %s31, 0
      %p266 = por %p264, %p265
      %p267 = scmp.le.s32.totalorder 1, %s25
      %p268 = scmp.lt.s32.totalorder %s25, 17
      %p269 = pnand %p267, %p268
      %p270 = pneg %p269
      // Predicated region
      $region9: #{megacrn_forward.4} parent=5 // pred_check
        _
      $region10: #{megacrn_forward.4} parent=5 // pred_check_branch
        %272 = sbr.rel (%p269) target = $region12
      $region11: #{megacrn_forward.4} parent=5 // pred_region
        %s273 = ssub.s32 %s25, 1
        // Predicated region
        $region13: #{megacrn_forward.4} parent=11 // pred_check
          %p274 = pneg %p86
        $region14: #{megacrn_forward.4} parent=11 // pred_check_branch
          %276 = sbr.rel (%p274) target = $region16
        $region15: #{megacrn_forward.4} parent=11 // pred_region
          %s278 = ssub.s32 768, 768
          %279 = vsyncadd [#allocation7], %s278
          %s280 = sshll.u32 [#allocation6], 4
          %s281 = int_to_ptr.vmem [resolvable:$true] %s280
          %286 = dma.hbm_to_vmem [thread:$0]  %s1, 768, %s281, [#allocation7], 64, 64, 4
        $region16: #{megacrn_forward.4} parent=11 // pred_fallthru
          _
        // Predicated region
        $region17: #{megacrn_forward.4} parent=11 // pred_check
          %p287 = pneg %p107
        $region18: #{megacrn_forward.4} parent=11 // pred_check_branch
          %289 = sbr.rel (%p287) target = $region20
        $region19: #{megacrn_forward.4} parent=11 // pred_region
          %s291 = ssub.s32 512, 512
          %292 = vsyncadd [#allocation7], %s291
          %s293 = sshll.u32 [#allocation8], 4
          %s294 = int_to_ptr.vmem [resolvable:$true] %s293
          %299 = dma.hbm_to_vmem [thread:$0]  %s2, 512, %s294, [#allocation7], 128, 128, 8
        $region20: #{megacrn_forward.4} parent=11 // pred_fallthru
          _
        // Predicated region
        $region21: #{megacrn_forward.4} parent=11 // pred_check
          %p300 = pneg %p128
        $region22: #{megacrn_forward.4} parent=11 // pred_check_branch
          %302 = sbr.rel (%p300) target = $region24
        $region23: #{megacrn_forward.4} parent=11 // pred_region
          %s304 = ssub.s32 128, 128
          %305 = vsyncadd [#allocation10], %s304
          %s307 = sshll.u32 [#allocation9], 4
          %s308 = int_to_ptr.vmem [resolvable:$true] %s307
          %310 = dma.hbm_to_vmem [thread:$0]  %s3, 128, %s308, [#allocation10]
        $region24: #{megacrn_forward.4} parent=11 // pred_fallthru
          _
        // Predicated region
        $region25: #{megacrn_forward.4} parent=11 // pred_check
          %p311 = pneg %p149
        $region26: #{megacrn_forward.4} parent=11 // pred_check_branch
          %313 = sbr.rel (%p311) target = $region28
        $region27: #{megacrn_forward.4} parent=11 // pred_region
          %s315 = ssub.s32 96, 96
          %316 = vsyncadd [#allocation10], %s315
          %s317 = sshll.u32 [#allocation11], 4
          %s318 = int_to_ptr.vmem [resolvable:$true] %s317
          %323 = dma.hbm_to_vmem [thread:$0]  %s4, 96, %s318, [#allocation10], 16, 16, 1
        $region28: #{megacrn_forward.4} parent=11 // pred_fallthru
          _
        // Predicated region
        $region29: #{megacrn_forward.4} parent=11 // pred_check
          %p324 = pneg %p170
        $region30: #{megacrn_forward.4} parent=11 // pred_check_branch
          %326 = sbr.rel (%p324) target = $region32
        $region31: #{megacrn_forward.4} parent=11 // pred_region
          %s328 = ssub.s32 1536, 1536
          %329 = vsyncadd [#allocation13], %s328
          %s330 = sshll.u32 [#allocation12], 4
          %s331 = int_to_ptr.vmem [resolvable:$true] %s330
          %336 = dma.hbm_to_vmem [thread:$0]  %s5, 1536, %s331, [#allocation13], 64, 64, 4
        $region32: #{megacrn_forward.4} parent=11 // pred_fallthru
          _
        // Predicated region
        $region33: #{megacrn_forward.4} parent=11 // pred_check
          %p337 = pneg %p191
        $region34: #{megacrn_forward.4} parent=11 // pred_check_branch
          %339 = sbr.rel (%p337) target = $region36
        $region35: #{megacrn_forward.4} parent=11 // pred_region
          %s341 = ssub.s32 1536, 1536
          %342 = vsyncadd [#allocation13], %s341
          %s343 = sshll.u32 [#allocation14], 4
          %s344 = int_to_ptr.vmem [resolvable:$true] %s343
          %349 = dma.hbm_to_vmem [thread:$0]  %s6, 1536, %s344, [#allocation13], 64, 64, 4
        $region36: #{megacrn_forward.4} parent=11 // pred_fallthru
          _
        // Predicated region
        $region37: #{megacrn_forward.4} parent=11 // pred_check
          %p350 = pneg %p212
        $region38: #{megacrn_forward.4} parent=11 // pred_check_branch
          %352 = sbr.rel (%p350) target = $region40
        $region39: #{megacrn_forward.4} parent=11 // pred_region
          %s354 = ssub.s32 16, 16
          %355 = vsyncadd [#allocation16], %s354
          %s357 = sshll.u32 [#allocation15], 4
          %s358 = int_to_ptr.vmem [resolvable:$true] %s357
          %360 = dma.hbm_to_vmem [thread:$0]  %s7, 16, %s358, [#allocation16]
        $region40: #{megacrn_forward.4} parent=11 // pred_fallthru
          _
        // Predicated region
        $region41: #{megacrn_forward.4} parent=11 // pred_check
          %p361 = pneg %p233
        $region42: #{megacrn_forward.4} parent=11 // pred_check_branch
          %363 = sbr.rel (%p361) target = $region44
        $region43: #{megacrn_forward.4} parent=11 // pred_region
          %s365 = ssub.s32 16, 16
          %366 = vsyncadd [#allocation16], %s365
          %s368 = sshll.u32 [#allocation17], 4
          %s369 = int_to_ptr.vmem [resolvable:$true] %s368
          %371 = dma.hbm_to_vmem [thread:$0]  %s8, 16, %s369, [#allocation16]
        $region44: #{megacrn_forward.4} parent=11 // pred_fallthru
          _
      $region12: #{megacrn_forward.4} parent=5 // pred_fallthru
        _
      %p372 = scmp.lt.s32.totalorder %s25, 16
      // Predicated region
      $region45: #{megacrn_forward.4} parent=5 // pred_check
        %p373 = pneg %p372
      $region46: #{megacrn_forward.4} parent=5 // pred_check_branch
        %375 = sbr.rel (%p373) target = $region48
      $region47: #{megacrn_forward.4} parent=5 // pred_region
        // Predicated region
        $region49: #{megacrn_forward.4} parent=47 // pred_check
          %p376 = pneg %p59
        $region50: #{megacrn_forward.4} parent=47 // pred_check_branch
          %378 = sbr.rel (%p376) target = $region52
        $region51: #{megacrn_forward.4} parent=47 // pred_region
          %s379 = sand.u32 %s49, 1
          %s380 = scalar_lea.sflag [#allocation4], %s379
          %s381 = sand.u32 %s49, 1
          %s382 = smul.addr %s381, 16
          %s383 = scalar_lea.vmem [#allocation3], %s382
          %s385 = ssub.s32 256, 256
          %386 = vsyncadd %s380, %s385
          %s387 = smul.addr %s32, 2
          %s388 = smul.addr %s33, 4
          %s389 = sadd.s32 %s387, %s388
          %s390 = smul.addr %s389, 128
          %s391 = scalar_lea.hbm %s0, %s390
          %s392 = sshll.u32 %s383, 4
          %s393 = int_to_ptr.vmem [resolvable:$true] %s392
          %398 = dma.hbm_to_vmem [thread:$0]  %s391, 256, %s393, %s380, 128, 128, 8
        $region52: #{megacrn_forward.4} parent=47 // pred_fallthru
          _
      $region48: #{megacrn_forward.4} parent=5 // pred_fallthru
        _
      %p399 = scmp.le.s32.totalorder 1, %s25
      %p400 = scmp.lt.s32.totalorder %s25, 17
      %p401 = pnand %p399, %p400
      %p402 = pneg %p401
      // Predicated region
      $region53: #{megacrn_forward.4} parent=5 // pred_check
        _
      $region54: #{megacrn_forward.4} parent=5 // pred_check_branch
        %404 = sbr.rel (%p401) target = $region56
      $region55: #{megacrn_forward.4} parent=5 // pred_region
        %s405 = ssub.s32 %s25, 1
        %s406 = sand.u32 %s52, 1
        %s407 = scalar_lea.sflag [#allocation4], %s406
        %s408 = sand.u32 %s52, 1
        %s409 = smul.addr %s408, 16
        %s410 = scalar_lea.vmem [#allocation3], %s409
        // Predicated region
        $region57: #{megacrn_forward.4} parent=55 // pred_check
          %p411 = pneg %p65
        $region58: #{megacrn_forward.4} parent=55 // pred_check_branch
          %413 = sbr.rel (%p411) target = $region60
        $region59: #{megacrn_forward.4} parent=55 // pred_region
          %414 = dma.done %s407, 256
        $region60: #{megacrn_forward.4} parent=55 // pred_fallthru
          _
        // Predicated region
        $region61: #{megacrn_forward.4} parent=55 // pred_check
          %p415 = pneg %p86
        $region62: #{megacrn_forward.4} parent=55 // pred_check_branch
          %417 = sbr.rel (%p415) target = $region64
        $region63: #{megacrn_forward.4} parent=55 // pred_region
          %418 = dma.done [#allocation7], 768
        $region64: #{megacrn_forward.4} parent=55 // pred_fallthru
          _
        // Predicated region
        $region65: #{megacrn_forward.4} parent=55 // pred_check
          %p419 = pneg %p107
        $region66: #{megacrn_forward.4} parent=55 // pred_check_branch
          %421 = sbr.rel (%p419) target = $region68
        $region67: #{megacrn_forward.4} parent=55 // pred_region
          %422 = dma.done [#allocation7], 512
        $region68: #{megacrn_forward.4} parent=55 // pred_fallthru
          _
        // Predicated region
        $region69: #{megacrn_forward.4} parent=55 // pred_check
          %p423 = pneg %p128
        $region70: #{megacrn_forward.4} parent=55 // pred_check_branch
          %425 = sbr.rel (%p423) target = $region72
        $region71: #{megacrn_forward.4} parent=55 // pred_region
          %426 = dma.done [#allocation10], 128
        $region72: #{megacrn_forward.4} parent=55 // pred_fallthru
          _
        // Predicated region
        $region73: #{megacrn_forward.4} parent=55 // pred_check
          %p427 = pneg %p149
        $region74: #{megacrn_forward.4} parent=55 // pred_check_branch
          %429 = sbr.rel (%p427) target = $region76
        $region75: #{megacrn_forward.4} parent=55 // pred_region
          %430 = dma.done [#allocation10], 96
        $region76: #{megacrn_forward.4} parent=55 // pred_fallthru
          _
        // Predicated region
        $region77: #{megacrn_forward.4} parent=55 // pred_check
          %p431 = pneg %p170
        $region78: #{megacrn_forward.4} parent=55 // pred_check_branch
          %433 = sbr.rel (%p431) target = $region80
        $region79: #{megacrn_forward.4} parent=55 // pred_region
          %434 = dma.done [#allocation13], 1536
        $region80: #{megacrn_forward.4} parent=55 // pred_fallthru
          _
        // Predicated region
        $region81: #{megacrn_forward.4} parent=55 // pred_check
          %p435 = pneg %p191
        $region82: #{megacrn_forward.4} parent=55 // pred_check_branch
          %437 = sbr.rel (%p435) target = $region84
        $region83: #{megacrn_forward.4} parent=55 // pred_region
          %438 = dma.done [#allocation13], 1536
        $region84: #{megacrn_forward.4} parent=55 // pred_fallthru
          _
        // Predicated region
        $region85: #{megacrn_forward.4} parent=55 // pred_check
          %p439 = pneg %p212
        $region86: #{megacrn_forward.4} parent=55 // pred_check_branch
          %441 = sbr.rel (%p439) target = $region88
        $region87: #{megacrn_forward.4} parent=55 // pred_region
          %442 = dma.done [#allocation16], 16
        $region88: #{megacrn_forward.4} parent=55 // pred_fallthru
          _
        // Predicated region
        $region89: #{megacrn_forward.4} parent=55 // pred_check
          %p443 = pneg %p233
        $region90: #{megacrn_forward.4} parent=55 // pred_check_branch
          %445 = sbr.rel (%p443) target = $region92
        $region91: #{megacrn_forward.4} parent=55 // pred_region
          %446 = dma.done [#allocation16], 16
        $region92: #{megacrn_forward.4} parent=55 // pred_fallthru
          _
        %s447 = sand.u32 %s52, 1
        %s448 = scalar_lea.sflag [#allocation4], %s447
        %s449 = sand.u32 %s52, 1
        %s450 = smul.addr %s449, 16
        %s451 = scalar_lea.vmem [#allocation3], %s450
        %p452 = pneg %p65
        %p453 = pneg %p62
        %p454 = pneg %p86
        %p455 = pneg %p83
        %p456 = pneg %p107
        %p457 = pneg %p104
        %p458 = pneg %p128
        %p459 = pneg %p125
        %p460 = pneg %p149
        %p461 = pneg %p146
        %p462 = pneg %p170
        %p463 = pneg %p167
        %p464 = pneg %p191
        %p465 = pneg %p188
        %p466 = pneg %p212
        %p467 = pneg %p209
        %p468 = pneg %p233
        %p469 = pneg %p230
        %p470 = pneg %p259
        %p471 = pneg %p256
        %s472 = sand.u32 %s246, 1
        %s473 = scalar_lea.sflag [#allocation5], %s472
        %s474 = sand.u32 %s246, 1
        %s475 = smul.addr %s474, 16
        %s476 = scalar_lea.vmem [#allocation18], %s475
        %p478 = scmp.eq.s32.totalorder %s35, 0
        // Predicated region
        $region93: #{megacrn_forward.4} parent=55 // pred_check
          %p479 = pneg %p478
        $region94: #{megacrn_forward.4} parent=55 // pred_check_branch
          %481 = sbr.rel (%p479) target = $region96
        $region95: #{megacrn_forward.4} parent=55 // pred_region
          %vm482 = vcmask 261120
          %483 = vst.msk [vmem:[#allocation2] sm:$0xff] %vm482, 0.0
          %484 = vst.msk [vmem:[#allocation2 + $0x8] sm:$0xff] %vm482, 0.0
        $region96: #{megacrn_forward.4} parent=55 // pred_fallthru
          _
        %v485 = vld [vmem:[#allocation6] sm:$0xf]
        %v486 = vld [vmem:[#allocation6 + $0x4] sm:$0xf]
        %v487 = vld [vmem:[#allocation6 + $0x8] sm:$0xf]
        %v488 = vld [vmem:[#allocation6 + $0xc] sm:$0xf]
        %v489 = vld [vmem:[#allocation6 + $0x10] sm:$0xf]
        %v490 = vld [vmem:[#allocation6 + $0x14] sm:$0xf]
        %v491 = vld [vmem:[#allocation6 + $0x18] sm:$0xf]
        %v492 = vld [vmem:[#allocation6 + $0x1c] sm:$0xf]
        %v493 = vld [vmem:[#allocation6 + $0x20] sm:$0xf]
        %v494 = vld [vmem:[#allocation6 + $0x24] sm:$0xf]
        %v495 = vld [vmem:[#allocation6 + $0x28] sm:$0xf]
        %v496 = vld [vmem:[#allocation6 + $0x2c] sm:$0xf]
        %v497 = vld [vmem:[%s410] sm:$0xff]
        %v498 = vld [vmem:[%s410 + $0x8] sm:$0xff]
        %v499 = vld [vmem:[#allocation11] sm:$0x1]
        %v500 = vld [vmem:[#allocation11 + $0x1] sm:$0x1]
        %v501 = vld [vmem:[#allocation11 + $0x2] sm:$0x1]
        %v502 = vld [vmem:[#allocation11 + $0x3] sm:$0x1]
        %v503 = vld [vmem:[#allocation11 + $0x4] sm:$0x1]
        %v504 = vld [vmem:[#allocation11 + $0x5] sm:$0x1]
        %v505 = vld [vmem:[#allocation12] sm:$0xf]
        %v506 = vld [vmem:[#allocation12 + $0x4] sm:$0xf]
        %v507 = vld [vmem:[#allocation12 + $0x8] sm:$0xf]
        %v508 = vld [vmem:[#allocation12 + $0xc] sm:$0xf]
        %v509 = vld [vmem:[#allocation12 + $0x10] sm:$0xf]
        %v510 = vld [vmem:[#allocation12 + $0x14] sm:$0xf]
        %v511 = vld [vmem:[#allocation12 + $0x18] sm:$0xf]
        %v512 = vld [vmem:[#allocation12 + $0x1c] sm:$0xf]
        %v513 = vld [vmem:[#allocation12 + $0x20] sm:$0xf]
        %v514 = vld [vmem:[#allocation12 + $0x24] sm:$0xf]
        %v515 = vld [vmem:[#allocation12 + $0x28] sm:$0xf]
        %v516 = vld [vmem:[#allocation12 + $0x2c] sm:$0xf]
        %v517 = vld [vmem:[#allocation12 + $0x30] sm:$0xf]
        %v518 = vld [vmem:[#allocation12 + $0x34] sm:$0xf]
        %v519 = vld [vmem:[#allocation12 + $0x38] sm:$0xf]
        %v520 = vld [vmem:[#allocation12 + $0x3c] sm:$0xf]
        %v521 = vld [vmem:[#allocation12 + $0x40] sm:$0xf]
        %v522 = vld [vmem:[#allocation12 + $0x44] sm:$0xf]
        %v523 = vld [vmem:[#allocation12 + $0x48] sm:$0xf]
        %v524 = vld [vmem:[#allocation12 + $0x4c] sm:$0xf]
        %v525 = vld [vmem:[#allocation12 + $0x50] sm:$0xf]
        %v526 = vld [vmem:[#allocation12 + $0x54] sm:$0xf]
        %v527 = vld [vmem:[#allocation12 + $0x58] sm:$0xf]
        %v528 = vld [vmem:[#allocation12 + $0x5c] sm:$0xf]
        %v529 = vld [vmem:[#allocation14] sm:$0xf]
        %v530 = vld [vmem:[#allocation14 + $0x4] sm:$0xf]
        %v531 = vld [vmem:[#allocation14 + $0x8] sm:$0xf]
        %v532 = vld [vmem:[#allocation14 + $0xc] sm:$0xf]
        %v533 = vld [vmem:[#allocation14 + $0x10] sm:$0xf]
        %v534 = vld [vmem:[#allocation14 + $0x14] sm:$0xf]
        %v535 = vld [vmem:[#allocation14 + $0x18] sm:$0xf]
        %v536 = vld [vmem:[#allocation14 + $0x1c] sm:$0xf]
        %v537 = vld [vmem:[#allocation14 + $0x20] sm:$0xf]
        %v538 = vld [vmem:[#allocation14 + $0x24] sm:$0xf]
        %v539 = vld [vmem:[#allocation14 + $0x28] sm:$0xf]
        %v540 = vld [vmem:[#allocation14 + $0x2c] sm:$0xf]
        %v541 = vld [vmem:[#allocation14 + $0x30] sm:$0xf]
        %v542 = vld [vmem:[#allocation14 + $0x34] sm:$0xf]
        %v543 = vld [vmem:[#allocation14 + $0x38] sm:$0xf]
        %v544 = vld [vmem:[#allocation14 + $0x3c] sm:$0xf]
        %v545 = vld [vmem:[#allocation14 + $0x40] sm:$0xf]
        %v546 = vld [vmem:[#allocation14 + $0x44] sm:$0xf]
        %v547 = vld [vmem:[#allocation14 + $0x48] sm:$0xf]
        %v548 = vld [vmem:[#allocation14 + $0x4c] sm:$0xf]
        %v549 = vld [vmem:[#allocation14 + $0x50] sm:$0xf]
        %v550 = vld [vmem:[#allocation14 + $0x54] sm:$0xf]
        %v551 = vld [vmem:[#allocation14 + $0x58] sm:$0xf]
        %v552 = vld [vmem:[#allocation14 + $0x5c] sm:$0xf]
        %v553 = vld [vmem:[#allocation15] sm:$0x1]
        %v554 = vld [vmem:[#allocation17] sm:$0x1]
        %v555 = vld [vmem:[#allocation2] sm:$0xff]
        %v556 = vld [vmem:[#allocation2 + $0x8] sm:$0xff]
        %v557 = vpack.c.bf16 %v498, %v497
        %v570 = vunpack.c.l.b16 %v485
        %v571 = vunpack.c.l.b16 %v486
        %v572 = vunpack.c.l.b16 %v487
        %v573 = vunpack.c.l.b16 %v488
        %v574 = vunpack.c.l.b16 %v489
        %v575 = vunpack.c.l.b16 %v490
        %v576 = vunpack.c.l.b16 %v491
        %v577 = vunpack.c.l.b16 %v492
        %v578 = vunpack.c.l.b16 %v493
        %v579 = vunpack.c.l.b16 %v494
        %v580 = vunpack.c.l.b16 %v495
        %v581 = vunpack.c.l.b16 %v496
        %v582 = vpack.c.b16 %v571, %v570
        %v583 = vpack.c.b16 %v573, %v572
        %v584 = vpack.c.b16 %v575, %v574
        %v585 = vpack.c.b16 %v577, %v576
        %v586 = vpack.c.b16 %v579, %v578
        %v587 = vpack.c.b16 %v581, %v580
        %vm588 = vcmask 130048
        %v590 = vsel %vm588, %v582, 0
        %v593 = vsel %vm588, %v583, 0
        %v596 = vsel %vm588, %v584, 0
        %v599 = vsel %vm588, %v585, 0
        %v602 = vsel %vm588, %v586, 0
        %v605 = vsel %vm588, %v587, 0
        %607 = vmatprep.subr.bf16.mxu0 0
        %608 = vmatpush1.bf16.msra.mxu0 %v557
        %609 = vmatprep.subr.bf16.mxu0 0
        %610 = vmatpush1.bf16.msra.mxu0 0
        %611 = vmatprep.subr.bf16.mxu0 0
        %612 = vmatpush1.bf16.msra.mxu0 0
        %613 = vmatprep.subr.bf16.mxu0 0
        %614 = vmatpush1.bf16.msra.mxu0 0
        %615 = vmatprep.subr.bf16.mxu0 0
        %616 = vmatpush1.bf16.msra.mxu0 0
        %617 = vmatprep.subr.bf16.mxu0 0
        %618 = vmatpush1.bf16.msra.mxu0 0
        %619 = vmatprep.subr.bf16.mxu0 0
        %620 = vmatpush1.bf16.msra.mxu0 0
        %621 = vmatprep.subr.bf16.mxu0 0
        %622 = vmatpush1.bf16.msra.mxu0 0
        %623 = vmatprep.subr.bf16.mxu0 0
        %624 = vmatpush1.bf16.msra.mxu0 0
        %625 = vmatprep.subr.bf16.mxu0 0
        %626 = vmatpush1.bf16.msra.mxu0 0
        %627 = vmatprep.subr.bf16.mxu0 0
        %628 = vmatpush1.bf16.msra.mxu0 0
        %629 = vmatprep.subr.bf16.mxu0 0
        %630 = vmatpush1.bf16.msra.mxu0 0
        %631 = vmatprep.subr.bf16.mxu0 0
        %632 = vmatpush1.bf16.msra.mxu0 0
        %633 = vmatprep.subr.bf16.mxu0 0
        %634 = vmatpush1.bf16.msra.mxu0 0
        %635 = vmatprep.subr.bf16.mxu0 0
        %636 = vmatpush1.bf16.msra.mxu0 0
        %637 = vmatprep.subr.bf16.mxu0 0
        %638 = vmatpush1.bf16.msra.mxu0 0
        %639 = vmatprep.mubr.bf16.mxu0 0
        %640 = vmatmul.mubr.bf16.gmra.mrb[0].mxu0 %v590
        %v641 = vpop.f32.mrb[0].mxu0
        %v642 = vadd.f32 0.0, %v641
        %v643 = vpop.f32.mrb[0].mxu0
        %v644 = vpop.f32.mrb[0].mxu0
        %v645 = vadd.f32 0.0, %v644
        %v646 = vpop.f32.mrb[0].mxu0
        %647 = vmatprep.mubr.bf16.mxu0 0
        %648 = vmatmul.mubr.bf16.gmra.mrb[0].mxu0 %v593
        %v649 = vpop.f32.mrb[0].mxu0
        %v650 = vadd.f32 0.0, %v649
        %v651 = vpop.f32.mrb[0].mxu0
        %v652 = vpop.f32.mrb[0].mxu0
        %v653 = vadd.f32 0.0, %v652
        %v654 = vpop.f32.mrb[0].mxu0
        %655 = vmatprep.mubr.bf16.mxu0 0
        %656 = vmatmul.mubr.bf16.gmra.mrb[0].mxu0 %v596
        %v657 = vpop.f32.mrb[0].mxu0
        %v658 = vadd.f32 0.0, %v657
        %v659 = vpop.f32.mrb[0].mxu0
        %v660 = vpop.f32.mrb[0].mxu0
        %v661 = vadd.f32 0.0, %v660
        %v662 = vpop.f32.mrb[0].mxu0
        %663 = vmatprep.mubr.bf16.mxu0 0
        %664 = vmatmul.mubr.bf16.gmra.mrb[0].mxu0 %v599
        %v665 = vpop.f32.mrb[0].mxu0
        %v666 = vadd.f32 0.0, %v665
        %v667 = vpop.f32.mrb[0].mxu0
        %v668 = vpop.f32.mrb[0].mxu0
        %v669 = vadd.f32 0.0, %v668
        %v670 = vpop.f32.mrb[0].mxu0
        %671 = vmatprep.mubr.bf16.mxu0 0
        %672 = vmatmul.mubr.bf16.gmra.mrb[0].mxu0 %v602
        %v673 = vpop.f32.mrb[0].mxu0
        %v674 = vadd.f32 0.0, %v673
        %v675 = vpop.f32.mrb[0].mxu0
        %v676 = vpop.f32.mrb[0].mxu0
        %v677 = vadd.f32 0.0, %v676
        %v678 = vpop.f32.mrb[0].mxu0
        %679 = vmatprep.mubr.bf16.mxu0 0
        %680 = vmatmul.mubr.bf16.gmra.mrb[0].mxu0 %v605
        %v681 = vpop.f32.mrb[0].mxu0
        %v682 = vadd.f32 0.0, %v681
        %v683 = vpop.f32.mrb[0].mxu0
        %v684 = vpop.f32.mrb[0].mxu0
        %v685 = vadd.f32 0.0, %v684
        %v686 = vpop.f32.mrb[0].mxu0
        %687 = vdwg.mxu0
        %v688 = vpack.c.bf16 %v645, %v642
        %v689 = vpack.c.bf16 %v653, %v650
        %v690 = vpack.c.bf16 %v661, %v658
        %v691 = vpack.c.bf16 %v669, %v666
        %v692 = vpack.c.bf16 %v677, %v674
        %v693 = vpack.c.bf16 %v685, %v682
        %v694 = vunpack.c.l.bf16 %v688
        %v695 = vunpack.c.h.bf16 %v688
        %v696 = vunpack.c.l.bf16 %v499
        %698 = vset.pattern.permute.xlu0 0
        %699 = vperm.xlu0 %698, %v694
        %v700 = vpop.permute.xlu0 %699
        %703 = vset.pattern.permute.xlu0 0
        %704 = vperm.xlu0 %703, %v695
        %v705 = vpop.permute.xlu0 %704
        %v707 = vlaneseq
        %v708 = vshrl.u32 %v707, 7
        %v709 = vsub.s32 0, %v708
        %v710 = vrot.slane %v696, %v709
        %v711 = vmul.f32 %v700, %v710
        %v712 = vmul.f32 %v705, %v710
        %v713 = vunpack.c.l.bf16 %v689
        %v714 = vunpack.c.h.bf16 %v689
        %v715 = vunpack.c.l.bf16 %v500
        %717 = vset.pattern.permute.xlu0 0
        %718 = vperm.xlu0 %717, %v713
        %v719 = vpop.permute.xlu0 %718
        %722 = vset.pattern.permute.xlu0 0
        %723 = vperm.xlu0 %722, %v714
        %v724 = vpop.permute.xlu0 %723
        %v726 = vlaneseq
        %v727 = vshrl.u32 %v726, 7
        %v728 = vsub.s32 0, %v727
        %v729 = vrot.slane %v715, %v728
        %v730 = vmul.f32 %v719, %v729
        %v731 = vmul.f32 %v724, %v729
        %v732 = vadd.f32 %v711, %v730
        %v733 = vadd.f32 %v712, %v731
        %v734 = vunpack.c.l.bf16 %v690
        %v735 = vunpack.c.h.bf16 %v690
        %v736 = vunpack.c.l.bf16 %v501
        %738 = vset.pattern.permute.xlu0 0
        %739 = vperm.xlu0 %738, %v734
        %v740 = vpop.permute.xlu0 %739
        %743 = vset.pattern.permute.xlu0 0
        %744 = vperm.xlu0 %743, %v735
        %v745 = vpop.permute.xlu0 %744
        %v747 = vlaneseq
        %v748 = vshrl.u32 %v747, 7
        %v749 = vsub.s32 0, %v748
        %v750 = vrot.slane %v736, %v749
        %v751 = vmul.f32 %v740, %v750
        %v752 = vmul.f32 %v745, %v750
        %v753 = vadd.f32 %v732, %v751
        %v754 = vadd.f32 %v733, %v752
        %v755 = vunpack.c.l.bf16 %v691
        %v756 = vunpack.c.h.bf16 %v691
        %v757 = vunpack.c.l.bf16 %v502
        %759 = vset.pattern.permute.xlu0 0
        %760 = vperm.xlu0 %759, %v755
        %v761 = vpop.permute.xlu0 %760
        %764 = vset.pattern.permute.xlu0 0
        %765 = vperm.xlu0 %764, %v756
        %v766 = vpop.permute.xlu0 %765
        %v768 = vlaneseq
        %v769 = vshrl.u32 %v768, 7
        %v770 = vsub.s32 0, %v769
        %v771 = vrot.slane %v757, %v770
        %v772 = vmul.f32 %v761, %v771
        %v773 = vmul.f32 %v766, %v771
        %v774 = vadd.f32 %v753, %v772
        %v775 = vadd.f32 %v754, %v773
        %v776 = vunpack.c.l.bf16 %v692
        %v777 = vunpack.c.h.bf16 %v692
        %v778 = vunpack.c.l.bf16 %v503
        %780 = vset.pattern.permute.xlu0 0
        %781 = vperm.xlu0 %780, %v776
        %v782 = vpop.permute.xlu0 %781
        %785 = vset.pattern.permute.xlu0 0
        %786 = vperm.xlu0 %785, %v777
        %v787 = vpop.permute.xlu0 %786
        %v789 = vlaneseq
        %v790 = vshrl.u32 %v789, 7
        %v791 = vsub.s32 0, %v790
        %v792 = vrot.slane %v778, %v791
        %v793 = vmul.f32 %v782, %v792
        %v794 = vmul.f32 %v787, %v792
        %v795 = vadd.f32 %v774, %v793
        %v796 = vadd.f32 %v775, %v794
        %v797 = vunpack.c.l.bf16 %v693
        %v798 = vunpack.c.h.bf16 %v693
        %v799 = vunpack.c.l.bf16 %v504
        %801 = vset.pattern.permute.xlu0 0
        %802 = vperm.xlu0 %801, %v797
        %v803 = vpop.permute.xlu0 %802
        %806 = vset.pattern.permute.xlu0 0
        %807 = vperm.xlu0 %806, %v798
        %v808 = vpop.permute.xlu0 %807
        %v810 = vlaneseq
        %v811 = vshrl.u32 %v810, 7
        %v812 = vsub.s32 0, %v811
        %v813 = vrot.slane %v799, %v812
        %v814 = vmul.f32 %v803, %v813
        %v815 = vmul.f32 %v808, %v813
        %v816 = vadd.f32 %v795, %v814
        %v817 = vadd.f32 %v796, %v815
        %v818 = vpack.c.bf16 %v556, %v555
        %819 = vmatprep.subr.bf16.mxu0 0
        %820 = vmatpush1.bf16.msra.mxu0 %v818
        %821 = vmatprep.subr.bf16.mxu0 0
        %822 = vmatpush1.bf16.msra.mxu0 0
        %823 = vmatprep.subr.bf16.mxu0 0
        %824 = vmatpush1.bf16.msra.mxu0 0
        %825 = vmatprep.subr.bf16.mxu0 0
        %826 = vmatpush1.bf16.msra.mxu0 0
        %827 = vmatprep.subr.bf16.mxu0 0
        %828 = vmatpush1.bf16.msra.mxu0 0
        %829 = vmatprep.subr.bf16.mxu0 0
        %830 = vmatpush1.bf16.msra.mxu0 0
        %831 = vmatprep.subr.bf16.mxu0 0
        %832 = vmatpush1.bf16.msra.mxu0 0
        %833 = vmatprep.subr.bf16.mxu0 0
        %834 = vmatpush1.bf16.msra.mxu0 0
        %835 = vmatprep.subr.bf16.mxu0 0
        %836 = vmatpush1.bf16.msra.mxu0 0
        %837 = vmatprep.subr.bf16.mxu0 0
        %838 = vmatpush1.bf16.msra.mxu0 0
        %839 = vmatprep.subr.bf16.mxu0 0
        %840 = vmatpush1.bf16.msra.mxu0 0
        %841 = vmatprep.subr.bf16.mxu0 0
        %842 = vmatpush1.bf16.msra.mxu0 0
        %843 = vmatprep.subr.bf16.mxu0 0
        %844 = vmatpush1.bf16.msra.mxu0 0
        %845 = vmatprep.subr.bf16.mxu0 0
        %846 = vmatpush1.bf16.msra.mxu0 0
        %847 = vmatprep.subr.bf16.mxu0 0
        %848 = vmatpush1.bf16.msra.mxu0 0
        %849 = vmatprep.subr.bf16.mxu0 0
        %850 = vmatpush1.bf16.msra.mxu0 0
        %851 = vmatprep.mubr.bf16.mxu0 0
        %852 = vmatmul.mubr.bf16.gmra.mrb[0].mxu0 %v590
        %v853 = vpop.f32.mrb[0].mxu0
        %v854 = vadd.f32 0.0, %v853
        %v855 = vpop.f32.mrb[0].mxu0
        %v856 = vpop.f32.mrb[0].mxu0
        %v857 = vadd.f32 0.0, %v856
        %v858 = vpop.f32.mrb[0].mxu0
        %859 = vmatprep.mubr.bf16.mxu0 0
        %860 = vmatmul.mubr.bf16.gmra.mrb[0].mxu0 %v593
        %v861 = vpop.f32.mrb[0].mxu0
        %v862 = vadd.f32 0.0, %v861
        %v863 = vpop.f32.mrb[0].mxu0
        %v864 = vpop.f32.mrb[0].mxu0
        %v865 = vadd.f32 0.0, %v864
        %v866 = vpop.f32.mrb[0].mxu0
        %867 = vmatprep.mubr.bf16.mxu0 0
        %868 = vmatmul.mubr.bf16.gmra.mrb[0].mxu0 %v596
        %v869 = vpop.f32.mrb[0].mxu0
        %v870 = vadd.f32 0.0, %v869
        %v871 = vpop.f32.mrb[0].mxu0
        %v872 = vpop.f32.mrb[0].mxu0
        %v873 = vadd.f32 0.0, %v872
        %v874 = vpop.f32.mrb[0].mxu0
        %875 = vmatprep.mubr.bf16.mxu0 0
        %876 = vmatmul.mubr.bf16.gmra.mrb[0].mxu0 %v599
        %v877 = vpop.f32.mrb[0].mxu0
        %v878 = vadd.f32 0.0, %v877
        %v879 = vpop.f32.mrb[0].mxu0
        %v880 = vpop.f32.mrb[0].mxu0
        %v881 = vadd.f32 0.0, %v880
        %v882 = vpop.f32.mrb[0].mxu0
        %883 = vmatprep.mubr.bf16.mxu0 0
        %884 = vmatmul.mubr.bf16.gmra.mrb[0].mxu0 %v602
        %v885 = vpop.f32.mrb[0].mxu0
        %v886 = vadd.f32 0.0, %v885
        %v887 = vpop.f32.mrb[0].mxu0
        %v888 = vpop.f32.mrb[0].mxu0
        %v889 = vadd.f32 0.0, %v888
        %v890 = vpop.f32.mrb[0].mxu0
        %891 = vmatprep.mubr.bf16.mxu0 0
        %892 = vmatmul.mubr.bf16.gmra.mrb[0].mxu0 %v605
        %v893 = vpop.f32.mrb[0].mxu0
        %v894 = vadd.f32 0.0, %v893
        %v895 = vpop.f32.mrb[0].mxu0
        %v896 = vpop.f32.mrb[0].mxu0
        %v897 = vadd.f32 0.0, %v896
        %v898 = vpop.f32.mrb[0].mxu0
        %899 = vdwg.mxu0
        %v900 = vpack.c.bf16 %v857, %v854
        %v901 = vpack.c.bf16 %v865, %v862
        %v902 = vpack.c.bf16 %v873, %v870
        %v903 = vpack.c.bf16 %v881, %v878
        %v904 = vpack.c.bf16 %v889, %v886
        %v905 = vpack.c.bf16 %v897, %v894
        %v910 = vunpack.c.l.b16 %v509
        %v911 = vunpack.c.l.b16 %v510
        %v912 = vunpack.c.l.b16 %v511
        %v913 = vunpack.c.l.b16 %v512
        %v914 = vpack.c.b16 %v911, %v910
        %v915 = vpack.c.b16 %v913, %v912
        %vm918 = vcmask 261120
        %v920 = vsel %vm918, %v901, 0
        %922 = vmatprep.subr.bf16.mxu0 0
        %923 = vmatpush1.bf16.msra.mxu0 %v914
        %924 = vmatprep.subr.bf16.mxu0 0
        %925 = vmatpush1.bf16.msra.mxu0 %v915
        %926 = vmatprep.subr.bf16.mxu0 0
        %927 = vmatpush1.bf16.msra.mxu0 0
        %928 = vmatprep.subr.bf16.mxu0 0
        %929 = vmatpush1.bf16.msra.mxu0 0
        %930 = vmatprep.subr.bf16.mxu0 0
        %931 = vmatpush1.bf16.msra.mxu0 0
        %932 = vmatprep.subr.bf16.mxu0 0
        %933 = vmatpush1.bf16.msra.mxu0 0
        %934 = vmatprep.subr.bf16.mxu0 0
        %935 = vmatpush1.bf16.msra.mxu0 0
        %936 = vmatprep.subr.bf16.mxu0 0
        %937 = vmatpush1.bf16.msra.mxu0 0
        %938 = vmatprep.subr.bf16.mxu0 0
        %939 = vmatpush1.bf16.msra.mxu0 0
        %940 = vmatprep.subr.bf16.mxu0 0
        %941 = vmatpush1.bf16.msra.mxu0 0
        %942 = vmatprep.subr.bf16.mxu0 0
        %943 = vmatpush1.bf16.msra.mxu0 0
        %944 = vmatprep.subr.bf16.mxu0 0
        %945 = vmatpush1.bf16.msra.mxu0 0
        %946 = vmatprep.subr.bf16.mxu0 0
        %947 = vmatpush1.bf16.msra.mxu0 0
        %948 = vmatprep.subr.bf16.mxu0 0
        %949 = vmatpush1.bf16.msra.mxu0 0
        %950 = vmatprep.subr.bf16.mxu0 0
        %951 = vmatpush1.bf16.msra.mxu0 0
        %952 = vmatprep.subr.bf16.mxu0 0
        %953 = vmatpush1.bf16.msra.mxu0 0
        %954 = vmatprep.mubr.bf16.mxu0 0
        %955 = vmatmul.mubr.bf16.gmra.mrb[0].mxu0 %v920
        %v956 = vpop.f32.mrb[0].mxu0
        %v957 = vadd.f32 0.0, %v956
        %v958 = vpop.f32.mrb[0].mxu0
        %v959 = vpop.f32.mrb[0].mxu0
        %v960 = vadd.f32 0.0, %v959
        %v961 = vpop.f32.mrb[0].mxu0
        %962 = vdwg.mxu0
        %v967 = vunpack.c.l.b16 %v505
        %v968 = vunpack.c.l.b16 %v506
        %v969 = vunpack.c.l.b16 %v507
        %v970 = vunpack.c.l.b16 %v508
        %v971 = vpack.c.b16 %v968, %v967
        %v972 = vpack.c.b16 %v970, %v969
        %v976 = vsel %vm918, %v900, 0
        %978 = vmatprep.subr.bf16.mxu0 0
        %979 = vmatpush1.bf16.msra.mxu0 %v971
        %980 = vmatprep.subr.bf16.mxu0 0
        %981 = vmatpush1.bf16.msra.mxu0 %v972
        %982 = vmatprep.subr.bf16.mxu0 0
        %983 = vmatpush1.bf16.msra.mxu0 0
        %984 = vmatprep.subr.bf16.mxu0 0
        %985 = vmatpush1.bf16.msra.mxu0 0
        %986 = vmatprep.subr.bf16.mxu0 0
        %987 = vmatpush1.bf16.msra.mxu0 0
        %988 = vmatprep.subr.bf16.mxu0 0
        %989 = vmatpush1.bf16.msra.mxu0 0
        %990 = vmatprep.subr.bf16.mxu0 0
        %991 = vmatpush1.bf16.msra.mxu0 0
        %992 = vmatprep.subr.bf16.mxu0 0
        %993 = vmatpush1.bf16.msra.mxu0 0
        %994 = vmatprep.subr.bf16.mxu0 0
        %995 = vmatpush1.bf16.msra.mxu0 0
        %996 = vmatprep.subr.bf16.mxu0 0
        %997 = vmatpush1.bf16.msra.mxu0 0
        %998 = vmatprep.subr.bf16.mxu0 0
        %999 = vmatpush1.bf16.msra.mxu0 0
        %1000 = vmatprep.subr.bf16.mxu0 0
        %1001 = vmatpush1.bf16.msra.mxu0 0
        %1002 = vmatprep.subr.bf16.mxu0 0
        %1003 = vmatpush1.bf16.msra.mxu0 0
        %1004 = vmatprep.subr.bf16.mxu0 0
        %1005 = vmatpush1.bf16.msra.mxu0 0
        %1006 = vmatprep.subr.bf16.mxu0 0
        %1007 = vmatpush1.bf16.msra.mxu0 0
        %1008 = vmatprep.subr.bf16.mxu0 0
        %1009 = vmatpush1.bf16.msra.mxu0 0
        %1010 = vmatprep.mubr.bf16.mxu0 0
        %1011 = vmatmul.mubr.bf16.gmra.mrb[0].mxu0 %v976
        %v1012 = vpop.f32.mrb[0].mxu0
        %v1013 = vadd.f32 %v957, %v1012
        %v1014 = vpop.f32.mrb[0].mxu0
        %v1015 = vpop.f32.mrb[0].mxu0
        %v1016 = vadd.f32 %v960, %v1015
        %v1017 = vpop.f32.mrb[0].mxu0
        %1018 = vdwg.mxu0
        %v1023 = vunpack.c.l.b16 %v513
        %v1024 = vunpack.c.l.b16 %v514
        %v1025 = vunpack.c.l.b16 %v515
        %v1026 = vunpack.c.l.b16 %v516
        %v1027 = vpack.c.b16 %v1024, %v1023
        %v1028 = vpack.c.b16 %v1026, %v1025
        %v1032 = vsel %vm918, %v902, 0
        %1034 = vmatprep.subr.bf16.mxu0 0
        %1035 = vmatpush1.bf16.msra.mxu0 %v1027
        %1036 = vmatprep.subr.bf16.mxu0 0
        %1037 = vmatpush1.bf16.msra.mxu0 %v1028
        %1038 = vmatprep.subr.bf16.mxu0 0
        %1039 = vmatpush1.bf16.msra.mxu0 0
        %1040 = vmatprep.subr.bf16.mxu0 0
        %1041 = vmatpush1.bf16.msra.mxu0 0
        %1042 = vmatprep.subr.bf16.mxu0 0
        %1043 = vmatpush1.bf16.msra.mxu0 0
        %1044 = vmatprep.subr.bf16.mxu0 0
        %1045 = vmatpush1.bf16.msra.mxu0 0
        %1046 = vmatprep.subr.bf16.mxu0 0
        %1047 = vmatpush1.bf16.msra.mxu0 0
        %1048 = vmatprep.subr.bf16.mxu0 0
        %1049 = vmatpush1.bf16.msra.mxu0 0
        %1050 = vmatprep.subr.bf16.mxu0 0
        %1051 = vmatpush1.bf16.msra.mxu0 0
        %1052 = vmatprep.subr.bf16.mxu0 0
        %1053 = vmatpush1.bf16.msra.mxu0 0
        %1054 = vmatprep.subr.bf16.mxu0 0
        %1055 = vmatpush1.bf16.msra.mxu0 0
        %1056 = vmatprep.subr.bf16.mxu0 0
        %1057 = vmatpush1.bf16.msra.mxu0 0
        %1058 = vmatprep.subr.bf16.mxu0 0
        %1059 = vmatpush1.bf16.msra.mxu0 0
        %1060 = vmatprep.subr.bf16.mxu0 0
        %1061 = vmatpush1.bf16.msra.mxu0 0
        %1062 = vmatprep.subr.bf16.mxu0 0
        %1063 = vmatpush1.bf16.msra.mxu0 0
        %1064 = vmatprep.subr.bf16.mxu0 0
        %1065 = vmatpush1.bf16.msra.mxu0 0
        %1066 = vmatprep.mubr.bf16.mxu0 0
        %1067 = vmatmul.mubr.bf16.gmra.mrb[0].mxu0 %v1032
        %v1068 = vpop.f32.mrb[0].mxu0
        %v1069 = vadd.f32 0.0, %v1068
        %v1070 = vpop.f32.mrb[0].mxu0
        %v1071 = vpop.f32.mrb[0].mxu0
        %v1072 = vadd.f32 0.0, %v1071
        %v1073 = vpop.f32.mrb[0].mxu0
        %1074 = vdwg.mxu0
        %v1075 = vadd.f32 %v1013, %v1069
        %v1076 = vadd.f32 %v1016, %v1072
        %v1081 = vunpack.c.l.b16 %v517
        %v1082 = vunpack.c.l.b16 %v518
        %v1083 = vunpack.c.l.b16 %v519
        %v1084 = vunpack.c.l.b16 %v520
        %v1085 = vpack.c.b16 %v1082, %v1081
        %v1086 = vpack.c.b16 %v1084, %v1083
        %v1090 = vsel %vm918, %v903, 0
        %1092 = vmatprep.subr.bf16.mxu0 0
        %1093 = vmatpush1.bf16.msra.mxu0 %v1085
        %1094 = vmatprep.subr.bf16.mxu0 0
        %1095 = vmatpush1.bf16.msra.mxu0 %v1086
        %1096 = vmatprep.subr.bf16.mxu0 0
        %1097 = vmatpush1.bf16.msra.mxu0 0
        %1098 = vmatprep.subr.bf16.mxu0 0
        %1099 = vmatpush1.bf16.msra.mxu0 0
        %1100 = vmatprep.subr.bf16.mxu0 0
        %1101 = vmatpush1.bf16.msra.mxu0 0
        %1102 = vmatprep.subr.bf16.mxu0 0
        %1103 = vmatpush1.bf16.msra.mxu0 0
        %1104 = vmatprep.subr.bf16.mxu0 0
        %1105 = vmatpush1.bf16.msra.mxu0 0
        %1106 = vmatprep.subr.bf16.mxu0 0
        %1107 = vmatpush1.bf16.msra.mxu0 0
        %1108 = vmatprep.subr.bf16.mxu0 0
        %1109 = vmatpush1.bf16.msra.mxu0 0
        %1110 = vmatprep.subr.bf16.mxu0 0
        %1111 = vmatpush1.bf16.msra.mxu0 0
        %1112 = vmatprep.subr.bf16.mxu0 0
        %1113 = vmatpush1.bf16.msra.mxu0 0
        %1114 = vmatprep.subr.bf16.mxu0 0
        %1115 = vmatpush1.bf16.msra.mxu0 0
        %1116 = vmatprep.subr.bf16.mxu0 0
        %1117 = vmatpush1.bf16.msra.mxu0 0
        %1118 = vmatprep.subr.bf16.mxu0 0
        %1119 = vmatpush1.bf16.msra.mxu0 0
        %1120 = vmatprep.subr.bf16.mxu0 0
        %1121 = vmatpush1.bf16.msra.mxu0 0
        %1122 = vmatprep.subr.bf16.mxu0 0
        %1123 = vmatpush1.bf16.msra.mxu0 0
        %1124 = vmatprep.mubr.bf16.mxu0 0
        %1125 = vmatmul.mubr.bf16.gmra.mrb[0].mxu0 %v1090
        %v1126 = vpop.f32.mrb[0].mxu0
        %v1127 = vadd.f32 0.0, %v1126
        %v1128 = vpop.f32.mrb[0].mxu0
        %v1129 = vpop.f32.mrb[0].mxu0
        %v1130 = vadd.f32 0.0, %v1129
        %v1131 = vpop.f32.mrb[0].mxu0
        %1132 = vdwg.mxu0
        %v1133 = vadd.f32 %v1075, %v1127
        %v1134 = vadd.f32 %v1076, %v1130
        %v1139 = vunpack.c.l.b16 %v521
        %v1140 = vunpack.c.l.b16 %v522
        %v1141 = vunpack.c.l.b16 %v523
        %v1142 = vunpack.c.l.b16 %v524
        %v1143 = vpack.c.b16 %v1140, %v1139
        %v1144 = vpack.c.b16 %v1142, %v1141
        %v1148 = vsel %vm918, %v904, 0
        %1150 = vmatprep.subr.bf16.mxu0 0
        %1151 = vmatpush1.bf16.msra.mxu0 %v1143
        %1152 = vmatprep.subr.bf16.mxu0 0
        %1153 = vmatpush1.bf16.msra.mxu0 %v1144
        %1154 = vmatprep.subr.bf16.mxu0 0
        %1155 = vmatpush1.bf16.msra.mxu0 0
        %1156 = vmatprep.subr.bf16.mxu0 0
        %1157 = vmatpush1.bf16.msra.mxu0 0
        %1158 = vmatprep.subr.bf16.mxu0 0
        %1159 = vmatpush1.bf16.msra.mxu0 0
        %1160 = vmatprep.subr.bf16.mxu0 0
        %1161 = vmatpush1.bf16.msra.mxu0 0
        %1162 = vmatprep.subr.bf16.mxu0 0
        %1163 = vmatpush1.bf16.msra.mxu0 0
        %1164 = vmatprep.subr.bf16.mxu0 0
        %1165 = vmatpush1.bf16.msra.mxu0 0
        %1166 = vmatprep.subr.bf16.mxu0 0
        %1167 = vmatpush1.bf16.msra.mxu0 0
        %1168 = vmatprep.subr.bf16.mxu0 0
        %1169 = vmatpush1.bf16.msra.mxu0 0
        %1170 = vmatprep.subr.bf16.mxu0 0
        %1171 = vmatpush1.bf16.msra.mxu0 0
        %1172 = vmatprep.subr.bf16.mxu0 0
        %1173 = vmatpush1.bf16.msra.mxu0 0
        %1174 = vmatprep.subr.bf16.mxu0 0
        %1175 = vmatpush1.bf16.msra.mxu0 0
        %1176 = vmatprep.subr.bf16.mxu0 0
        %1177 = vmatpush1.bf16.msra.mxu0 0
        %1178 = vmatprep.subr.bf16.mxu0 0
        %1179 = vmatpush1.bf16.msra.mxu0 0
        %1180 = vmatprep.subr.bf16.mxu0 0
        %1181 = vmatpush1.bf16.msra.mxu0 0
        %1182 = vmatprep.mubr.bf16.mxu0 0
        %1183 = vmatmul.mubr.bf16.gmra.mrb[0].mxu0 %v1148
        %v1184 = vpop.f32.mrb[0].mxu0
        %v1185 = vadd.f32 0.0, %v1184
        %v1186 = vpop.f32.mrb[0].mxu0
        %v1187 = vpop.f32.mrb[0].mxu0
        %v1188 = vadd.f32 0.0, %v1187
        %v1189 = vpop.f32.mrb[0].mxu0
        %1190 = vdwg.mxu0
        %v1191 = vadd.f32 %v1133, %v1185
        %v1192 = vadd.f32 %v1134, %v1188
        %v1197 = vunpack.c.l.b16 %v525
        %v1198 = vunpack.c.l.b16 %v526
        %v1199 = vunpack.c.l.b16 %v527
        %v1200 = vunpack.c.l.b16 %v528
        %v1201 = vpack.c.b16 %v1198, %v1197
        %v1202 = vpack.c.b16 %v1200, %v1199
        %v1206 = vsel %vm918, %v905, 0
        %1208 = vmatprep.subr.bf16.mxu0 0
        %1209 = vmatpush1.bf16.msra.mxu0 %v1201
        %1210 = vmatprep.subr.bf16.mxu0 0
        %1211 = vmatpush1.bf16.msra.mxu0 %v1202
        %1212 = vmatprep.subr.bf16.mxu0 0
        %1213 = vmatpush1.bf16.msra.mxu0 0
        %1214 = vmatprep.subr.bf16.mxu0 0
        %1215 = vmatpush1.bf16.msra.mxu0 0
        %1216 = vmatprep.subr.bf16.mxu0 0
        %1217 = vmatpush1.bf16.msra.mxu0 0
        %1218 = vmatprep.subr.bf16.mxu0 0
        %1219 = vmatpush1.bf16.msra.mxu0 0
        %1220 = vmatprep.subr.bf16.mxu0 0
        %1221 = vmatpush1.bf16.msra.mxu0 0
        %1222 = vmatprep.subr.bf16.mxu0 0
        %1223 = vmatpush1.bf16.msra.mxu0 0
        %1224 = vmatprep.subr.bf16.mxu0 0
        %1225 = vmatpush1.bf16.msra.mxu0 0
        %1226 = vmatprep.subr.bf16.mxu0 0
        %1227 = vmatpush1.bf16.msra.mxu0 0
        %1228 = vmatprep.subr.bf16.mxu0 0
        %1229 = vmatpush1.bf16.msra.mxu0 0
        %1230 = vmatprep.subr.bf16.mxu0 0
        %1231 = vmatpush1.bf16.msra.mxu0 0
        %1232 = vmatprep.subr.bf16.mxu0 0
        %1233 = vmatpush1.bf16.msra.mxu0 0
        %1234 = vmatprep.subr.bf16.mxu0 0
        %1235 = vmatpush1.bf16.msra.mxu0 0
        %1236 = vmatprep.subr.bf16.mxu0 0
        %1237 = vmatpush1.bf16.msra.mxu0 0
        %1238 = vmatprep.subr.bf16.mxu0 0
        %1239 = vmatpush1.bf16.msra.mxu0 0
        %1240 = vmatprep.mubr.bf16.mxu0 0
        %1241 = vmatmul.mubr.bf16.gmra.mrb[0].mxu0 %v1206
        %v1242 = vpop.f32.mrb[0].mxu0
        %v1243 = vadd.f32 0.0, %v1242
        %v1244 = vpop.f32.mrb[0].mxu0
        %v1245 = vpop.f32.mrb[0].mxu0
        %v1246 = vadd.f32 0.0, %v1245
        %v1247 = vpop.f32.mrb[0].mxu0
        %1248 = vdwg.mxu0
        %v1249 = vadd.f32 %v1191, %v1243
        %v1250 = vadd.f32 %v1192, %v1246
        %v1251 = vadd.f32 %v816, %v1249
        %v1252 = vadd.f32 %v817, %v1250
        %v1254 = vlaneseq
        %v1255 = vshrl.u32 %v1254, 7
        %v1256 = vsub.s32 0, %v1255
        %v1257 = vrot.slane %v553, %v1256
        %v1259 = vadd.f32 %v1251, %v1257
        %v1260 = vadd.f32 %v1252, %v1257
        %v1261 = vxor.u32 %v1259, 2147483648
        %v1262 = vxor.u32 %v1260, 2147483648
        %v1263 = vmul.f32 %v1261, 1.442695
        %v1264 = vpow.pop %v1263
        %v1265 = vmul.f32 %v1262, 1.442695
        %v1266 = vpow.pop %v1265
        %v1267 = vadd.f32 %v1264, 1.0
        %v1268 = vadd.f32 %v1266, 1.0
        %v1269 = vrcp.pop %v1267
        %v1270 = vmul.f32 1.0, %v1269
        %v1271 = vrcp.pop %v1268
        %v1272 = vmul.f32 1.0, %v1271
        %v1273 = vmul.f32 %v1270, %v555
        %v1274 = vmul.f32 %v1272, %v556
        %v1275 = vpack.c.bf16 %v1274, %v1273
        %1276 = vmatprep.subr.bf16.mxu0 0
        %1277 = vmatpush1.bf16.msra.mxu0 %v1275
        %1278 = vmatprep.subr.bf16.mxu0 0
        %1279 = vmatpush1.bf16.msra.mxu0 0
        %1280 = vmatprep.subr.bf16.mxu0 0
        %1281 = vmatpush1.bf16.msra.mxu0 0
        %1282 = vmatprep.subr.bf16.mxu0 0
        %1283 = vmatpush1.bf16.msra.mxu0 0
        %1284 = vmatprep.subr.bf16.mxu0 0
        %1285 = vmatpush1.bf16.msra.mxu0 0
        %1286 = vmatprep.subr.bf16.mxu0 0
        %1287 = vmatpush1.bf16.msra.mxu0 0
        %1288 = vmatprep.subr.bf16.mxu0 0
        %1289 = vmatpush1.bf16.msra.mxu0 0
        %1290 = vmatprep.subr.bf16.mxu0 0
        %1291 = vmatpush1.bf16.msra.mxu0 0
        %1292 = vmatprep.subr.bf16.mxu0 0
        %1293 = vmatpush1.bf16.msra.mxu0 0
        %1294 = vmatprep.subr.bf16.mxu0 0
        %1295 = vmatpush1.bf16.msra.mxu0 0
        %1296 = vmatprep.subr.bf16.mxu0 0
        %1297 = vmatpush1.bf16.msra.mxu0 0
        %1298 = vmatprep.subr.bf16.mxu0 0
        %1299 = vmatpush1.bf16.msra.mxu0 0
        %1300 = vmatprep.subr.bf16.mxu0 0
        %1301 = vmatpush1.bf16.msra.mxu0 0
        %1302 = vmatprep.subr.bf16.mxu0 0
        %1303 = vmatpush1.bf16.msra.mxu0 0
        %1304 = vmatprep.subr.bf16.mxu0 0
        %1305 = vmatpush1.bf16.msra.mxu0 0
        %1306 = vmatprep.subr.bf16.mxu0 0
        %1307 = vmatpush1.bf16.msra.mxu0 0
        %1308 = vmatprep.mubr.bf16.mxu0 0
        %1309 = vmatmul.mubr.bf16.gmra.mrb[0].mxu0 %v590
        %v1310 = vpop.f32.mrb[0].mxu0
        %v1311 = vadd.f32 0.0, %v1310
        %v1312 = vpop.f32.mrb[0].mxu0
        %v1313 = vpop.f32.mrb[0].mxu0
        %v1314 = vadd.f32 0.0, %v1313
        %v1315 = vpop.f32.mrb[0].mxu0
        %1316 = vmatprep.mubr.bf16.mxu0 0
        %1317 = vmatmul.mubr.bf16.gmra.mrb[0].mxu0 %v593
        %v1318 = vpop.f32.mrb[0].mxu0
        %v1319 = vadd.f32 0.0, %v1318
        %v1320 = vpop.f32.mrb[0].mxu0
        %v1321 = vpop.f32.mrb[0].mxu0
        %v1322 = vadd.f32 0.0, %v1321
        %v1323 = vpop.f32.mrb[0].mxu0
        %1324 = vmatprep.mubr.bf16.mxu0 0
        %1325 = vmatmul.mubr.bf16.gmra.mrb[0].mxu0 %v596
        %v1326 = vpop.f32.mrb[0].mxu0
        %v1327 = vadd.f32 0.0, %v1326
        %v1328 = vpop.f32.mrb[0].mxu0
        %v1329 = vpop.f32.mrb[0].mxu0
        %v1330 = vadd.f32 0.0, %v1329
        %v1331 = vpop.f32.mrb[0].mxu0
        %1332 = vmatprep.mubr.bf16.mxu0 0
        %1333 = vmatmul.mubr.bf16.gmra.mrb[0].mxu0 %v599
        %v1334 = vpop.f32.mrb[0].mxu0
        %v1335 = vadd.f32 0.0, %v1334
        %v1336 = vpop.f32.mrb[0].mxu0
        %v1337 = vpop.f32.mrb[0].mxu0
        %v1338 = vadd.f32 0.0, %v1337
        %v1339 = vpop.f32.mrb[0].mxu0
        %1340 = vmatprep.mubr.bf16.mxu0 0
        %1341 = vmatmul.mubr.bf16.gmra.mrb[0].mxu0 %v602
        %v1342 = vpop.f32.mrb[0].mxu0
        %v1343 = vadd.f32 0.0, %v1342
        %v1344 = vpop.f32.mrb[0].mxu0
        %v1345 = vpop.f32.mrb[0].mxu0
        %v1346 = vadd.f32 0.0, %v1345
        %v1347 = vpop.f32.mrb[0].mxu0
        %1348 = vmatprep.mubr.bf16.mxu0 0
        %1349 = vmatmul.mubr.bf16.gmra.mrb[0].mxu0 %v605
        %v1350 = vpop.f32.mrb[0].mxu0
        %v1351 = vadd.f32 0.0, %v1350
        %v1352 = vpop.f32.mrb[0].mxu0
        %v1353 = vpop.f32.mrb[0].mxu0
        %v1354 = vadd.f32 0.0, %v1353
        %v1355 = vpop.f32.mrb[0].mxu0
        %1356 = vdwg.mxu0
        %v1357 = vpack.c.bf16 %v1314, %v1311
        %v1358 = vpack.c.bf16 %v1322, %v1319
        %v1359 = vpack.c.bf16 %v1330, %v1327
        %v1360 = vpack.c.bf16 %v1338, %v1335
        %v1361 = vpack.c.bf16 %v1346, %v1343
        %v1362 = vpack.c.bf16 %v1354, %v1351
        %v1367 = vunpack.c.l.b16 %v533
        %v1368 = vunpack.c.l.b16 %v534
        %v1369 = vunpack.c.l.b16 %v535
        %v1370 = vunpack.c.l.b16 %v536
        %v1371 = vpack.c.b16 %v1368, %v1367
        %v1372 = vpack.c.b16 %v1370, %v1369
        %v1376 = vsel %vm918, %v1358, 0
        %1378 = vmatprep.subr.bf16.mxu0 0
        %1379 = vmatpush1.bf16.msra.mxu0 %v1371
        %1380 = vmatprep.subr.bf16.mxu0 0
        %1381 = vmatpush1.bf16.msra.mxu0 %v1372
        %1382 = vmatprep.subr.bf16.mxu0 0
        %1383 = vmatpush1.bf16.msra.mxu0 0
        %1384 = vmatprep.subr.bf16.mxu0 0
        %1385 = vmatpush1.bf16.msra.mxu0 0
        %1386 = vmatprep.subr.bf16.mxu0 0
        %1387 = vmatpush1.bf16.msra.mxu0 0
        %1388 = vmatprep.subr.bf16.mxu0 0
        %1389 = vmatpush1.bf16.msra.mxu0 0
        %1390 = vmatprep.subr.bf16.mxu0 0
        %1391 = vmatpush1.bf16.msra.mxu0 0
        %1392 = vmatprep.subr.bf16.mxu0 0
        %1393 = vmatpush1.bf16.msra.mxu0 0
        %1394 = vmatprep.subr.bf16.mxu0 0
        %1395 = vmatpush1.bf16.msra.mxu0 0
        %1396 = vmatprep.subr.bf16.mxu0 0
        %1397 = vmatpush1.bf16.msra.mxu0 0
        %1398 = vmatprep.subr.bf16.mxu0 0
        %1399 = vmatpush1.bf16.msra.mxu0 0
        %1400 = vmatprep.subr.bf16.mxu0 0
        %1401 = vmatpush1.bf16.msra.mxu0 0
        %1402 = vmatprep.subr.bf16.mxu0 0
        %1403 = vmatpush1.bf16.msra.mxu0 0
        %1404 = vmatprep.subr.bf16.mxu0 0
        %1405 = vmatpush1.bf16.msra.mxu0 0
        %1406 = vmatprep.subr.bf16.mxu0 0
        %1407 = vmatpush1.bf16.msra.mxu0 0
        %1408 = vmatprep.subr.bf16.mxu0 0
        %1409 = vmatpush1.bf16.msra.mxu0 0
        %1410 = vmatprep.mubr.bf16.mxu0 0
        %1411 = vmatmul.mubr.bf16.gmra.mrb[0].mxu0 %v1376
        %v1412 = vpop.f32.mrb[0].mxu0
        %v1413 = vadd.f32 0.0, %v1412
        %v1414 = vpop.f32.mrb[0].mxu0
        %v1415 = vpop.f32.mrb[0].mxu0
        %v1416 = vadd.f32 0.0, %v1415
        %v1417 = vpop.f32.mrb[0].mxu0
        %1418 = vdwg.mxu0
        %v1423 = vunpack.c.l.b16 %v529
        %v1424 = vunpack.c.l.b16 %v530
        %v1425 = vunpack.c.l.b16 %v531
        %v1426 = vunpack.c.l.b16 %v532
        %v1427 = vpack.c.b16 %v1424, %v1423
        %v1428 = vpack.c.b16 %v1426, %v1425
        %v1432 = vsel %vm918, %v1357, 0
        %1434 = vmatprep.subr.bf16.mxu0 0
        %1435 = vmatpush1.bf16.msra.mxu0 %v1427
        %1436 = vmatprep.subr.bf16.mxu0 0
        %1437 = vmatpush1.bf16.msra.mxu0 %v1428
        %1438 = vmatprep.subr.bf16.mxu0 0
        %1439 = vmatpush1.bf16.msra.mxu0 0
        %1440 = vmatprep.subr.bf16.mxu0 0
        %1441 = vmatpush1.bf16.msra.mxu0 0
        %1442 = vmatprep.subr.bf16.mxu0 0
        %1443 = vmatpush1.bf16.msra.mxu0 0
        %1444 = vmatprep.subr.bf16.mxu0 0
        %1445 = vmatpush1.bf16.msra.mxu0 0
        %1446 = vmatprep.subr.bf16.mxu0 0
        %1447 = vmatpush1.bf16.msra.mxu0 0
        %1448 = vmatprep.subr.bf16.mxu0 0
        %1449 = vmatpush1.bf16.msra.mxu0 0
        %1450 = vmatprep.subr.bf16.mxu0 0
        %1451 = vmatpush1.bf16.msra.mxu0 0
        %1452 = vmatprep.subr.bf16.mxu0 0
        %1453 = vmatpush1.bf16.msra.mxu0 0
        %1454 = vmatprep.subr.bf16.mxu0 0
        %1455 = vmatpush1.bf16.msra.mxu0 0
        %1456 = vmatprep.subr.bf16.mxu0 0
        %1457 = vmatpush1.bf16.msra.mxu0 0
        %1458 = vmatprep.subr.bf16.mxu0 0
        %1459 = vmatpush1.bf16.msra.mxu0 0
        %1460 = vmatprep.subr.bf16.mxu0 0
        %1461 = vmatpush1.bf16.msra.mxu0 0
        %1462 = vmatprep.subr.bf16.mxu0 0
        %1463 = vmatpush1.bf16.msra.mxu0 0
        %1464 = vmatprep.subr.bf16.mxu0 0
        %1465 = vmatpush1.bf16.msra.mxu0 0
        %1466 = vmatprep.mubr.bf16.mxu0 0
        %1467 = vmatmul.mubr.bf16.gmra.mrb[0].mxu0 %v1432
        %v1468 = vpop.f32.mrb[0].mxu0
        %v1469 = vadd.f32 %v1413, %v1468
        %v1470 = vpop.f32.mrb[0].mxu0
        %v1471 = vpop.f32.mrb[0].mxu0
        %v1472 = vadd.f32 %v1416, %v1471
        %v1473 = vpop.f32.mrb[0].mxu0
        %1474 = vdwg.mxu0
        %v1479 = vunpack.c.l.b16 %v537
        %v1480 = vunpack.c.l.b16 %v538
        %v1481 = vunpack.c.l.b16 %v539
        %v1482 = vunpack.c.l.b16 %v540
        %v1483 = vpack.c.b16 %v1480, %v1479
        %v1484 = vpack.c.b16 %v1482, %v1481
        %v1488 = vsel %vm918, %v1359, 0
        %1490 = vmatprep.subr.bf16.mxu0 0
        %1491 = vmatpush1.bf16.msra.mxu0 %v1483
        %1492 = vmatprep.subr.bf16.mxu0 0
        %1493 = vmatpush1.bf16.msra.mxu0 %v1484
        %1494 = vmatprep.subr.bf16.mxu0 0
        %1495 = vmatpush1.bf16.msra.mxu0 0
        %1496 = vmatprep.subr.bf16.mxu0 0
        %1497 = vmatpush1.bf16.msra.mxu0 0
        %1498 = vmatprep.subr.bf16.mxu0 0
        %1499 = vmatpush1.bf16.msra.mxu0 0
        %1500 = vmatprep.subr.bf16.mxu0 0
        %1501 = vmatpush1.bf16.msra.mxu0 0
        %1502 = vmatprep.subr.bf16.mxu0 0
        %1503 = vmatpush1.bf16.msra.mxu0 0
        %1504 = vmatprep.subr.bf16.mxu0 0
        %1505 = vmatpush1.bf16.msra.mxu0 0
        %1506 = vmatprep.subr.bf16.mxu0 0
        %1507 = vmatpush1.bf16.msra.mxu0 0
        %1508 = vmatprep.subr.bf16.mxu0 0
        %1509 = vmatpush1.bf16.msra.mxu0 0
        %1510 = vmatprep.subr.bf16.mxu0 0
        %1511 = vmatpush1.bf16.msra.mxu0 0
        %1512 = vmatprep.subr.bf16.mxu0 0
        %1513 = vmatpush1.bf16.msra.mxu0 0
        %1514 = vmatprep.subr.bf16.mxu0 0
        %1515 = vmatpush1.bf16.msra.mxu0 0
        %1516 = vmatprep.subr.bf16.mxu0 0
        %1517 = vmatpush1.bf16.msra.mxu0 0
        %1518 = vmatprep.subr.bf16.mxu0 0
        %1519 = vmatpush1.bf16.msra.mxu0 0
        %1520 = vmatprep.subr.bf16.mxu0 0
        %1521 = vmatpush1.bf16.msra.mxu0 0
        %1522 = vmatprep.mubr.bf16.mxu0 0
        %1523 = vmatmul.mubr.bf16.gmra.mrb[0].mxu0 %v1488
        %v1524 = vpop.f32.mrb[0].mxu0
        %v1525 = vadd.f32 0.0, %v1524
        %v1526 = vpop.f32.mrb[0].mxu0
        %v1527 = vpop.f32.mrb[0].mxu0
        %v1528 = vadd.f32 0.0, %v1527
        %v1529 = vpop.f32.mrb[0].mxu0
        %1530 = vdwg.mxu0
        %v1531 = vadd.f32 %v1469, %v1525
        %v1532 = vadd.f32 %v1472, %v1528
        %v1537 = vunpack.c.l.b16 %v541
        %v1538 = vunpack.c.l.b16 %v542
        %v1539 = vunpack.c.l.b16 %v543
        %v1540 = vunpack.c.l.b16 %v544
        %v1541 = vpack.c.b16 %v1538, %v1537
        %v1542 = vpack.c.b16 %v1540, %v1539
        %v1546 = vsel %vm918, %v1360, 0
        %1548 = vmatprep.subr.bf16.mxu0 0
        %1549 = vmatpush1.bf16.msra.mxu0 %v1541
        %1550 = vmatprep.subr.bf16.mxu0 0
        %1551 = vmatpush1.bf16.msra.mxu0 %v1542
        %1552 = vmatprep.subr.bf16.mxu0 0
        %1553 = vmatpush1.bf16.msra.mxu0 0
        %1554 = vmatprep.subr.bf16.mxu0 0
        %1555 = vmatpush1.bf16.msra.mxu0 0
        %1556 = vmatprep.subr.bf16.mxu0 0
        %1557 = vmatpush1.bf16.msra.mxu0 0
        %1558 = vmatprep.subr.bf16.mxu0 0
        %1559 = vmatpush1.bf16.msra.mxu0 0
        %1560 = vmatprep.subr.bf16.mxu0 0
        %1561 = vmatpush1.bf16.msra.mxu0 0
        %1562 = vmatprep.subr.bf16.mxu0 0
        %1563 = vmatpush1.bf16.msra.mxu0 0
        %1564 = vmatprep.subr.bf16.mxu0 0
        %1565 = vmatpush1.bf16.msra.mxu0 0
        %1566 = vmatprep.subr.bf16.mxu0 0
        %1567 = vmatpush1.bf16.msra.mxu0 0
        %1568 = vmatprep.subr.bf16.mxu0 0
        %1569 = vmatpush1.bf16.msra.mxu0 0
        %1570 = vmatprep.subr.bf16.mxu0 0
        %1571 = vmatpush1.bf16.msra.mxu0 0
        %1572 = vmatprep.subr.bf16.mxu0 0
        %1573 = vmatpush1.bf16.msra.mxu0 0
        %1574 = vmatprep.subr.bf16.mxu0 0
        %1575 = vmatpush1.bf16.msra.mxu0 0
        %1576 = vmatprep.subr.bf16.mxu0 0
        %1577 = vmatpush1.bf16.msra.mxu0 0
        %1578 = vmatprep.subr.bf16.mxu0 0
        %1579 = vmatpush1.bf16.msra.mxu0 0
        %1580 = vmatprep.mubr.bf16.mxu0 0
        %1581 = vmatmul.mubr.bf16.gmra.mrb[0].mxu0 %v1546
        %v1582 = vpop.f32.mrb[0].mxu0
        %v1583 = vadd.f32 0.0, %v1582
        %v1584 = vpop.f32.mrb[0].mxu0
        %v1585 = vpop.f32.mrb[0].mxu0
        %v1586 = vadd.f32 0.0, %v1585
        %v1587 = vpop.f32.mrb[0].mxu0
        %1588 = vdwg.mxu0
        %v1589 = vadd.f32 %v1531, %v1583
        %v1590 = vadd.f32 %v1532, %v1586
        %v1595 = vunpack.c.l.b16 %v545
        %v1596 = vunpack.c.l.b16 %v546
        %v1597 = vunpack.c.l.b16 %v547
        %v1598 = vunpack.c.l.b16 %v548
        %v1599 = vpack.c.b16 %v1596, %v1595
        %v1600 = vpack.c.b16 %v1598, %v1597
        %v1604 = vsel %vm918, %v1361, 0
        %1606 = vmatprep.subr.bf16.mxu0 0
        %1607 = vmatpush1.bf16.msra.mxu0 %v1599
        %1608 = vmatprep.subr.bf16.mxu0 0
        %1609 = vmatpush1.bf16.msra.mxu0 %v1600
        %1610 = vmatprep.subr.bf16.mxu0 0
        %1611 = vmatpush1.bf16.msra.mxu0 0
        %1612 = vmatprep.subr.bf16.mxu0 0
        %1613 = vmatpush1.bf16.msra.mxu0 0
        %1614 = vmatprep.subr.bf16.mxu0 0
        %1615 = vmatpush1.bf16.msra.mxu0 0
        %1616 = vmatprep.subr.bf16.mxu0 0
        %1617 = vmatpush1.bf16.msra.mxu0 0
        %1618 = vmatprep.subr.bf16.mxu0 0
        %1619 = vmatpush1.bf16.msra.mxu0 0
        %1620 = vmatprep.subr.bf16.mxu0 0
        %1621 = vmatpush1.bf16.msra.mxu0 0
        %1622 = vmatprep.subr.bf16.mxu0 0
        %1623 = vmatpush1.bf16.msra.mxu0 0
        %1624 = vmatprep.subr.bf16.mxu0 0
        %1625 = vmatpush1.bf16.msra.mxu0 0
        %1626 = vmatprep.subr.bf16.mxu0 0
        %1627 = vmatpush1.bf16.msra.mxu0 0
        %1628 = vmatprep.subr.bf16.mxu0 0
        %1629 = vmatpush1.bf16.msra.mxu0 0
        %1630 = vmatprep.subr.bf16.mxu0 0
        %1631 = vmatpush1.bf16.msra.mxu0 0
        %1632 = vmatprep.subr.bf16.mxu0 0
        %1633 = vmatpush1.bf16.msra.mxu0 0
        %1634 = vmatprep.subr.bf16.mxu0 0
        %1635 = vmatpush1.bf16.msra.mxu0 0
        %1636 = vmatprep.subr.bf16.mxu0 0
        %1637 = vmatpush1.bf16.msra.mxu0 0
        %1638 = vmatprep.mubr.bf16.mxu0 0
        %1639 = vmatmul.mubr.bf16.gmra.mrb[0].mxu0 %v1604
        %v1640 = vpop.f32.mrb[0].mxu0
        %v1641 = vadd.f32 0.0, %v1640
        %v1642 = vpop.f32.mrb[0].mxu0
        %v1643 = vpop.f32.mrb[0].mxu0
        %v1644 = vadd.f32 0.0, %v1643
        %v1645 = vpop.f32.mrb[0].mxu0
        %1646 = vdwg.mxu0
        %v1647 = vadd.f32 %v1589, %v1641
        %v1648 = vadd.f32 %v1590, %v1644
        %v1653 = vunpack.c.l.b16 %v549
        %v1654 = vunpack.c.l.b16 %v550
        %v1655 = vunpack.c.l.b16 %v551
        %v1656 = vunpack.c.l.b16 %v552
        %v1657 = vpack.c.b16 %v1654, %v1653
        %v1658 = vpack.c.b16 %v1656, %v1655
        %v1662 = vsel %vm918, %v1362, 0
        %1664 = vmatprep.subr.bf16.mxu0 0
        %1665 = vmatpush1.bf16.msra.mxu0 %v1657
        %1666 = vmatprep.subr.bf16.mxu0 0
        %1667 = vmatpush1.bf16.msra.mxu0 %v1658
        %1668 = vmatprep.subr.bf16.mxu0 0
        %1669 = vmatpush1.bf16.msra.mxu0 0
        %1670 = vmatprep.subr.bf16.mxu0 0
        %1671 = vmatpush1.bf16.msra.mxu0 0
        %1672 = vmatprep.subr.bf16.mxu0 0
        %1673 = vmatpush1.bf16.msra.mxu0 0
        %1674 = vmatprep.subr.bf16.mxu0 0
        %1675 = vmatpush1.bf16.msra.mxu0 0
        %1676 = vmatprep.subr.bf16.mxu0 0
        %1677 = vmatpush1.bf16.msra.mxu0 0
        %1678 = vmatprep.subr.bf16.mxu0 0
        %1679 = vmatpush1.bf16.msra.mxu0 0
        %1680 = vmatprep.subr.bf16.mxu0 0
        %1681 = vmatpush1.bf16.msra.mxu0 0
        %1682 = vmatprep.subr.bf16.mxu0 0
        %1683 = vmatpush1.bf16.msra.mxu0 0
        %1684 = vmatprep.subr.bf16.mxu0 0
        %1685 = vmatpush1.bf16.msra.mxu0 0
        %1686 = vmatprep.subr.bf16.mxu0 0
        %1687 = vmatpush1.bf16.msra.mxu0 0
        %1688 = vmatprep.subr.bf16.mxu0 0
        %1689 = vmatpush1.bf16.msra.mxu0 0
        %1690 = vmatprep.subr.bf16.mxu0 0
        %1691 = vmatpush1.bf16.msra.mxu0 0
        %1692 = vmatprep.subr.bf16.mxu0 0
        %1693 = vmatpush1.bf16.msra.mxu0 0
        %1694 = vmatprep.subr.bf16.mxu0 0
        %1695 = vmatpush1.bf16.msra.mxu0 0
        %1696 = vmatprep.mubr.bf16.mxu0 0
        %1697 = vmatmul.mubr.bf16.gmra.mrb[0].mxu0 %v1662
        %v1698 = vpop.f32.mrb[0].mxu0
        %v1699 = vadd.f32 0.0, %v1698
        %v1700 = vpop.f32.mrb[0].mxu0
        %v1701 = vpop.f32.mrb[0].mxu0
        %v1702 = vadd.f32 0.0, %v1701
        %v1703 = vpop.f32.mrb[0].mxu0
        %1704 = vdwg.mxu0
        %v1705 = vadd.f32 %v1647, %v1699
        %v1706 = vadd.f32 %v1648, %v1702
        %1709 = vrot.lane.b32.xlu0 %v1705, 64
        %v1710 = vpop.permute.xlu0 %1709
        %1711 = vrot.lane.b32.xlu0 %v1706, 64
        %v1712 = vpop.permute.xlu0 %1711
        %v1715 = vadd.f32 %v816, %v1710
        %v1716 = vadd.f32 %v817, %v1712
        %v1718 = vlaneseq
        %v1719 = vshrl.u32 %v1718, 7
        %v1720 = vsub.s32 0, %v1719
        %v1721 = vrot.slane %v554, %v1720
        %1722 = vrot.lane.b32.xlu0 %v1721, 64
        %v1723 = vpop.permute.xlu0 %1722
        %v1725 = vadd.f32 %v1715, %v1723
        %v1726 = vadd.f32 %v1716, %v1723
        %v1727 = vtanh.pop %v1725
        %v1728 = vtanh.pop %v1726
        %1731 = vrot.lane.b32.xlu0 %v555, 32
        %v1732 = vpop.permute.xlu0 %1731
        %1733 = vrot.lane.b32.xlu0 %v556, 32
        %v1734 = vpop.permute.xlu0 %1733
        %v1737 = vmul.f32 %v1270, %v1732
        %v1738 = vmul.f32 %v1272, %v1734
        %v1739 = vsub.f32 1.0, %v1270
        %v1740 = vsub.f32 1.0, %v1272
        %1743 = vrot.lane.b32.xlu0 %v1727, 96
        %v1744 = vpop.permute.xlu0 %1743
        %1745 = vrot.lane.b32.xlu0 %v1728, 96
        %v1746 = vpop.permute.xlu0 %1745
        %v1749 = vmul.f32 %v1739, %v1744
        %v1750 = vmul.f32 %v1740, %v1746
        %v1751 = vadd.f32 %v1737, %v1749
        %v1752 = vadd.f32 %v1738, %v1750
        %1755 = vrot.lane.b32.xlu0 %v1751, 96
        %v1756 = vpop.permute.xlu0 %1755
        %1757 = vrot.lane.b32.xlu0 %v1752, 96
        %v1758 = vpop.permute.xlu0 %1757
        %1761 = vst.msk [vmem:[#allocation2] sm:$0xff] %vm918, %v1756
        %1762 = vst.msk [vmem:[#allocation2 + $0x8] sm:$0xff] %vm918, %v1758
        %p1763 = scmp.eq.s32.totalorder %s35, 7
        // Predicated region
        $region97: #{megacrn_forward.4} parent=55 // pred_check
          %p1764 = pneg %p1763
        $region98: #{megacrn_forward.4} parent=55 // pred_check_branch
          %1766 = sbr.rel (%p1764) target = $region100
        $region99: #{megacrn_forward.4} parent=55 // pred_region
          %v1767 = vld [vmem:[#allocation9] sm:$0xff]
          %v1768 = vld [vmem:[#allocation8] sm:$0xff]
          %v1769 = vld [vmem:[#allocation8 + $0x8] sm:$0xff]
          %v1770 = vld [vmem:[#allocation8 + $0x10] sm:$0xff]
          %v1771 = vld [vmem:[#allocation8 + $0x18] sm:$0xff]
          %v1772 = vsel %vm918, %v1756, 0
          %v1774 = vsel %vm918, %v1758, 0
          %1776 = vmatprep.subr.mxu0 0.0
          %1777 = vmatpush1.msra.mxu0 %v1768
          %1778 = vmatprep.subr.mxu0 0.0
          %1779 = vmatpush1.msra.mxu0 %v1769
          %1780 = vmatprep.subr.mxu0 0.0
          %1781 = vmatpush1.msra.mxu0 %v1770
          %1782 = vmatprep.subr.mxu0 0.0
          %1783 = vmatpush1.msra.mxu0 %v1771
          %1784 = vmatprep.subr.mxu0 0.0
          %1785 = vmatpush1.msra.mxu0 0.0
          %1786 = vmatprep.subr.mxu0 0.0
          %1787 = vmatpush1.msra.mxu0 0.0
          %1788 = vmatprep.subr.mxu0 0.0
          %1789 = vmatpush1.msra.mxu0 0.0
          %1790 = vmatprep.subr.mxu0 0.0
          %1791 = vmatpush1.msra.mxu0 0.0
          %1792 = vmatprep.subr.mxu0 0.0
          %1793 = vmatpush1.msra.mxu0 0.0
          %1794 = vmatprep.subr.mxu0 0.0
          %1795 = vmatpush1.msra.mxu0 0.0
          %1796 = vmatprep.subr.mxu0 0.0
          %1797 = vmatpush1.msra.mxu0 0.0
          %1798 = vmatprep.subr.mxu0 0.0
          %1799 = vmatpush1.msra.mxu0 0.0
          %1800 = vmatprep.subr.mxu0 0.0
          %1801 = vmatpush1.msra.mxu0 0.0
          %1802 = vmatprep.subr.mxu0 0.0
          %1803 = vmatpush1.msra.mxu0 0.0
          %1804 = vmatprep.subr.mxu0 0.0
          %1805 = vmatpush1.msra.mxu0 0.0
          %1806 = vmatprep.subr.mxu0 0.0
          %1807 = vmatpush1.msra.mxu0 0.0
          %1808 = vmatprep.subr.mxu0 0.0
          %1809 = vmatpush1.msra.mxu0 0.0
          %1810 = vmatprep.subr.mxu0 0.0
          %1811 = vmatpush1.msra.mxu0 0.0
          %1812 = vmatprep.subr.mxu0 0.0
          %1813 = vmatpush1.msra.mxu0 0.0
          %1814 = vmatprep.subr.mxu0 0.0
          %1815 = vmatpush1.msra.mxu0 0.0
          %1816 = vmatprep.subr.mxu0 0.0
          %1817 = vmatpush1.msra.mxu0 0.0
          %1818 = vmatprep.subr.mxu0 0.0
          %1819 = vmatpush1.msra.mxu0 0.0
          %1820 = vmatprep.subr.mxu0 0.0
          %1821 = vmatpush1.msra.mxu0 0.0
          %1822 = vmatprep.subr.mxu0 0.0
          %1823 = vmatpush1.msra.mxu0 0.0
          %1824 = vmatprep.subr.mxu0 0.0
          %1825 = vmatpush1.msra.mxu0 0.0
          %1826 = vmatprep.subr.mxu0 0.0
          %1827 = vmatpush1.msra.mxu0 0.0
          %1828 = vmatprep.subr.mxu0 0.0
          %1829 = vmatpush1.msra.mxu0 0.0
          %1830 = vmatprep.subr.mxu0 0.0
          %1831 = vmatpush1.msra.mxu0 0.0
          %1832 = vmatprep.subr.mxu0 0.0
          %1833 = vmatpush1.msra.mxu0 0.0
          %1834 = vmatprep.subr.mxu0 0.0
          %1835 = vmatpush1.msra.mxu0 0.0
          %1836 = vmatprep.subr.mxu0 0.0
          %1837 = vmatpush1.msra.mxu0 0.0
          %1838 = vmatprep.subr.mxu0 0.0
          %1839 = vmatpush1.msra.mxu0 0.0
          %1840 = vmatprep.mubr.f32.mxu0 0.0
          %1841 = vmatmul.mubr.f32.gmra.mrb[0].mxu0 %v1772
          %v1842 = vpop.f32.mrb[0].mxu0
          %v1843 = vadd.f32 0.0, %v1842
          %v1844 = vpop.f32.mrb[0].mxu0
          %1845 = vmatprep.mubr.f32.mxu0 0.0
          %1846 = vmatmul.mubr.f32.gmra.mrb[0].mxu0 %v1774
          %v1847 = vpop.f32.mrb[0].mxu0
          %v1848 = vadd.f32 0.0, %v1847
          %v1849 = vpop.f32.mrb[0].mxu0
          %1850 = vdwg.mxu0
          %v1852 = vsel %vm588, %v1843, 0
          %v1855 = vsel %vm588, %v1848, 0
          %v1858 = vsel %vm588, %v1767, 0
          %1860 = vmatprep.subr.mxu0 0.0
          %1861 = vmatpush1.xpose.msra.mxu0 %v1858
          %1862 = vmatprep.subr.mxu0 0.0
          %1863 = vmatpush1.xpose.msra.mxu0 0.0
          %1864 = vmatprep.subr.mxu0 0.0
          %1865 = vmatpush1.xpose.msra.mxu0 0.0
          %1866 = vmatprep.subr.mxu0 0.0
          %1867 = vmatpush1.xpose.msra.mxu0 0.0
          %1868 = vmatprep.subr.mxu0 0.0
          %1869 = vmatpush1.xpose.msra.mxu0 0.0
          %1870 = vmatprep.subr.mxu0 0.0
          %1871 = vmatpush1.xpose.msra.mxu0 0.0
          %1872 = vmatprep.subr.mxu0 0.0
          %1873 = vmatpush1.xpose.msra.mxu0 0.0
          %1874 = vmatprep.subr.mxu0 0.0
          %1875 = vmatpush1.xpose.msra.mxu0 0.0
          %1876 = vmatprep.subr.mxu0 0.0
          %1877 = vmatpush1.xpose.msra.mxu0 0.0
          %1878 = vmatprep.subr.mxu0 0.0
          %1879 = vmatpush1.xpose.msra.mxu0 0.0
          %1880 = vmatprep.subr.mxu0 0.0
          %1881 = vmatpush1.xpose.msra.mxu0 0.0
          %1882 = vmatprep.subr.mxu0 0.0
          %1883 = vmatpush1.xpose.msra.mxu0 0.0
          %1884 = vmatprep.subr.mxu0 0.0
          %1885 = vmatpush1.xpose.msra.mxu0 0.0
          %1886 = vmatprep.subr.mxu0 0.0
          %1887 = vmatpush1.xpose.msra.mxu0 0.0
          %1888 = vmatprep.subr.mxu0 0.0
          %1889 = vmatpush1.xpose.msra.mxu0 0.0
          %1890 = vmatprep.subr.mxu0 0.0
          %1891 = vmatpush1.xpose.msra.mxu0 0.0
          %1892 = vmatprep.subr.mxu0 0.0
          %1893 = vmatpush1.xpose.msra.mxu0 0.0
          %1894 = vmatprep.subr.mxu0 0.0
          %1895 = vmatpush1.xpose.msra.mxu0 0.0
          %1896 = vmatprep.subr.mxu0 0.0
          %1897 = vmatpush1.xpose.msra.mxu0 0.0
          %1898 = vmatprep.subr.mxu0 0.0
          %1899 = vmatpush1.xpose.msra.mxu0 0.0
          %1900 = vmatprep.subr.mxu0 0.0
          %1901 = vmatpush1.xpose.msra.mxu0 0.0
          %1902 = vmatprep.subr.mxu0 0.0
          %1903 = vmatpush1.xpose.msra.mxu0 0.0
          %1904 = vmatprep.subr.mxu0 0.0
          %1905 = vmatpush1.xpose.msra.mxu0 0.0
          %1906 = vmatprep.subr.mxu0 0.0
          %1907 = vmatpush1.xpose.msra.mxu0 0.0
          %1908 = vmatprep.subr.mxu0 0.0
          %1909 = vmatpush1.xpose.msra.mxu0 0.0
          %1910 = vmatprep.subr.mxu0 0.0
          %1911 = vmatpush1.xpose.msra.mxu0 0.0
          %1912 = vmatprep.subr.mxu0 0.0
          %1913 = vmatpush1.xpose.msra.mxu0 0.0
          %1914 = vmatprep.subr.mxu0 0.0
          %1915 = vmatpush1.xpose.msra.mxu0 0.0
          %1916 = vmatprep.subr.mxu0 0.0
          %1917 = vmatpush1.xpose.msra.mxu0 0.0
          %1918 = vmatprep.subr.mxu0 0.0
          %1919 = vmatpush1.xpose.msra.mxu0 0.0
          %1920 = vmatprep.subr.mxu0 0.0
          %1921 = vmatpush1.xpose.msra.mxu0 0.0
          %1922 = vmatprep.subr.mxu0 0.0
          %1923 = vmatpush1.xpose.msra.mxu0 0.0
          %1924 = vmatprep.mubr.f32.mxu0 0.0
          %1925 = vmatmul.mubr.f32.gmra.mrb[0].mxu0 %v1852
          %v1926 = vpop.f32.mrb[0].mxu0
          %v1927 = vadd.f32 0.0, %v1926
          %v1928 = vpop.f32.mrb[0].mxu0
          %1929 = vmatprep.mubr.f32.mxu0 0.0
          %1930 = vmatmul.mubr.f32.gmra.mrb[0].mxu0 %v1855
          %v1931 = vpop.f32.mrb[0].mxu0
          %v1932 = vadd.f32 0.0, %v1931
          %v1933 = vpop.f32.mrb[0].mxu0
          %1934 = vdwg.mxu0
          %vm1935 = vcmask 64512
          %v1936 = vsel %vm1935, %v1927, -inf
          %1937 = vmax.xlane.f32.xlu0 %v1936
          %v1938 = vpop.xlane.xlu0 %1937
          %v1939 = vsel %vm1935, %v1932, -inf
          %1940 = vmax.xlane.f32.xlu0 %v1939
          %v1941 = vpop.xlane.xlu0 %1940
          %v1942 = vsub.f32 %v1927, %v1938
          %v1943 = vsub.f32 %v1932, %v1941
          %v1944 = vmul.f32 %v1942, 1.442695
          %v1945 = vpow.pop %v1944
          %v1946 = vmul.f32 %v1943, 1.442695
          %v1947 = vpow.pop %v1946
          %v1948 = vsel %vm1935, %v1945, 0.0
          %1949 = vadd.xlane.f32.xlu0 %v1948
          %v1950 = vpop.xlane.xlu0 %1949
          %v1951 = vsel %vm1935, %v1947, 0.0
          %1952 = vadd.xlane.f32.xlu0 %v1951
          %v1953 = vpop.xlane.xlu0 %1952
          %v1954 = vrcp.pop %v1950
          %v1955 = vrcp.pop %v1953
          %v1956 = vmul.f32 %v1945, %v1954
          %v1957 = vmul.f32 %v1947, %v1955
          %v1959 = vsel %vm1935, %v1956, 0
          %v1962 = vsel %vm1935, %v1957, 0
          %1964 = vmatprep.subr.mxu0 0.0
          %1965 = vmatpush1.msra.mxu0 %v1767
          %1966 = vmatprep.subr.mxu0 0.0
          %1967 = vmatpush1.msra.mxu0 0.0
          %1968 = vmatprep.subr.mxu0 0.0
          %1969 = vmatpush1.msra.mxu0 0.0
          %1970 = vmatprep.subr.mxu0 0.0
          %1971 = vmatpush1.msra.mxu0 0.0
          %1972 = vmatprep.subr.mxu0 0.0
          %1973 = vmatpush1.msra.mxu0 0.0
          %1974 = vmatprep.subr.mxu0 0.0
          %1975 = vmatpush1.msra.mxu0 0.0
          %1976 = vmatprep.subr.mxu0 0.0
          %1977 = vmatpush1.msra.mxu0 0.0
          %1978 = vmatprep.subr.mxu0 0.0
          %1979 = vmatpush1.msra.mxu0 0.0
          %1980 = vmatprep.subr.mxu0 0.0
          %1981 = vmatpush1.msra.mxu0 0.0
          %1982 = vmatprep.subr.mxu0 0.0
          %1983 = vmatpush1.msra.mxu0 0.0
          %1984 = vmatprep.subr.mxu0 0.0
          %1985 = vmatpush1.msra.mxu0 0.0
          %1986 = vmatprep.subr.mxu0 0.0
          %1987 = vmatpush1.msra.mxu0 0.0
          %1988 = vmatprep.subr.mxu0 0.0
          %1989 = vmatpush1.msra.mxu0 0.0
          %1990 = vmatprep.subr.mxu0 0.0
          %1991 = vmatpush1.msra.mxu0 0.0
          %1992 = vmatprep.subr.mxu0 0.0
          %1993 = vmatpush1.msra.mxu0 0.0
          %1994 = vmatprep.subr.mxu0 0.0
          %1995 = vmatpush1.msra.mxu0 0.0
          %1996 = vmatprep.subr.mxu0 0.0
          %1997 = vmatpush1.msra.mxu0 0.0
          %1998 = vmatprep.subr.mxu0 0.0
          %1999 = vmatpush1.msra.mxu0 0.0
          %2000 = vmatprep.subr.mxu0 0.0
          %2001 = vmatpush1.msra.mxu0 0.0
          %2002 = vmatprep.subr.mxu0 0.0
          %2003 = vmatpush1.msra.mxu0 0.0
          %2004 = vmatprep.subr.mxu0 0.0
          %2005 = vmatpush1.msra.mxu0 0.0
          %2006 = vmatprep.subr.mxu0 0.0
          %2007 = vmatpush1.msra.mxu0 0.0
          %2008 = vmatprep.subr.mxu0 0.0
          %2009 = vmatpush1.msra.mxu0 0.0
          %2010 = vmatprep.subr.mxu0 0.0
          %2011 = vmatpush1.msra.mxu0 0.0
          %2012 = vmatprep.subr.mxu0 0.0
          %2013 = vmatpush1.msra.mxu0 0.0
          %2014 = vmatprep.subr.mxu0 0.0
          %2015 = vmatpush1.msra.mxu0 0.0
          %2016 = vmatprep.subr.mxu0 0.0
          %2017 = vmatpush1.msra.mxu0 0.0
          %2018 = vmatprep.subr.mxu0 0.0
          %2019 = vmatpush1.msra.mxu0 0.0
          %2020 = vmatprep.subr.mxu0 0.0
          %2021 = vmatpush1.msra.mxu0 0.0
          %2022 = vmatprep.subr.mxu0 0.0
          %2023 = vmatpush1.msra.mxu0 0.0
          %2024 = vmatprep.subr.mxu0 0.0
          %2025 = vmatpush1.msra.mxu0 0.0
          %2026 = vmatprep.subr.mxu0 0.0
          %2027 = vmatpush1.msra.mxu0 0.0
          %2028 = vmatprep.mubr.f32.mxu0 0.0
          %2029 = vmatmul.mubr.f32.gmra.mrb[0].mxu0 %v1959
          %v2030 = vpop.f32.mrb[0].mxu0
          %v2031 = vadd.f32 0.0, %v2030
          %v2032 = vpop.f32.mrb[0].mxu0
          %2033 = vmatprep.mubr.f32.mxu0 0.0
          %2034 = vmatmul.mubr.f32.gmra.mrb[0].mxu0 %v1962
          %v2035 = vpop.f32.mrb[0].mxu0
          %v2036 = vadd.f32 0.0, %v2035
          %v2037 = vpop.f32.mrb[0].mxu0
          %2038 = vdwg.mxu0
          %2039 = vst.msk [vmem:[%s476] sm:$0xff] %vm918, %v1756
          %2040 = vst.msk [vmem:[%s476 + $0x8] sm:$0xff] %vm918, %v1758
          %2043 = vrot.lane.b32.xlu0 %v2031, 32
          %v2044 = vpop.permute.xlu0 %2043
          %2045 = vrot.lane.b32.xlu0 %v2036, 32
          %v2046 = vpop.permute.xlu0 %2045
          %vm2049 = vcmask 392448
          %2050 = vst.msk [vmem:[%s476] sm:$0xff] %vm2049, %v2044
          %2051 = vst.msk [vmem:[%s476 + $0x8] sm:$0xff] %vm2049, %v2046
        $region100: #{megacrn_forward.4} parent=55 // pred_fallthru
          _
        %s2052 = sand.u32 %s246, 1
        %s2053 = scalar_lea.sflag [#allocation5], %s2052
        %s2054 = sand.u32 %s246, 1
        %s2055 = smul.addr %s2054, 16
        %s2056 = scalar_lea.vmem [#allocation18], %s2055
        // Predicated region
        $region101: #{megacrn_forward.4} parent=55 // pred_check
          %p2057 = pneg %p256
        $region102: #{megacrn_forward.4} parent=55 // pred_check_branch
          %2059 = sbr.rel (%p2057) target = $region104
        $region103: #{megacrn_forward.4} parent=55 // pred_region
          %s2061 = ssub.s32 256, 256
          %2062 = vsyncadd %s2053, %s2061
          %s2063 = smul.addr %s34, 2
          %s2064 = smul.addr %s2063, 128
          %s2065 = scalar_lea.hbm %s9, %s2064
          %s2066 = sshll.u32 %s2056, 4
          %s2067 = int_to_ptr.vmem [resolvable:$true] %s2066
          %2072 = dma.vmem_to_hbm [thread:$0]  %s2067, 256, %s2065, %s2053, 128, 128, 8
        $region104: #{megacrn_forward.4} parent=55 // pred_fallthru
          _
      $region56: #{megacrn_forward.4} parent=5 // pred_fallthru
        _
      %p2073 = scmp.le.s32.totalorder 2, %s25
      // Predicated region
      $region105: #{megacrn_forward.4} parent=5 // pred_check
        %p2074 = pneg %p2073
      $region106: #{megacrn_forward.4} parent=5 // pred_check_branch
        %2076 = sbr.rel (%p2074) target = $region108
      $region107: #{megacrn_forward.4} parent=5 // pred_region
        %s2077 = ssub.s32 %s25, 2
        // Predicated region
        $region109: #{megacrn_forward.4} parent=107 // pred_check
          %p2078 = pneg %p262
        $region110: #{megacrn_forward.4} parent=107 // pred_check_branch
          %2080 = sbr.rel (%p2078) target = $region112
        $region111: #{megacrn_forward.4} parent=107 // pred_region
          %s2081 = sand.u32 %s247, 1
          %s2082 = scalar_lea.sflag [#allocation5], %s2081
          %s2083 = sand.u32 %s247, 1
          %s2084 = smul.addr %s2083, 16
          %s2085 = scalar_lea.vmem [#allocation18], %s2084
          %2086 = dma.done %s2082, 256
        $region112: #{megacrn_forward.4} parent=107 // pred_fallthru
          _
      $region108: #{megacrn_forward.4} parent=5 // pred_fallthru
        _
    $region6: #{megacrn_forward.4} parent=1 // loop_footer
      %s29 = sadd.s32 1, %s25
    $region7: #{megacrn_forward.4} parent=1 // loop_footer_branch
      %24 = sbr.rel target = $region3
    $region8: #{megacrn_forward.4} parent=1 // loop_exit
      _
    %2087 = vsyncpa [#allocation4], 1
    %s2088 = scalar_lea.sflag [#allocation4], 1
    %2089 = vsyncpa %s2088, 1
    %2090 = vsyncpa [#allocation7], 1
    %2091 = vsyncpa [#allocation10], 1
    %2092 = vsyncpa [#allocation13], 1
    %2093 = vsyncpa [#allocation16], 1
    %2094 = vsyncpa [#allocation5], 1
    %s2095 = scalar_lea.sflag [#allocation5], 1
    %2096 = vsyncpa %s2095, 1

// kernel: megacrn_forward.5
$region0: #{megacrn_forward.5}
  #allocation0 [shape = 'u32[]', space=smem, size = 0x4, offset = 0x4, fixed_abs, tag = 'smem constant byte address 0x4 - core index']
  #allocation1 [shape = 'u32[144,128]{1,0:T(1,128)}', space=vmem, size = 0x12000, scoped, tag = 'internal scratch']
  #allocation2 [shape = 'f32[1,16,48]{2,1,0:T(8,128)}', space=vmem, size = 0x2000, scoped, tag = 'scratch operand']
  #allocation3 [shape = 'f32[16,1]{1,0:T(8,128)}', space=vmem, size = 0x2000, scoped, tag = 'scratch operand']
  #allocation4 [shape = 'f32[1,1]{1,0:T(1,128)S(1)}', space=vmem, size = 0x200, scoped, tag = 'scoped memory for megacrn_forward.5']
  %s0 = inlined_call_operand.hbm [shape: f32[4,2,16,5], index: 0, kind: input, shape index: {}]
  %s1 = inlined_call_operand.hbm [shape: f32[2,16,48], index: 1, kind: input, shape index: {}]
  %s2 = inlined_call_operand.hbm [shape: bf16[96,16], index: 2, kind: input, shape index: {}]
  %s3 = inlined_call_operand.hbm [shape: bf16[6,6,144], index: 3, kind: input, shape index: {}]
  %s4 = inlined_call_operand.hbm [shape: bf16[6,48,96], index: 4, kind: input, shape index: {}]
  %s5 = inlined_call_operand.hbm [shape: bf16[6,48,48], index: 5, kind: input, shape index: {}]
  %s6 = inlined_call_operand.hbm [shape: f32[1,96], index: 6, kind: input, shape index: {}]
  %s7 = inlined_call_operand.hbm [shape: f32[1,48], index: 7, kind: input, shape index: {}]
  %s8 = inlined_call_operand.hbm [shape: f32[48,1], index: 8, kind: input, shape index: {}]
  %s9 = inlined_call_operand.<no memory space> [shape: f32[1,1], index: 9, kind: input, shape index: {}]
  %s10 = inlined_call_operand.hbm [shape: f32[4,2,16,1], index: 10, kind: output, shape index: {}]
  %s11 = sld [smem:[#allocation0]]
  $region113: #{megacrn_forward.5} parent=0
    _
  %s13 = ssub.s32 1, %s11
  %s14 = scalar_select 0, %s13, %s11
  %v15 = vstv %s9
  %16 = vst [vmem:[#allocation4] sm:$0x1] %v15
  $region1: #{megacrn_forward.5} parent=0
    #allocation5 [shape = 'u8[16384]{0}', space=vmem, size = 0x4000, scoped, tag = 'input window, operand 0']
    #allocation6 [shape = 's32[2]{0}', space=sflag, size = 0x8, scoped, tag = 'scoped memory for megacrn_forward.5']
    #allocation7 [shape = 's32[2]{0}', space=sflag, size = 0x8, scoped, tag = 'scoped memory for megacrn_forward.5']
    #allocation8 [shape = 'u8[16384]{0}', space=vmem, size = 0x4000, scoped, tag = 'input window, operand 1']
    #allocation9 [shape = 's32[2]{0}', space=sflag, size = 0x8, scoped, tag = 'scoped memory for megacrn_forward.5']
    #allocation10 [shape = 'u8[24576]{0}', space=vmem, size = 0x6000, scoped, tag = 'input window, operand 2, single buffered']
    #allocation11 [shape = 'u8[24576]{0}', space=vmem, size = 0x6000, scoped, tag = 'input window, operand 3, single buffered']
    #allocation12 [shape = 's32[1]{0}', space=sflag, size = 0x4, scoped, tag = 'scoped memory for megacrn_forward.5']
    #allocation13 [shape = 'u8[73728]{0}', space=vmem, size = 0x12000, scoped, tag = 'input window, operand 4, single buffered']
    #allocation14 [shape = 'u8[73728]{0}', space=vmem, size = 0x12000, scoped, tag = 'input window, operand 5, single buffered']
    #allocation15 [shape = 's32[1]{0}', space=sflag, size = 0x4, scoped, tag = 'scoped memory for megacrn_forward.5']
    #allocation16 [shape = 'u8[512]{0}', space=vmem, size = 0x400, scoped, tag = 'input window, operand 6, single buffered']
    #allocation17 [shape = 'u8[512]{0}', space=vmem, size = 0x400, scoped, tag = 'input window, operand 7, single buffered']
    #allocation18 [shape = 's32[1]{0}', space=sflag, size = 0x4, scoped, tag = 'scoped memory for megacrn_forward.5']
    #allocation19 [shape = 'u8[24576]{0}', space=vmem, size = 0x6000, scoped, tag = 'input window, operand 8, single buffered']
    #allocation20 [shape = 'u8[16384]{0}', space=vmem, size = 0x4000, scoped, tag = 'output window, operand 0']
    %17 = vsyncpa [#allocation6], 0
    %s18 = scalar_lea.sflag [#allocation6], 1
    %19 = vsyncpa %s18, 0
    %20 = vsyncpa [#allocation9], 0
    %s21 = scalar_lea.sflag [#allocation9], 1
    %22 = vsyncpa %s21, 0
    %23 = vsyncpa [#allocation12], 0
    %24 = vsyncpa [#allocation15], 0
    %25 = vsyncpa [#allocation18], 0
    %26 = vsyncpa [#allocation7], 0
    %s27 = scalar_lea.sflag [#allocation7], 1
    %28 = vsyncpa %s27, 0
    loop: start=0, step=1, limit=10
    $region2: #{megacrn_forward.5} parent=1 // loop_pre_header
      _
    $region3: #{megacrn_forward.5} parent=1 // loop_header
      %s30 = sphi 0, %s34
      %p31 = scmp.ge.s32.totalorder %s30, 10
      %s37 = sphi 0, %s49
      %s38 = sphi 0, %s45
      %s39 = sphi 0, %s37
      %s40 = sphi 0, %s38
      %s41 = sphi 0, %s39
      %s42 = sphi 0, %s40
      %s54 = sphi 0, %s56
      %s57 = sphi 0, %s54
      %s58 = sphi 0, %s57
      %s74 = sphi 0, %s58
      %s80 = sphi 0, %s82
      %s83 = sphi 0, %s80
      %s84 = sphi 0, %s83
      %s100 = sphi 0, %s84
      %s104 = sphi 0, %s104
      %s106 = sphi 0, %s104
      %s107 = sphi 0, %s106
      %s121 = sphi 0, %s107
      %s125 = sphi 0, %s125
      %s127 = sphi 0, %s125
      %s128 = sphi 0, %s127
      %s142 = sphi 0, %s128
      %s146 = sphi 0, %s146
      %s148 = sphi 0, %s146
      %s149 = sphi 0, %s148
      %s163 = sphi 0, %s149
      %s167 = sphi 0, %s167
      %s169 = sphi 0, %s167
      %s170 = sphi 0, %s169
      %s184 = sphi 0, %s170
      %s188 = sphi 0, %s188
      %s190 = sphi 0, %s188
      %s191 = sphi 0, %s190
      %s205 = sphi 0, %s191
      %s209 = sphi 0, %s209
      %s211 = sphi 0, %s209
      %s212 = sphi 0, %s211
      %s226 = sphi 0, %s212
      %s230 = sphi 0, %s230
      %s232 = sphi 0, %s230
      %s233 = sphi 0, %s232
      %s247 = sphi 0, %s233
      %s251 = sphi 0, %s251
      %s253 = sphi 0, %s251
      %s254 = sphi 0, %s253
      %s268 = sphi 0, %s254
      %s276 = sphi 0, %s278
      %s279 = sphi 0, %s276
      %s280 = sphi 0, %s279
      %s296 = sphi 0, %s280
    $region4: #{megacrn_forward.5} parent=1 // loop_header_branch
      %33 = sbr.rel (%p31) target = $region8
    $region5: #{megacrn_forward.5} parent=1 // loop_body
      %s35 = ssub.s32 %s30, 1
      %s36 = ssub.s32 %s30, 2
      %s43 = sadd.s32 1, %s38
      %p44 = scmp.ge.s32.totalorder %s43, 4
      %s45 = scalar_select %p44, 0, %s43
      %s46 = sadd.s32 1, %s37
      %s47 = scalar_select %p44, %s46, %s37
      %p48 = scmp.ge.s32.totalorder %s47, 2
      %s49 = scalar_select %p48, 0, %s47
      %s50 = ssub.s32 %s38, %s45
      %s51 = ssub.s32 %s37, %s49
      %s52 = sor.u32 %s50, %s51
      %p53 = scmp.eq.s32.totalorder %s52, 0
      %s55 = sadd.s32 %s54, 1
      %s56 = scalar_select %p53, %s54, %s55
      %p59 = pneg %p53
      %p60 = scmp.eq.s32.totalorder %s30, 7
      %p61 = por %p59, %p60
      %p62 = scmp.ne.s32.totalorder %s54, %s57
      %p63 = scmp.eq.s32.totalorder %s30, 0
      %p64 = por %p62, %p63
      %p65 = scmp.ne.s32.totalorder %s54, %s57
      %p66 = scmp.eq.s32.totalorder %s35, 7
      %p67 = por %p65, %p66
      %p68 = scmp.ne.s32.totalorder %s57, %s58
      %p69 = scmp.eq.s32.totalorder %s35, 0
      %p70 = por %p68, %p69
      %p71 = scmp.ne.s32.totalorder %s57, %s58
      %p72 = scmp.eq.s32.totalorder %s36, 7
      %p73 = por %p71, %p72
      %p75 = scmp.ne.s32.totalorder %s58, %s74
      %p76 = scmp.eq.s32.totalorder %s36, 0
      %p77 = por %p75, %p76
      %s78 = ssub.s32 %s37, %s49
      %p79 = scmp.eq.s32.totalorder %s78, 0
      %s81 = sadd.s32 %s80, 1
      %s82 = scalar_select %p79, %s80, %s81
      %p85 = pneg %p79
      %p86 = scmp.eq.s32.totalorder %s30, 7
      %p87 = por %p85, %p86
      %p88 = scmp.ne.s32.totalorder %s80, %s83
      %p89 = scmp.eq.s32.totalorder %s30, 0
      %p90 = por %p88, %p89
      %p91 = scmp.ne.s32.totalorder %s80, %s83
      %p92 = scmp.eq.s32.totalorder %s35, 7
      %p93 = por %p91, %p92
      %p94 = scmp.ne.s32.totalorder %s83, %s84
      %p95 = scmp.eq.s32.totalorder %s35, 0
      %p96 = por %p94, %p95
      %p97 = scmp.ne.s32.totalorder %s83, %s84
      %p98 = scmp.eq.s32.totalorder %s36, 7
      %p99 = por %p97, %p98
      %p101 = scmp.ne.s32.totalorder %s84, %s100
      %p102 = scmp.eq.s32.totalorder %s36, 0
      %p103 = por %p101, %p102
      %s105 = sadd.s32 %s104, 1
      %p108 = scmp.eq.s32.totalorder %s30, 7
      %p109 = scmp.ne.s32.totalorder %s104, %s106
      %p110 = scmp.eq.s32.totalorder %s30, 0
      %p111 = por %p109, %p110
      %p112 = scmp.ne.s32.totalorder %s104, %s106
      %p113 = scmp.eq.s32.totalorder %s35, 7
      %p114 = por %p112, %p113
      %p115 = scmp.ne.s32.totalorder %s106, %s107
      %p116 = scmp.eq.s32.totalorder %s35, 0
      %p117 = por %p115, %p116
      %p118 = scmp.ne.s32.totalorder %s106, %s107
      %p119 = scmp.eq.s32.totalorder %s36, 7
      %p120 = por %p118, %p119
      %p122 = scmp.ne.s32.totalorder %s107, %s121
      %p123 = scmp.eq.s32.totalorder %s36, 0
      %p124 = por %p122, %p123
      %s126 = sadd.s32 %s125, 1
      %p129 = scmp.eq.s32.totalorder %s30, 7
      %p130 = scmp.ne.s32.totalorder %s125, %s127
      %p131 = scmp.eq.s32.totalorder %s30, 0
      %p132 = por %p130, %p131
      %p133 = scmp.ne.s32.totalorder %s125, %s127
      %p134 = scmp.eq.s32.totalorder %s35, 7
      %p135 = por %p133, %p134
      %p136 = scmp.ne.s32.totalorder %s127, %s128
      %p137 = scmp.eq.s32.totalorder %s35, 0
      %p138 = por %p136, %p137
      %p139 = scmp.ne.s32.totalorder %s127, %s128
      %p140 = scmp.eq.s32.totalorder %s36, 7
      %p141 = por %p139, %p140
      %p143 = scmp.ne.s32.totalorder %s128, %s142
      %p144 = scmp.eq.s32.totalorder %s36, 0
      %p145 = por %p143, %p144
      %s147 = sadd.s32 %s146, 1
      %p150 = scmp.eq.s32.totalorder %s30, 7
      %p151 = scmp.ne.s32.totalorder %s146, %s148
      %p152 = scmp.eq.s32.totalorder %s30, 0
      %p153 = por %p151, %p152
      %p154 = scmp.ne.s32.totalorder %s146, %s148
      %p155 = scmp.eq.s32.totalorder %s35, 7
      %p156 = por %p154, %p155
      %p157 = scmp.ne.s32.totalorder %s148, %s149
      %p158 = scmp.eq.s32.totalorder %s35, 0
      %p159 = por %p157, %p158
      %p160 = scmp.ne.s32.totalorder %s148, %s149
      %p161 = scmp.eq.s32.totalorder %s36, 7
      %p162 = por %p160, %p161
      %p164 = scmp.ne.s32.totalorder %s149, %s163
      %p165 = scmp.eq.s32.totalorder %s36, 0
      %p166 = por %p164, %p165
      %s168 = sadd.s32 %s167, 1
      %p171 = scmp.eq.s32.totalorder %s30, 7
      %p172 = scmp.ne.s32.totalorder %s167, %s169
      %p173 = scmp.eq.s32.totalorder %s30, 0
      %p174 = por %p172, %p173
      %p175 = scmp.ne.s32.totalorder %s167, %s169
      %p176 = scmp.eq.s32.totalorder %s35, 7
      %p177 = por %p175, %p176
      %p178 = scmp.ne.s32.totalorder %s169, %s170
      %p179 = scmp.eq.s32.totalorder %s35, 0
      %p180 = por %p178, %p179
      %p181 = scmp.ne.s32.totalorder %s169, %s170
      %p182 = scmp.eq.s32.totalorder %s36, 7
      %p183 = por %p181, %p182
      %p185 = scmp.ne.s32.totalorder %s170, %s184
      %p186 = scmp.eq.s32.totalorder %s36, 0
      %p187 = por %p185, %p186
      %s189 = sadd.s32 %s188, 1
      %p192 = scmp.eq.s32.totalorder %s30, 7
      %p193 = scmp.ne.s32.totalorder %s188, %s190
      %p194 = scmp.eq.s32.totalorder %s30, 0
      %p195 = por %p193, %p194
      %p196 = scmp.ne.s32.totalorder %s188, %s190
      %p197 = scmp.eq.s32.totalorder %s35, 7
      %p198 = por %p196, %p197
      %p199 = scmp.ne.s32.totalorder %s190, %s191
      %p200 = scmp.eq.s32.totalorder %s35, 0
      %p201 = por %p199, %p200
      %p202 = scmp.ne.s32.totalorder %s190, %s191
      %p203 = scmp.eq.s32.totalorder %s36, 7
      %p204 = por %p202, %p203
      %p206 = scmp.ne.s32.totalorder %s191, %s205
      %p207 = scmp.eq.s32.totalorder %s36, 0
      %p208 = por %p206, %p207
      %s210 = sadd.s32 %s209, 1
      %p213 = scmp.eq.s32.totalorder %s30, 7
      %p214 = scmp.ne.s32.totalorder %s209, %s211
      %p215 = scmp.eq.s32.totalorder %s30, 0
      %p216 = por %p214, %p215
      %p217 = scmp.ne.s32.totalorder %s209, %s211
      %p218 = scmp.eq.s32.totalorder %s35, 7
      %p219 = por %p217, %p218
      %p220 = scmp.ne.s32.totalorder %s211, %s212
      %p221 = scmp.eq.s32.totalorder %s35, 0
      %p222 = por %p220, %p221
      %p223 = scmp.ne.s32.totalorder %s211, %s212
      %p224 = scmp.eq.s32.totalorder %s36, 7
      %p225 = por %p223, %p224
      %p227 = scmp.ne.s32.totalorder %s212, %s226
      %p228 = scmp.eq.s32.totalorder %s36, 0
      %p229 = por %p227, %p228
      %s231 = sadd.s32 %s230, 1
      %p234 = scmp.eq.s32.totalorder %s30, 7
      %p235 = scmp.ne.s32.totalorder %s230, %s232
      %p236 = scmp.eq.s32.totalorder %s30, 0
      %p237 = por %p235, %p236
      %p238 = scmp.ne.s32.totalorder %s230, %s232
      %p239 = scmp.eq.s32.totalorder %s35, 7
      %p240 = por %p238, %p239
      %p241 = scmp.ne.s32.totalorder %s232, %s233
      %p242 = scmp.eq.s32.totalorder %s35, 0
      %p243 = por %p241, %p242
      %p244 = scmp.ne.s32.totalorder %s232, %s233
      %p245 = scmp.eq.s32.totalorder %s36, 7
      %p246 = por %p244, %p245
      %p248 = scmp.ne.s32.totalorder %s233, %s247
      %p249 = scmp.eq.s32.totalorder %s36, 0
      %p250 = por %p248, %p249
      %s252 = sadd.s32 %s251, 1
      %p255 = scmp.eq.s32.totalorder %s30, 7
      %p256 = scmp.ne.s32.totalorder %s251, %s253
      %p257 = scmp.eq.s32.totalorder %s30, 0
      %p258 = por %p256, %p257
      %p259 = scmp.ne.s32.totalorder %s251, %s253
      %p260 = scmp.eq.s32.totalorder %s35, 7
      %p261 = por %p259, %p260
      %p262 = scmp.ne.s32.totalorder %s253, %s254
      %p263 = scmp.eq.s32.totalorder %s35, 0
      %p264 = por %p262, %p263
      %p265 = scmp.ne.s32.totalorder %s253, %s254
      %p266 = scmp.eq.s32.totalorder %s36, 7
      %p267 = por %p265, %p266
      %p269 = scmp.ne.s32.totalorder %s254, %s268
      %p270 = scmp.eq.s32.totalorder %s36, 0
      %p271 = por %p269, %p270
      %s272 = ssub.s32 %s38, %s45
      %s273 = ssub.s32 %s37, %s49
      %s274 = sor.u32 %s272, %s273
      %p275 = scmp.eq.s32.totalorder %s274, 0
      %s277 = sadd.s32 %s276, 1
      %s278 = scalar_select %p275, %s276, %s277
      %p281 = pneg %p275
      %p282 = scmp.eq.s32.totalorder %s30, 7
      %p283 = por %p281, %p282
      %p284 = scmp.ne.s32.totalorder %s276, %s279
      %p285 = scmp.eq.s32.totalorder %s30, 0
      %p286 = por %p284, %p285
      %p287 = scmp.ne.s32.totalorder %s276, %s279
      %p288 = scmp.eq.s32.totalorder %s35, 7
      %p289 = por %p287, %p288
      %p290 = scmp.ne.s32.totalorder %s279, %s280
      %p291 = scmp.eq.s32.totalorder %s35, 0
      %p292 = por %p290, %p291
      %p293 = scmp.ne.s32.totalorder %s279, %s280
      %p294 = scmp.eq.s32.totalorder %s36, 7
      %p295 = por %p293, %p294
      %p297 = scmp.ne.s32.totalorder %s280, %s296
      %p298 = scmp.eq.s32.totalorder %s36, 0
      %p299 = por %p297, %p298
      %p300 = scmp.le.s32.totalorder 1, %s30
      %p301 = scmp.lt.s32.totalorder %s30, 9
      %p302 = pnand %p300, %p301
      %p303 = pneg %p302
      // Predicated region
      $region9: #{megacrn_forward.5} parent=5 // pred_check
        _
      $region10: #{megacrn_forward.5} parent=5 // pred_check_branch
        %305 = sbr.rel (%p302) target = $region12
      $region11: #{megacrn_forward.5} parent=5 // pred_region
        %s306 = ssub.s32 %s30, 1
        // Predicated region
        $region13: #{megacrn_forward.5} parent=11 // pred_check
          %p307 = pneg %p117
        $region14: #{megacrn_forward.5} parent=11 // pred_check_branch
          %309 = sbr.rel (%p307) target = $region16
        $region15: #{megacrn_forward.5} parent=11 // pred_region
          %s311 = ssub.s32 768, 768
          %312 = vsyncadd [#allocation9], %s311
          %s313 = sshll.u32 [#allocation10], 4
          %s314 = int_to_ptr.vmem [resolvable:$true] %s313
          %319 = dma.hbm_to_vmem [thread:$0]  %s2, 768, %s314, [#allocation9], 64, 64, 4
        $region16: #{megacrn_forward.5} parent=11 // pred_fallthru
          _
        // Predicated region
        $region17: #{megacrn_forward.5} parent=11 // pred_check
          %p320 = pneg %p138
        $region18: #{megacrn_forward.5} parent=11 // pred_check_branch
          %322 = sbr.rel (%p320) target = $region20
        $region19: #{megacrn_forward.5} parent=11 // pred_region
          %s324 = ssub.s32 768, 768
          %325 = vsyncadd [#allocation12], %s324
          %s326 = sshll.u32 [#allocation11], 4
          %s327 = int_to_ptr.vmem [resolvable:$true] %s326
          %332 = dma.hbm_to_vmem [thread:$0]  %s3, 768, %s327, [#allocation12], 128, 128, 8
        $region20: #{megacrn_forward.5} parent=11 // pred_fallthru
          _
        // Predicated region
        $region21: #{megacrn_forward.5} parent=11 // pred_check
          %p333 = pneg %p159
        $region22: #{megacrn_forward.5} parent=11 // pred_check_branch
          %335 = sbr.rel (%p333) target = $region24
        $region23: #{megacrn_forward.5} parent=11 // pred_region
          %s337 = ssub.s32 2304, 2304
          %338 = vsyncadd [#allocation12], %s337
          %s339 = sshll.u32 [#allocation13], 4
          %s340 = int_to_ptr.vmem [resolvable:$true] %s339
          %345 = dma.hbm_to_vmem [thread:$0]  %s4, 2304, %s340, [#allocation12], 64, 64, 4
        $region24: #{megacrn_forward.5} parent=11 // pred_fallthru
          _
        // Predicated region
        $region25: #{megacrn_forward.5} parent=11 // pred_check
          %p346 = pneg %p180
        $region26: #{megacrn_forward.5} parent=11 // pred_check_branch
          %348 = sbr.rel (%p346) target = $region28
        $region27: #{megacrn_forward.5} parent=11 // pred_region
          %s350 = ssub.s32 2304, 2304
          %351 = vsyncadd [#allocation15], %s350
          %s352 = sshll.u32 [#allocation14], 4
          %s353 = int_to_ptr.vmem [resolvable:$true] %s352
          %358 = dma.hbm_to_vmem [thread:$0]  %s5, 2304, %s353, [#allocation15], 64, 64, 4
        $region28: #{megacrn_forward.5} parent=11 // pred_fallthru
          _
        // Predicated region
        $region29: #{megacrn_forward.5} parent=11 // pred_check
          %p359 = pneg %p201
        $region30: #{megacrn_forward.5} parent=11 // pred_check_branch
          %361 = sbr.rel (%p359) target = $region32
        $region31: #{megacrn_forward.5} parent=11 // pred_region
          %s363 = ssub.s32 16, 16
          %364 = vsyncadd [#allocation15], %s363
          %s366 = sshll.u32 [#allocation16], 4
          %s367 = int_to_ptr.vmem [resolvable:$true] %s366
          %369 = dma.hbm_to_vmem [thread:$0]  %s6, 16, %s367, [#allocation15]
        $region32: #{megacrn_forward.5} parent=11 // pred_fallthru
          _
        // Predicated region
        $region33: #{megacrn_forward.5} parent=11 // pred_check
          %p370 = pneg %p222
        $region34: #{megacrn_forward.5} parent=11 // pred_check_branch
          %372 = sbr.rel (%p370) target = $region36
        $region35: #{megacrn_forward.5} parent=11 // pred_region
          %s374 = ssub.s32 16, 16
          %375 = vsyncadd [#allocation18], %s374
          %s377 = sshll.u32 [#allocation17], 4
          %s378 = int_to_ptr.vmem [resolvable:$true] %s377
          %380 = dma.hbm_to_vmem [thread:$0]  %s7, 16, %s378, [#allocation18]
        $region36: #{megacrn_forward.5} parent=11 // pred_fallthru
          _
        // Predicated region
        $region37: #{megacrn_forward.5} parent=11 // pred_check
          %p381 = pneg %p243
        $region38: #{megacrn_forward.5} parent=11 // pred_check_branch
          %383 = sbr.rel (%p381) target = $region40
        $region39: #{megacrn_forward.5} parent=11 // pred_region
          %s385 = ssub.s32 768, 768
          %386 = vsyncadd [#allocation18], %s385
          %s387 = sshll.u32 [#allocation19], 4
          %s388 = int_to_ptr.vmem [resolvable:$true] %s387
          %393 = dma.hbm_to_vmem [thread:$0]  %s8, 768, %s388, [#allocation18], 128, 128, 8
        $region40: #{megacrn_forward.5} parent=11 // pred_fallthru
          _
        // Predicated region
        $region41: #{megacrn_forward.5} parent=11 // pred_check
          %p394 = pneg %p264
        $region42: #{megacrn_forward.5} parent=11 // pred_check_branch
          %396 = sbr.rel (%p394) target = $region44
        $region43: #{megacrn_forward.5} parent=11 // pred_region
          _
        $region44: #{megacrn_forward.5} parent=11 // pred_fallthru
          _
      $region12: #{megacrn_forward.5} parent=5 // pred_fallthru
        _
      %p397 = scmp.lt.s32.totalorder %s30, 8
      // Predicated region
      $region45: #{megacrn_forward.5} parent=5 // pred_check
        %p398 = pneg %p397
      $region46: #{megacrn_forward.5} parent=5 // pred_check_branch
        %400 = sbr.rel (%p398) target = $region48
      $region47: #{megacrn_forward.5} parent=5 // pred_region
        // Predicated region
        $region49: #{megacrn_forward.5} parent=47 // pred_check
          %p401 = pneg %p64
        $region50: #{megacrn_forward.5} parent=47 // pred_check_branch
          %403 = sbr.rel (%p401) target = $region52
        $region51: #{megacrn_forward.5} parent=47 // pred_region
          %s404 = sand.u32 %s54, 1
          %s405 = scalar_lea.sflag [#allocation6], %s404
          %s406 = sand.u32 %s54, 1
          %s407 = smul.addr %s406, 16
          %s408 = scalar_lea.vmem [#allocation5], %s407
          %s410 = ssub.s32 256, 256
          %411 = vsyncadd %s405, %s410
          %s412 = smul.addr %s37, 2
          %s413 = smul.addr %s38, 4
          %s414 = sadd.s32 %s412, %s413
          %s415 = smul.addr %s414, 128
          %s416 = scalar_lea.hbm %s0, %s415
          %s417 = sshll.u32 %s408, 4
          %s418 = int_to_ptr.vmem [resolvable:$true] %s417
          %423 = dma.hbm_to_vmem [thread:$0]  %s416, 256, %s418, %s405, 128, 128, 8
        $region52: #{megacrn_forward.5} parent=47 // pred_fallthru
          _
        // Predicated region
        $region53: #{megacrn_forward.5} parent=47 // pred_check
          %p424 = pneg %p90
        $region54: #{megacrn_forward.5} parent=47 // pred_check_branch
          %426 = sbr.rel (%p424) target = $region56
        $region55: #{megacrn_forward.5} parent=47 // pred_region
          %s427 = sand.u32 %s30, 1
          %s428 = scalar_lea.sflag [#allocation9], %s427
          %s429 = sand.u32 %s80, 1
          %s430 = smul.addr %s429, 16
          %s431 = scalar_lea.vmem [#allocation8], %s430
          %s433 = ssub.s32 256, 256
          %434 = vsyncadd %s428, %s433
          %s435 = smul.addr %s37, 2
          %s436 = smul.addr %s435, 128
          %s437 = scalar_lea.hbm %s1, %s436
          %s438 = sshll.u32 %s431, 4
          %s439 = int_to_ptr.vmem [resolvable:$true] %s438
          %444 = dma.hbm_to_vmem [thread:$0]  %s437, 256, %s439, %s428, 128, 128, 8
        $region56: #{megacrn_forward.5} parent=47 // pred_fallthru
          _
      $region48: #{megacrn_forward.5} parent=5 // pred_fallthru
        _
      %p445 = scmp.le.s32.totalorder 1, %s30
      %p446 = scmp.lt.s32.totalorder %s30, 9
      %p447 = pnand %p445, %p446
      %p448 = pneg %p447
      // Predicated region
      $region57: #{megacrn_forward.5} parent=5 // pred_check
        _
      $region58: #{megacrn_forward.5} parent=5 // pred_check_branch
        %450 = sbr.rel (%p447) target = $region60
      $region59: #{megacrn_forward.5} parent=5 // pred_region
        %s451 = ssub.s32 %s30, 1
        %s452 = sand.u32 %s57, 1
        %s453 = scalar_lea.sflag [#allocation6], %s452
        %s454 = sand.u32 %s57, 1
        %s455 = smul.addr %s454, 16
        %s456 = scalar_lea.vmem [#allocation5], %s455
        // Predicated region
        $region61: #{megacrn_forward.5} parent=59 // pred_check
          %p457 = pneg %p70
        $region62: #{megacrn_forward.5} parent=59 // pred_check_branch
          %459 = sbr.rel (%p457) target = $region64
        $region63: #{megacrn_forward.5} parent=59 // pred_region
          %460 = dma.done %s453, 256
        $region64: #{megacrn_forward.5} parent=59 // pred_fallthru
          _
        %s461 = sand.u32 %s35, 1
        %s462 = scalar_lea.sflag [#allocation9], %s461
        %s463 = sand.u32 %s83, 1
        %s464 = smul.addr %s463, 16
        %s465 = scalar_lea.vmem [#allocation8], %s464
        // Predicated region
        $region65: #{megacrn_forward.5} parent=59 // pred_check
          %p466 = pneg %p96
        $region66: #{megacrn_forward.5} parent=59 // pred_check_branch
          %468 = sbr.rel (%p466) target = $region68
        $region67: #{megacrn_forward.5} parent=59 // pred_region
          %469 = dma.done %s462, 256
        $region68: #{megacrn_forward.5} parent=59 // pred_fallthru
          _
        // Predicated region
        $region69: #{megacrn_forward.5} parent=59 // pred_check
          %p470 = pneg %p117
        $region70: #{megacrn_forward.5} parent=59 // pred_check_branch
          %472 = sbr.rel (%p470) target = $region72
        $region71: #{megacrn_forward.5} parent=59 // pred_region
          %473 = dma.done [#allocation9], 768
        $region72: #{megacrn_forward.5} parent=59 // pred_fallthru
          _
        // Predicated region
        $region73: #{megacrn_forward.5} parent=59 // pred_check
          %p474 = pneg %p138
        $region74: #{megacrn_forward.5} parent=59 // pred_check_branch
          %476 = sbr.rel (%p474) target = $region76
        $region75: #{megacrn_forward.5} parent=59 // pred_region
          %477 = dma.done [#allocation12], 768
        $region76: #{megacrn_forward.5} parent=59 // pred_fallthru
          _
        // Predicated region
        $region77: #{megacrn_forward.5} parent=59 // pred_check
          %p478 = pneg %p159
        $region78: #{megacrn_forward.5} parent=59 // pred_check_branch
          %480 = sbr.rel (%p478) target = $region80
        $region79: #{megacrn_forward.5} parent=59 // pred_region
          %481 = dma.done [#allocation12], 2304
        $region80: #{megacrn_forward.5} parent=59 // pred_fallthru
          _
        // Predicated region
        $region81: #{megacrn_forward.5} parent=59 // pred_check
          %p482 = pneg %p180
        $region82: #{megacrn_forward.5} parent=59 // pred_check_branch
          %484 = sbr.rel (%p482) target = $region84
        $region83: #{megacrn_forward.5} parent=59 // pred_region
          %485 = dma.done [#allocation15], 2304
        $region84: #{megacrn_forward.5} parent=59 // pred_fallthru
          _
        // Predicated region
        $region85: #{megacrn_forward.5} parent=59 // pred_check
          %p486 = pneg %p201
        $region86: #{megacrn_forward.5} parent=59 // pred_check_branch
          %488 = sbr.rel (%p486) target = $region88
        $region87: #{megacrn_forward.5} parent=59 // pred_region
          %489 = dma.done [#allocation15], 16
        $region88: #{megacrn_forward.5} parent=59 // pred_fallthru
          _
        // Predicated region
        $region89: #{megacrn_forward.5} parent=59 // pred_check
          %p490 = pneg %p222
        $region90: #{megacrn_forward.5} parent=59 // pred_check_branch
          %492 = sbr.rel (%p490) target = $region92
        $region91: #{megacrn_forward.5} parent=59 // pred_region
          %493 = dma.done [#allocation18], 16
        $region92: #{megacrn_forward.5} parent=59 // pred_fallthru
          _
        // Predicated region
        $region93: #{megacrn_forward.5} parent=59 // pred_check
          %p494 = pneg %p243
        $region94: #{megacrn_forward.5} parent=59 // pred_check_branch
          %496 = sbr.rel (%p494) target = $region96
        $region95: #{megacrn_forward.5} parent=59 // pred_region
          %497 = dma.done [#allocation18], 768
        $region96: #{megacrn_forward.5} parent=59 // pred_fallthru
          _
        %s498 = sand.u32 %s57, 1
        %s499 = scalar_lea.sflag [#allocation6], %s498
        %s500 = sand.u32 %s57, 1
        %s501 = smul.addr %s500, 16
        %s502 = scalar_lea.vmem [#allocation5], %s501
        %p503 = pneg %p70
        %p504 = pneg %p67
        %s505 = sand.u32 %s35, 1
        %s506 = scalar_lea.sflag [#allocation9], %s505
        %s507 = sand.u32 %s83, 1
        %s508 = smul.addr %s507, 16
        %s509 = scalar_lea.vmem [#allocation8], %s508
        %p510 = pneg %p96
        %p511 = pneg %p93
        %p512 = pneg %p117
        %p513 = pneg %p114
        %p514 = pneg %p138
        %p515 = pneg %p135
        %p516 = pneg %p159
        %p517 = pneg %p156
        %p518 = pneg %p180
        %p519 = pneg %p177
        %p520 = pneg %p201
        %p521 = pneg %p198
        %p522 = pneg %p222
        %p523 = pneg %p219
        %p524 = pneg %p243
        %p525 = pneg %p240
        %p526 = pneg %p264
        %p527 = pneg %p261
        %p528 = pneg %p292
        %p529 = pneg %p289
        %s530 = sand.u32 %s279, 1
        %s531 = scalar_lea.sflag [#allocation7], %s530
        %s532 = sand.u32 %s279, 1
        %s533 = smul.addr %s532, 16
        %s534 = scalar_lea.vmem [#allocation20], %s533
        %p536 = scmp.eq.s32.totalorder %s40, 0
        // Predicated region
        $region97: #{megacrn_forward.5} parent=59 // pred_check
          %p537 = pneg %p536
        $region98: #{megacrn_forward.5} parent=59 // pred_check_branch
          %539 = sbr.rel (%p537) target = $region100
        $region99: #{megacrn_forward.5} parent=59 // pred_region
          %v540 = vld [vmem:[%s465] sm:$0xff]
          %v541 = vld [vmem:[%s465 + $0x8] sm:$0xff]
          %vm542 = vcmask 392192
          %543 = vst.msk [vmem:[#allocation2] sm:$0xff] %vm542, %v540
          %544 = vst.msk [vmem:[#allocation2 + $0x8] sm:$0xff] %vm542, %v541
          %vm545 = vcmask 7168
          %546 = vst.msk [vmem:[#allocation3] sm:$0xff] %vm545, 0.0
          %547 = vst.msk [vmem:[#allocation3 + $0x8] sm:$0xff] %vm545, 0.0
        $region100: #{megacrn_forward.5} parent=59 // pred_fallthru
          _
        %v548 = vld [vmem:[#allocation10] sm:$0xf]
        %v549 = vld [vmem:[#allocation10 + $0x4] sm:$0xf]
        %v550 = vld [vmem:[#allocation10 + $0x8] sm:$0xf]
        %v551 = vld [vmem:[#allocation10 + $0xc] sm:$0xf]
        %v552 = vld [vmem:[#allocation10 + $0x10] sm:$0xf]
        %v553 = vld [vmem:[#allocation10 + $0x14] sm:$0xf]
        %v554 = vld [vmem:[#allocation10 + $0x18] sm:$0xf]
        %v555 = vld [vmem:[#allocation10 + $0x1c] sm:$0xf]
        %v556 = vld [vmem:[#allocation10 + $0x20] sm:$0xf]
        %v557 = vld [vmem:[#allocation10 + $0x24] sm:$0xf]
        %v558 = vld [vmem:[#allocation10 + $0x28] sm:$0xf]
        %v559 = vld [vmem:[#allocation10 + $0x2c] sm:$0xf]
        %v560 = vld [vmem:[%s456] sm:$0xff]
        %v561 = vld [vmem:[%s456 + $0x8] sm:$0xff]
        %v562 = vld [vmem:[#allocation11] sm:$0x77]
        %v563 = vld [vmem:[#allocation11 + $0x8] sm:$0x77]
        %v564 = vld [vmem:[#allocation11 + $0x10] sm:$0x77]
        %v565 = vld [vmem:[#allocation11 + $0x18] sm:$0x77]
        %v566 = vld [vmem:[#allocation11 + $0x20] sm:$0x77]
        %v567 = vld [vmem:[#allocation11 + $0x28] sm:$0x77]
        %v568 = vld [vmem:[#allocation13] sm:$0xf]
        %v569 = vld [vmem:[#allocation13 + $0x4] sm:$0xf]
        %v570 = vld [vmem:[#allocation13 + $0x8] sm:$0xf]
        %v571 = vld [vmem:[#allocation13 + $0xc] sm:$0xf]
        %v572 = vld [vmem:[#allocation13 + $0x10] sm:$0xf]
        %v573 = vld [vmem:[#allocation13 + $0x14] sm:$0xf]
        %v574 = vld [vmem:[#allocation13 + $0x18] sm:$0xf]
        %v575 = vld [vmem:[#allocation13 + $0x1c] sm:$0xf]
        %v576 = vld [vmem:[#allocation13 + $0x20] sm:$0xf]
        %v577 = vld [vmem:[#allocation13 + $0x24] sm:$0xf]
        %v578 = vld [vmem:[#allocation13 + $0x28] sm:$0xf]
        %v579 = vld [vmem:[#allocation13 + $0x2c] sm:$0xf]
        %v580 = vld [vmem:[#allocation13 + $0x30] sm:$0xf]
        %v581 = vld [vmem:[#allocation13 + $0x34] sm:$0xf]
        %v582 = vld [vmem:[#allocation13 + $0x38] sm:$0xf]
        %v583 = vld [vmem:[#allocation13 + $0x3c] sm:$0xf]
        %v584 = vld [vmem:[#allocation13 + $0x40] sm:$0xf]
        %v585 = vld [vmem:[#allocation13 + $0x44] sm:$0xf]
        %v586 = vld [vmem:[#allocation13 + $0x48] sm:$0xf]
        %v587 = vld [vmem:[#allocation13 + $0x4c] sm:$0xf]
        %v588 = vld [vmem:[#allocation13 + $0x50] sm:$0xf]
        %v589 = vld [vmem:[#allocation13 + $0x54] sm:$0xf]
        %v590 = vld [vmem:[#allocation13 + $0x58] sm:$0xf]
        %v591 = vld [vmem:[#allocation13 + $0x5c] sm:$0xf]
        %v592 = vld [vmem:[#allocation13 + $0x60] sm:$0xf]
        %v593 = vld [vmem:[#allocation13 + $0x64] sm:$0xf]
        %v594 = vld [vmem:[#allocation13 + $0x68] sm:$0xf]
        %v595 = vld [vmem:[#allocation13 + $0x6c] sm:$0xf]
        %v596 = vld [vmem:[#allocation13 + $0x70] sm:$0xf]
        %v597 = vld [vmem:[#allocation13 + $0x74] sm:$0xf]
        %v598 = vld [vmem:[#allocation13 + $0x78] sm:$0xf]
        %v599 = vld [vmem:[#allocation13 + $0x7c] sm:$0xf]
        %v600 = vld [vmem:[#allocation13 + $0x80] sm:$0xf]
        %v601 = vld [vmem:[#allocation13 + $0x84] sm:$0xf]
        %v602 = vld [vmem:[#allocation13 + $0x88] sm:$0xf]
        %v603 = vld [vmem:[#allocation13 + $0x8c] sm:$0xf]
        %v604 = vld [vmem:[#allocation14] sm:$0xf]
        %v605 = vld [vmem:[#allocation14 + $0x4] sm:$0xf]
        %v606 = vld [vmem:[#allocation14 + $0x8] sm:$0xf]
        %v607 = vld [vmem:[#allocation14 + $0xc] sm:$0xf]
        %v608 = vld [vmem:[#allocation14 + $0x10] sm:$0xf]
        %v609 = vld [vmem:[#allocation14 + $0x14] sm:$0xf]
        %v610 = vld [vmem:[#allocation14 + $0x18] sm:$0xf]
        %v611 = vld [vmem:[#allocation14 + $0x1c] sm:$0xf]
        %v612 = vld [vmem:[#allocation14 + $0x20] sm:$0xf]
        %v613 = vld [vmem:[#allocation14 + $0x24] sm:$0xf]
        %v614 = vld [vmem:[#allocation14 + $0x28] sm:$0xf]
        %v615 = vld [vmem:[#allocation14 + $0x2c] sm:$0xf]
        %v616 = vld [vmem:[#allocation14 + $0x30] sm:$0xf]
        %v617 = vld [vmem:[#allocation14 + $0x34] sm:$0xf]
        %v618 = vld [vmem:[#allocation14 + $0x38] sm:$0xf]
        %v619 = vld [vmem:[#allocation14 + $0x3c] sm:$0xf]
        %v620 = vld [vmem:[#allocation14 + $0x40] sm:$0xf]
        %v621 = vld [vmem:[#allocation14 + $0x44] sm:$0xf]
        %v622 = vld [vmem:[#allocation14 + $0x48] sm:$0xf]
        %v623 = vld [vmem:[#allocation14 + $0x4c] sm:$0xf]
        %v624 = vld [vmem:[#allocation14 + $0x50] sm:$0xf]
        %v625 = vld [vmem:[#allocation14 + $0x54] sm:$0xf]
        %v626 = vld [vmem:[#allocation14 + $0x58] sm:$0xf]
        %v627 = vld [vmem:[#allocation14 + $0x5c] sm:$0xf]
        %v628 = vld [vmem:[#allocation14 + $0x60] sm:$0xf]
        %v629 = vld [vmem:[#allocation14 + $0x64] sm:$0xf]
        %v630 = vld [vmem:[#allocation14 + $0x68] sm:$0xf]
        %v631 = vld [vmem:[#allocation14 + $0x6c] sm:$0xf]
        %v632 = vld [vmem:[#allocation14 + $0x70] sm:$0xf]
        %v633 = vld [vmem:[#allocation14 + $0x74] sm:$0xf]
        %v634 = vld [vmem:[#allocation14 + $0x78] sm:$0xf]
        %v635 = vld [vmem:[#allocation14 + $0x7c] sm:$0xf]
        %v636 = vld [vmem:[#allocation14 + $0x80] sm:$0xf]
        %v637 = vld [vmem:[#allocation14 + $0x84] sm:$0xf]
        %v638 = vld [vmem:[#allocation14 + $0x88] sm:$0xf]
        %v639 = vld [vmem:[#allocation14 + $0x8c] sm:$0xf]
        %v640 = vld [vmem:[#allocation16] sm:$0x1]
        %v641 = vld [vmem:[#allocation17] sm:$0x1]
        %v642 = vld [vmem:[#allocation3] sm:$0xff]
        %v643 = vld [vmem:[#allocation3 + $0x8] sm:$0xff]
        %v644 = vld [vmem:[#allocation2] sm:$0xff]
        %v645 = vld [vmem:[#allocation2 + $0x8] sm:$0xff]
        %v646 = vpack.c.bf16 %v643, %v642
        %v659 = vunpack.c.l.b16 %v548
        %v660 = vunpack.c.l.b16 %v549
        %v661 = vunpack.c.l.b16 %v550
        %v662 = vunpack.c.l.b16 %v551
        %v663 = vunpack.c.l.b16 %v552
        %v664 = vunpack.c.l.b16 %v553
        %v665 = vunpack.c.l.b16 %v554
        %v666 = vunpack.c.l.b16 %v555
        %v667 = vunpack.c.l.b16 %v556
        %v668 = vunpack.c.l.b16 %v557
        %v669 = vunpack.c.l.b16 %v558
        %v670 = vunpack.c.l.b16 %v559
        %v671 = vpack.c.b16 %v660, %v659
        %v672 = vpack.c.b16 %v662, %v661
        %v673 = vpack.c.b16 %v664, %v663
        %v674 = vpack.c.b16 %v666, %v665
        %v675 = vpack.c.b16 %v668, %v667
        %v676 = vpack.c.b16 %v670, %v669
        %vm677 = vcmask 130048
        %v679 = vsel %vm677, %v671, 0
        %v682 = vsel %vm677, %v672, 0
        %v685 = vsel %vm677, %v673, 0
        %v688 = vsel %vm677, %v674, 0
        %v691 = vsel %vm677, %v675, 0
        %v694 = vsel %vm677, %v676, 0
        %696 = vmatprep.subr.bf16.mxu0 0
        %697 = vmatpush1.bf16.msra.mxu0 %v646
        %698 = vmatprep.subr.bf16.mxu0 0
        %699 = vmatpush1.bf16.msra.mxu0 0
        %700 = vmatprep.subr.bf16.mxu0 0
        %701 = vmatpush1.bf16.msra.mxu0 0
        %702 = vmatprep.subr.bf16.mxu0 0
        %703 = vmatpush1.bf16.msra.mxu0 0
        %704 = vmatprep.subr.bf16.mxu0 0
        %705 = vmatpush1.bf16.msra.mxu0 0
        %706 = vmatprep.subr.bf16.mxu0 0
        %707 = vmatpush1.bf16.msra.mxu0 0
        %708 = vmatprep.subr.bf16.mxu0 0
        %709 = vmatpush1.bf16.msra.mxu0 0
        %710 = vmatprep.subr.bf16.mxu0 0
        %711 = vmatpush1.bf16.msra.mxu0 0
        %712 = vmatprep.subr.bf16.mxu0 0
        %713 = vmatpush1.bf16.msra.mxu0 0
        %714 = vmatprep.subr.bf16.mxu0 0
        %715 = vmatpush1.bf16.msra.mxu0 0
        %716 = vmatprep.subr.bf16.mxu0 0
        %717 = vmatpush1.bf16.msra.mxu0 0
        %718 = vmatprep.subr.bf16.mxu0 0
        %719 = vmatpush1.bf16.msra.mxu0 0
        %720 = vmatprep.subr.bf16.mxu0 0
        %721 = vmatpush1.bf16.msra.mxu0 0
        %722 = vmatprep.subr.bf16.mxu0 0
        %723 = vmatpush1.bf16.msra.mxu0 0
        %724 = vmatprep.subr.bf16.mxu0 0
        %725 = vmatpush1.bf16.msra.mxu0 0
        %726 = vmatprep.subr.bf16.mxu0 0
        %727 = vmatpush1.bf16.msra.mxu0 0
        %728 = vmatprep.mubr.bf16.mxu0 0
        %729 = vmatmul.mubr.bf16.gmra.mrb[0].mxu0 %v679
        %v730 = vpop.f32.mrb[0].mxu0
        %v731 = vadd.f32 0.0, %v730
        %v732 = vpop.f32.mrb[0].mxu0
        %v733 = vpop.f32.mrb[0].mxu0
        %v734 = vadd.f32 0.0, %v733
        %v735 = vpop.f32.mrb[0].mxu0
        %736 = vmatprep.mubr.bf16.mxu0 0
        %737 = vmatmul.mubr.bf16.gmra.mrb[0].mxu0 %v682
        %v738 = vpop.f32.mrb[0].mxu0
        %v739 = vadd.f32 0.0, %v738
        %v740 = vpop.f32.mrb[0].mxu0
        %v741 = vpop.f32.mrb[0].mxu0
        %v742 = vadd.f32 0.0, %v741
        %v743 = vpop.f32.mrb[0].mxu0
        %744 = vmatprep.mubr.bf16.mxu0 0
        %745 = vmatmul.mubr.bf16.gmra.mrb[0].mxu0 %v685
        %v746 = vpop.f32.mrb[0].mxu0
        %v747 = vadd.f32 0.0, %v746
        %v748 = vpop.f32.mrb[0].mxu0
        %v749 = vpop.f32.mrb[0].mxu0
        %v750 = vadd.f32 0.0, %v749
        %v751 = vpop.f32.mrb[0].mxu0
        %752 = vmatprep.mubr.bf16.mxu0 0
        %753 = vmatmul.mubr.bf16.gmra.mrb[0].mxu0 %v688
        %v754 = vpop.f32.mrb[0].mxu0
        %v755 = vadd.f32 0.0, %v754
        %v756 = vpop.f32.mrb[0].mxu0
        %v757 = vpop.f32.mrb[0].mxu0
        %v758 = vadd.f32 0.0, %v757
        %v759 = vpop.f32.mrb[0].mxu0
        %760 = vmatprep.mubr.bf16.mxu0 0
        %761 = vmatmul.mubr.bf16.gmra.mrb[0].mxu0 %v691
        %v762 = vpop.f32.mrb[0].mxu0
        %v763 = vadd.f32 0.0, %v762
        %v764 = vpop.f32.mrb[0].mxu0
        %v765 = vpop.f32.mrb[0].mxu0
        %v766 = vadd.f32 0.0, %v765
        %v767 = vpop.f32.mrb[0].mxu0
        %768 = vmatprep.mubr.bf16.mxu0 0
        %769 = vmatmul.mubr.bf16.gmra.mrb[0].mxu0 %v694
        %v770 = vpop.f32.mrb[0].mxu0
        %v771 = vadd.f32 0.0, %v770
        %v772 = vpop.f32.mrb[0].mxu0
        %v773 = vpop.f32.mrb[0].mxu0
        %v774 = vadd.f32 0.0, %v773
        %v775 = vpop.f32.mrb[0].mxu0
        %776 = vdwg.mxu0
        %v777 = vpack.c.bf16 %v734, %v731
        %v778 = vpack.c.bf16 %v742, %v739
        %v779 = vpack.c.bf16 %v750, %v747
        %v780 = vpack.c.bf16 %v758, %v755
        %v781 = vpack.c.bf16 %v766, %v763
        %v782 = vpack.c.bf16 %v774, %v771
        %v783 = vunpack.c.l.bf16 %v777
        %v784 = vunpack.c.h.bf16 %v777
        %v785 = vunpack.c.l.bf16 %v562
        %v786 = vunpack.c.h.bf16 %v562
        %788 = vset.pattern.permute.xlu0 0
        %789 = vperm.xlu0 %788, %v783
        %v790 = vpop.permute.xlu0 %789
        %793 = vset.pattern.permute.xlu0 0
        %794 = vperm.xlu0 %793, %v784
        %v795 = vpop.permute.xlu0 %794
        %v797 = vlaneseq
        %v798 = vshrl.u32 %v797, 7
        %v799 = vsub.s32 0, %v798
        %v800 = vrot.slane %v785, %v799
        %v801 = vlaneseq
        %v802 = vshrl.u32 %v801, 7
        %v803 = vsub.s32 0, %v802
        %v804 = vrot.slane %v786, %v803
        %v805 = vmul.f32 %v790, %v800
        %v806 = vmul.f32 %v790, %v804
        %v807 = vmul.f32 %v795, %v800
        %v808 = vmul.f32 %v795, %v804
        %v809 = vunpack.c.l.bf16 %v778
        %v810 = vunpack.c.h.bf16 %v778
        %v811 = vunpack.c.l.bf16 %v563
        %v812 = vunpack.c.h.bf16 %v563
        %814 = vset.pattern.permute.xlu0 0
        %815 = vperm.xlu0 %814, %v809
        %v816 = vpop.permute.xlu0 %815
        %819 = vset.pattern.permute.xlu0 0
        %820 = vperm.xlu0 %819, %v810
        %v821 = vpop.permute.xlu0 %820
        %v823 = vlaneseq
        %v824 = vshrl.u32 %v823, 7
        %v825 = vsub.s32 0, %v824
        %v826 = vrot.slane %v811, %v825
        %v827 = vlaneseq
        %v828 = vshrl.u32 %v827, 7
        %v829 = vsub.s32 0, %v828
        %v830 = vrot.slane %v812, %v829
        %v831 = vmul.f32 %v816, %v826
        %v832 = vmul.f32 %v816, %v830
        %v833 = vmul.f32 %v821, %v826
        %v834 = vmul.f32 %v821, %v830
        %v835 = vadd.f32 %v805, %v831
        %v836 = vadd.f32 %v806, %v832
        %v837 = vadd.f32 %v807, %v833
        %v838 = vadd.f32 %v808, %v834
        %v839 = vunpack.c.l.bf16 %v779
        %v840 = vunpack.c.h.bf16 %v779
        %v841 = vunpack.c.l.bf16 %v564
        %v842 = vunpack.c.h.bf16 %v564
        %844 = vset.pattern.permute.xlu0 0
        %845 = vperm.xlu0 %844, %v839
        %v846 = vpop.permute.xlu0 %845
        %849 = vset.pattern.permute.xlu0 0
        %850 = vperm.xlu0 %849, %v840
        %v851 = vpop.permute.xlu0 %850
        %v853 = vlaneseq
        %v854 = vshrl.u32 %v853, 7
        %v855 = vsub.s32 0, %v854
        %v856 = vrot.slane %v841, %v855
        %v857 = vlaneseq
        %v858 = vshrl.u32 %v857, 7
        %v859 = vsub.s32 0, %v858
        %v860 = vrot.slane %v842, %v859
        %v861 = vmul.f32 %v846, %v856
        %v862 = vmul.f32 %v846, %v860
        %v863 = vmul.f32 %v851, %v856
        %v864 = vmul.f32 %v851, %v860
        %v865 = vadd.f32 %v835, %v861
        %v866 = vadd.f32 %v836, %v862
        %v867 = vadd.f32 %v837, %v863
        %v868 = vadd.f32 %v838, %v864
        %v869 = vunpack.c.l.bf16 %v780
        %v870 = vunpack.c.h.bf16 %v780
        %v871 = vunpack.c.l.bf16 %v565
        %v872 = vunpack.c.h.bf16 %v565
        %874 = vset.pattern.permute.xlu0 0
        %875 = vperm.xlu0 %874, %v869
        %v876 = vpop.permute.xlu0 %875
        %879 = vset.pattern.permute.xlu0 0
        %880 = vperm.xlu0 %879, %v870
        %v881 = vpop.permute.xlu0 %880
        %v883 = vlaneseq
        %v884 = vshrl.u32 %v883, 7
        %v885 = vsub.s32 0, %v884
        %v886 = vrot.slane %v871, %v885
        %v887 = vlaneseq
        %v888 = vshrl.u32 %v887, 7
        %v889 = vsub.s32 0, %v888
        %v890 = vrot.slane %v872, %v889
        %v891 = vmul.f32 %v876, %v886
        %v892 = vmul.f32 %v876, %v890
        %v893 = vmul.f32 %v881, %v886
        %v894 = vmul.f32 %v881, %v890
        %v895 = vadd.f32 %v865, %v891
        %v896 = vadd.f32 %v866, %v892
        %v897 = vadd.f32 %v867, %v893
        %v898 = vadd.f32 %v868, %v894
        %v899 = vunpack.c.l.bf16 %v781
        %v900 = vunpack.c.h.bf16 %v781
        %v901 = vunpack.c.l.bf16 %v566
        %v902 = vunpack.c.h.bf16 %v566
        %904 = vset.pattern.permute.xlu0 0
        %905 = vperm.xlu0 %904, %v899
        %v906 = vpop.permute.xlu0 %905
        %909 = vset.pattern.permute.xlu0 0
        %910 = vperm.xlu0 %909, %v900
        %v911 = vpop.permute.xlu0 %910
        %v913 = vlaneseq
        %v914 = vshrl.u32 %v913, 7
        %v915 = vsub.s32 0, %v914
        %v916 = vrot.slane %v901, %v915
        %v917 = vlaneseq
        %v918 = vshrl.u32 %v917, 7
        %v919 = vsub.s32 0, %v918
        %v920 = vrot.slane %v902, %v919
        %v921 = vmul.f32 %v906, %v916
        %v922 = vmul.f32 %v906, %v920
        %v923 = vmul.f32 %v911, %v916
        %v924 = vmul.f32 %v911, %v920
        %v925 = vadd.f32 %v895, %v921
        %v926 = vadd.f32 %v896, %v922
        %v927 = vadd.f32 %v897, %v923
        %v928 = vadd.f32 %v898, %v924
        %v929 = vunpack.c.l.bf16 %v782
        %v930 = vunpack.c.h.bf16 %v782
        %v931 = vunpack.c.l.bf16 %v567
        %v932 = vunpack.c.h.bf16 %v567
        %934 = vset.pattern.permute.xlu0 0
        %935 = vperm.xlu0 %934, %v929
        %v936 = vpop.permute.xlu0 %935
        %939 = vset.pattern.permute.xlu0 0
        %940 = vperm.xlu0 %939, %v930
        %v941 = vpop.permute.xlu0 %940
        %v943 = vlaneseq
        %v944 = vshrl.u32 %v943, 7
        %v945 = vsub.s32 0, %v944
        %v946 = vrot.slane %v931, %v945
        %v947 = vlaneseq
        %v948 = vshrl.u32 %v947, 7
        %v949 = vsub.s32 0, %v948
        %v950 = vrot.slane %v932, %v949
        %v951 = vmul.f32 %v936, %v946
        %v952 = vmul.f32 %v936, %v950
        %v953 = vmul.f32 %v941, %v946
        %v954 = vmul.f32 %v941, %v950
        %v955 = vadd.f32 %v925, %v951
        %v956 = vadd.f32 %v926, %v952
        %v957 = vadd.f32 %v927, %v953
        %v958 = vadd.f32 %v928, %v954
        %v959 = vpack.c.bf16 %v561, %v560
        %960 = vmatprep.subr.bf16.mxu0 0
        %961 = vmatpush1.bf16.msra.mxu0 %v959
        %962 = vmatprep.subr.bf16.mxu0 0
        %963 = vmatpush1.bf16.msra.mxu0 0
        %964 = vmatprep.subr.bf16.mxu0 0
        %965 = vmatpush1.bf16.msra.mxu0 0
        %966 = vmatprep.subr.bf16.mxu0 0
        %967 = vmatpush1.bf16.msra.mxu0 0
        %968 = vmatprep.subr.bf16.mxu0 0
        %969 = vmatpush1.bf16.msra.mxu0 0
        %970 = vmatprep.subr.bf16.mxu0 0
        %971 = vmatpush1.bf16.msra.mxu0 0
        %972 = vmatprep.subr.bf16.mxu0 0
        %973 = vmatpush1.bf16.msra.mxu0 0
        %974 = vmatprep.subr.bf16.mxu0 0
        %975 = vmatpush1.bf16.msra.mxu0 0
        %976 = vmatprep.subr.bf16.mxu0 0
        %977 = vmatpush1.bf16.msra.mxu0 0
        %978 = vmatprep.subr.bf16.mxu0 0
        %979 = vmatpush1.bf16.msra.mxu0 0
        %980 = vmatprep.subr.bf16.mxu0 0
        %981 = vmatpush1.bf16.msra.mxu0 0
        %982 = vmatprep.subr.bf16.mxu0 0
        %983 = vmatpush1.bf16.msra.mxu0 0
        %984 = vmatprep.subr.bf16.mxu0 0
        %985 = vmatpush1.bf16.msra.mxu0 0
        %986 = vmatprep.subr.bf16.mxu0 0
        %987 = vmatpush1.bf16.msra.mxu0 0
        %988 = vmatprep.subr.bf16.mxu0 0
        %989 = vmatpush1.bf16.msra.mxu0 0
        %990 = vmatprep.subr.bf16.mxu0 0
        %991 = vmatpush1.bf16.msra.mxu0 0
        %992 = vmatprep.mubr.bf16.mxu0 0
        %993 = vmatmul.mubr.bf16.gmra.mrb[0].mxu0 %v679
        %v994 = vpop.f32.mrb[0].mxu0
        %v995 = vadd.f32 0.0, %v994
        %v996 = vpop.f32.mrb[0].mxu0
        %v997 = vpop.f32.mrb[0].mxu0
        %v998 = vadd.f32 0.0, %v997
        %v999 = vpop.f32.mrb[0].mxu0
        %1000 = vmatprep.mubr.bf16.mxu0 0
        %1001 = vmatmul.mubr.bf16.gmra.mrb[0].mxu0 %v682
        %v1002 = vpop.f32.mrb[0].mxu0
        %v1003 = vadd.f32 0.0, %v1002
        %v1004 = vpop.f32.mrb[0].mxu0
        %v1005 = vpop.f32.mrb[0].mxu0
        %v1006 = vadd.f32 0.0, %v1005
        %v1007 = vpop.f32.mrb[0].mxu0
        %1008 = vmatprep.mubr.bf16.mxu0 0
        %1009 = vmatmul.mubr.bf16.gmra.mrb[0].mxu0 %v685
        %v1010 = vpop.f32.mrb[0].mxu0
        %v1011 = vadd.f32 0.0, %v1010
        %v1012 = vpop.f32.mrb[0].mxu0
        %v1013 = vpop.f32.mrb[0].mxu0
        %v1014 = vadd.f32 0.0, %v1013
        %v1015 = vpop.f32.mrb[0].mxu0
        %1016 = vmatprep.mubr.bf16.mxu0 0
        %1017 = vmatmul.mubr.bf16.gmra.mrb[0].mxu0 %v688
        %v1018 = vpop.f32.mrb[0].mxu0
        %v1019 = vadd.f32 0.0, %v1018
        %v1020 = vpop.f32.mrb[0].mxu0
        %v1021 = vpop.f32.mrb[0].mxu0
        %v1022 = vadd.f32 0.0, %v1021
        %v1023 = vpop.f32.mrb[0].mxu0
        %1024 = vmatprep.mubr.bf16.mxu0 0
        %1025 = vmatmul.mubr.bf16.gmra.mrb[0].mxu0 %v691
        %v1026 = vpop.f32.mrb[0].mxu0
        %v1027 = vadd.f32 0.0, %v1026
        %v1028 = vpop.f32.mrb[0].mxu0
        %v1029 = vpop.f32.mrb[0].mxu0
        %v1030 = vadd.f32 0.0, %v1029
        %v1031 = vpop.f32.mrb[0].mxu0
        %1032 = vmatprep.mubr.bf16.mxu0 0
        %1033 = vmatmul.mubr.bf16.gmra.mrb[0].mxu0 %v694
        %v1034 = vpop.f32.mrb[0].mxu0
        %v1035 = vadd.f32 0.0, %v1034
        %v1036 = vpop.f32.mrb[0].mxu0
        %v1037 = vpop.f32.mrb[0].mxu0
        %v1038 = vadd.f32 0.0, %v1037
        %v1039 = vpop.f32.mrb[0].mxu0
        %1040 = vdwg.mxu0
        %v1041 = vpack.c.bf16 %v998, %v995
        %v1042 = vpack.c.bf16 %v1006, %v1003
        %v1043 = vpack.c.bf16 %v1014, %v1011
        %v1044 = vpack.c.bf16 %v1022, %v1019
        %v1045 = vpack.c.bf16 %v1030, %v1027
        %v1046 = vpack.c.bf16 %v1038, %v1035
        %v1048 = vunpack.c.l.b16 %v563
        %v1049 = vunpack.c.h.b16 %v563
        %v1050 = vpack.c.b16 %v1048, %v1048
        %v1051 = vpack.c.b16 %v1049, %v1049
        %v1053 = vshrl.u32 %v1050, 16
        %v1055 = vshll.u32 %v1050, 16
        %v1057 = vrot.slane %v1055, 1
        %v1058 = vor.u32 %v1053, %v1057
        %v1060 = vshrl.u32 %v1051, 16
        %v1062 = vshll.u32 %v1051, 16
        %v1064 = vrot.slane %v1062, 1
        %v1065 = vor.u32 %v1060, %v1064
        %vm1066 = vcmask 39936
        %v1068 = vsel %vm1066, %v1042, 0
        %vm1070 = vcmask 1041408
        %vm1071 = vcmask 1042432
        %v1072 = vsel %vm1070, 4294967295, 65535
        %v1073 = vsel %vm1071, %v1072, 0
        %v1075 = vand.u32 %v1058, %v1073
        %v1078 = vand.u32 %v1065, %v1073
        %1080 = vmatprep.subr.bf16.mxu0 %v1078
        %1081 = vmatpush1.bf16.msra.mxu0 %v1075
        %1082 = vmatprep.subr.bf16.mxu0 0
        %1083 = vmatpush1.bf16.msra.mxu0 0
        %1084 = vmatprep.subr.bf16.mxu0 0
        %1085 = vmatpush1.bf16.msra.mxu0 0
        %1086 = vmatprep.subr.bf16.mxu0 0
        %1087 = vmatpush1.bf16.msra.mxu0 0
        %1088 = vmatprep.subr.bf16.mxu0 0
        %1089 = vmatpush1.bf16.msra.mxu0 0
        %1090 = vmatprep.subr.bf16.mxu0 0
        %1091 = vmatpush1.bf16.msra.mxu0 0
        %1092 = vmatprep.subr.bf16.mxu0 0
        %1093 = vmatpush1.bf16.msra.mxu0 0
        %1094 = vmatprep.subr.bf16.mxu0 0
        %1095 = vmatpush1.bf16.msra.mxu0 0
        %1096 = vmatprep.subr.bf16.mxu0 0
        %1097 = vmatpush1.bf16.msra.mxu0 0
        %1098 = vmatprep.subr.bf16.mxu0 0
        %1099 = vmatpush1.bf16.msra.mxu0 0
        %1100 = vmatprep.subr.bf16.mxu0 0
        %1101 = vmatpush1.bf16.msra.mxu0 0
        %1102 = vmatprep.subr.bf16.mxu0 0
        %1103 = vmatpush1.bf16.msra.mxu0 0
        %1104 = vmatprep.subr.bf16.mxu0 0
        %1105 = vmatpush1.bf16.msra.mxu0 0
        %1106 = vmatprep.subr.bf16.mxu0 0
        %1107 = vmatpush1.bf16.msra.mxu0 0
        %1108 = vmatprep.subr.bf16.mxu0 0
        %1109 = vmatpush1.bf16.msra.mxu0 0
        %1110 = vmatprep.subr.bf16.mxu0 0
        %1111 = vmatpush1.bf16.msra.mxu0 0
        %1112 = vmatprep.mubr.bf16.mxu0 0
        %1113 = vmatmul.mubr.bf16.gmra.mrb[0].mxu0 %v1068
        %v1114 = vpop.f32.mrb[0].mxu0
        %v1115 = vadd.f32 0.0, %v1114
        %v1116 = vpop.f32.mrb[0].mxu0
        %v1117 = vadd.f32 0.0, %v1116
        %v1118 = vpop.f32.mrb[0].mxu0
        %v1119 = vadd.f32 0.0, %v1118
        %v1120 = vpop.f32.mrb[0].mxu0
        %v1121 = vadd.f32 0.0, %v1120
        %1122 = vdwg.mxu0
        %v1124 = vunpack.c.l.b16 %v562
        %v1125 = vunpack.c.h.b16 %v562
        %v1126 = vpack.c.b16 %v1124, %v1124
        %v1127 = vpack.c.b16 %v1125, %v1125
        %v1129 = vshrl.u32 %v1126, 16
        %v1131 = vshll.u32 %v1126, 16
        %v1133 = vrot.slane %v1131, 1
        %v1134 = vor.u32 %v1129, %v1133
        %v1136 = vshrl.u32 %v1127, 16
        %v1138 = vshll.u32 %v1127, 16
        %v1140 = vrot.slane %v1138, 1
        %v1141 = vor.u32 %v1136, %v1140
        %v1143 = vsel %vm1066, %v1041, 0
        %v1146 = vand.u32 %v1134, %v1073
        %v1149 = vand.u32 %v1141, %v1073
        %1151 = vmatprep.subr.bf16.mxu0 %v1149
        %1152 = vmatpush1.bf16.msra.mxu0 %v1146
        %1153 = vmatprep.subr.bf16.mxu0 0
        %1154 = vmatpush1.bf16.msra.mxu0 0
        %1155 = vmatprep.subr.bf16.mxu0 0
        %1156 = vmatpush1.bf16.msra.mxu0 0
        %1157 = vmatprep.subr.bf16.mxu0 0
        %1158 = vmatpush1.bf16.msra.mxu0 0
        %1159 = vmatprep.subr.bf16.mxu0 0
        %1160 = vmatpush1.bf16.msra.mxu0 0
        %1161 = vmatprep.subr.bf16.mxu0 0
        %1162 = vmatpush1.bf16.msra.mxu0 0
        %1163 = vmatprep.subr.bf16.mxu0 0
        %1164 = vmatpush1.bf16.msra.mxu0 0
        %1165 = vmatprep.subr.bf16.mxu0 0
        %1166 = vmatpush1.bf16.msra.mxu0 0
        %1167 = vmatprep.subr.bf16.mxu0 0
        %1168 = vmatpush1.bf16.msra.mxu0 0
        %1169 = vmatprep.subr.bf16.mxu0 0
        %1170 = vmatpush1.bf16.msra.mxu0 0
        %1171 = vmatprep.subr.bf16.mxu0 0
        %1172 = vmatpush1.bf16.msra.mxu0 0
        %1173 = vmatprep.subr.bf16.mxu0 0
        %1174 = vmatpush1.bf16.msra.mxu0 0
        %1175 = vmatprep.subr.bf16.mxu0 0
        %1176 = vmatpush1.bf16.msra.mxu0 0
        %1177 = vmatprep.subr.bf16.mxu0 0
        %1178 = vmatpush1.bf16.msra.mxu0 0
        %1179 = vmatprep.subr.bf16.mxu0 0
        %1180 = vmatpush1.bf16.msra.mxu0 0
        %1181 = vmatprep.subr.bf16.mxu0 0
        %1182 = vmatpush1.bf16.msra.mxu0 0
        %1183 = vmatprep.mubr.bf16.mxu0 0
        %1184 = vmatmul.mubr.bf16.gmra.mrb[0].mxu0 %v1143
        %v1185 = vpop.f32.mrb[0].mxu0
        %v1186 = vadd.f32 %v1115, %v1185
        %v1187 = vpop.f32.mrb[0].mxu0
        %v1188 = vadd.f32 %v1117, %v1187
        %v1189 = vpop.f32.mrb[0].mxu0
        %v1190 = vadd.f32 %v1119, %v1189
        %v1191 = vpop.f32.mrb[0].mxu0
        %v1192 = vadd.f32 %v1121, %v1191
        %1193 = vdwg.mxu0
        %v1195 = vunpack.c.l.b16 %v564
        %v1196 = vunpack.c.h.b16 %v564
        %v1197 = vpack.c.b16 %v1195, %v1195
        %v1198 = vpack.c.b16 %v1196, %v1196
        %v1200 = vshrl.u32 %v1197, 16
        %v1202 = vshll.u32 %v1197, 16
        %v1204 = vrot.slane %v1202, 1
        %v1205 = vor.u32 %v1200, %v1204
        %v1207 = vshrl.u32 %v1198, 16
        %v1209 = vshll.u32 %v1198, 16
        %v1211 = vrot.slane %v1209, 1
        %v1212 = vor.u32 %v1207, %v1211
        %v1214 = vsel %vm1066, %v1043, 0
        %v1217 = vand.u32 %v1205, %v1073
        %v1220 = vand.u32 %v1212, %v1073
        %1222 = vmatprep.subr.bf16.mxu0 %v1220
        %1223 = vmatpush1.bf16.msra.mxu0 %v1217
        %1224 = vmatprep.subr.bf16.mxu0 0
        %1225 = vmatpush1.bf16.msra.mxu0 0
        %1226 = vmatprep.subr.bf16.mxu0 0
        %1227 = vmatpush1.bf16.msra.mxu0 0
        %1228 = vmatprep.subr.bf16.mxu0 0
        %1229 = vmatpush1.bf16.msra.mxu0 0
        %1230 = vmatprep.subr.bf16.mxu0 0
        %1231 = vmatpush1.bf16.msra.mxu0 0
        %1232 = vmatprep.subr.bf16.mxu0 0
        %1233 = vmatpush1.bf16.msra.mxu0 0
        %1234 = vmatprep.subr.bf16.mxu0 0
        %1235 = vmatpush1.bf16.msra.mxu0 0
        %1236 = vmatprep.subr.bf16.mxu0 0
        %1237 = vmatpush1.bf16.msra.mxu0 0
        %1238 = vmatprep.subr.bf16.mxu0 0
        %1239 = vmatpush1.bf16.msra.mxu0 0
        %1240 = vmatprep.subr.bf16.mxu0 0
        %1241 = vmatpush1.bf16.msra.mxu0 0
        %1242 = vmatprep.subr.bf16.mxu0 0
        %1243 = vmatpush1.bf16.msra.mxu0 0
        %1244 = vmatprep.subr.bf16.mxu0 0
        %1245 = vmatpush1.bf16.msra.mxu0 0
        %1246 = vmatprep.subr.bf16.mxu0 0
        %1247 = vmatpush1.bf16.msra.mxu0 0
        %1248 = vmatprep.subr.bf16.mxu0 0
        %1249 = vmatpush1.bf16.msra.mxu0 0
        %1250 = vmatprep.subr.bf16.mxu0 0
        %1251 = vmatpush1.bf16.msra.mxu0 0
        %1252 = vmatprep.subr.bf16.mxu0 0
        %1253 = vmatpush1.bf16.msra.mxu0 0
        %1254 = vmatprep.mubr.bf16.mxu0 0
        %1255 = vmatmul.mubr.bf16.gmra.mrb[0].mxu0 %v1214
        %v1256 = vpop.f32.mrb[0].mxu0
        %v1257 = vadd.f32 0.0, %v1256
        %v1258 = vpop.f32.mrb[0].mxu0
        %v1259 = vadd.f32 0.0, %v1258
        %v1260 = vpop.f32.mrb[0].mxu0
        %v1261 = vadd.f32 0.0, %v1260
        %v1262 = vpop.f32.mrb[0].mxu0
        %v1263 = vadd.f32 0.0, %v1262
        %1264 = vdwg.mxu0
        %v1265 = vadd.f32 %v1186, %v1257
        %v1266 = vadd.f32 %v1188, %v1259
        %v1267 = vadd.f32 %v1190, %v1261
        %v1268 = vadd.f32 %v1192, %v1263
        %v1270 = vunpack.c.l.b16 %v565
        %v1271 = vunpack.c.h.b16 %v565
        %v1272 = vpack.c.b16 %v1270, %v1270
        %v1273 = vpack.c.b16 %v1271, %v1271
        %v1275 = vshrl.u32 %v1272, 16
        %v1277 = vshll.u32 %v1272, 16
        %v1279 = vrot.slane %v1277, 1
        %v1280 = vor.u32 %v1275, %v1279
        %v1282 = vshrl.u32 %v1273, 16
        %v1284 = vshll.u32 %v1273, 16
        %v1286 = vrot.slane %v1284, 1
        %v1287 = vor.u32 %v1282, %v1286
        %v1289 = vsel %vm1066, %v1044, 0
        %v1292 = vand.u32 %v1280, %v1073
        %v1295 = vand.u32 %v1287, %v1073
        %1297 = vmatprep.subr.bf16.mxu0 %v1295
        %1298 = vmatpush1.bf16.msra.mxu0 %v1292
        %1299 = vmatprep.subr.bf16.mxu0 0
        %1300 = vmatpush1.bf16.msra.mxu0 0
        %1301 = vmatprep.subr.bf16.mxu0 0
        %1302 = vmatpush1.bf16.msra.mxu0 0
        %1303 = vmatprep.subr.bf16.mxu0 0
        %1304 = vmatpush1.bf16.msra.mxu0 0
        %1305 = vmatprep.subr.bf16.mxu0 0
        %1306 = vmatpush1.bf16.msra.mxu0 0
        %1307 = vmatprep.subr.bf16.mxu0 0
        %1308 = vmatpush1.bf16.msra.mxu0 0
        %1309 = vmatprep.subr.bf16.mxu0 0
        %1310 = vmatpush1.bf16.msra.mxu0 0
        %1311 = vmatprep.subr.bf16.mxu0 0
        %1312 = vmatpush1.bf16.msra.mxu0 0
        %1313 = vmatprep.subr.bf16.mxu0 0
        %1314 = vmatpush1.bf16.msra.mxu0 0
        %1315 = vmatprep.subr.bf16.mxu0 0
        %1316 = vmatpush1.bf16.msra.mxu0 0
        %1317 = vmatprep.subr.bf16.mxu0 0
        %1318 = vmatpush1.bf16.msra.mxu0 0
        %1319 = vmatprep.subr.bf16.mxu0 0
        %1320 = vmatpush1.bf16.msra.mxu0 0
        %1321 = vmatprep.subr.bf16.mxu0 0
        %1322 = vmatpush1.bf16.msra.mxu0 0
        %1323 = vmatprep.subr.bf16.mxu0 0
        %1324 = vmatpush1.bf16.msra.mxu0 0
        %1325 = vmatprep.subr.bf16.mxu0 0
        %1326 = vmatpush1.bf16.msra.mxu0 0
        %1327 = vmatprep.subr.bf16.mxu0 0
        %1328 = vmatpush1.bf16.msra.mxu0 0
        %1329 = vmatprep.mubr.bf16.mxu0 0
        %1330 = vmatmul.mubr.bf16.gmra.mrb[0].mxu0 %v1289
        %v1331 = vpop.f32.mrb[0].mxu0
        %v1332 = vadd.f32 0.0, %v1331
        %v1333 = vpop.f32.mrb[0].mxu0
        %v1334 = vadd.f32 0.0, %v1333
        %v1335 = vpop.f32.mrb[0].mxu0
        %v1336 = vadd.f32 0.0, %v1335
        %v1337 = vpop.f32.mrb[0].mxu0
        %v1338 = vadd.f32 0.0, %v1337
        %1339 = vdwg.mxu0
        %v1340 = vadd.f32 %v1265, %v1332
        %v1341 = vadd.f32 %v1266, %v1334
        %v1342 = vadd.f32 %v1267, %v1336
        %v1343 = vadd.f32 %v1268, %v1338
        %v1345 = vunpack.c.l.b16 %v566
        %v1346 = vunpack.c.h.b16 %v566
        %v1347 = vpack.c.b16 %v1345, %v1345
        %v1348 = vpack.c.b16 %v1346, %v1346
        %v1350 = vshrl.u32 %v1347, 16
        %v1352 = vshll.u32 %v1347, 16
        %v1354 = vrot.slane %v1352, 1
        %v1355 = vor.u32 %v1350, %v1354
        %v1357 = vshrl.u32 %v1348, 16
        %v1359 = vshll.u32 %v1348, 16
        %v1361 = vrot.slane %v1359, 1
        %v1362 = vor.u32 %v1357, %v1361
        %v1364 = vsel %vm1066, %v1045, 0
        %v1367 = vand.u32 %v1355, %v1073
        %v1370 = vand.u32 %v1362, %v1073
        %1372 = vmatprep.subr.bf16.mxu0 %v1370
        %1373 = vmatpush1.bf16.msra.mxu0 %v1367
        %1374 = vmatprep.subr.bf16.mxu0 0
        %1375 = vmatpush1.bf16.msra.mxu0 0
        %1376 = vmatprep.subr.bf16.mxu0 0
        %1377 = vmatpush1.bf16.msra.mxu0 0
        %1378 = vmatprep.subr.bf16.mxu0 0
        %1379 = vmatpush1.bf16.msra.mxu0 0
        %1380 = vmatprep.subr.bf16.mxu0 0
        %1381 = vmatpush1.bf16.msra.mxu0 0
        %1382 = vmatprep.subr.bf16.mxu0 0
        %1383 = vmatpush1.bf16.msra.mxu0 0
        %1384 = vmatprep.subr.bf16.mxu0 0
        %1385 = vmatpush1.bf16.msra.mxu0 0
        %1386 = vmatprep.subr.bf16.mxu0 0
        %1387 = vmatpush1.bf16.msra.mxu0 0
        %1388 = vmatprep.subr.bf16.mxu0 0
        %1389 = vmatpush1.bf16.msra.mxu0 0
        %1390 = vmatprep.subr.bf16.mxu0 0
        %1391 = vmatpush1.bf16.msra.mxu0 0
        %1392 = vmatprep.subr.bf16.mxu0 0
        %1393 = vmatpush1.bf16.msra.mxu0 0
        %1394 = vmatprep.subr.bf16.mxu0 0
        %1395 = vmatpush1.bf16.msra.mxu0 0
        %1396 = vmatprep.subr.bf16.mxu0 0
        %1397 = vmatpush1.bf16.msra.mxu0 0
        %1398 = vmatprep.subr.bf16.mxu0 0
        %1399 = vmatpush1.bf16.msra.mxu0 0
        %1400 = vmatprep.subr.bf16.mxu0 0
        %1401 = vmatpush1.bf16.msra.mxu0 0
        %1402 = vmatprep.subr.bf16.mxu0 0
        %1403 = vmatpush1.bf16.msra.mxu0 0
        %1404 = vmatprep.mubr.bf16.mxu0 0
        %1405 = vmatmul.mubr.bf16.gmra.mrb[0].mxu0 %v1364
        %v1406 = vpop.f32.mrb[0].mxu0
        %v1407 = vadd.f32 0.0, %v1406
        %v1408 = vpop.f32.mrb[0].mxu0
        %v1409 = vadd.f32 0.0, %v1408
        %v1410 = vpop.f32.mrb[0].mxu0
        %v1411 = vadd.f32 0.0, %v1410
        %v1412 = vpop.f32.mrb[0].mxu0
        %v1413 = vadd.f32 0.0, %v1412
        %1414 = vdwg.mxu0
        %v1415 = vadd.f32 %v1340, %v1407
        %v1416 = vadd.f32 %v1341, %v1409
        %v1417 = vadd.f32 %v1342, %v1411
        %v1418 = vadd.f32 %v1343, %v1413
        %v1420 = vunpack.c.l.b16 %v567
        %v1421 = vunpack.c.h.b16 %v567
        %v1422 = vpack.c.b16 %v1420, %v1420
        %v1423 = vpack.c.b16 %v1421, %v1421
        %v1425 = vshrl.u32 %v1422, 16
        %v1427 = vshll.u32 %v1422, 16
        %v1429 = vrot.slane %v1427, 1
        %v1430 = vor.u32 %v1425, %v1429
        %v1432 = vshrl.u32 %v1423, 16
        %v1434 = vshll.u32 %v1423, 16
        %v1436 = vrot.slane %v1434, 1
        %v1437 = vor.u32 %v1432, %v1436
        %v1439 = vsel %vm1066, %v1046, 0
        %v1442 = vand.u32 %v1430, %v1073
        %v1445 = vand.u32 %v1437, %v1073
        %1447 = vmatprep.subr.bf16.mxu0 %v1445
        %1448 = vmatpush1.bf16.msra.mxu0 %v1442
        %1449 = vmatprep.subr.bf16.mxu0 0
        %1450 = vmatpush1.bf16.msra.mxu0 0
        %1451 = vmatprep.subr.bf16.mxu0 0
        %1452 = vmatpush1.bf16.msra.mxu0 0
        %1453 = vmatprep.subr.bf16.mxu0 0
        %1454 = vmatpush1.bf16.msra.mxu0 0
        %1455 = vmatprep.subr.bf16.mxu0 0
        %1456 = vmatpush1.bf16.msra.mxu0 0
        %1457 = vmatprep.subr.bf16.mxu0 0
        %1458 = vmatpush1.bf16.msra.mxu0 0
        %1459 = vmatprep.subr.bf16.mxu0 0
        %1460 = vmatpush1.bf16.msra.mxu0 0
        %1461 = vmatprep.subr.bf16.mxu0 0
        %1462 = vmatpush1.bf16.msra.mxu0 0
        %1463 = vmatprep.subr.bf16.mxu0 0
        %1464 = vmatpush1.bf16.msra.mxu0 0
        %1465 = vmatprep.subr.bf16.mxu0 0
        %1466 = vmatpush1.bf16.msra.mxu0 0
        %1467 = vmatprep.subr.bf16.mxu0 0
        %1468 = vmatpush1.bf16.msra.mxu0 0
        %1469 = vmatprep.subr.bf16.mxu0 0
        %1470 = vmatpush1.bf16.msra.mxu0 0
        %1471 = vmatprep.subr.bf16.mxu0 0
        %1472 = vmatpush1.bf16.msra.mxu0 0
        %1473 = vmatprep.subr.bf16.mxu0 0
        %1474 = vmatpush1.bf16.msra.mxu0 0
        %1475 = vmatprep.subr.bf16.mxu0 0
        %1476 = vmatpush1.bf16.msra.mxu0 0
        %1477 = vmatprep.subr.bf16.mxu0 0
        %1478 = vmatpush1.bf16.msra.mxu0 0
        %1479 = vmatprep.mubr.bf16.mxu0 0
        %1480 = vmatmul.mubr.bf16.gmra.mrb[0].mxu0 %v1439
        %v1481 = vpop.f32.mrb[0].mxu0
        %v1482 = vadd.f32 0.0, %v1481
        %v1483 = vpop.f32.mrb[0].mxu0
        %v1484 = vadd.f32 0.0, %v1483
        %v1485 = vpop.f32.mrb[0].mxu0
        %v1486 = vadd.f32 0.0, %v1485
        %v1487 = vpop.f32.mrb[0].mxu0
        %v1488 = vadd.f32 0.0, %v1487
        %1489 = vdwg.mxu0
        %v1490 = vadd.f32 %v1415, %v1482
        %v1491 = vadd.f32 %v1416, %v1484
        %v1492 = vadd.f32 %v1417, %v1486
        %v1493 = vadd.f32 %v1418, %v1488
        %v1494 = vadd.f32 %v955, %v1490
        %v1495 = vadd.f32 %v956, %v1491
        %v1496 = vadd.f32 %v957, %v1492
        %v1497 = vadd.f32 %v958, %v1493
        %v1498 = vpack.c.bf16 %v645, %v644
        %1499 = vmatprep.subr.bf16.mxu0 0
        %1500 = vmatpush1.bf16.msra.mxu0 %v1498
        %1501 = vmatprep.subr.bf16.mxu0 0
        %1502 = vmatpush1.bf16.msra.mxu0 0
        %1503 = vmatprep.subr.bf16.mxu0 0
        %1504 = vmatpush1.bf16.msra.mxu0 0
        %1505 = vmatprep.subr.bf16.mxu0 0
        %1506 = vmatpush1.bf16.msra.mxu0 0
        %1507 = vmatprep.subr.bf16.mxu0 0
        %1508 = vmatpush1.bf16.msra.mxu0 0
        %1509 = vmatprep.subr.bf16.mxu0 0
        %1510 = vmatpush1.bf16.msra.mxu0 0
        %1511 = vmatprep.subr.bf16.mxu0 0
        %1512 = vmatpush1.bf16.msra.mxu0 0
        %1513 = vmatprep.subr.bf16.mxu0 0
        %1514 = vmatpush1.bf16.msra.mxu0 0
        %1515 = vmatprep.subr.bf16.mxu0 0
        %1516 = vmatpush1.bf16.msra.mxu0 0
        %1517 = vmatprep.subr.bf16.mxu0 0
        %1518 = vmatpush1.bf16.msra.mxu0 0
        %1519 = vmatprep.subr.bf16.mxu0 0
        %1520 = vmatpush1.bf16.msra.mxu0 0
        %1521 = vmatprep.subr.bf16.mxu0 0
        %1522 = vmatpush1.bf16.msra.mxu0 0
        %1523 = vmatprep.subr.bf16.mxu0 0
        %1524 = vmatpush1.bf16.msra.mxu0 0
        %1525 = vmatprep.subr.bf16.mxu0 0
        %1526 = vmatpush1.bf16.msra.mxu0 0
        %1527 = vmatprep.subr.bf16.mxu0 0
        %1528 = vmatpush1.bf16.msra.mxu0 0
        %1529 = vmatprep.subr.bf16.mxu0 0
        %1530 = vmatpush1.bf16.msra.mxu0 0
        %1531 = vmatprep.mubr.bf16.mxu0 0
        %1532 = vmatmul.mubr.bf16.gmra.mrb[0].mxu0 %v679
        %v1533 = vpop.f32.mrb[0].mxu0
        %v1534 = vadd.f32 0.0, %v1533
        %v1535 = vpop.f32.mrb[0].mxu0
        %v1536 = vpop.f32.mrb[0].mxu0
        %v1537 = vadd.f32 0.0, %v1536
        %v1538 = vpop.f32.mrb[0].mxu0
        %1539 = vmatprep.mubr.bf16.mxu0 0
        %1540 = vmatmul.mubr.bf16.gmra.mrb[0].mxu0 %v682
        %v1541 = vpop.f32.mrb[0].mxu0
        %v1542 = vadd.f32 0.0, %v1541
        %v1543 = vpop.f32.mrb[0].mxu0
        %v1544 = vpop.f32.mrb[0].mxu0
        %v1545 = vadd.f32 0.0, %v1544
        %v1546 = vpop.f32.mrb[0].mxu0
        %1547 = vmatprep.mubr.bf16.mxu0 0
        %1548 = vmatmul.mubr.bf16.gmra.mrb[0].mxu0 %v685
        %v1549 = vpop.f32.mrb[0].mxu0
        %v1550 = vadd.f32 0.0, %v1549
        %v1551 = vpop.f32.mrb[0].mxu0
        %v1552 = vpop.f32.mrb[0].mxu0
        %v1553 = vadd.f32 0.0, %v1552
        %v1554 = vpop.f32.mrb[0].mxu0
        %1555 = vmatprep.mubr.bf16.mxu0 0
        %1556 = vmatmul.mubr.bf16.gmra.mrb[0].mxu0 %v688
        %v1557 = vpop.f32.mrb[0].mxu0
        %v1558 = vadd.f32 0.0, %v1557
        %v1559 = vpop.f32.mrb[0].mxu0
        %v1560 = vpop.f32.mrb[0].mxu0
        %v1561 = vadd.f32 0.0, %v1560
        %v1562 = vpop.f32.mrb[0].mxu0
        %1563 = vmatprep.mubr.bf16.mxu0 0
        %1564 = vmatmul.mubr.bf16.gmra.mrb[0].mxu0 %v691
        %v1565 = vpop.f32.mrb[0].mxu0
        %v1566 = vadd.f32 0.0, %v1565
        %v1567 = vpop.f32.mrb[0].mxu0
        %v1568 = vpop.f32.mrb[0].mxu0
        %v1569 = vadd.f32 0.0, %v1568
        %v1570 = vpop.f32.mrb[0].mxu0
        %1571 = vmatprep.mubr.bf16.mxu0 0
        %1572 = vmatmul.mubr.bf16.gmra.mrb[0].mxu0 %v694
        %v1573 = vpop.f32.mrb[0].mxu0
        %v1574 = vadd.f32 0.0, %v1573
        %v1575 = vpop.f32.mrb[0].mxu0
        %v1576 = vpop.f32.mrb[0].mxu0
        %v1577 = vadd.f32 0.0, %v1576
        %v1578 = vpop.f32.mrb[0].mxu0
        %1579 = vdwg.mxu0
        %v1580 = vpack.c.bf16 %v1537, %v1534
        %v1581 = vpack.c.bf16 %v1545, %v1542
        %v1582 = vpack.c.bf16 %v1553, %v1550
        %v1583 = vpack.c.bf16 %v1561, %v1558
        %v1584 = vpack.c.bf16 %v1569, %v1566
        %v1585 = vpack.c.bf16 %v1577, %v1574
        %v1592 = vunpack.c.l.b16 %v574
        %v1593 = vunpack.c.l.b16 %v575
        %v1594 = vunpack.c.l.b16 %v576
        %v1595 = vunpack.c.l.b16 %v577
        %v1596 = vunpack.c.l.b16 %v578
        %v1597 = vunpack.c.l.b16 %v579
        %v1598 = vpack.c.b16 %v1593, %v1592
        %v1599 = vpack.c.b16 %v1595, %v1594
        %v1600 = vpack.c.b16 %v1597, %v1596
        %vm1604 = vcmask 392192
        %v1606 = vsel %vm1604, %v1581, 0
        %1608 = vmatprep.subr.bf16.mxu0 0
        %1609 = vmatpush1.bf16.msra.mxu0 %v1598
        %1610 = vmatprep.subr.bf16.mxu0 0
        %1611 = vmatpush1.bf16.msra.mxu0 %v1599
        %1612 = vmatprep.subr.bf16.mxu0 0
        %1613 = vmatpush1.bf16.msra.mxu0 %v1600
        %1614 = vmatprep.subr.bf16.mxu0 0
        %1615 = vmatpush1.bf16.msra.mxu0 0
        %1616 = vmatprep.subr.bf16.mxu0 0
        %1617 = vmatpush1.bf16.msra.mxu0 0
        %1618 = vmatprep.subr.bf16.mxu0 0
        %1619 = vmatpush1.bf16.msra.mxu0 0
        %1620 = vmatprep.subr.bf16.mxu0 0
        %1621 = vmatpush1.bf16.msra.mxu0 0
        %1622 = vmatprep.subr.bf16.mxu0 0
        %1623 = vmatpush1.bf16.msra.mxu0 0
        %1624 = vmatprep.subr.bf16.mxu0 0
        %1625 = vmatpush1.bf16.msra.mxu0 0
        %1626 = vmatprep.subr.bf16.mxu0 0
        %1627 = vmatpush1.bf16.msra.mxu0 0
        %1628 = vmatprep.subr.bf16.mxu0 0
        %1629 = vmatpush1.bf16.msra.mxu0 0
        %1630 = vmatprep.subr.bf16.mxu0 0
        %1631 = vmatpush1.bf16.msra.mxu0 0
        %1632 = vmatprep.subr.bf16.mxu0 0
        %1633 = vmatpush1.bf16.msra.mxu0 0
        %1634 = vmatprep.subr.bf16.mxu0 0
        %1635 = vmatpush1.bf16.msra.mxu0 0
        %1636 = vmatprep.subr.bf16.mxu0 0
        %1637 = vmatpush1.bf16.msra.mxu0 0
        %1638 = vmatprep.subr.bf16.mxu0 0
        %1639 = vmatpush1.bf16.msra.mxu0 0
        %1640 = vmatprep.mubr.bf16.mxu0 0
        %1641 = vmatmul.mubr.bf16.gmra.mrb[0].mxu0 %v1606
        %v1642 = vpop.f32.mrb[0].mxu0
        %v1643 = vadd.f32 0.0, %v1642
        %v1644 = vpop.f32.mrb[0].mxu0
        %v1645 = vpop.f32.mrb[0].mxu0
        %v1646 = vadd.f32 0.0, %v1645
        %v1647 = vpop.f32.mrb[0].mxu0
        %1648 = vdwg.mxu0
        %v1655 = vunpack.c.l.b16 %v568
        %v1656 = vunpack.c.l.b16 %v569
        %v1657 = vunpack.c.l.b16 %v570
        %v1658 = vunpack.c.l.b16 %v571
        %v1659 = vunpack.c.l.b16 %v572
        %v1660 = vunpack.c.l.b16 %v573
        %v1661 = vpack.c.b16 %v1656, %v1655
        %v1662 = vpack.c.b16 %v1658, %v1657
        %v1663 = vpack.c.b16 %v1660, %v1659
        %v1668 = vsel %vm1604, %v1580, 0
        %1670 = vmatprep.subr.bf16.mxu0 0
        %1671 = vmatpush1.bf16.msra.mxu0 %v1661
        %1672 = vmatprep.subr.bf16.mxu0 0
        %1673 = vmatpush1.bf16.msra.mxu0 %v1662
        %1674 = vmatprep.subr.bf16.mxu0 0
        %1675 = vmatpush1.bf16.msra.mxu0 %v1663
        %1676 = vmatprep.subr.bf16.mxu0 0
        %1677 = vmatpush1.bf16.msra.mxu0 0
        %1678 = vmatprep.subr.bf16.mxu0 0
        %1679 = vmatpush1.bf16.msra.mxu0 0
        %1680 = vmatprep.subr.bf16.mxu0 0
        %1681 = vmatpush1.bf16.msra.mxu0 0
        %1682 = vmatprep.subr.bf16.mxu0 0
        %1683 = vmatpush1.bf16.msra.mxu0 0
        %1684 = vmatprep.subr.bf16.mxu0 0
        %1685 = vmatpush1.bf16.msra.mxu0 0
        %1686 = vmatprep.subr.bf16.mxu0 0
        %1687 = vmatpush1.bf16.msra.mxu0 0
        %1688 = vmatprep.subr.bf16.mxu0 0
        %1689 = vmatpush1.bf16.msra.mxu0 0
        %1690 = vmatprep.subr.bf16.mxu0 0
        %1691 = vmatpush1.bf16.msra.mxu0 0
        %1692 = vmatprep.subr.bf16.mxu0 0
        %1693 = vmatpush1.bf16.msra.mxu0 0
        %1694 = vmatprep.subr.bf16.mxu0 0
        %1695 = vmatpush1.bf16.msra.mxu0 0
        %1696 = vmatprep.subr.bf16.mxu0 0
        %1697 = vmatpush1.bf16.msra.mxu0 0
        %1698 = vmatprep.subr.bf16.mxu0 0
        %1699 = vmatpush1.bf16.msra.mxu0 0
        %1700 = vmatprep.subr.bf16.mxu0 0
        %1701 = vmatpush1.bf16.msra.mxu0 0
        %1702 = vmatprep.mubr.bf16.mxu0 0
        %1703 = vmatmul.mubr.bf16.gmra.mrb[0].mxu0 %v1668
        %v1704 = vpop.f32.mrb[0].mxu0
        %v1705 = vadd.f32 %v1643, %v1704
        %v1706 = vpop.f32.mrb[0].mxu0
        %v1707 = vpop.f32.mrb[0].mxu0
        %v1708 = vadd.f32 %v1646, %v1707
        %v1709 = vpop.f32.mrb[0].mxu0
        %1710 = vdwg.mxu0
        %v1717 = vunpack.c.l.b16 %v580
        %v1718 = vunpack.c.l.b16 %v581
        %v1719 = vunpack.c.l.b16 %v582
        %v1720 = vunpack.c.l.b16 %v583
        %v1721 = vunpack.c.l.b16 %v584
        %v1722 = vunpack.c.l.b16 %v585
        %v1723 = vpack.c.b16 %v1718, %v1717
        %v1724 = vpack.c.b16 %v1720, %v1719
        %v1725 = vpack.c.b16 %v1722, %v1721
        %v1730 = vsel %vm1604, %v1582, 0
        %1732 = vmatprep.subr.bf16.mxu0 0
        %1733 = vmatpush1.bf16.msra.mxu0 %v1723
        %1734 = vmatprep.subr.bf16.mxu0 0
        %1735 = vmatpush1.bf16.msra.mxu0 %v1724
        %1736 = vmatprep.subr.bf16.mxu0 0
        %1737 = vmatpush1.bf16.msra.mxu0 %v1725
        %1738 = vmatprep.subr.bf16.mxu0 0
        %1739 = vmatpush1.bf16.msra.mxu0 0
        %1740 = vmatprep.subr.bf16.mxu0 0
        %1741 = vmatpush1.bf16.msra.mxu0 0
        %1742 = vmatprep.subr.bf16.mxu0 0
        %1743 = vmatpush1.bf16.msra.mxu0 0
        %1744 = vmatprep.subr.bf16.mxu0 0
        %1745 = vmatpush1.bf16.msra.mxu0 0
        %1746 = vmatprep.subr.bf16.mxu0 0
        %1747 = vmatpush1.bf16.msra.mxu0 0
        %1748 = vmatprep.subr.bf16.mxu0 0
        %1749 = vmatpush1.bf16.msra.mxu0 0
        %1750 = vmatprep.subr.bf16.mxu0 0
        %1751 = vmatpush1.bf16.msra.mxu0 0
        %1752 = vmatprep.subr.bf16.mxu0 0
        %1753 = vmatpush1.bf16.msra.mxu0 0
        %1754 = vmatprep.subr.bf16.mxu0 0
        %1755 = vmatpush1.bf16.msra.mxu0 0
        %1756 = vmatprep.subr.bf16.mxu0 0
        %1757 = vmatpush1.bf16.msra.mxu0 0
        %1758 = vmatprep.subr.bf16.mxu0 0
        %1759 = vmatpush1.bf16.msra.mxu0 0
        %1760 = vmatprep.subr.bf16.mxu0 0
        %1761 = vmatpush1.bf16.msra.mxu0 0
        %1762 = vmatprep.subr.bf16.mxu0 0
        %1763 = vmatpush1.bf16.msra.mxu0 0
        %1764 = vmatprep.mubr.bf16.mxu0 0
        %1765 = vmatmul.mubr.bf16.gmra.mrb[0].mxu0 %v1730
        %v1766 = vpop.f32.mrb[0].mxu0
        %v1767 = vadd.f32 0.0, %v1766
        %v1768 = vpop.f32.mrb[0].mxu0
        %v1769 = vpop.f32.mrb[0].mxu0
        %v1770 = vadd.f32 0.0, %v1769
        %v1771 = vpop.f32.mrb[0].mxu0
        %1772 = vdwg.mxu0
        %v1773 = vadd.f32 %v1705, %v1767
        %v1774 = vadd.f32 %v1708, %v1770
        %v1781 = vunpack.c.l.b16 %v586
        %v1782 = vunpack.c.l.b16 %v587
        %v1783 = vunpack.c.l.b16 %v588
        %v1784 = vunpack.c.l.b16 %v589
        %v1785 = vunpack.c.l.b16 %v590
        %v1786 = vunpack.c.l.b16 %v591
        %v1787 = vpack.c.b16 %v1782, %v1781
        %v1788 = vpack.c.b16 %v1784, %v1783
        %v1789 = vpack.c.b16 %v1786, %v1785
        %v1794 = vsel %vm1604, %v1583, 0
        %1796 = vmatprep.subr.bf16.mxu0 0
        %1797 = vmatpush1.bf16.msra.mxu0 %v1787
        %1798 = vmatprep.subr.bf16.mxu0 0
        %1799 = vmatpush1.bf16.msra.mxu0 %v1788
        %1800 = vmatprep.subr.bf16.mxu0 0
        %1801 = vmatpush1.bf16.msra.mxu0 %v1789
        %1802 = vmatprep.subr.bf16.mxu0 0
        %1803 = vmatpush1.bf16.msra.mxu0 0
        %1804 = vmatprep.subr.bf16.mxu0 0
        %1805 = vmatpush1.bf16.msra.mxu0 0
        %1806 = vmatprep.subr.bf16.mxu0 0
        %1807 = vmatpush1.bf16.msra.mxu0 0
        %1808 = vmatprep.subr.bf16.mxu0 0
        %1809 = vmatpush1.bf16.msra.mxu0 0
        %1810 = vmatprep.subr.bf16.mxu0 0
        %1811 = vmatpush1.bf16.msra.mxu0 0
        %1812 = vmatprep.subr.bf16.mxu0 0
        %1813 = vmatpush1.bf16.msra.mxu0 0
        %1814 = vmatprep.subr.bf16.mxu0 0
        %1815 = vmatpush1.bf16.msra.mxu0 0
        %1816 = vmatprep.subr.bf16.mxu0 0
        %1817 = vmatpush1.bf16.msra.mxu0 0
        %1818 = vmatprep.subr.bf16.mxu0 0
        %1819 = vmatpush1.bf16.msra.mxu0 0
        %1820 = vmatprep.subr.bf16.mxu0 0
        %1821 = vmatpush1.bf16.msra.mxu0 0
        %1822 = vmatprep.subr.bf16.mxu0 0
        %1823 = vmatpush1.bf16.msra.mxu0 0
        %1824 = vmatprep.subr.bf16.mxu0 0
        %1825 = vmatpush1.bf16.msra.mxu0 0
        %1826 = vmatprep.subr.bf16.mxu0 0
        %1827 = vmatpush1.bf16.msra.mxu0 0
        %1828 = vmatprep.mubr.bf16.mxu0 0
        %1829 = vmatmul.mubr.bf16.gmra.mrb[0].mxu0 %v1794
        %v1830 = vpop.f32.mrb[0].mxu0
        %v1831 = vadd.f32 0.0, %v1830
        %v1832 = vpop.f32.mrb[0].mxu0
        %v1833 = vpop.f32.mrb[0].mxu0
        %v1834 = vadd.f32 0.0, %v1833
        %v1835 = vpop.f32.mrb[0].mxu0
        %1836 = vdwg.mxu0
        %v1837 = vadd.f32 %v1773, %v1831
        %v1838 = vadd.f32 %v1774, %v1834
        %v1845 = vunpack.c.l.b16 %v592
        %v1846 = vunpack.c.l.b16 %v593
        %v1847 = vunpack.c.l.b16 %v594
        %v1848 = vunpack.c.l.b16 %v595
        %v1849 = vunpack.c.l.b16 %v596
        %v1850 = vunpack.c.l.b16 %v597
        %v1851 = vpack.c.b16 %v1846, %v1845
        %v1852 = vpack.c.b16 %v1848, %v1847
        %v1853 = vpack.c.b16 %v1850, %v1849
        %v1858 = vsel %vm1604, %v1584, 0
        %1860 = vmatprep.subr.bf16.mxu0 0
        %1861 = vmatpush1.bf16.msra.mxu0 %v1851
        %1862 = vmatprep.subr.bf16.mxu0 0
        %1863 = vmatpush1.bf16.msra.mxu0 %v1852
        %1864 = vmatprep.subr.bf16.mxu0 0
        %1865 = vmatpush1.bf16.msra.mxu0 %v1853
        %1866 = vmatprep.subr.bf16.mxu0 0
        %1867 = vmatpush1.bf16.msra.mxu0 0
        %1868 = vmatprep.subr.bf16.mxu0 0
        %1869 = vmatpush1.bf16.msra.mxu0 0
        %1870 = vmatprep.subr.bf16.mxu0 0
        %1871 = vmatpush1.bf16.msra.mxu0 0
        %1872 = vmatprep.subr.bf16.mxu0 0
        %1873 = vmatpush1.bf16.msra.mxu0 0
        %1874 = vmatprep.subr.bf16.mxu0 0
        %1875 = vmatpush1.bf16.msra.mxu0 0
        %1876 = vmatprep.subr.bf16.mxu0 0
        %1877 = vmatpush1.bf16.msra.mxu0 0
        %1878 = vmatprep.subr.bf16.mxu0 0
        %1879 = vmatpush1.bf16.msra.mxu0 0
        %1880 = vmatprep.subr.bf16.mxu0 0
        %1881 = vmatpush1.bf16.msra.mxu0 0
        %1882 = vmatprep.subr.bf16.mxu0 0
        %1883 = vmatpush1.bf16.msra.mxu0 0
        %1884 = vmatprep.subr.bf16.mxu0 0
        %1885 = vmatpush1.bf16.msra.mxu0 0
        %1886 = vmatprep.subr.bf16.mxu0 0
        %1887 = vmatpush1.bf16.msra.mxu0 0
        %1888 = vmatprep.subr.bf16.mxu0 0
        %1889 = vmatpush1.bf16.msra.mxu0 0
        %1890 = vmatprep.subr.bf16.mxu0 0
        %1891 = vmatpush1.bf16.msra.mxu0 0
        %1892 = vmatprep.mubr.bf16.mxu0 0
        %1893 = vmatmul.mubr.bf16.gmra.mrb[0].mxu0 %v1858
        %v1894 = vpop.f32.mrb[0].mxu0
        %v1895 = vadd.f32 0.0, %v1894
        %v1896 = vpop.f32.mrb[0].mxu0
        %v1897 = vpop.f32.mrb[0].mxu0
        %v1898 = vadd.f32 0.0, %v1897
        %v1899 = vpop.f32.mrb[0].mxu0
        %1900 = vdwg.mxu0
        %v1901 = vadd.f32 %v1837, %v1895
        %v1902 = vadd.f32 %v1838, %v1898
        %v1909 = vunpack.c.l.b16 %v598
        %v1910 = vunpack.c.l.b16 %v599
        %v1911 = vunpack.c.l.b16 %v600
        %v1912 = vunpack.c.l.b16 %v601
        %v1913 = vunpack.c.l.b16 %v602
        %v1914 = vunpack.c.l.b16 %v603
        %v1915 = vpack.c.b16 %v1910, %v1909
        %v1916 = vpack.c.b16 %v1912, %v1911
        %v1917 = vpack.c.b16 %v1914, %v1913
        %v1922 = vsel %vm1604, %v1585, 0
        %1924 = vmatprep.subr.bf16.mxu0 0
        %1925 = vmatpush1.bf16.msra.mxu0 %v1915
        %1926 = vmatprep.subr.bf16.mxu0 0
        %1927 = vmatpush1.bf16.msra.mxu0 %v1916
        %1928 = vmatprep.subr.bf16.mxu0 0
        %1929 = vmatpush1.bf16.msra.mxu0 %v1917
        %1930 = vmatprep.subr.bf16.mxu0 0
        %1931 = vmatpush1.bf16.msra.mxu0 0
        %1932 = vmatprep.subr.bf16.mxu0 0
        %1933 = vmatpush1.bf16.msra.mxu0 0
        %1934 = vmatprep.subr.bf16.mxu0 0
        %1935 = vmatpush1.bf16.msra.mxu0 0
        %1936 = vmatprep.subr.bf16.mxu0 0
        %1937 = vmatpush1.bf16.msra.mxu0 0
        %1938 = vmatprep.subr.bf16.mxu0 0
        %1939 = vmatpush1.bf16.msra.mxu0 0
        %1940 = vmatprep.subr.bf16.mxu0 0
        %1941 = vmatpush1.bf16.msra.mxu0 0
        %1942 = vmatprep.subr.bf16.mxu0 0
        %1943 = vmatpush1.bf16.msra.mxu0 0
        %1944 = vmatprep.subr.bf16.mxu0 0
        %1945 = vmatpush1.bf16.msra.mxu0 0
        %1946 = vmatprep.subr.bf16.mxu0 0
        %1947 = vmatpush1.bf16.msra.mxu0 0
        %1948 = vmatprep.subr.bf16.mxu0 0
        %1949 = vmatpush1.bf16.msra.mxu0 0
        %1950 = vmatprep.subr.bf16.mxu0 0
        %1951 = vmatpush1.bf16.msra.mxu0 0
        %1952 = vmatprep.subr.bf16.mxu0 0
        %1953 = vmatpush1.bf16.msra.mxu0 0
        %1954 = vmatprep.subr.bf16.mxu0 0
        %1955 = vmatpush1.bf16.msra.mxu0 0
        %1956 = vmatprep.mubr.bf16.mxu0 0
        %1957 = vmatmul.mubr.bf16.gmra.mrb[0].mxu0 %v1922
        %v1958 = vpop.f32.mrb[0].mxu0
        %v1959 = vadd.f32 0.0, %v1958
        %v1960 = vpop.f32.mrb[0].mxu0
        %v1961 = vpop.f32.mrb[0].mxu0
        %v1962 = vadd.f32 0.0, %v1961
        %v1963 = vpop.f32.mrb[0].mxu0
        %1964 = vdwg.mxu0
        %v1965 = vadd.f32 %v1901, %v1959
        %v1966 = vadd.f32 %v1902, %v1962
        %v1967 = vadd.f32 %v1494, %v1965
        %v1968 = vadd.f32 %v1496, %v1966
        %v1970 = vlaneseq
        %v1971 = vshrl.u32 %v1970, 7
        %v1972 = vsub.s32 0, %v1971
        %v1973 = vrot.slane %v640, %v1972
        %v1975 = vadd.f32 %v1967, %v1973
        %v1976 = vadd.f32 %v1968, %v1973
        %v1977 = vxor.u32 %v1975, 2147483648
        %v1978 = vxor.u32 %v1976, 2147483648
        %v1979 = vmul.f32 %v1977, 1.442695
        %v1980 = vpow.pop %v1979
        %v1981 = vmul.f32 %v1978, 1.442695
        %v1982 = vpow.pop %v1981
        %v1983 = vadd.f32 %v1980, 1.0
        %v1984 = vadd.f32 %v1982, 1.0
        %v1985 = vrcp.pop %v1983
        %v1986 = vmul.f32 1.0, %v1985
        %v1987 = vrcp.pop %v1984
        %v1988 = vmul.f32 1.0, %v1987
        %v1989 = vmul.f32 %v1986, %v644
        %v1990 = vmul.f32 %v1988, %v645
        %v1991 = vpack.c.bf16 %v1990, %v1989
        %1992 = vmatprep.subr.bf16.mxu0 0
        %1993 = vmatpush1.bf16.msra.mxu0 %v1991
        %1994 = vmatprep.subr.bf16.mxu0 0
        %1995 = vmatpush1.bf16.msra.mxu0 0
        %1996 = vmatprep.subr.bf16.mxu0 0
        %1997 = vmatpush1.bf16.msra.mxu0 0
        %1998 = vmatprep.subr.bf16.mxu0 0
        %1999 = vmatpush1.bf16.msra.mxu0 0
        %2000 = vmatprep.subr.bf16.mxu0 0
        %2001 = vmatpush1.bf16.msra.mxu0 0
        %2002 = vmatprep.subr.bf16.mxu0 0
        %2003 = vmatpush1.bf16.msra.mxu0 0
        %2004 = vmatprep.subr.bf16.mxu0 0
        %2005 = vmatpush1.bf16.msra.mxu0 0
        %2006 = vmatprep.subr.bf16.mxu0 0
        %2007 = vmatpush1.bf16.msra.mxu0 0
        %2008 = vmatprep.subr.bf16.mxu0 0
        %2009 = vmatpush1.bf16.msra.mxu0 0
        %2010 = vmatprep.subr.bf16.mxu0 0
        %2011 = vmatpush1.bf16.msra.mxu0 0
        %2012 = vmatprep.subr.bf16.mxu0 0
        %2013 = vmatpush1.bf16.msra.mxu0 0
        %2014 = vmatprep.subr.bf16.mxu0 0
        %2015 = vmatpush1.bf16.msra.mxu0 0
        %2016 = vmatprep.subr.bf16.mxu0 0
        %2017 = vmatpush1.bf16.msra.mxu0 0
        %2018 = vmatprep.subr.bf16.mxu0 0
        %2019 = vmatpush1.bf16.msra.mxu0 0
        %2020 = vmatprep.subr.bf16.mxu0 0
        %2021 = vmatpush1.bf16.msra.mxu0 0
        %2022 = vmatprep.subr.bf16.mxu0 0
        %2023 = vmatpush1.bf16.msra.mxu0 0
        %2024 = vmatprep.mubr.bf16.mxu0 0
        %2025 = vmatmul.mubr.bf16.gmra.mrb[0].mxu0 %v679
        %v2026 = vpop.f32.mrb[0].mxu0
        %v2027 = vadd.f32 0.0, %v2026
        %v2028 = vpop.f32.mrb[0].mxu0
        %v2029 = vpop.f32.mrb[0].mxu0
        %v2030 = vadd.f32 0.0, %v2029
        %v2031 = vpop.f32.mrb[0].mxu0
        %2032 = vmatprep.mubr.bf16.mxu0 0
        %2033 = vmatmul.mubr.bf16.gmra.mrb[0].mxu0 %v682
        %v2034 = vpop.f32.mrb[0].mxu0
        %v2035 = vadd.f32 0.0, %v2034
        %v2036 = vpop.f32.mrb[0].mxu0
        %v2037 = vpop.f32.mrb[0].mxu0
        %v2038 = vadd.f32 0.0, %v2037
        %v2039 = vpop.f32.mrb[0].mxu0
        %2040 = vmatprep.mubr.bf16.mxu0 0
        %2041 = vmatmul.mubr.bf16.gmra.mrb[0].mxu0 %v685
        %v2042 = vpop.f32.mrb[0].mxu0
        %v2043 = vadd.f32 0.0, %v2042
        %v2044 = vpop.f32.mrb[0].mxu0
        %v2045 = vpop.f32.mrb[0].mxu0
        %v2046 = vadd.f32 0.0, %v2045
        %v2047 = vpop.f32.mrb[0].mxu0
        %2048 = vmatprep.mubr.bf16.mxu0 0
        %2049 = vmatmul.mubr.bf16.gmra.mrb[0].mxu0 %v688
        %v2050 = vpop.f32.mrb[0].mxu0
        %v2051 = vadd.f32 0.0, %v2050
        %v2052 = vpop.f32.mrb[0].mxu0
        %v2053 = vpop.f32.mrb[0].mxu0
        %v2054 = vadd.f32 0.0, %v2053
        %v2055 = vpop.f32.mrb[0].mxu0
        %2056 = vmatprep.mubr.bf16.mxu0 0
        %2057 = vmatmul.mubr.bf16.gmra.mrb[0].mxu0 %v691
        %v2058 = vpop.f32.mrb[0].mxu0
        %v2059 = vadd.f32 0.0, %v2058
        %v2060 = vpop.f32.mrb[0].mxu0
        %v2061 = vpop.f32.mrb[0].mxu0
        %v2062 = vadd.f32 0.0, %v2061
        %v2063 = vpop.f32.mrb[0].mxu0
        %2064 = vmatprep.mubr.bf16.mxu0 0
        %2065 = vmatmul.mubr.bf16.gmra.mrb[0].mxu0 %v694
        %v2066 = vpop.f32.mrb[0].mxu0
        %v2067 = vadd.f32 0.0, %v2066
        %v2068 = vpop.f32.mrb[0].mxu0
        %v2069 = vpop.f32.mrb[0].mxu0
        %v2070 = vadd.f32 0.0, %v2069
        %v2071 = vpop.f32.mrb[0].mxu0
        %2072 = vdwg.mxu0
        %v2073 = vpack.c.bf16 %v2030, %v2027
        %v2074 = vpack.c.bf16 %v2038, %v2035
        %v2075 = vpack.c.bf16 %v2046, %v2043
        %v2076 = vpack.c.bf16 %v2054, %v2051
        %v2077 = vpack.c.bf16 %v2062, %v2059
        %v2078 = vpack.c.bf16 %v2070, %v2067
        %v2085 = vunpack.c.l.b16 %v610
        %v2086 = vunpack.c.l.b16 %v611
        %v2087 = vunpack.c.l.b16 %v612
        %v2088 = vunpack.c.l.b16 %v613
        %v2089 = vunpack.c.l.b16 %v614
        %v2090 = vunpack.c.l.b16 %v615
        %v2091 = vpack.c.b16 %v2086, %v2085
        %v2092 = vpack.c.b16 %v2088, %v2087
        %v2093 = vpack.c.b16 %v2090, %v2089
        %v2098 = vsel %vm1604, %v2074, 0
        %2100 = vmatprep.subr.bf16.mxu0 0
        %2101 = vmatpush1.bf16.msra.mxu0 %v2091
        %2102 = vmatprep.subr.bf16.mxu0 0
        %2103 = vmatpush1.bf16.msra.mxu0 %v2092
        %2104 = vmatprep.subr.bf16.mxu0 0
        %2105 = vmatpush1.bf16.msra.mxu0 %v2093
        %2106 = vmatprep.subr.bf16.mxu0 0
        %2107 = vmatpush1.bf16.msra.mxu0 0
        %2108 = vmatprep.subr.bf16.mxu0 0
        %2109 = vmatpush1.bf16.msra.mxu0 0
        %2110 = vmatprep.subr.bf16.mxu0 0
        %2111 = vmatpush1.bf16.msra.mxu0 0
        %2112 = vmatprep.subr.bf16.mxu0 0
        %2113 = vmatpush1.bf16.msra.mxu0 0
        %2114 = vmatprep.subr.bf16.mxu0 0
        %2115 = vmatpush1.bf16.msra.mxu0 0
        %2116 = vmatprep.subr.bf16.mxu0 0
        %2117 = vmatpush1.bf16.msra.mxu0 0
        %2118 = vmatprep.subr.bf16.mxu0 0
        %2119 = vmatpush1.bf16.msra.mxu0 0
        %2120 = vmatprep.subr.bf16.mxu0 0
        %2121 = vmatpush1.bf16.msra.mxu0 0
        %2122 = vmatprep.subr.bf16.mxu0 0
        %2123 = vmatpush1.bf16.msra.mxu0 0
        %2124 = vmatprep.subr.bf16.mxu0 0
        %2125 = vmatpush1.bf16.msra.mxu0 0
        %2126 = vmatprep.subr.bf16.mxu0 0
        %2127 = vmatpush1.bf16.msra.mxu0 0
        %2128 = vmatprep.subr.bf16.mxu0 0
        %2129 = vmatpush1.bf16.msra.mxu0 0
        %2130 = vmatprep.subr.bf16.mxu0 0
        %2131 = vmatpush1.bf16.msra.mxu0 0
        %2132 = vmatprep.mubr.bf16.mxu0 0
        %2133 = vmatmul.mubr.bf16.gmra.mrb[0].mxu0 %v2098
        %v2134 = vpop.f32.mrb[0].mxu0
        %v2135 = vadd.f32 0.0, %v2134
        %v2136 = vpop.f32.mrb[0].mxu0
        %v2137 = vpop.f32.mrb[0].mxu0
        %v2138 = vadd.f32 0.0, %v2137
        %v2139 = vpop.f32.mrb[0].mxu0
        %2140 = vdwg.mxu0
        %v2147 = vunpack.c.l.b16 %v604
        %v2148 = vunpack.c.l.b16 %v605
        %v2149 = vunpack.c.l.b16 %v606
        %v2150 = vunpack.c.l.b16 %v607
        %v2151 = vunpack.c.l.b16 %v608
        %v2152 = vunpack.c.l.b16 %v609
        %v2153 = vpack.c.b16 %v2148, %v2147
        %v2154 = vpack.c.b16 %v2150, %v2149
        %v2155 = vpack.c.b16 %v2152, %v2151
        %v2160 = vsel %vm1604, %v2073, 0
        %2162 = vmatprep.subr.bf16.mxu0 0
        %2163 = vmatpush1.bf16.msra.mxu0 %v2153
        %2164 = vmatprep.subr.bf16.mxu0 0
        %2165 = vmatpush1.bf16.msra.mxu0 %v2154
        %2166 = vmatprep.subr.bf16.mxu0 0
        %2167 = vmatpush1.bf16.msra.mxu0 %v2155
        %2168 = vmatprep.subr.bf16.mxu0 0
        %2169 = vmatpush1.bf16.msra.mxu0 0
        %2170 = vmatprep.subr.bf16.mxu0 0
        %2171 = vmatpush1.bf16.msra.mxu0 0
        %2172 = vmatprep.subr.bf16.mxu0 0
        %2173 = vmatpush1.bf16.msra.mxu0 0
        %2174 = vmatprep.subr.bf16.mxu0 0
        %2175 = vmatpush1.bf16.msra.mxu0 0
        %2176 = vmatprep.subr.bf16.mxu0 0
        %2177 = vmatpush1.bf16.msra.mxu0 0
        %2178 = vmatprep.subr.bf16.mxu0 0
        %2179 = vmatpush1.bf16.msra.mxu0 0
        %2180 = vmatprep.subr.bf16.mxu0 0
        %2181 = vmatpush1.bf16.msra.mxu0 0
        %2182 = vmatprep.subr.bf16.mxu0 0
        %2183 = vmatpush1.bf16.msra.mxu0 0
        %2184 = vmatprep.subr.bf16.mxu0 0
        %2185 = vmatpush1.bf16.msra.mxu0 0
        %2186 = vmatprep.subr.bf16.mxu0 0
        %2187 = vmatpush1.bf16.msra.mxu0 0
        %2188 = vmatprep.subr.bf16.mxu0 0
        %2189 = vmatpush1.bf16.msra.mxu0 0
        %2190 = vmatprep.subr.bf16.mxu0 0
        %2191 = vmatpush1.bf16.msra.mxu0 0
        %2192 = vmatprep.subr.bf16.mxu0 0
        %2193 = vmatpush1.bf16.msra.mxu0 0
        %2194 = vmatprep.mubr.bf16.mxu0 0
        %2195 = vmatmul.mubr.bf16.gmra.mrb[0].mxu0 %v2160
        %v2196 = vpop.f32.mrb[0].mxu0
        %v2197 = vadd.f32 %v2135, %v2196
        %v2198 = vpop.f32.mrb[0].mxu0
        %v2199 = vpop.f32.mrb[0].mxu0
        %v2200 = vadd.f32 %v2138, %v2199
        %v2201 = vpop.f32.mrb[0].mxu0
        %2202 = vdwg.mxu0
        %v2209 = vunpack.c.l.b16 %v616
        %v2210 = vunpack.c.l.b16 %v617
        %v2211 = vunpack.c.l.b16 %v618
        %v2212 = vunpack.c.l.b16 %v619
        %v2213 = vunpack.c.l.b16 %v620
        %v2214 = vunpack.c.l.b16 %v621
        %v2215 = vpack.c.b16 %v2210, %v2209
        %v2216 = vpack.c.b16 %v2212, %v2211
        %v2217 = vpack.c.b16 %v2214, %v2213
        %v2222 = vsel %vm1604, %v2075, 0
        %2224 = vmatprep.subr.bf16.mxu0 0
        %2225 = vmatpush1.bf16.msra.mxu0 %v2215
        %2226 = vmatprep.subr.bf16.mxu0 0
        %2227 = vmatpush1.bf16.msra.mxu0 %v2216
        %2228 = vmatprep.subr.bf16.mxu0 0
        %2229 = vmatpush1.bf16.msra.mxu0 %v2217
        %2230 = vmatprep.subr.bf16.mxu0 0
        %2231 = vmatpush1.bf16.msra.mxu0 0
        %2232 = vmatprep.subr.bf16.mxu0 0
        %2233 = vmatpush1.bf16.msra.mxu0 0
        %2234 = vmatprep.subr.bf16.mxu0 0
        %2235 = vmatpush1.bf16.msra.mxu0 0
        %2236 = vmatprep.subr.bf16.mxu0 0
        %2237 = vmatpush1.bf16.msra.mxu0 0
        %2238 = vmatprep.subr.bf16.mxu0 0
        %2239 = vmatpush1.bf16.msra.mxu0 0
        %2240 = vmatprep.subr.bf16.mxu0 0
        %2241 = vmatpush1.bf16.msra.mxu0 0
        %2242 = vmatprep.subr.bf16.mxu0 0
        %2243 = vmatpush1.bf16.msra.mxu0 0
        %2244 = vmatprep.subr.bf16.mxu0 0
        %2245 = vmatpush1.bf16.msra.mxu0 0
        %2246 = vmatprep.subr.bf16.mxu0 0
        %2247 = vmatpush1.bf16.msra.mxu0 0
        %2248 = vmatprep.subr.bf16.mxu0 0
        %2249 = vmatpush1.bf16.msra.mxu0 0
        %2250 = vmatprep.subr.bf16.mxu0 0
        %2251 = vmatpush1.bf16.msra.mxu0 0
        %2252 = vmatprep.subr.bf16.mxu0 0
        %2253 = vmatpush1.bf16.msra.mxu0 0
        %2254 = vmatprep.subr.bf16.mxu0 0
        %2255 = vmatpush1.bf16.msra.mxu0 0
        %2256 = vmatprep.mubr.bf16.mxu0 0
        %2257 = vmatmul.mubr.bf16.gmra.mrb[0].mxu0 %v2222
        %v2258 = vpop.f32.mrb[0].mxu0
        %v2259 = vadd.f32 0.0, %v2258
        %v2260 = vpop.f32.mrb[0].mxu0
        %v2261 = vpop.f32.mrb[0].mxu0
        %v2262 = vadd.f32 0.0, %v2261
        %v2263 = vpop.f32.mrb[0].mxu0
        %2264 = vdwg.mxu0
        %v2265 = vadd.f32 %v2197, %v2259
        %v2266 = vadd.f32 %v2200, %v2262
        %v2273 = vunpack.c.l.b16 %v622
        %v2274 = vunpack.c.l.b16 %v623
        %v2275 = vunpack.c.l.b16 %v624
        %v2276 = vunpack.c.l.b16 %v625
        %v2277 = vunpack.c.l.b16 %v626
        %v2278 = vunpack.c.l.b16 %v627
        %v2279 = vpack.c.b16 %v2274, %v2273
        %v2280 = vpack.c.b16 %v2276, %v2275
        %v2281 = vpack.c.b16 %v2278, %v2277
        %v2286 = vsel %vm1604, %v2076, 0
        %2288 = vmatprep.subr.bf16.mxu0 0
        %2289 = vmatpush1.bf16.msra.mxu0 %v2279
        %2290 = vmatprep.subr.bf16.mxu0 0
        %2291 = vmatpush1.bf16.msra.mxu0 %v2280
        %2292 = vmatprep.subr.bf16.mxu0 0
        %2293 = vmatpush1.bf16.msra.mxu0 %v2281
        %2294 = vmatprep.subr.bf16.mxu0 0
        %2295 = vmatpush1.bf16.msra.mxu0 0
        %2296 = vmatprep.subr.bf16.mxu0 0
        %2297 = vmatpush1.bf16.msra.mxu0 0
        %2298 = vmatprep.subr.bf16.mxu0 0
        %2299 = vmatpush1.bf16.msra.mxu0 0
        %2300 = vmatprep.subr.bf16.mxu0 0
        %2301 = vmatpush1.bf16.msra.mxu0 0
        %2302 = vmatprep.subr.bf16.mxu0 0
        %2303 = vmatpush1.bf16.msra.mxu0 0
        %2304 = vmatprep.subr.bf16.mxu0 0
        %2305 = vmatpush1.bf16.msra.mxu0 0
        %2306 = vmatprep.subr.bf16.mxu0 0
        %2307 = vmatpush1.bf16.msra.mxu0 0
        %2308 = vmatprep.subr.bf16.mxu0 0
        %2309 = vmatpush1.bf16.msra.mxu0 0
        %2310 = vmatprep.subr.bf16.mxu0 0
        %2311 = vmatpush1.bf16.msra.mxu0 0
        %2312 = vmatprep.subr.bf16.mxu0 0
        %2313 = vmatpush1.bf16.msra.mxu0 0
        %2314 = vmatprep.subr.bf16.mxu0 0
        %2315 = vmatpush1.bf16.msra.mxu0 0
        %2316 = vmatprep.subr.bf16.mxu0 0
        %2317 = vmatpush1.bf16.msra.mxu0 0
        %2318 = vmatprep.subr.bf16.mxu0 0
        %2319 = vmatpush1.bf16.msra.mxu0 0
        %2320 = vmatprep.mubr.bf16.mxu0 0
        %2321 = vmatmul.mubr.bf16.gmra.mrb[0].mxu0 %v2286
        %v2322 = vpop.f32.mrb[0].mxu0
        %v2323 = vadd.f32 0.0, %v2322
        %v2324 = vpop.f32.mrb[0].mxu0
        %v2325 = vpop.f32.mrb[0].mxu0
        %v2326 = vadd.f32 0.0, %v2325
        %v2327 = vpop.f32.mrb[0].mxu0
        %2328 = vdwg.mxu0
        %v2329 = vadd.f32 %v2265, %v2323
        %v2330 = vadd.f32 %v2266, %v2326
        %v2337 = vunpack.c.l.b16 %v628
        %v2338 = vunpack.c.l.b16 %v629
        %v2339 = vunpack.c.l.b16 %v630
        %v2340 = vunpack.c.l.b16 %v631
        %v2341 = vunpack.c.l.b16 %v632
        %v2342 = vunpack.c.l.b16 %v633
        %v2343 = vpack.c.b16 %v2338, %v2337
        %v2344 = vpack.c.b16 %v2340, %v2339
        %v2345 = vpack.c.b16 %v2342, %v2341
        %v2350 = vsel %vm1604, %v2077, 0
        %2352 = vmatprep.subr.bf16.mxu0 0
        %2353 = vmatpush1.bf16.msra.mxu0 %v2343
        %2354 = vmatprep.subr.bf16.mxu0 0
        %2355 = vmatpush1.bf16.msra.mxu0 %v2344
        %2356 = vmatprep.subr.bf16.mxu0 0
        %2357 = vmatpush1.bf16.msra.mxu0 %v2345
        %2358 = vmatprep.subr.bf16.mxu0 0
        %2359 = vmatpush1.bf16.msra.mxu0 0
        %2360 = vmatprep.subr.bf16.mxu0 0
        %2361 = vmatpush1.bf16.msra.mxu0 0
        %2362 = vmatprep.subr.bf16.mxu0 0
        %2363 = vmatpush1.bf16.msra.mxu0 0
        %2364 = vmatprep.subr.bf16.mxu0 0
        %2365 = vmatpush1.bf16.msra.mxu0 0
        %2366 = vmatprep.subr.bf16.mxu0 0
        %2367 = vmatpush1.bf16.msra.mxu0 0
        %2368 = vmatprep.subr.bf16.mxu0 0
        %2369 = vmatpush1.bf16.msra.mxu0 0
        %2370 = vmatprep.subr.bf16.mxu0 0
        %2371 = vmatpush1.bf16.msra.mxu0 0
        %2372 = vmatprep.subr.bf16.mxu0 0
        %2373 = vmatpush1.bf16.msra.mxu0 0
        %2374 = vmatprep.subr.bf16.mxu0 0
        %2375 = vmatpush1.bf16.msra.mxu0 0
        %2376 = vmatprep.subr.bf16.mxu0 0
        %2377 = vmatpush1.bf16.msra.mxu0 0
        %2378 = vmatprep.subr.bf16.mxu0 0
        %2379 = vmatpush1.bf16.msra.mxu0 0
        %2380 = vmatprep.subr.bf16.mxu0 0
        %2381 = vmatpush1.bf16.msra.mxu0 0
        %2382 = vmatprep.subr.bf16.mxu0 0
        %2383 = vmatpush1.bf16.msra.mxu0 0
        %2384 = vmatprep.mubr.bf16.mxu0 0
        %2385 = vmatmul.mubr.bf16.gmra.mrb[0].mxu0 %v2350
        %v2386 = vpop.f32.mrb[0].mxu0
        %v2387 = vadd.f32 0.0, %v2386
        %v2388 = vpop.f32.mrb[0].mxu0
        %v2389 = vpop.f32.mrb[0].mxu0
        %v2390 = vadd.f32 0.0, %v2389
        %v2391 = vpop.f32.mrb[0].mxu0
        %2392 = vdwg.mxu0
        %v2393 = vadd.f32 %v2329, %v2387
        %v2394 = vadd.f32 %v2330, %v2390
        %v2401 = vunpack.c.l.b16 %v634
        %v2402 = vunpack.c.l.b16 %v635
        %v2403 = vunpack.c.l.b16 %v636
        %v2404 = vunpack.c.l.b16 %v637
        %v2405 = vunpack.c.l.b16 %v638
        %v2406 = vunpack.c.l.b16 %v639
        %v2407 = vpack.c.b16 %v2402, %v2401
        %v2408 = vpack.c.b16 %v2404, %v2403
        %v2409 = vpack.c.b16 %v2406, %v2405
        %v2414 = vsel %vm1604, %v2078, 0
        %2416 = vmatprep.subr.bf16.mxu0 0
        %2417 = vmatpush1.bf16.msra.mxu0 %v2407
        %2418 = vmatprep.subr.bf16.mxu0 0
        %2419 = vmatpush1.bf16.msra.mxu0 %v2408
        %2420 = vmatprep.subr.bf16.mxu0 0
        %2421 = vmatpush1.bf16.msra.mxu0 %v2409
        %2422 = vmatprep.subr.bf16.mxu0 0
        %2423 = vmatpush1.bf16.msra.mxu0 0
        %2424 = vmatprep.subr.bf16.mxu0 0
        %2425 = vmatpush1.bf16.msra.mxu0 0
        %2426 = vmatprep.subr.bf16.mxu0 0
        %2427 = vmatpush1.bf16.msra.mxu0 0
        %2428 = vmatprep.subr.bf16.mxu0 0
        %2429 = vmatpush1.bf16.msra.mxu0 0
        %2430 = vmatprep.subr.bf16.mxu0 0
        %2431 = vmatpush1.bf16.msra.mxu0 0
        %2432 = vmatprep.subr.bf16.mxu0 0
        %2433 = vmatpush1.bf16.msra.mxu0 0
        %2434 = vmatprep.subr.bf16.mxu0 0
        %2435 = vmatpush1.bf16.msra.mxu0 0
        %2436 = vmatprep.subr.bf16.mxu0 0
        %2437 = vmatpush1.bf16.msra.mxu0 0
        %2438 = vmatprep.subr.bf16.mxu0 0
        %2439 = vmatpush1.bf16.msra.mxu0 0
        %2440 = vmatprep.subr.bf16.mxu0 0
        %2441 = vmatpush1.bf16.msra.mxu0 0
        %2442 = vmatprep.subr.bf16.mxu0 0
        %2443 = vmatpush1.bf16.msra.mxu0 0
        %2444 = vmatprep.subr.bf16.mxu0 0
        %2445 = vmatpush1.bf16.msra.mxu0 0
        %2446 = vmatprep.subr.bf16.mxu0 0
        %2447 = vmatpush1.bf16.msra.mxu0 0
        %2448 = vmatprep.mubr.bf16.mxu0 0
        %2449 = vmatmul.mubr.bf16.gmra.mrb[0].mxu0 %v2414
        %v2450 = vpop.f32.mrb[0].mxu0
        %v2451 = vadd.f32 0.0, %v2450
        %v2452 = vpop.f32.mrb[0].mxu0
        %v2453 = vpop.f32.mrb[0].mxu0
        %v2454 = vadd.f32 0.0, %v2453
        %v2455 = vpop.f32.mrb[0].mxu0
        %2456 = vdwg.mxu0
        %v2457 = vadd.f32 %v2393, %v2451
        %v2458 = vadd.f32 %v2394, %v2454
        %2461 = vrot.lane.b32.xlu0 %v2457, 96
        %v2462 = vpop.permute.xlu0 %2461
        %2463 = vrot.lane.b32.xlu0 %v2458, 96
        %v2464 = vpop.permute.xlu0 %2463
        %v2467 = vadd.f32 %v1494, %v2462
        %v2468 = vadd.f32 %v1495, %v2462
        %v2469 = vadd.f32 %v1496, %v2464
        %v2470 = vadd.f32 %v1497, %v2464
        %v2472 = vlaneseq
        %v2473 = vshrl.u32 %v2472, 7
        %v2474 = vsub.s32 0, %v2473
        %v2475 = vrot.slane %v641, %v2474
        %2476 = vrot.lane.b32.xlu0 %v2475, 96
        %v2477 = vpop.permute.xlu0 %2476
        %v2479 = vadd.f32 %v2467, %v2477
        %v2480 = vadd.f32 %v2468, %v2477
        %v2481 = vadd.f32 %v2469, %v2477
        %v2482 = vadd.f32 %v2470, %v2477
        %v2483 = vtanh.pop %v2479
        %v2484 = vtanh.pop %v2480
        %v2485 = vtanh.pop %v2481
        %v2486 = vtanh.pop %v2482
        %2489 = vrot.lane.b32.xlu0 %v644, 48
        %v2490 = vpop.permute.xlu0 %2489
        %2491 = vrot.lane.b32.xlu0 %v645, 48
        %v2492 = vpop.permute.xlu0 %2491
        %v2495 = vmul.f32 %v1986, %v2490
        %v2496 = vmul.f32 %v1988, %v2492
        %v2497 = vsub.f32 1.0, %v1986
        %v2498 = vsub.f32 1.0, %v1988
        %2503 = vrot.lane.b32.xlu0 %v2483, 80
        %v2504 = vpop.permute.xlu0 %2503
        %2505 = vrot.lane.b32.xlu0 %v2484, 80
        %v2506 = vpop.permute.xlu0 %2505
        %2507 = vrot.lane.b32.xlu0 %v2485, 80
        %v2508 = vpop.permute.xlu0 %2507
        %2509 = vrot.lane.b32.xlu0 %v2486, 80
        %v2510 = vpop.permute.xlu0 %2509
        %vm2511 = vcmask 654336
        %v2512 = vsel %vm2511, %v2504, %v2506
        %v2513 = vsel %vm2511, %v2508, %v2510
        %v2516 = vmul.f32 %v2497, %v2512
        %v2517 = vmul.f32 %v2498, %v2513
        %v2518 = vadd.f32 %v2495, %v2516
        %v2519 = vadd.f32 %v2496, %v2517
        %2522 = vrot.lane.b32.xlu0 %v2518, 80
        %v2523 = vpop.permute.xlu0 %2522
        %2524 = vrot.lane.b32.xlu0 %v2519, 80
        %v2525 = vpop.permute.xlu0 %2524
        %2528 = vst.msk [vmem:[#allocation2] sm:$0xff] %vm1604, %v2523
        %2529 = vst.msk [vmem:[#allocation2 + $0x8] sm:$0xff] %vm1604, %v2525
        %v2530 = vld [vmem:[#allocation19] sm:$0xff]
        %v2531 = vld [vmem:[#allocation19 + $0x8] sm:$0xff]
        %v2532 = vld [vmem:[#allocation19 + $0x10] sm:$0xff]
        %v2533 = vld [vmem:[#allocation19 + $0x18] sm:$0xff]
        %v2534 = vld [vmem:[#allocation19 + $0x20] sm:$0xff]
        %v2535 = vld [vmem:[#allocation19 + $0x28] sm:$0xff]
        %v2536 = vld [vmem:[#allocation4] sm:$0x1]
        %v2538 = vlaneseq
        %v2539 = vshrl.u32 %v2538, 7
        %v2540 = vsub.s32 0, %v2539
        %v2541 = vrot.slane %v2536, %v2540
        %v2543 = vsel %vm1604, %v2523, 0
        %v2545 = vsel %vm1604, %v2525, 0
        %2547 = vmatprep.subr.mxu0 0.0
        %2548 = vmatpush1.msra.mxu0 %v2530
        %2549 = vmatprep.subr.mxu0 0.0
        %2550 = vmatpush1.msra.mxu0 %v2531
        %2551 = vmatprep.subr.mxu0 0.0
        %2552 = vmatpush1.msra.mxu0 %v2532
        %2553 = vmatprep.subr.mxu0 0.0
        %2554 = vmatpush1.msra.mxu0 %v2533
        %2555 = vmatprep.subr.mxu0 0.0
        %2556 = vmatpush1.msra.mxu0 %v2534
        %2557 = vmatprep.subr.mxu0 0.0
        %2558 = vmatpush1.msra.mxu0 %v2535
        %2559 = vmatprep.subr.mxu0 0.0
        %2560 = vmatpush1.msra.mxu0 0.0
        %2561 = vmatprep.subr.mxu0 0.0
        %2562 = vmatpush1.msra.mxu0 0.0
        %2563 = vmatprep.subr.mxu0 0.0
        %2564 = vmatpush1.msra.mxu0 0.0
        %2565 = vmatprep.subr.mxu0 0.0
        %2566 = vmatpush1.msra.mxu0 0.0
        %2567 = vmatprep.subr.mxu0 0.0
        %2568 = vmatpush1.msra.mxu0 0.0
        %2569 = vmatprep.subr.mxu0 0.0
        %2570 = vmatpush1.msra.mxu0 0.0
        %2571 = vmatprep.subr.mxu0 0.0
        %2572 = vmatpush1.msra.mxu0 0.0
        %2573 = vmatprep.subr.mxu0 0.0
        %2574 = vmatpush1.msra.mxu0 0.0
        %2575 = vmatprep.subr.mxu0 0.0
        %2576 = vmatpush1.msra.mxu0 0.0
        %2577 = vmatprep.subr.mxu0 0.0
        %2578 = vmatpush1.msra.mxu0 0.0
        %2579 = vmatprep.subr.mxu0 0.0
        %2580 = vmatpush1.msra.mxu0 0.0
        %2581 = vmatprep.subr.mxu0 0.0
        %2582 = vmatpush1.msra.mxu0 0.0
        %2583 = vmatprep.subr.mxu0 0.0
        %2584 = vmatpush1.msra.mxu0 0.0
        %2585 = vmatprep.subr.mxu0 0.0
        %2586 = vmatpush1.msra.mxu0 0.0
        %2587 = vmatprep.subr.mxu0 0.0
        %2588 = vmatpush1.msra.mxu0 0.0
        %2589 = vmatprep.subr.mxu0 0.0
        %2590 = vmatpush1.msra.mxu0 0.0
        %2591 = vmatprep.subr.mxu0 0.0
        %2592 = vmatpush1.msra.mxu0 0.0
        %2593 = vmatprep.subr.mxu0 0.0
        %2594 = vmatpush1.msra.mxu0 0.0
        %2595 = vmatprep.subr.mxu0 0.0
        %2596 = vmatpush1.msra.mxu0 0.0
        %2597 = vmatprep.subr.mxu0 0.0
        %2598 = vmatpush1.msra.mxu0 0.0
        %2599 = vmatprep.subr.mxu0 0.0
        %2600 = vmatpush1.msra.mxu0 0.0
        %2601 = vmatprep.subr.mxu0 0.0
        %2602 = vmatpush1.msra.mxu0 0.0
        %2603 = vmatprep.subr.mxu0 0.0
        %2604 = vmatpush1.msra.mxu0 0.0
        %2605 = vmatprep.subr.mxu0 0.0
        %2606 = vmatpush1.msra.mxu0 0.0
        %2607 = vmatprep.subr.mxu0 0.0
        %2608 = vmatpush1.msra.mxu0 0.0
        %2609 = vmatprep.subr.mxu0 0.0
        %2610 = vmatpush1.msra.mxu0 0.0
        %2611 = vmatprep.mubr.f32.mxu0 0.0
        %2612 = vmatmul.mubr.f32.gmra.mrb[0].mxu0 %v2543
        %v2613 = vpop.f32.mrb[0].mxu0
        %v2614 = vadd.f32 %v2541, %v2613
        %v2615 = vpop.f32.mrb[0].mxu0
        %2616 = vmatprep.mubr.f32.mxu0 0.0
        %2617 = vmatmul.mubr.f32.gmra.mrb[0].mxu0 %v2545
        %v2618 = vpop.f32.mrb[0].mxu0
        %v2619 = vadd.f32 %v2541, %v2618
        %v2620 = vpop.f32.mrb[0].mxu0
        %2621 = vdwg.mxu0
        %vm2622 = vcmask 7168
        %2623 = vst.msk [vmem:[#allocation3] sm:$0xff] %vm2622, %v2614
        %2624 = vst.msk [vmem:[#allocation3 + $0x8] sm:$0xff] %vm2622, %v2619
        %2625 = vst.msk [vmem:[%s534] sm:$0xff] %vm2622, %v2614
        %2626 = vst.msk [vmem:[%s534 + $0x8] sm:$0xff] %vm2622, %v2619
        %s2627 = sand.u32 %s279, 1
        %s2628 = scalar_lea.sflag [#allocation7], %s2627
        %s2629 = sand.u32 %s279, 1
        %s2630 = smul.addr %s2629, 16
        %s2631 = scalar_lea.vmem [#allocation20], %s2630
        // Predicated region
        $region101: #{megacrn_forward.5} parent=59 // pred_check
          %p2632 = pneg %p289
        $region102: #{megacrn_forward.5} parent=59 // pred_check_branch
          %2634 = sbr.rel (%p2632) target = $region104
        $region103: #{megacrn_forward.5} parent=59 // pred_region
          %s2636 = ssub.s32 256, 256
          %2637 = vsyncadd %s2628, %s2636
          %s2638 = smul.addr %s39, 2
          %s2639 = smul.addr %s40, 4
          %s2640 = sadd.s32 %s2638, %s2639
          %s2641 = smul.addr %s2640, 128
          %s2642 = scalar_lea.hbm %s10, %s2641
          %s2643 = sshll.u32 %s2631, 4
          %s2644 = int_to_ptr.vmem [resolvable:$true] %s2643
          %2649 = dma.vmem_to_hbm [thread:$0]  %s2644, 256, %s2642, %s2628, 128, 128, 8
        $region104: #{megacrn_forward.5} parent=59 // pred_fallthru
          _
      $region60: #{megacrn_forward.5} parent=5 // pred_fallthru
        _
      %p2650 = scmp.le.s32.totalorder 2, %s30
      // Predicated region
      $region105: #{megacrn_forward.5} parent=5 // pred_check
        %p2651 = pneg %p2650
      $region106: #{megacrn_forward.5} parent=5 // pred_check_branch
        %2653 = sbr.rel (%p2651) target = $region108
      $region107: #{megacrn_forward.5} parent=5 // pred_region
        %s2654 = ssub.s32 %s30, 2
        // Predicated region
        $region109: #{megacrn_forward.5} parent=107 // pred_check
          %p2655 = pneg %p295
        $region110: #{megacrn_forward.5} parent=107 // pred_check_branch
          %2657 = sbr.rel (%p2655) target = $region112
        $region111: #{megacrn_forward.5} parent=107 // pred_region
          %s2658 = sand.u32 %s280, 1
          %s2659 = scalar_lea.sflag [#allocation7], %s2658
          %s2660 = sand.u32 %s280, 1
          %s2661 = smul.addr %s2660, 16
          %s2662 = scalar_lea.vmem [#allocation20], %s2661
          %2663 = dma.done %s2659, 256
        $region112: #{megacrn_forward.5} parent=107 // pred_fallthru
          _
      $region108: #{megacrn_forward.5} parent=5 // pred_fallthru
        _
    $region6: #{megacrn_forward.5} parent=1 // loop_footer
      %s34 = sadd.s32 1, %s30
    $region7: #{megacrn_forward.5} parent=1 // loop_footer_branch
      %29 = sbr.rel target = $region3
    $region8: #{megacrn_forward.5} parent=1 // loop_exit
      _
    %2664 = vsyncpa [#allocation6], 1
    %s2665 = scalar_lea.sflag [#allocation6], 1
    %2666 = vsyncpa %s2665, 1
    %2667 = vsyncpa [#allocation9], 1
    %s2668 = scalar_lea.sflag [#allocation9], 1
    %2669 = vsyncpa %s2668, 1
    %2670 = vsyncpa [#allocation12], 1
    %2671 = vsyncpa [#allocation15], 1
    %2672 = vsyncpa [#allocation18], 1
    %2673 = vsyncpa [#allocation7], 1
    %s2674 = scalar_lea.sflag [#allocation7], 1
    %2675 = vsyncpa %s2674, 1

</llo_original>
